<compile_context>
chip_gen: v6e
topology: v6e:2x2x1
jax: 0.10.0
libtpu: 0.0.40
codegen_flags: <defaults>
</compile_context>

<pallas_src>
import math
from functools import partial

import jax
import jax.numpy as jnp
from jax import lax
from jax.experimental import pallas as pl
from jax.experimental.pallas import tpu as pltpu

# ---- module hyper-parameters (from the PyTorch source) ----
N_EMBD = 32
N_HEAD = 2
HEAD_SIZE = N_EMBD // N_HEAD   # 16
BLOCK_SIZE = 16                # seq length used in the demo


# ----------------------------------------------------------------------------
# Pallas kernel: multi-head attention for a block of Bb batch elements.
# ----------------------------------------------------------------------------
def mha_kernel(x_ref, wqkv_ref, cos_ref, sin_ref, wp_ref, bp_ref, o_ref,
               *, num_heads, head_size):
    Bb, T, C = x_ref.shape
    H, D = num_heads, head_size
    HD = H * D

    # ---- fused QKV projection: one (Bb*T, C) x (C, 5*HD) matmul (MXU) ----
    x2 = x_ref[...].reshape(Bb * T, C)                       # (Bb*T, C)
    qkv = jnp.dot(x2, wqkv_ref[...],
                  preferred_element_type=jnp.float32)        # (Bb*T, 5*HD)
    qkv3 = qkv.reshape(Bb, T, 5 * HD)

    q  = qkv3[:, :, 0 * HD:1 * HD]    # 1/sqrt(D) already folded into wq cols
    qs = qkv3[:, :, 1 * HD:2 * HD]    # q with even/odd columns swapped
    k  = qkv3[:, :, 2 * HD:3 * HD]
    ks = qkv3[:, :, 3 * HD:4 * HD]
    v  = qkv3[:, :, 4 * HD:5 * HD]

    # ---- RoPE via the swapped-weight trick (pure VPU, no lane swizzle) ----
    #   out[2i]   = x[2i]*cos - x[2i+1]*sin
    #   out[2i+1] = x[2i+1]*cos + x[2i]*sin
    cos = cos_ref[...][None]                                 # (1, T, HD)
    sin = sin_ref[...][None]                                 # signed interleave
    qr = q * cos + qs * sin                                  # (Bb, T, HD)
    kr = k * cos + ks * sin

    # ---- causal softmax-attention, batched over Bb per head ----
    row = lax.broadcasted_iota(jnp.int32, (T, T), 0)
    col = lax.broadcasted_iota(jnp.int32, (T, T), 1)
    causal = (row >= col)[None]                              # (1, T, T)

    outs = []
    for h in range(H):
        lo, hi = h * D, (h + 1) * D
        qh = qr[:, :, lo:hi]                                 # (Bb, T, D)
        kh = kr[:, :, lo:hi]
        vh = v[:, :, lo:hi]
        s = jnp.einsum('btd,bsd->bts', qh, kh,
                       preferred_element_type=jnp.float32)   # (Bb, T, T)
        s = jnp.where(causal, s, jnp.float32(-1e30))
        s = s - jnp.max(s, axis=-1, keepdims=True)
        p = jnp.exp(s)
        p = p * pl.reciprocal(jnp.sum(p, axis=-1, keepdims=True), approx=False)
        outs.append(jnp.einsum('bts,bsd->btd', p, vh,
                               preferred_element_type=jnp.float32))
    out = jnp.concatenate(outs, axis=-1)                     # (Bb, T, HD)

    # ---- output projection ----
    out2 = out.reshape(Bb * T, HD)
    proj = jnp.dot(out2, wp_ref[...],
                   preferred_element_type=jnp.float32) + bp_ref[...]
    o_ref[...] = proj.reshape(Bb, T, C).astype(o_ref.dtype)


# ----------------------------------------------------------------------------
# One-time parameter preprocessing (hoisted out of the hot path)
# ----------------------------------------------------------------------------
def rope_tables(head_size, T, theta=10000.0):
    """Interleaved cos / signed-sin tables of shape (T, head_size)."""
    inv = 1.0 / (theta ** (jnp.arange(0, head_size, 2, dtype=jnp.float32) / head_size))
    m = jnp.arange(T, dtype=jnp.float32)
    freqs = jnp.outer(m, inv)                                        # (T, D/2)
    cos = jnp.cos(freqs)
    sin = jnp.sin(freqs)
    cos_f = jnp.repeat(cos, 2, axis=-1)                              # (T, D)
    sin_f = jnp.stack([-sin, sin], axis=-1).reshape(T, head_size)    # (T, D)
    return cos_f, sin_f


def prepare_params(params, T):
    """Build the fused / pre-permuted / pre-scaled kernel operands once."""
    H, D, C = N_HEAD, HEAD_SIZE, N_EMBD
    HD = H * D

    wq = jnp.concatenate([w.T for w in params["wq"]], axis=1)    # (C, HD)
    wk = jnp.concatenate([w.T for w in params["wk"]], axis=1)
    wv = jnp.concatenate([w.T for w in params["wv"]], axis=1)

    # fold 1/sqrt(D) into q (RoPE is linear, so pre-scaling q is equivalent)
    wq = wq * (1.0 / math.sqrt(D))

    # even<->odd column swap within each head (RoPE swapped-weight trick)
    idx = jnp.arange(HD)
    perm = idx + 1 - 2 * (idx % 2)          # [1,0,3,2,...]
    wq_s = wq[:, perm]
    wk_s = wk[:, perm]

    # single fused projection weight: (C, 5*HD)
    w_qkv = jnp.concatenate([wq, wq_s, wk, wk_s, wv], axis=1)

    cos1, sin1 = rope_tables(D, T)
    cos_f = jnp.tile(cos1, (1, H))          # (T, HD)
    sin_f = jnp.tile(sin1, (1, H))

    return {
        "w_qkv": w_qkv,
        "cos": cos_f,
        "sin": sin_f,
        "wp": params["w_proj"].T,           # (HD, C)
        "bp": params["b_proj"].reshape(1, C),
    }


# ----------------------------------------------------------------------------
# Host-side wrapper
# ----------------------------------------------------------------------------
def multi_head_attention(x, prep, *, block_b=None):
    """x: (B, T, C) float32. prep: output of prepare_params()."""
    B, T, C = x.shape
    H, D = N_HEAD, HEAD_SIZE
    HD = H * D

    if block_b is None:
        # target Bb*T ~= 256 (v6e/v7x MXU edge); use block_b=8 on v5e if desired
        block_b = max(1, min(B, max(1, 256 // T)))
    while B % block_b != 0:                 # Bb must divide B
        block_b -= 1
    Bb = block_b
    grid = (B // Bb,)

    full2 = lambda b: (0, 0)
    kernel = partial(mha_kernel, num_heads=H, head_size=D)

    return pl.pallas_call(
        kernel,
        out_shape=jax.ShapeDtypeStruct((B, T, C), x.dtype),
        grid_spec=pltpu.PrefetchScalarGridSpec(
            num_scalar_prefetch=0,
            grid=grid,
            in_specs=[
                pl.BlockSpec((Bb, T, C), lambda b: (b, 0, 0)),   # x block
                pl.BlockSpec((C, 5 * HD), full2),                # fused qkv weight
                pl.BlockSpec((T, HD), full2),                    # cos
                pl.BlockSpec((T, HD), full2),                    # sin (signed)
                pl.BlockSpec((HD, C), full2),                    # w_proj.T
                pl.BlockSpec((1, C), full2),                     # b_proj
            ],
            out_specs=pl.BlockSpec((Bb, T, C), lambda b: (b, 0, 0)),
        ),
        compiler_params=pltpu.CompilerParams(
            dimension_semantics=("parallel",)),
    )(x, prep["w_qkv"], prep["cos"], prep["sin"], prep["wp"], prep["bp"])


# ----------------------------------------------------------------------------
# Pure-JAX reference (mirrors the PyTorch training path, dropout disabled)
# ----------------------------------------------------------------------------
def reference_mha(x, params):
    B, T, C = x.shape
    D = HEAD_SIZE
    inv = 1.0 / (10000.0 ** (jnp.arange(0, D, 2, dtype=jnp.float32) / D))
    freqs = jnp.outer(jnp.arange(T, dtype=jnp.float32), inv)     # (T, D/2)
    cos, sin = jnp.cos(freqs), jnp.sin(freqs)

    def rope(t):  # t: (B, T, D)
        te, to = t[..., 0::2], t[..., 1::2]
        re = te * cos - to * sin
        im = te * sin + to * cos
        return jnp.stack([re, im], axis=-1).reshape(B, T, D)

    mask = jnp.tril(jnp.ones((T, T), dtype=bool))
    outs = []
    for h in range(N_HEAD):
        q = rope(x @ params["wq"][h].T)
        k = rope(x @ params["wk"][h].T)
        v = x @ params["wv"][h].T
        wei = (q @ jnp.swapaxes(k, -1, -2)) * (D ** -0.5)
        wei = jnp.where(mask, wei, -jnp.inf)
        wei = jax.nn.softmax(wei, axis=-1)
        outs.append(wei @ v)
    out = jnp.concatenate(outs, axis=-1)
    return out @ params["w_proj"].T + params["b_proj"]


def init_params(key):
    ks = jax.random.split(key, 3 * N_HEAD + 1)
    std = 0.02
    return {
        "wq": [std * jax.random.normal(ks[i], (HEAD_SIZE, N_EMBD), jnp.float32)
               for i in range(N_HEAD)],
        "wk": [std * jax.random.normal(ks[N_HEAD + i], (HEAD_SIZE, N_EMBD), jnp.float32)
               for i in range(N_HEAD)],
        "wv": [std * jax.random.normal(ks[2 * N_HEAD + i], (HEAD_SIZE, N_EMBD), jnp.float32)
               for i in range(N_HEAD)],
        "w_proj": std * jax.random.normal(ks[-1], (N_EMBD, N_HEAD * HEAD_SIZE), jnp.float32),
        "b_proj": jnp.zeros((N_EMBD,), jnp.float32),
    }


if __name__ == "__main__":
    key = jax.random.PRNGKey(0)
    k_x, k_p = jax.random.split(key)
    # B=32, Bb=16 -> Bb*T=256 rows per grid step and a 2-step parallel grid
    # (keeps both v7x TensorCores busy).
    B, T, C = 32, BLOCK_SIZE, N_EMBD
    x = jax.random.normal(k_x, (B, T, C), jnp.float32)
    params = init_params(k_p)

    prep = prepare_params(params, T)        # one-time weight preprocessing

    out = multi_head_attention(x, prep)
    out = jax.block_until_ready(out)

    ref = reference_mha(x, params)
    assert out.shape == (B, T, C)
    assert jnp.allclose(out, ref, rtol=1e-4, atol=1e-5), \
        f"max err {jnp.max(jnp.abs(out - ref))}"
    print("KERNEL_OK")
</pallas_src>

<mosaic_0001>
module attributes {stable_mosaic.version = 11 : i64} {
  func.func @mha_kernel(%arg0: i32, %arg1: memref<16x16x32xf32, #tpu.memory_space<vmem>>, %arg2: memref<32x160xf32, #tpu.memory_space<vmem>>, %arg3: memref<16x32xf32, #tpu.memory_space<vmem>>, %arg4: memref<16x32xf32, #tpu.memory_space<vmem>>, %arg5: memref<32x32xf32, #tpu.memory_space<vmem>>, %arg6: memref<1x32xf32, #tpu.memory_space<vmem>>, %arg7: memref<16x16x32xf32, #tpu.memory_space<vmem>>) attributes {dimension_semantics = [#tpu.dimension_semantics<parallel>], iteration_bounds = array<i64: 2>, scalar_prefetch = 0 : i64, scratch_operands = 0 : i64, tpu.core_type = #tpu.core_type<tc>, window_params = [{transform_indices = @transform_0, window_bounds = array<i64: 16, 16, 32>}, {pipeline_mode = #tpu.pipeline_mode<synchronous>, transform_indices = @transform_1, window_bounds = array<i64: 32, 160>}, {pipeline_mode = #tpu.pipeline_mode<synchronous>, transform_indices = @transform_2, window_bounds = array<i64: 16, 32>}, {pipeline_mode = #tpu.pipeline_mode<synchronous>, transform_indices = @transform_3, window_bounds = array<i64: 16, 32>}, {pipeline_mode = #tpu.pipeline_mode<synchronous>, transform_indices = @transform_4, window_bounds = array<i64: 32, 32>}, {pipeline_mode = #tpu.pipeline_mode<synchronous>, transform_indices = @transform_5, window_bounds = array<i64: 1, 32>}, {transform_indices = @transform_6, window_bounds = array<i64: 16, 16, 32>}]} {
    %c0 = arith.constant 0 : index
    %c0_0 = arith.constant 0 : index
    %c0_1 = arith.constant 0 : index
    %0 = vector.load %arg1[%c0, %c0_0, %c0_1] : memref<16x16x32xf32, #tpu.memory_space<vmem>>, vector<16x16x32xf32>
    %1 = vector.shape_cast %0 : vector<16x16x32xf32> to vector<256x32xf32>
    %c0_2 = arith.constant 0 : index
    %c0_3 = arith.constant 0 : index
    %2 = vector.load %arg2[%c0_2, %c0_3] : memref<32x160xf32, #tpu.memory_space<vmem>>, vector<32x160xf32>
    %cst = arith.constant dense<0.000000e+00> : vector<256x160xf32>
    %3 = tpu.matmul %1, %2, %cst {dimension_numbers = #tpu.dot_dimension_numbers<[1], [0], [0], [1], [0, 0, 1, 1], [], []>} : vector<256x32xf32>, vector<32x160xf32>, vector<256x160xf32> -> vector<256x160xf32>
    %4 = vector.shape_cast %3 : vector<256x160xf32> to vector<16x16x160xf32>
    %5 = vector.extract_strided_slice %4 {offsets = [0, 0, 0], sizes = [16, 16, 32], strides = [1, 1, 1]} : vector<16x16x160xf32> to vector<16x16x32xf32>
    %6 = vector.extract_strided_slice %4 {offsets = [0, 0, 32], sizes = [16, 16, 32], strides = [1, 1, 1]} : vector<16x16x160xf32> to vector<16x16x32xf32>
    %7 = vector.extract_strided_slice %4 {offsets = [0, 0, 64], sizes = [16, 16, 32], strides = [1, 1, 1]} : vector<16x16x160xf32> to vector<16x16x32xf32>
    %8 = vector.extract_strided_slice %4 {offsets = [0, 0, 96], sizes = [16, 16, 32], strides = [1, 1, 1]} : vector<16x16x160xf32> to vector<16x16x32xf32>
    %9 = vector.extract_strided_slice %4 {offsets = [0, 0, 128], sizes = [16, 16, 32], strides = [1, 1, 1]} : vector<16x16x160xf32> to vector<16x16x32xf32>
    %c0_4 = arith.constant 0 : index
    %c0_5 = arith.constant 0 : index
    %10 = vector.load %arg3[%c0_4, %c0_5] : memref<16x32xf32, #tpu.memory_space<vmem>>, vector<16x32xf32>
    %11 = vector.shape_cast %10 : vector<16x32xf32> to vector<1x16x32xf32>
    %c0_6 = arith.constant 0 : index
    %c0_7 = arith.constant 0 : index
    %12 = vector.load %arg4[%c0_6, %c0_7] : memref<16x32xf32, #tpu.memory_space<vmem>>, vector<16x32xf32>
    %13 = vector.shape_cast %12 : vector<16x32xf32> to vector<1x16x32xf32>
    %14 = vector.broadcast %11 : vector<1x16x32xf32> to vector<16x16x32xf32>
    %15 = arith.mulf %5, %14 : vector<16x16x32xf32>
    %16 = vector.broadcast %13 : vector<1x16x32xf32> to vector<16x16x32xf32>
    %17 = arith.mulf %6, %16 : vector<16x16x32xf32>
    %18 = arith.addf %15, %17 : vector<16x16x32xf32>
    %19 = vector.broadcast %11 : vector<1x16x32xf32> to vector<16x16x32xf32>
    %20 = arith.mulf %7, %19 : vector<16x16x32xf32>
    %21 = vector.broadcast %13 : vector<1x16x32xf32> to vector<16x16x32xf32>
    %22 = arith.mulf %8, %21 : vector<16x16x32xf32>
    %23 = arith.addf %20, %22 : vector<16x16x32xf32>
    %24 = tpu.iota {dimensions = array<i32: 0>} : vector<16x16xi32>
    %25 = tpu.iota {dimensions = array<i32: 1>} : vector<16x16xi32>
    %26 = arith.cmpi sge, %24, %25 : vector<16x16xi32>
    %27 = vector.shape_cast %26 : vector<16x16xi1> to vector<1x16x16xi1>
    %28 = vector.extract_strided_slice %18 {offsets = [0, 0, 0], sizes = [16, 16, 16], strides = [1, 1, 1]} : vector<16x16x32xf32> to vector<16x16x16xf32>
    %29 = vector.extract_strided_slice %23 {offsets = [0, 0, 0], sizes = [16, 16, 16], strides = [1, 1, 1]} : vector<16x16x32xf32> to vector<16x16x16xf32>
    %30 = vector.extract_strided_slice %9 {offsets = [0, 0, 0], sizes = [16, 16, 16], strides = [1, 1, 1]} : vector<16x16x32xf32> to vector<16x16x16xf32>
    "tpu.trace_start"() <{level = 10 : i32, message = "btd,bsd->bts"}> : () -> ()
    %cst_8 = arith.constant dense<0.000000e+00> : vector<16x16x16xf32>
    %31 = tpu.matmul %28, %29, %cst_8 {dimension_numbers = #tpu.dot_dimension_numbers<[2], [2], [1], [1], [0, 0, 0, 1, 1, 1], [0], [0]>} : vector<16x16x16xf32>, vector<16x16x16xf32>, vector<16x16x16xf32> -> vector<16x16x16xf32>
    %cst_9 = arith.constant -1.000000e+30 : f32
    "tpu.trace_stop"() : () -> ()
    %32 = vector.shape_cast %27 : vector<1x16x16xi1> to vector<1x16x16xi1>
    %33 = vector.broadcast %32 : vector<1x16x16xi1> to vector<16x16x16xi1>
    %34 = vector.broadcast %cst_9 : f32 to vector<16x16x16xf32>
    %35 = arith.select %33, %31, %34 : vector<16x16x16xi1>, vector<16x16x16xf32>
    %cst_10 = arith.constant dense<0xFF800000> : vector<16x16xf32>
    %36 = vector.multi_reduction <maximumf>, %35, %cst_10 [2] : vector<16x16x16xf32> to vector<16x16xf32>
    %37 = vector.shape_cast %36 : vector<16x16xf32> to vector<16x16x1xf32>
    %38 = vector.broadcast %37 : vector<16x16x1xf32> to vector<16x16x16xf32>
    %39 = arith.subf %35, %38 : vector<16x16x16xf32>
    %40 = math.exp %39 : vector<16x16x16xf32>
    %cst_11 = arith.constant dense<0.000000e+00> : vector<16x16xf32>
    %41 = vector.multi_reduction <add>, %40, %cst_11 [2] : vector<16x16x16xf32> to vector<16x16xf32>
    %42 = vector.shape_cast %41 : vector<16x16xf32> to vector<16x16x1xf32>
    %43 = tpu.reciprocal %42 : vector<16x16x1xf32> -> vector<16x16x1xf32>
    %44 = vector.broadcast %43 : vector<16x16x1xf32> to vector<16x16x16xf32>
    %45 = arith.mulf %40, %44 : vector<16x16x16xf32>
    "tpu.trace_start"() <{level = 10 : i32, message = "bts,bsd->btd"}> : () -> ()
    %cst_12 = arith.constant dense<0.000000e+00> : vector<16x16x16xf32>
    %46 = tpu.matmul %45, %30, %cst_12 {dimension_numbers = #tpu.dot_dimension_numbers<[2], [1], [1], [2], [0, 0, 0, 1, 1, 2], [0], [0]>} : vector<16x16x16xf32>, vector<16x16x16xf32>, vector<16x16x16xf32> -> vector<16x16x16xf32>
    "tpu.trace_stop"() : () -> ()
    %47 = vector.extract_strided_slice %18 {offsets = [0, 0, 16], sizes = [16, 16, 16], strides = [1, 1, 1]} : vector<16x16x32xf32> to vector<16x16x16xf32>
    %48 = vector.extract_strided_slice %23 {offsets = [0, 0, 16], sizes = [16, 16, 16], strides = [1, 1, 1]} : vector<16x16x32xf32> to vector<16x16x16xf32>
    %49 = vector.extract_strided_slice %9 {offsets = [0, 0, 16], sizes = [16, 16, 16], strides = [1, 1, 1]} : vector<16x16x32xf32> to vector<16x16x16xf32>
    "tpu.trace_start"() <{level = 10 : i32, message = "btd,bsd->bts"}> : () -> ()
    %cst_13 = arith.constant dense<0.000000e+00> : vector<16x16x16xf32>
    %50 = tpu.matmul %47, %48, %cst_13 {dimension_numbers = #tpu.dot_dimension_numbers<[2], [2], [1], [1], [0, 0, 0, 1, 1, 1], [0], [0]>} : vector<16x16x16xf32>, vector<16x16x16xf32>, vector<16x16x16xf32> -> vector<16x16x16xf32>
    %cst_14 = arith.constant -1.000000e+30 : f32
    "tpu.trace_stop"() : () -> ()
    %51 = vector.shape_cast %27 : vector<1x16x16xi1> to vector<1x16x16xi1>
    %52 = vector.broadcast %51 : vector<1x16x16xi1> to vector<16x16x16xi1>
    %53 = vector.broadcast %cst_14 : f32 to vector<16x16x16xf32>
    %54 = arith.select %52, %50, %53 : vector<16x16x16xi1>, vector<16x16x16xf32>
    %cst_15 = arith.constant dense<0xFF800000> : vector<16x16xf32>
    %55 = vector.multi_reduction <maximumf>, %54, %cst_15 [2] : vector<16x16x16xf32> to vector<16x16xf32>
    %56 = vector.shape_cast %55 : vector<16x16xf32> to vector<16x16x1xf32>
    %57 = vector.broadcast %56 : vector<16x16x1xf32> to vector<16x16x16xf32>
    %58 = arith.subf %54, %57 : vector<16x16x16xf32>
    %59 = math.exp %58 : vector<16x16x16xf32>
    %cst_16 = arith.constant dense<0.000000e+00> : vector<16x16xf32>
    %60 = vector.multi_reduction <add>, %59, %cst_16 [2] : vector<16x16x16xf32> to vector<16x16xf32>
    %61 = vector.shape_cast %60 : vector<16x16xf32> to vector<16x16x1xf32>
    %62 = tpu.reciprocal %61 : vector<16x16x1xf32> -> vector<16x16x1xf32>
    %63 = vector.broadcast %62 : vector<16x16x1xf32> to vector<16x16x16xf32>
    %64 = arith.mulf %59, %63 : vector<16x16x16xf32>
    "tpu.trace_start"() <{level = 10 : i32, message = "bts,bsd->btd"}> : () -> ()
    %cst_17 = arith.constant dense<0.000000e+00> : vector<16x16x16xf32>
    %65 = tpu.matmul %64, %49, %cst_17 {dimension_numbers = #tpu.dot_dimension_numbers<[2], [1], [1], [2], [0, 0, 0, 1, 1, 2], [0], [0]>} : vector<16x16x16xf32>, vector<16x16x16xf32>, vector<16x16x16xf32> -> vector<16x16x16xf32>
    "tpu.trace_stop"() : () -> ()
    %66 = tpu.concatenate %46, %65 in 2 : vector<16x16x16xf32>, vector<16x16x16xf32> -> vector<16x16x32xf32>
    %67 = vector.shape_cast %66 : vector<16x16x32xf32> to vector<256x32xf32>
    %c0_18 = arith.constant 0 : index
    %c0_19 = arith.constant 0 : index
    %68 = vector.load %arg5[%c0_18, %c0_19] : memref<32x32xf32, #tpu.memory_space<vmem>>, vector<32x32xf32>
    %cst_20 = arith.constant dense<0.000000e+00> : vector<256x32xf32>
    %69 = tpu.matmul %67, %68, %cst_20 {dimension_numbers = #tpu.dot_dimension_numbers<[1], [0], [0], [1], [0, 0, 1, 1], [], []>} : vector<256x32xf32>, vector<32x32xf32>, vector<256x32xf32> -> vector<256x32xf32>
    %c0_21 = arith.constant 0 : index
    %c0_22 = arith.constant 0 : index
    %70 = vector.load %arg6[%c0_21, %c0_22] : memref<1x32xf32, #tpu.memory_space<vmem>>, vector<1x32xf32>
    %71 = vector.broadcast %70 : vector<1x32xf32> to vector<256x32xf32>
    %72 = arith.addf %69, %71 : vector<256x32xf32>
    %73 = vector.shape_cast %72 : vector<256x32xf32> to vector<16x16x32xf32>
    %c0_23 = arith.constant 0 : index
    %c0_24 = arith.constant 0 : index
    %c0_25 = arith.constant 0 : index
    %74 = vector.load %arg7[%c0_23, %c0_24, %c0_25] : memref<16x16x32xf32, #tpu.memory_space<vmem>>, vector<16x16x32xf32>
    tpu.vector_store %arg7[%c0_23, %c0_24, %c0_25], %73 {strides = array<i32>} : memref<16x16x32xf32, #tpu.memory_space<vmem>>, vector<16x16x32xf32>,
    return
  }
  func.func @transform_0(%arg0: i32) -> (i32, i32, i32) {
    %c0_i32 = arith.constant 0 : i32
    %c0_i32_0 = arith.constant 0 : i32
    %c0_i32_1 = arith.constant 0 : i32
    return %arg0, %c0_i32, %c0_i32_0 : i32, i32, i32
  }
  func.func @transform_1(%arg0: i32) -> (i32, i32) {
    %c0_i32 = arith.constant 0 : i32
    %c0_i32_0 = arith.constant 0 : i32
    %c0_i32_1 = arith.constant 0 : i32
    return %c0_i32, %c0_i32_0 : i32, i32
  }
  func.func @transform_2(%arg0: i32) -> (i32, i32) {
    %c0_i32 = arith.constant 0 : i32
    %c0_i32_0 = arith.constant 0 : i32
    %c0_i32_1 = arith.constant 0 : i32
    return %c0_i32, %c0_i32_0 : i32, i32
  }
  func.func @transform_3(%arg0: i32) -> (i32, i32) {
    %c0_i32 = arith.constant 0 : i32
    %c0_i32_0 = arith.constant 0 : i32
    %c0_i32_1 = arith.constant 0 : i32
    return %c0_i32, %c0_i32_0 : i32, i32
  }
  func.func @transform_4(%arg0: i32) -> (i32, i32) {
    %c0_i32 = arith.constant 0 : i32
    %c0_i32_0 = arith.constant 0 : i32
    %c0_i32_1 = arith.constant 0 : i32
    return %c0_i32, %c0_i32_0 : i32, i32
  }
  func.func @transform_5(%arg0: i32) -> (i32, i32) {
    %c0_i32 = arith.constant 0 : i32
    %c0_i32_0 = arith.constant 0 : i32
    %c0_i32_1 = arith.constant 0 : i32
    return %c0_i32, %c0_i32_0 : i32, i32
  }
  func.func @transform_6(%arg0: i32) -> (i32, i32, i32) {
    %c0_i32 = arith.constant 0 : i32
    %c0_i32_0 = arith.constant 0 : i32
    %c0_i32_1 = arith.constant 0 : i32
    return %arg0, %c0_i32, %c0_i32_0 : i32, i32, i32
  }
}

</mosaic_0001>

<llo_original>
// kernel: tpu_custom_call.1
$region0: #{tpu_custom_call.1}
  #allocation0 [shape = 'u32[]', space=smem, size = 0x4, offset = 0x4, fixed_abs, tag = 'smem constant byte address 0x4 - core index']
  #allocation1 [shape = 'u32[144,128]{1,0:T(1,128)}', space=vmem, size = 0x12000, scoped, tag = 'internal scratch']
  %s0 = inlined_call_operand.hbm [shape: f32[32,16,32], index: 0, kind: input, shape index: {}]
  %s1 = inlined_call_operand.hbm [shape: f32[32,160], index: 1, kind: input, shape index: {}]
  %s2 = inlined_call_operand.hbm [shape: f32[16,32], index: 2, kind: input, shape index: {}]
  %s3 = inlined_call_operand.hbm [shape: f32[16,32], index: 3, kind: input, shape index: {}]
  %s4 = inlined_call_operand.hbm [shape: f32[32,32], index: 4, kind: input, shape index: {}]
  %s5 = inlined_call_operand.vmem [shape: f32[1,32], index: 5, kind: input, shape index: {}]
  %s6 = inlined_call_operand.hbm [shape: f32[32,16,32], index: 6, kind: output, shape index: {}]
  %s7 = sld [smem:[#allocation0]]
  $region77: #{tpu_custom_call.1} parent=0
    _
  %s9 = ssub.s32 1, %s7
  %s10 = scalar_select 0, %s9, %s7
  $region1: #{tpu_custom_call.1} parent=0
    #allocation2 [shape = 'u8[262144]{0}', space=vmem, size = 0x40000, scoped, tag = 'input window, operand 0']
    #allocation3 [shape = 's32[2]{0}', space=sflag, size = 0x8, scoped, tag = 'scoped memory for tpu_custom_call.1']
    #allocation4 [shape = 's32[2]{0}', space=sflag, size = 0x8, scoped, tag = 'scoped memory for tpu_custom_call.1']
    #allocation5 [shape = 'u8[32768]{0}', space=vmem, size = 0x8000, scoped, tag = 'input window, operand 1, single buffered']
    #allocation6 [shape = 's32[1]{0}', space=sflag, size = 0x4, scoped, tag = 'scoped memory for tpu_custom_call.1']
    #allocation7 [shape = 'u8[8192]{0}', space=vmem, size = 0x2000, scoped, tag = 'input window, operand 2, single buffered']
    #allocation8 [shape = 'u8[8192]{0}', space=vmem, size = 0x2000, scoped, tag = 'input window, operand 3, single buffered']
    #allocation9 [shape = 's32[1]{0}', space=sflag, size = 0x4, scoped, tag = 'scoped memory for tpu_custom_call.1']
    #allocation10 [shape = 'u8[16384]{0}', space=vmem, size = 0x4000, scoped, tag = 'input window, operand 4, single buffered']
    #allocation11 [shape = 'u8[262144]{0}', space=vmem, size = 0x40000, scoped, tag = 'output window, operand 0']
    %11 = vsyncpa [#allocation3], 0
    %s12 = scalar_lea.sflag [#allocation3], 1
    %13 = vsyncpa %s12, 0
    %14 = vsyncpa [#allocation6], 0
    %15 = vsyncpa [#allocation9], 0
    %16 = vsyncpa [#allocation4], 0
    %s17 = scalar_lea.sflag [#allocation4], 1
    %18 = vsyncpa %s17, 0
    loop: start=0, step=1, limit=4
    $region2: #{tpu_custom_call.1} parent=1 // loop_pre_header
      _
    $region3: #{tpu_custom_call.1} parent=1 // loop_header
      %s20 = sphi 0, %s24
      %p21 = scmp.ge.s32.totalorder %s20, 4
      %s30 = sphi 0, %s32
      %s33 = sphi 0, %s30
      %s34 = sphi 0, %s33
      %s50 = sphi 0, %s34
      %s54 = sphi 0, %s54
      %s56 = sphi 0, %s54
      %s57 = sphi 0, %s56
      %s71 = sphi 0, %s57
      %s75 = sphi 0, %s75
      %s77 = sphi 0, %s75
      %s78 = sphi 0, %s77
      %s92 = sphi 0, %s78
      %s96 = sphi 0, %s96
      %s98 = sphi 0, %s96
      %s99 = sphi 0, %s98
      %s113 = sphi 0, %s99
      %s117 = sphi 0, %s117
      %s119 = sphi 0, %s117
      %s120 = sphi 0, %s119
      %s134 = sphi 0, %s120
      %s138 = sphi 0, %s138
      %s140 = sphi 0, %s138
      %s141 = sphi 0, %s140
      %s155 = sphi 0, %s141
      %s161 = sphi 0, %s163
      %s164 = sphi 0, %s161
      %s165 = sphi 0, %s164
      %s181 = sphi 0, %s165
    $region4: #{tpu_custom_call.1} parent=1 // loop_header_branch
      %23 = sbr.rel (%p21) target = $region8
    $region5: #{tpu_custom_call.1} parent=1 // loop_body
      %s25 = ssub.s32 %s20, 1
      %s26 = ssub.s32 %s20, 2
      %s27 = sadd.s32 %s20, 1
      %s28 = ssub.s32 %s20, %s27
      %p29 = scmp.eq.s32.totalorder %s28, 0
      %s31 = sadd.s32 %s30, 1
      %s32 = scalar_select %p29, %s30, %s31
      %p35 = pneg %p29
      %p36 = scmp.eq.s32.totalorder %s20, 1
      %p37 = por %p35, %p36
      %p38 = scmp.ne.s32.totalorder %s30, %s33
      %p39 = scmp.eq.s32.totalorder %s20, 0
      %p40 = por %p38, %p39
      %p41 = scmp.ne.s32.totalorder %s30, %s33
      %p42 = scmp.eq.s32.totalorder %s25, 1
      %p43 = por %p41, %p42
      %p44 = scmp.ne.s32.totalorder %s33, %s34
      %p45 = scmp.eq.s32.totalorder %s25, 0
      %p46 = por %p44, %p45
      %p47 = scmp.ne.s32.totalorder %s33, %s34
      %p48 = scmp.eq.s32.totalorder %s26, 1
      %p49 = por %p47, %p48
      %p51 = scmp.ne.s32.totalorder %s34, %s50
      %p52 = scmp.eq.s32.totalorder %s26, 0
      %p53 = por %p51, %p52
      %s55 = sadd.s32 %s54, 1
      %p58 = scmp.eq.s32.totalorder %s20, 1
      %p59 = scmp.ne.s32.totalorder %s54, %s56
      %p60 = scmp.eq.s32.totalorder %s20, 0
      %p61 = por %p59, %p60
      %p62 = scmp.ne.s32.totalorder %s54, %s56
      %p63 = scmp.eq.s32.totalorder %s25, 1
      %p64 = por %p62, %p63
      %p65 = scmp.ne.s32.totalorder %s56, %s57
      %p66 = scmp.eq.s32.totalorder %s25, 0
      %p67 = por %p65, %p66
      %p68 = scmp.ne.s32.totalorder %s56, %s57
      %p69 = scmp.eq.s32.totalorder %s26, 1
      %p70 = por %p68, %p69
      %p72 = scmp.ne.s32.totalorder %s57, %s71
      %p73 = scmp.eq.s32.totalorder %s26, 0
      %p74 = por %p72, %p73
      %s76 = sadd.s32 %s75, 1
      %p79 = scmp.eq.s32.totalorder %s20, 1
      %p80 = scmp.ne.s32.totalorder %s75, %s77
      %p81 = scmp.eq.s32.totalorder %s20, 0
      %p82 = por %p80, %p81
      %p83 = scmp.ne.s32.totalorder %s75, %s77
      %p84 = scmp.eq.s32.totalorder %s25, 1
      %p85 = por %p83, %p84
      %p86 = scmp.ne.s32.totalorder %s77, %s78
      %p87 = scmp.eq.s32.totalorder %s25, 0
      %p88 = por %p86, %p87
      %p89 = scmp.ne.s32.totalorder %s77, %s78
      %p90 = scmp.eq.s32.totalorder %s26, 1
      %p91 = por %p89, %p90
      %p93 = scmp.ne.s32.totalorder %s78, %s92
      %p94 = scmp.eq.s32.totalorder %s26, 0
      %p95 = por %p93, %p94
      %s97 = sadd.s32 %s96, 1
      %p100 = scmp.eq.s32.totalorder %s20, 1
      %p101 = scmp.ne.s32.totalorder %s96, %s98
      %p102 = scmp.eq.s32.totalorder %s20, 0
      %p103 = por %p101, %p102
      %p104 = scmp.ne.s32.totalorder %s96, %s98
      %p105 = scmp.eq.s32.totalorder %s25, 1
      %p106 = por %p104, %p105
      %p107 = scmp.ne.s32.totalorder %s98, %s99
      %p108 = scmp.eq.s32.totalorder %s25, 0
      %p109 = por %p107, %p108
      %p110 = scmp.ne.s32.totalorder %s98, %s99
      %p111 = scmp.eq.s32.totalorder %s26, 1
      %p112 = por %p110, %p111
      %p114 = scmp.ne.s32.totalorder %s99, %s113
      %p115 = scmp.eq.s32.totalorder %s26, 0
      %p116 = por %p114, %p115
      %s118 = sadd.s32 %s117, 1
      %p121 = scmp.eq.s32.totalorder %s20, 1
      %p122 = scmp.ne.s32.totalorder %s117, %s119
      %p123 = scmp.eq.s32.totalorder %s20, 0
      %p124 = por %p122, %p123
      %p125 = scmp.ne.s32.totalorder %s117, %s119
      %p126 = scmp.eq.s32.totalorder %s25, 1
      %p127 = por %p125, %p126
      %p128 = scmp.ne.s32.totalorder %s119, %s120
      %p129 = scmp.eq.s32.totalorder %s25, 0
      %p130 = por %p128, %p129
      %p131 = scmp.ne.s32.totalorder %s119, %s120
      %p132 = scmp.eq.s32.totalorder %s26, 1
      %p133 = por %p131, %p132
      %p135 = scmp.ne.s32.totalorder %s120, %s134
      %p136 = scmp.eq.s32.totalorder %s26, 0
      %p137 = por %p135, %p136
      %s139 = sadd.s32 %s138, 1
      %p142 = scmp.eq.s32.totalorder %s20, 1
      %p143 = scmp.ne.s32.totalorder %s138, %s140
      %p144 = scmp.eq.s32.totalorder %s20, 0
      %p145 = por %p143, %p144
      %p146 = scmp.ne.s32.totalorder %s138, %s140
      %p147 = scmp.eq.s32.totalorder %s25, 1
      %p148 = por %p146, %p147
      %p149 = scmp.ne.s32.totalorder %s140, %s141
      %p150 = scmp.eq.s32.totalorder %s25, 0
      %p151 = por %p149, %p150
      %p152 = scmp.ne.s32.totalorder %s140, %s141
      %p153 = scmp.eq.s32.totalorder %s26, 1
      %p154 = por %p152, %p153
      %p156 = scmp.ne.s32.totalorder %s141, %s155
      %p157 = scmp.eq.s32.totalorder %s26, 0
      %p158 = por %p156, %p157
      %s159 = ssub.s32 %s20, %s27
      %p160 = scmp.eq.s32.totalorder %s159, 0
      %s162 = sadd.s32 %s161, 1
      %s163 = scalar_select %p160, %s161, %s162
      %p166 = pneg %p160
      %p167 = scmp.eq.s32.totalorder %s20, 1
      %p168 = por %p166, %p167
      %p169 = scmp.ne.s32.totalorder %s161, %s164
      %p170 = scmp.eq.s32.totalorder %s20, 0
      %p171 = por %p169, %p170
      %p172 = scmp.ne.s32.totalorder %s161, %s164
      %p173 = scmp.eq.s32.totalorder %s25, 1
      %p174 = por %p172, %p173
      %p175 = scmp.ne.s32.totalorder %s164, %s165
      %p176 = scmp.eq.s32.totalorder %s25, 0
      %p177 = por %p175, %p176
      %p178 = scmp.ne.s32.totalorder %s164, %s165
      %p179 = scmp.eq.s32.totalorder %s26, 1
      %p180 = por %p178, %p179
      %p182 = scmp.ne.s32.totalorder %s165, %s181
      %p183 = scmp.eq.s32.totalorder %s26, 0
      %p184 = por %p182, %p183
      %p185 = scmp.le.s32.totalorder 1, %s20
      %p186 = scmp.lt.s32.totalorder %s20, 3
      %p187 = pnand %p185, %p186
      %p188 = pneg %p187
      // Predicated region
      $region9: #{tpu_custom_call.1} parent=5 // pred_check
        _
      $region10: #{tpu_custom_call.1} parent=5 // pred_check_branch
        %190 = sbr.rel (%p187) target = $region12
      $region11: #{tpu_custom_call.1} parent=5 // pred_region
        %s191 = ssub.s32 %s20, 1
        // Predicated region
        $region13: #{tpu_custom_call.1} parent=11 // pred_check
          %p192 = pneg %p67
        $region14: #{tpu_custom_call.1} parent=11 // pred_check_branch
          %194 = sbr.rel (%p192) target = $region16
        $region15: #{tpu_custom_call.1} parent=11 // pred_region
          %s196 = ssub.s32 1024, 1024
          %197 = vsyncadd [#allocation6], %s196
          %s198 = sshll.u32 [#allocation5], 4
          %s199 = int_to_ptr.vmem [resolvable:$true] %s198
          %204 = dma.hbm_to_vmem [thread:$0]  %s1, 1024, %s199, [#allocation6], 256, 256, 16
        $region16: #{tpu_custom_call.1} parent=11 // pred_fallthru
          _
        // Predicated region
        $region17: #{tpu_custom_call.1} parent=11 // pred_check
          %p205 = pneg %p88
        $region18: #{tpu_custom_call.1} parent=11 // pred_check_branch
          %207 = sbr.rel (%p205) target = $region20
        $region19: #{tpu_custom_call.1} parent=11 // pred_region
          %s209 = ssub.s32 256, 256
          %210 = vsyncadd [#allocation6], %s209
          %s211 = sshll.u32 [#allocation7], 4
          %s212 = int_to_ptr.vmem [resolvable:$true] %s211
          %217 = dma.hbm_to_vmem [thread:$0]  %s2, 256, %s212, [#allocation6], 128, 128, 8
        $region20: #{tpu_custom_call.1} parent=11 // pred_fallthru
          _
        // Predicated region
        $region21: #{tpu_custom_call.1} parent=11 // pred_check
          %p218 = pneg %p109
        $region22: #{tpu_custom_call.1} parent=11 // pred_check_branch
          %220 = sbr.rel (%p218) target = $region24
        $region23: #{tpu_custom_call.1} parent=11 // pred_region
          %s222 = ssub.s32 256, 256
          %223 = vsyncadd [#allocation9], %s222
          %s224 = sshll.u32 [#allocation8], 4
          %s225 = int_to_ptr.vmem [resolvable:$true] %s224
          %230 = dma.hbm_to_vmem [thread:$0]  %s3, 256, %s225, [#allocation9], 128, 128, 8
        $region24: #{tpu_custom_call.1} parent=11 // pred_fallthru
          _
        // Predicated region
        $region25: #{tpu_custom_call.1} parent=11 // pred_check
          %p231 = pneg %p130
        $region26: #{tpu_custom_call.1} parent=11 // pred_check_branch
          %233 = sbr.rel (%p231) target = $region28
        $region27: #{tpu_custom_call.1} parent=11 // pred_region
          %s235 = ssub.s32 512, 512
          %236 = vsyncadd [#allocation9], %s235
          %s237 = sshll.u32 [#allocation10], 4
          %s238 = int_to_ptr.vmem [resolvable:$true] %s237
          %243 = dma.hbm_to_vmem [thread:$0]  %s4, 512, %s238, [#allocation9], 128, 128, 8
        $region28: #{tpu_custom_call.1} parent=11 // pred_fallthru
          _
        // Predicated region
        $region29: #{tpu_custom_call.1} parent=11 // pred_check
          %p244 = pneg %p151
        $region30: #{tpu_custom_call.1} parent=11 // pred_check_branch
          %246 = sbr.rel (%p244) target = $region32
        $region31: #{tpu_custom_call.1} parent=11 // pred_region
          _
        $region32: #{tpu_custom_call.1} parent=11 // pred_fallthru
          _
      $region12: #{tpu_custom_call.1} parent=5 // pred_fallthru
        _
      %p247 = scmp.lt.s32.totalorder %s20, 2
      // Predicated region
      $region33: #{tpu_custom_call.1} parent=5 // pred_check
        %p248 = pneg %p247
      $region34: #{tpu_custom_call.1} parent=5 // pred_check_branch
        %250 = sbr.rel (%p248) target = $region36
      $region35: #{tpu_custom_call.1} parent=5 // pred_region
        // Predicated region
        $region37: #{tpu_custom_call.1} parent=35 // pred_check
          %p251 = pneg %p40
        $region38: #{tpu_custom_call.1} parent=35 // pred_check_branch
          %253 = sbr.rel (%p251) target = $region40
        $region39: #{tpu_custom_call.1} parent=35 // pred_region
          %s254 = sand.u32 %s30, 1
          %s255 = scalar_lea.sflag [#allocation3], %s254
          %s256 = sand.u32 %s30, 1
          %s257 = smul.addr %s256, 256
          %s258 = scalar_lea.vmem [#allocation2], %s257
          %s259 = smul.u32 16, %s20
          %s261 = ssub.s32 4096, 4096
          %262 = vsyncadd %s255, %s261
          %s263 = smul.addr %s259, 2
          %s264 = smul.addr %s263, 128
          %s265 = scalar_lea.hbm %s0, %s264
          %s266 = sshll.u32 %s258, 4
          %s267 = int_to_ptr.vmem [resolvable:$true] %s266
          %272 = dma.hbm_to_vmem [thread:$0]  %s265, 4096, %s267, %s255, 128, 128, 8
        $region40: #{tpu_custom_call.1} parent=35 // pred_fallthru
          _
      $region36: #{tpu_custom_call.1} parent=5 // pred_fallthru
        _
      %p273 = scmp.le.s32.totalorder 1, %s20
      %p274 = scmp.lt.s32.totalorder %s20, 3
      %p275 = pnand %p273, %p274
      %p276 = pneg %p275
      // Predicated region
      $region41: #{tpu_custom_call.1} parent=5 // pred_check
        _
      $region42: #{tpu_custom_call.1} parent=5 // pred_check_branch
        %278 = sbr.rel (%p275) target = $region44
      $region43: #{tpu_custom_call.1} parent=5 // pred_region
        %s279 = ssub.s32 %s20, 1
        %s280 = sand.u32 %s33, 1
        %s281 = scalar_lea.sflag [#allocation3], %s280
        %s282 = sand.u32 %s33, 1
        %s283 = smul.addr %s282, 256
        %s284 = scalar_lea.vmem [#allocation2], %s283
        // Predicated region
        $region45: #{tpu_custom_call.1} parent=43 // pred_check
          %p285 = pneg %p46
        $region46: #{tpu_custom_call.1} parent=43 // pred_check_branch
          %287 = sbr.rel (%p285) target = $region48
        $region47: #{tpu_custom_call.1} parent=43 // pred_region
          %288 = dma.done %s281, 4096
        $region48: #{tpu_custom_call.1} parent=43 // pred_fallthru
          _
        // Predicated region
        $region49: #{tpu_custom_call.1} parent=43 // pred_check
          %p289 = pneg %p67
        $region50: #{tpu_custom_call.1} parent=43 // pred_check_branch
          %291 = sbr.rel (%p289) target = $region52
        $region51: #{tpu_custom_call.1} parent=43 // pred_region
          %292 = dma.done [#allocation6], 1024
        $region52: #{tpu_custom_call.1} parent=43 // pred_fallthru
          _
        // Predicated region
        $region53: #{tpu_custom_call.1} parent=43 // pred_check
          %p293 = pneg %p88
        $region54: #{tpu_custom_call.1} parent=43 // pred_check_branch
          %295 = sbr.rel (%p293) target = $region56
        $region55: #{tpu_custom_call.1} parent=43 // pred_region
          %296 = dma.done [#allocation6], 256
        $region56: #{tpu_custom_call.1} parent=43 // pred_fallthru
          _
        // Predicated region
        $region57: #{tpu_custom_call.1} parent=43 // pred_check
          %p297 = pneg %p109
        $region58: #{tpu_custom_call.1} parent=43 // pred_check_branch
          %299 = sbr.rel (%p297) target = $region60
        $region59: #{tpu_custom_call.1} parent=43 // pred_region
          %300 = dma.done [#allocation9], 256
        $region60: #{tpu_custom_call.1} parent=43 // pred_fallthru
          _
        // Predicated region
        $region61: #{tpu_custom_call.1} parent=43 // pred_check
          %p301 = pneg %p130
        $region62: #{tpu_custom_call.1} parent=43 // pred_check_branch
          %303 = sbr.rel (%p301) target = $region64
        $region63: #{tpu_custom_call.1} parent=43 // pred_region
          %304 = dma.done [#allocation9], 512
        $region64: #{tpu_custom_call.1} parent=43 // pred_fallthru
          _
        %s305 = sand.u32 %s33, 1
        %s306 = scalar_lea.sflag [#allocation3], %s305
        %s307 = sand.u32 %s33, 1
        %s308 = smul.addr %s307, 256
        %s309 = scalar_lea.vmem [#allocation2], %s308
        %p310 = pneg %p46
        %p311 = pneg %p43
        %p312 = pneg %p67
        %p313 = pneg %p64
        %p314 = pneg %p88
        %p315 = pneg %p85
        %p316 = pneg %p109
        %p317 = pneg %p106
        %p318 = pneg %p130
        %p319 = pneg %p127
        %p320 = pneg %p151
        %p321 = pneg %p148
        %p322 = pneg %p177
        %p323 = pneg %p174
        %s324 = sand.u32 %s164, 1
        %s325 = scalar_lea.sflag [#allocation4], %s324
        %s326 = sand.u32 %s164, 1
        %s327 = smul.addr %s326, 256
        %s328 = scalar_lea.vmem [#allocation11], %s327
        %s329 = smul.u32 16, %s25
        %s330 = smul.u32 16, %s25
        %v331 = vld [vmem:[%s284] sm:$0xff]
        %v332 = vld [vmem:[%s284 + $0x8] sm:$0xff]
        %v333 = vld [vmem:[%s284 + $0x10] sm:$0xff]
        %v334 = vld [vmem:[%s284 + $0x18] sm:$0xff]
        %v335 = vld [vmem:[%s284 + $0x20] sm:$0xff]
        %v336 = vld [vmem:[%s284 + $0x28] sm:$0xff]
        %v337 = vld [vmem:[%s284 + $0x30] sm:$0xff]
        %v338 = vld [vmem:[%s284 + $0x38] sm:$0xff]
        %v339 = vld [vmem:[%s284 + $0x40] sm:$0xff]
        %v340 = vld [vmem:[%s284 + $0x48] sm:$0xff]
        %v341 = vld [vmem:[%s284 + $0x50] sm:$0xff]
        %v342 = vld [vmem:[%s284 + $0x58] sm:$0xff]
        %v343 = vld [vmem:[%s284 + $0x60] sm:$0xff]
        %v344 = vld [vmem:[%s284 + $0x68] sm:$0xff]
        %v345 = vld [vmem:[%s284 + $0x70] sm:$0xff]
        %v346 = vld [vmem:[%s284 + $0x78] sm:$0xff]
        %v347 = vld [vmem:[%s284 + $0x80] sm:$0xff]
        %v348 = vld [vmem:[%s284 + $0x88] sm:$0xff]
        %v349 = vld [vmem:[%s284 + $0x90] sm:$0xff]
        %v350 = vld [vmem:[%s284 + $0x98] sm:$0xff]
        %v351 = vld [vmem:[%s284 + $0xa0] sm:$0xff]
        %v352 = vld [vmem:[%s284 + $0xa8] sm:$0xff]
        %v353 = vld [vmem:[%s284 + $0xb0] sm:$0xff]
        %v354 = vld [vmem:[%s284 + $0xb8] sm:$0xff]
        %v355 = vld [vmem:[%s284 + $0xc0] sm:$0xff]
        %v356 = vld [vmem:[%s284 + $0xc8] sm:$0xff]
        %v357 = vld [vmem:[%s284 + $0xd0] sm:$0xff]
        %v358 = vld [vmem:[%s284 + $0xd8] sm:$0xff]
        %v359 = vld [vmem:[%s284 + $0xe0] sm:$0xff]
        %v360 = vld [vmem:[%s284 + $0xe8] sm:$0xff]
        %v361 = vld [vmem:[%s284 + $0xf0] sm:$0xff]
        %v362 = vld [vmem:[%s284 + $0xf8] sm:$0xff]
        %v363 = vld [vmem:[#allocation5] sm:$0xff]
        %v364 = vld [vmem:[#allocation5 + $0x8] sm:$0xff]
        %v365 = vld [vmem:[#allocation5 + $0x10] sm:$0xff]
        %v366 = vld [vmem:[#allocation5 + $0x18] sm:$0xff]
        %v367 = vld [vmem:[#allocation5 + $0x20] sm:$0xff]
        %v368 = vld [vmem:[#allocation5 + $0x28] sm:$0xff]
        %v369 = vld [vmem:[#allocation5 + $0x30] sm:$0xff]
        %v370 = vld [vmem:[#allocation5 + $0x38] sm:$0xff]
        %vm371 = vcmask 261120
        %v373 = vsel %vm371, %v331, 0
        %v376 = vsel %vm371, %v332, 0
        %v379 = vsel %vm371, %v333, 0
        %v382 = vsel %vm371, %v334, 0
        %v385 = vsel %vm371, %v335, 0
        %v388 = vsel %vm371, %v336, 0
        %v391 = vsel %vm371, %v337, 0
        %v394 = vsel %vm371, %v338, 0
        %v397 = vsel %vm371, %v339, 0
        %v400 = vsel %vm371, %v340, 0
        %v403 = vsel %vm371, %v341, 0
        %v406 = vsel %vm371, %v342, 0
        %v409 = vsel %vm371, %v343, 0
        %v412 = vsel %vm371, %v344, 0
        %v415 = vsel %vm371, %v345, 0
        %v418 = vsel %vm371, %v346, 0
        %v421 = vsel %vm371, %v347, 0
        %v424 = vsel %vm371, %v348, 0
        %v427 = vsel %vm371, %v349, 0
        %v430 = vsel %vm371, %v350, 0
        %v433 = vsel %vm371, %v351, 0
        %v436 = vsel %vm371, %v352, 0
        %v439 = vsel %vm371, %v353, 0
        %v442 = vsel %vm371, %v354, 0
        %v445 = vsel %vm371, %v355, 0
        %v448 = vsel %vm371, %v356, 0
        %v451 = vsel %vm371, %v357, 0
        %v454 = vsel %vm371, %v358, 0
        %v457 = vsel %vm371, %v359, 0
        %v460 = vsel %vm371, %v360, 0
        %v463 = vsel %vm371, %v361, 0
        %v466 = vsel %vm371, %v362, 0
        %468 = vmatprep.subr.mxu0 0.0
        %469 = vmatpush1.msra.mxu0 0.0
        %470 = vmatprep.subr.mxu0 0.0
        %471 = vmatpush1.msra.mxu0 0.0
        %472 = vmatprep.subr.mxu0 0.0
        %473 = vmatpush1.msra.mxu0 0.0
        %474 = vmatprep.subr.mxu0 0.0
        %475 = vmatpush1.msra.mxu0 0.0
        %476 = vmatprep.subr.mxu0 0.0
        %477 = vmatpush1.msra.mxu0 0.0
        %478 = vmatprep.subr.mxu0 0.0
        %479 = vmatpush1.msra.mxu0 0.0
        %480 = vmatprep.subr.mxu0 0.0
        %481 = vmatpush1.msra.mxu0 0.0
        %482 = vmatprep.subr.mxu0 0.0
        %483 = vmatpush1.msra.mxu0 0.0
        %484 = vmatprep.subr.mxu0 0.0
        %485 = vmatpush1.msra.mxu0 0.0
        %486 = vmatprep.subr.mxu0 0.0
        %487 = vmatpush1.msra.mxu0 0.0
        %488 = vmatprep.subr.mxu0 0.0
        %489 = vmatpush1.msra.mxu0 0.0
        %490 = vmatprep.subr.mxu0 0.0
        %491 = vmatpush1.msra.mxu0 0.0
        %492 = vmatprep.subr.mxu0 %v370
        %493 = vmatpush1.msra.mxu0 %v369
        %494 = vmatprep.subr.mxu0 %v368
        %495 = vmatpush1.msra.mxu0 %v367
        %496 = vmatprep.subr.mxu0 %v366
        %497 = vmatpush1.msra.mxu0 %v365
        %498 = vmatprep.subr.mxu0 %v364
        %499 = vmatpush1.msra.mxu0 %v363
        %500 = vmatprep.subr.mxu0 0.0
        %501 = vmatpush2.msra.mxu0 0.0
        %502 = vmatprep.subr.mxu0 0.0
        %503 = vmatpush2.msra.mxu0 0.0
        %504 = vmatprep.subr.mxu0 0.0
        %505 = vmatpush2.msra.mxu0 0.0
        %506 = vmatprep.subr.mxu0 0.0
        %507 = vmatpush2.msra.mxu0 0.0
        %508 = vmatprep.subr.mxu0 0.0
        %509 = vmatpush2.msra.mxu0 0.0
        %510 = vmatprep.subr.mxu0 0.0
        %511 = vmatpush2.msra.mxu0 0.0
        %512 = vmatprep.subr.mxu0 0.0
        %513 = vmatpush2.msra.mxu0 0.0
        %514 = vmatprep.subr.mxu0 0.0
        %515 = vmatpush2.msra.mxu0 0.0
        %516 = vmatprep.subr.mxu0 0.0
        %517 = vmatpush2.msra.mxu0 0.0
        %518 = vmatprep.subr.mxu0 0.0
        %519 = vmatpush2.msra.mxu0 0.0
        %520 = vmatprep.subr.mxu0 0.0
        %521 = vmatpush2.msra.mxu0 0.0
        %522 = vmatprep.subr.mxu0 0.0
        %523 = vmatpush2.msra.mxu0 0.0
        %524 = vmatprep.subr.mxu0 0.0
        %525 = vmatpush2.msra.mxu0 0.0
        %526 = vmatprep.subr.mxu0 0.0
        %527 = vmatpush2.msra.mxu0 0.0
        %528 = vmatprep.subr.mxu0 0.0
        %529 = vmatpush2.msra.mxu0 0.0
        %530 = vmatprep.subr.mxu0 0.0
        %531 = vmatpush2.msra.mxu0 0.0
        %532 = vmatprep.mubr.f32.mxu0 0.0
        %533 = vmatmul.mubr.f32.gmra.mxu0 %v373
        %v534 = vpop.f32.mrf.mxu0
        %v535 = vadd.f32 0.0, %v534
        %v536 = vpop.f32.mrf.mxu0
        %v537 = vadd.f32 0.0, %v536
        %538 = vmatprep.mubr.f32.mxu0 0.0
        %539 = vmatmul.mubr.f32.gmra.mxu0 %v376
        %v540 = vpop.f32.mrf.mxu0
        %v541 = vadd.f32 0.0, %v540
        %v542 = vpop.f32.mrf.mxu0
        %v543 = vadd.f32 0.0, %v542
        %544 = vmatprep.mubr.f32.mxu0 0.0
        %545 = vmatmul.mubr.f32.gmra.mxu0 %v379
        %v546 = vpop.f32.mrf.mxu0
        %v547 = vadd.f32 0.0, %v546
        %v548 = vpop.f32.mrf.mxu0
        %v549 = vadd.f32 0.0, %v548
        %550 = vmatprep.mubr.f32.mxu0 0.0
        %551 = vmatmul.mubr.f32.gmra.mxu0 %v382
        %v552 = vpop.f32.mrf.mxu0
        %v553 = vadd.f32 0.0, %v552
        %v554 = vpop.f32.mrf.mxu0
        %v555 = vadd.f32 0.0, %v554
        %556 = vmatprep.mubr.f32.mxu0 0.0
        %557 = vmatmul.mubr.f32.gmra.mxu0 %v385
        %v558 = vpop.f32.mrf.mxu0
        %v559 = vadd.f32 0.0, %v558
        %v560 = vpop.f32.mrf.mxu0
        %v561 = vadd.f32 0.0, %v560
        %562 = vmatprep.mubr.f32.mxu0 0.0
        %563 = vmatmul.mubr.f32.gmra.mxu0 %v388
        %v564 = vpop.f32.mrf.mxu0
        %v565 = vadd.f32 0.0, %v564
        %v566 = vpop.f32.mrf.mxu0
        %v567 = vadd.f32 0.0, %v566
        %568 = vmatprep.mubr.f32.mxu0 0.0
        %569 = vmatmul.mubr.f32.gmra.mxu0 %v391
        %v570 = vpop.f32.mrf.mxu0
        %v571 = vadd.f32 0.0, %v570
        %v572 = vpop.f32.mrf.mxu0
        %v573 = vadd.f32 0.0, %v572
        %574 = vmatprep.mubr.f32.mxu0 0.0
        %575 = vmatmul.mubr.f32.gmra.mxu0 %v394
        %v576 = vpop.f32.mrf.mxu0
        %v577 = vadd.f32 0.0, %v576
        %v578 = vpop.f32.mrf.mxu0
        %v579 = vadd.f32 0.0, %v578
        %580 = vmatprep.mubr.f32.mxu0 0.0
        %581 = vmatmul.mubr.f32.gmra.mxu0 %v397
        %v582 = vpop.f32.mrf.mxu0
        %v583 = vadd.f32 0.0, %v582
        %v584 = vpop.f32.mrf.mxu0
        %v585 = vadd.f32 0.0, %v584
        %586 = vmatprep.mubr.f32.mxu0 0.0
        %587 = vmatmul.mubr.f32.gmra.mxu0 %v400
        %v588 = vpop.f32.mrf.mxu0
        %v589 = vadd.f32 0.0, %v588
        %v590 = vpop.f32.mrf.mxu0
        %v591 = vadd.f32 0.0, %v590
        %592 = vmatprep.mubr.f32.mxu0 0.0
        %593 = vmatmul.mubr.f32.gmra.mxu0 %v403
        %v594 = vpop.f32.mrf.mxu0
        %v595 = vadd.f32 0.0, %v594
        %v596 = vpop.f32.mrf.mxu0
        %v597 = vadd.f32 0.0, %v596
        %598 = vmatprep.mubr.f32.mxu0 0.0
        %599 = vmatmul.mubr.f32.gmra.mxu0 %v406
        %v600 = vpop.f32.mrf.mxu0
        %v601 = vadd.f32 0.0, %v600
        %v602 = vpop.f32.mrf.mxu0
        %v603 = vadd.f32 0.0, %v602
        %604 = vmatprep.mubr.f32.mxu0 0.0
        %605 = vmatmul.mubr.f32.gmra.mxu0 %v409
        %v606 = vpop.f32.mrf.mxu0
        %v607 = vadd.f32 0.0, %v606
        %v608 = vpop.f32.mrf.mxu0
        %v609 = vadd.f32 0.0, %v608
        %610 = vmatprep.mubr.f32.mxu0 0.0
        %611 = vmatmul.mubr.f32.gmra.mxu0 %v412
        %v612 = vpop.f32.mrf.mxu0
        %v613 = vadd.f32 0.0, %v612
        %v614 = vpop.f32.mrf.mxu0
        %v615 = vadd.f32 0.0, %v614
        %616 = vmatprep.mubr.f32.mxu0 0.0
        %617 = vmatmul.mubr.f32.gmra.mxu0 %v415
        %v618 = vpop.f32.mrf.mxu0
        %v619 = vadd.f32 0.0, %v618
        %v620 = vpop.f32.mrf.mxu0
        %v621 = vadd.f32 0.0, %v620
        %622 = vmatprep.mubr.f32.mxu0 0.0
        %623 = vmatmul.mubr.f32.gmra.mxu0 %v418
        %v624 = vpop.f32.mrf.mxu0
        %v625 = vadd.f32 0.0, %v624
        %v626 = vpop.f32.mrf.mxu0
        %v627 = vadd.f32 0.0, %v626
        %628 = vmatprep.mubr.f32.mxu0 0.0
        %629 = vmatmul.mubr.f32.gmra.mxu0 %v421
        %v630 = vpop.f32.mrf.mxu0
        %v631 = vadd.f32 0.0, %v630
        %v632 = vpop.f32.mrf.mxu0
        %v633 = vadd.f32 0.0, %v632
        %634 = vmatprep.mubr.f32.mxu0 0.0
        %635 = vmatmul.mubr.f32.gmra.mxu0 %v424
        %v636 = vpop.f32.mrf.mxu0
        %v637 = vadd.f32 0.0, %v636
        %v638 = vpop.f32.mrf.mxu0
        %v639 = vadd.f32 0.0, %v638
        %640 = vmatprep.mubr.f32.mxu0 0.0
        %641 = vmatmul.mubr.f32.gmra.mxu0 %v427
        %v642 = vpop.f32.mrf.mxu0
        %v643 = vadd.f32 0.0, %v642
        %v644 = vpop.f32.mrf.mxu0
        %v645 = vadd.f32 0.0, %v644
        %646 = vmatprep.mubr.f32.mxu0 0.0
        %647 = vmatmul.mubr.f32.gmra.mxu0 %v430
        %v648 = vpop.f32.mrf.mxu0
        %v649 = vadd.f32 0.0, %v648
        %v650 = vpop.f32.mrf.mxu0
        %v651 = vadd.f32 0.0, %v650
        %652 = vmatprep.mubr.f32.mxu0 0.0
        %653 = vmatmul.mubr.f32.gmra.mxu0 %v433
        %v654 = vpop.f32.mrf.mxu0
        %v655 = vadd.f32 0.0, %v654
        %v656 = vpop.f32.mrf.mxu0
        %v657 = vadd.f32 0.0, %v656
        %658 = vmatprep.mubr.f32.mxu0 0.0
        %659 = vmatmul.mubr.f32.gmra.mxu0 %v436
        %v660 = vpop.f32.mrf.mxu0
        %v661 = vadd.f32 0.0, %v660
        %v662 = vpop.f32.mrf.mxu0
        %v663 = vadd.f32 0.0, %v662
        %664 = vmatprep.mubr.f32.mxu0 0.0
        %665 = vmatmul.mubr.f32.gmra.mxu0 %v439
        %v666 = vpop.f32.mrf.mxu0
        %v667 = vadd.f32 0.0, %v666
        %v668 = vpop.f32.mrf.mxu0
        %v669 = vadd.f32 0.0, %v668
        %670 = vmatprep.mubr.f32.mxu0 0.0
        %671 = vmatmul.mubr.f32.gmra.mxu0 %v442
        %v672 = vpop.f32.mrf.mxu0
        %v673 = vadd.f32 0.0, %v672
        %v674 = vpop.f32.mrf.mxu0
        %v675 = vadd.f32 0.0, %v674
        %676 = vmatprep.mubr.f32.mxu0 0.0
        %677 = vmatmul.mubr.f32.gmra.mxu0 %v445
        %v678 = vpop.f32.mrf.mxu0
        %v679 = vadd.f32 0.0, %v678
        %v680 = vpop.f32.mrf.mxu0
        %v681 = vadd.f32 0.0, %v680
        %682 = vmatprep.mubr.f32.mxu0 0.0
        %683 = vmatmul.mubr.f32.gmra.mxu0 %v448
        %v684 = vpop.f32.mrf.mxu0
        %v685 = vadd.f32 0.0, %v684
        %v686 = vpop.f32.mrf.mxu0
        %v687 = vadd.f32 0.0, %v686
        %688 = vmatprep.mubr.f32.mxu0 0.0
        %689 = vmatmul.mubr.f32.gmra.mxu0 %v451
        %v690 = vpop.f32.mrf.mxu0
        %v691 = vadd.f32 0.0, %v690
        %v692 = vpop.f32.mrf.mxu0
        %v693 = vadd.f32 0.0, %v692
        %694 = vmatprep.mubr.f32.mxu0 0.0
        %695 = vmatmul.mubr.f32.gmra.mxu0 %v454
        %v696 = vpop.f32.mrf.mxu0
        %v697 = vadd.f32 0.0, %v696
        %v698 = vpop.f32.mrf.mxu0
        %v699 = vadd.f32 0.0, %v698
        %700 = vmatprep.mubr.f32.mxu0 0.0
        %701 = vmatmul.mubr.f32.gmra.mxu0 %v457
        %v702 = vpop.f32.mrf.mxu0
        %v703 = vadd.f32 0.0, %v702
        %v704 = vpop.f32.mrf.mxu0
        %v705 = vadd.f32 0.0, %v704
        %706 = vmatprep.mubr.f32.mxu0 0.0
        %707 = vmatmul.mubr.f32.gmra.mxu0 %v460
        %v708 = vpop.f32.mrf.mxu0
        %v709 = vadd.f32 0.0, %v708
        %v710 = vpop.f32.mrf.mxu0
        %v711 = vadd.f32 0.0, %v710
        %712 = vmatprep.mubr.f32.mxu0 0.0
        %713 = vmatmul.mubr.f32.gmra.mxu0 %v463
        %v714 = vpop.f32.mrf.mxu0
        %v715 = vadd.f32 0.0, %v714
        %v716 = vpop.f32.mrf.mxu0
        %v717 = vadd.f32 0.0, %v716
        %718 = vmatprep.mubr.f32.mxu0 0.0
        %719 = vmatmul.mubr.f32.gmra.mxu0 %v466
        %v720 = vpop.f32.mrf.mxu0
        %v721 = vadd.f32 0.0, %v720
        %v722 = vpop.f32.mrf.mxu0
        %v723 = vadd.f32 0.0, %v722
        %724 = vdwg.mxu0
        %v725 = vld [vmem:[#allocation7] sm:$0xff]
        %v726 = vld [vmem:[#allocation7 + $0x8] sm:$0xff]
        %v727 = vld [vmem:[#allocation8] sm:$0xff]
        %v728 = vld [vmem:[#allocation8 + $0x8] sm:$0xff]
        %v729 = vmul.f32 %v535, %v725
        %v730 = vmul.f32 %v541, %v726
        %v731 = vmul.f32 %v547, %v725
        %v732 = vmul.f32 %v553, %v726
        %v733 = vmul.f32 %v559, %v725
        %v734 = vmul.f32 %v565, %v726
        %v735 = vmul.f32 %v571, %v725
        %v736 = vmul.f32 %v577, %v726
        %v737 = vmul.f32 %v583, %v725
        %v738 = vmul.f32 %v589, %v726
        %v739 = vmul.f32 %v595, %v725
        %v740 = vmul.f32 %v601, %v726
        %v741 = vmul.f32 %v607, %v725
        %v742 = vmul.f32 %v613, %v726
        %v743 = vmul.f32 %v619, %v725
        %v744 = vmul.f32 %v625, %v726
        %v745 = vmul.f32 %v631, %v725
        %v746 = vmul.f32 %v637, %v726
        %v747 = vmul.f32 %v643, %v725
        %v748 = vmul.f32 %v649, %v726
        %v749 = vmul.f32 %v655, %v725
        %v750 = vmul.f32 %v661, %v726
        %v751 = vmul.f32 %v667, %v725
        %v752 = vmul.f32 %v673, %v726
        %v753 = vmul.f32 %v679, %v725
        %v754 = vmul.f32 %v685, %v726
        %v755 = vmul.f32 %v691, %v725
        %v756 = vmul.f32 %v697, %v726
        %v757 = vmul.f32 %v703, %v725
        %v758 = vmul.f32 %v709, %v726
        %v759 = vmul.f32 %v715, %v725
        %v760 = vmul.f32 %v721, %v726
        %763 = vrot.lane.b32.xlu0 %v727, 32
        %v764 = vpop.permute.xlu0 %763
        %765 = vrot.lane.b32.xlu0 %v728, 32
        %v766 = vpop.permute.xlu0 %765
        %v769 = vmul.f32 %v535, %v764
        %v770 = vmul.f32 %v541, %v766
        %v771 = vmul.f32 %v547, %v764
        %v772 = vmul.f32 %v553, %v766
        %v773 = vmul.f32 %v559, %v764
        %v774 = vmul.f32 %v565, %v766
        %v775 = vmul.f32 %v571, %v764
        %v776 = vmul.f32 %v577, %v766
        %v777 = vmul.f32 %v583, %v764
        %v778 = vmul.f32 %v589, %v766
        %v779 = vmul.f32 %v595, %v764
        %v780 = vmul.f32 %v601, %v766
        %v781 = vmul.f32 %v607, %v764
        %v782 = vmul.f32 %v613, %v766
        %v783 = vmul.f32 %v619, %v764
        %v784 = vmul.f32 %v625, %v766
        %v785 = vmul.f32 %v631, %v764
        %v786 = vmul.f32 %v637, %v766
        %v787 = vmul.f32 %v643, %v764
        %v788 = vmul.f32 %v649, %v766
        %v789 = vmul.f32 %v655, %v764
        %v790 = vmul.f32 %v661, %v766
        %v791 = vmul.f32 %v667, %v764
        %v792 = vmul.f32 %v673, %v766
        %v793 = vmul.f32 %v679, %v764
        %v794 = vmul.f32 %v685, %v766
        %v795 = vmul.f32 %v691, %v764
        %v796 = vmul.f32 %v697, %v766
        %v797 = vmul.f32 %v703, %v764
        %v798 = vmul.f32 %v709, %v766
        %v799 = vmul.f32 %v715, %v764
        %v800 = vmul.f32 %v721, %v766
        %833 = vrot.lane.b32.xlu0 %v769, 96
        %v834 = vpop.permute.xlu0 %833
        %835 = vrot.lane.b32.xlu0 %v770, 96
        %v836 = vpop.permute.xlu0 %835
        %837 = vrot.lane.b32.xlu0 %v771, 96
        %v838 = vpop.permute.xlu0 %837
        %839 = vrot.lane.b32.xlu0 %v772, 96
        %v840 = vpop.permute.xlu0 %839
        %841 = vrot.lane.b32.xlu0 %v773, 96
        %v842 = vpop.permute.xlu0 %841
        %843 = vrot.lane.b32.xlu0 %v774, 96
        %v844 = vpop.permute.xlu0 %843
        %845 = vrot.lane.b32.xlu0 %v775, 96
        %v846 = vpop.permute.xlu0 %845
        %847 = vrot.lane.b32.xlu0 %v776, 96
        %v848 = vpop.permute.xlu0 %847
        %849 = vrot.lane.b32.xlu0 %v777, 96
        %v850 = vpop.permute.xlu0 %849
        %851 = vrot.lane.b32.xlu0 %v778, 96
        %v852 = vpop.permute.xlu0 %851
        %853 = vrot.lane.b32.xlu0 %v779, 96
        %v854 = vpop.permute.xlu0 %853
        %855 = vrot.lane.b32.xlu0 %v780, 96
        %v856 = vpop.permute.xlu0 %855
        %857 = vrot.lane.b32.xlu0 %v781, 96
        %v858 = vpop.permute.xlu0 %857
        %859 = vrot.lane.b32.xlu0 %v782, 96
        %v860 = vpop.permute.xlu0 %859
        %861 = vrot.lane.b32.xlu0 %v783, 96
        %v862 = vpop.permute.xlu0 %861
        %863 = vrot.lane.b32.xlu0 %v784, 96
        %v864 = vpop.permute.xlu0 %863
        %865 = vrot.lane.b32.xlu0 %v785, 96
        %v866 = vpop.permute.xlu0 %865
        %867 = vrot.lane.b32.xlu0 %v786, 96
        %v868 = vpop.permute.xlu0 %867
        %869 = vrot.lane.b32.xlu0 %v787, 96
        %v870 = vpop.permute.xlu0 %869
        %871 = vrot.lane.b32.xlu0 %v788, 96
        %v872 = vpop.permute.xlu0 %871
        %873 = vrot.lane.b32.xlu0 %v789, 96
        %v874 = vpop.permute.xlu0 %873
        %875 = vrot.lane.b32.xlu0 %v790, 96
        %v876 = vpop.permute.xlu0 %875
        %877 = vrot.lane.b32.xlu0 %v791, 96
        %v878 = vpop.permute.xlu0 %877
        %879 = vrot.lane.b32.xlu0 %v792, 96
        %v880 = vpop.permute.xlu0 %879
        %881 = vrot.lane.b32.xlu0 %v793, 96
        %v882 = vpop.permute.xlu0 %881
        %883 = vrot.lane.b32.xlu0 %v794, 96
        %v884 = vpop.permute.xlu0 %883
        %885 = vrot.lane.b32.xlu0 %v795, 96
        %v886 = vpop.permute.xlu0 %885
        %887 = vrot.lane.b32.xlu0 %v796, 96
        %v888 = vpop.permute.xlu0 %887
        %889 = vrot.lane.b32.xlu0 %v797, 96
        %v890 = vpop.permute.xlu0 %889
        %891 = vrot.lane.b32.xlu0 %v798, 96
        %v892 = vpop.permute.xlu0 %891
        %893 = vrot.lane.b32.xlu0 %v799, 96
        %v894 = vpop.permute.xlu0 %893
        %895 = vrot.lane.b32.xlu0 %v800, 96
        %v896 = vpop.permute.xlu0 %895
        %v929 = vadd.f32 %v729, %v834
        %v930 = vadd.f32 %v730, %v836
        %v931 = vadd.f32 %v731, %v838
        %v932 = vadd.f32 %v732, %v840
        %v933 = vadd.f32 %v733, %v842
        %v934 = vadd.f32 %v734, %v844
        %v935 = vadd.f32 %v735, %v846
        %v936 = vadd.f32 %v736, %v848
        %v937 = vadd.f32 %v737, %v850
        %v938 = vadd.f32 %v738, %v852
        %v939 = vadd.f32 %v739, %v854
        %v940 = vadd.f32 %v740, %v856
        %v941 = vadd.f32 %v741, %v858
        %v942 = vadd.f32 %v742, %v860
        %v943 = vadd.f32 %v743, %v862
        %v944 = vadd.f32 %v744, %v864
        %v945 = vadd.f32 %v745, %v866
        %v946 = vadd.f32 %v746, %v868
        %v947 = vadd.f32 %v747, %v870
        %v948 = vadd.f32 %v748, %v872
        %v949 = vadd.f32 %v749, %v874
        %v950 = vadd.f32 %v750, %v876
        %v951 = vadd.f32 %v751, %v878
        %v952 = vadd.f32 %v752, %v880
        %v953 = vadd.f32 %v753, %v882
        %v954 = vadd.f32 %v754, %v884
        %v955 = vadd.f32 %v755, %v886
        %v956 = vadd.f32 %v756, %v888
        %v957 = vadd.f32 %v757, %v890
        %v958 = vadd.f32 %v758, %v892
        %v959 = vadd.f32 %v759, %v894
        %v960 = vadd.f32 %v760, %v896
        %963 = vrot.lane.b32.xlu0 %v725, 64
        %v964 = vpop.permute.xlu0 %963
        %965 = vrot.lane.b32.xlu0 %v726, 64
        %v966 = vpop.permute.xlu0 %965
        %v969 = vmul.f32 %v535, %v964
        %v970 = vmul.f32 %v541, %v966
        %v971 = vmul.f32 %v547, %v964
        %v972 = vmul.f32 %v553, %v966
        %v973 = vmul.f32 %v559, %v964
        %v974 = vmul.f32 %v565, %v966
        %v975 = vmul.f32 %v571, %v964
        %v976 = vmul.f32 %v577, %v966
        %v977 = vmul.f32 %v583, %v964
        %v978 = vmul.f32 %v589, %v966
        %v979 = vmul.f32 %v595, %v964
        %v980 = vmul.f32 %v601, %v966
        %v981 = vmul.f32 %v607, %v964
        %v982 = vmul.f32 %v613, %v966
        %v983 = vmul.f32 %v619, %v964
        %v984 = vmul.f32 %v625, %v966
        %v985 = vmul.f32 %v631, %v964
        %v986 = vmul.f32 %v637, %v966
        %v987 = vmul.f32 %v643, %v964
        %v988 = vmul.f32 %v649, %v966
        %v989 = vmul.f32 %v655, %v964
        %v990 = vmul.f32 %v661, %v966
        %v991 = vmul.f32 %v667, %v964
        %v992 = vmul.f32 %v673, %v966
        %v993 = vmul.f32 %v679, %v964
        %v994 = vmul.f32 %v685, %v966
        %v995 = vmul.f32 %v691, %v964
        %v996 = vmul.f32 %v697, %v966
        %v997 = vmul.f32 %v703, %v964
        %v998 = vmul.f32 %v709, %v966
        %v999 = vmul.f32 %v715, %v964
        %v1000 = vmul.f32 %v721, %v966
        %1001 = vrot.lane.b32.xlu0 %v727, 96
        %v1002 = vpop.permute.xlu0 %1001
        %1003 = vrot.lane.b32.xlu0 %v728, 96
        %v1004 = vpop.permute.xlu0 %1003
        %v1007 = vmul.f32 %v535, %v1002
        %v1008 = vmul.f32 %v541, %v1004
        %v1009 = vmul.f32 %v547, %v1002
        %v1010 = vmul.f32 %v553, %v1004
        %v1011 = vmul.f32 %v559, %v1002
        %v1012 = vmul.f32 %v565, %v1004
        %v1013 = vmul.f32 %v571, %v1002
        %v1014 = vmul.f32 %v577, %v1004
        %v1015 = vmul.f32 %v583, %v1002
        %v1016 = vmul.f32 %v589, %v1004
        %v1017 = vmul.f32 %v595, %v1002
        %v1018 = vmul.f32 %v601, %v1004
        %v1019 = vmul.f32 %v607, %v1002
        %v1020 = vmul.f32 %v613, %v1004
        %v1021 = vmul.f32 %v619, %v1002
        %v1022 = vmul.f32 %v625, %v1004
        %v1023 = vmul.f32 %v631, %v1002
        %v1024 = vmul.f32 %v637, %v1004
        %v1025 = vmul.f32 %v643, %v1002
        %v1026 = vmul.f32 %v649, %v1004
        %v1027 = vmul.f32 %v655, %v1002
        %v1028 = vmul.f32 %v661, %v1004
        %v1029 = vmul.f32 %v667, %v1002
        %v1030 = vmul.f32 %v673, %v1004
        %v1031 = vmul.f32 %v679, %v1002
        %v1032 = vmul.f32 %v685, %v1004
        %v1033 = vmul.f32 %v691, %v1002
        %v1034 = vmul.f32 %v697, %v1004
        %v1035 = vmul.f32 %v703, %v1002
        %v1036 = vmul.f32 %v709, %v1004
        %v1037 = vmul.f32 %v715, %v1002
        %v1038 = vmul.f32 %v721, %v1004
        %1071 = vrot.lane.b32.xlu0 %v1007, 96
        %v1072 = vpop.permute.xlu0 %1071
        %1073 = vrot.lane.b32.xlu0 %v1008, 96
        %v1074 = vpop.permute.xlu0 %1073
        %1075 = vrot.lane.b32.xlu0 %v1009, 96
        %v1076 = vpop.permute.xlu0 %1075
        %1077 = vrot.lane.b32.xlu0 %v1010, 96
        %v1078 = vpop.permute.xlu0 %1077
        %1079 = vrot.lane.b32.xlu0 %v1011, 96
        %v1080 = vpop.permute.xlu0 %1079
        %1081 = vrot.lane.b32.xlu0 %v1012, 96
        %v1082 = vpop.permute.xlu0 %1081
        %1083 = vrot.lane.b32.xlu0 %v1013, 96
        %v1084 = vpop.permute.xlu0 %1083
        %1085 = vrot.lane.b32.xlu0 %v1014, 96
        %v1086 = vpop.permute.xlu0 %1085
        %1087 = vrot.lane.b32.xlu0 %v1015, 96
        %v1088 = vpop.permute.xlu0 %1087
        %1089 = vrot.lane.b32.xlu0 %v1016, 96
        %v1090 = vpop.permute.xlu0 %1089
        %1091 = vrot.lane.b32.xlu0 %v1017, 96
        %v1092 = vpop.permute.xlu0 %1091
        %1093 = vrot.lane.b32.xlu0 %v1018, 96
        %v1094 = vpop.permute.xlu0 %1093
        %1095 = vrot.lane.b32.xlu0 %v1019, 96
        %v1096 = vpop.permute.xlu0 %1095
        %1097 = vrot.lane.b32.xlu0 %v1020, 96
        %v1098 = vpop.permute.xlu0 %1097
        %1099 = vrot.lane.b32.xlu0 %v1021, 96
        %v1100 = vpop.permute.xlu0 %1099
        %1101 = vrot.lane.b32.xlu0 %v1022, 96
        %v1102 = vpop.permute.xlu0 %1101
        %1103 = vrot.lane.b32.xlu0 %v1023, 96
        %v1104 = vpop.permute.xlu0 %1103
        %1105 = vrot.lane.b32.xlu0 %v1024, 96
        %v1106 = vpop.permute.xlu0 %1105
        %1107 = vrot.lane.b32.xlu0 %v1025, 96
        %v1108 = vpop.permute.xlu0 %1107
        %1109 = vrot.lane.b32.xlu0 %v1026, 96
        %v1110 = vpop.permute.xlu0 %1109
        %1111 = vrot.lane.b32.xlu0 %v1027, 96
        %v1112 = vpop.permute.xlu0 %1111
        %1113 = vrot.lane.b32.xlu0 %v1028, 96
        %v1114 = vpop.permute.xlu0 %1113
        %1115 = vrot.lane.b32.xlu0 %v1029, 96
        %v1116 = vpop.permute.xlu0 %1115
        %1117 = vrot.lane.b32.xlu0 %v1030, 96
        %v1118 = vpop.permute.xlu0 %1117
        %1119 = vrot.lane.b32.xlu0 %v1031, 96
        %v1120 = vpop.permute.xlu0 %1119
        %1121 = vrot.lane.b32.xlu0 %v1032, 96
        %v1122 = vpop.permute.xlu0 %1121
        %1123 = vrot.lane.b32.xlu0 %v1033, 96
        %v1124 = vpop.permute.xlu0 %1123
        %1125 = vrot.lane.b32.xlu0 %v1034, 96
        %v1126 = vpop.permute.xlu0 %1125
        %1127 = vrot.lane.b32.xlu0 %v1035, 96
        %v1128 = vpop.permute.xlu0 %1127
        %1129 = vrot.lane.b32.xlu0 %v1036, 96
        %v1130 = vpop.permute.xlu0 %1129
        %1131 = vrot.lane.b32.xlu0 %v1037, 96
        %v1132 = vpop.permute.xlu0 %1131
        %1133 = vrot.lane.b32.xlu0 %v1038, 96
        %v1134 = vpop.permute.xlu0 %1133
        %v1167 = vadd.f32 %v969, %v1072
        %v1168 = vadd.f32 %v970, %v1074
        %v1169 = vadd.f32 %v971, %v1076
        %v1170 = vadd.f32 %v972, %v1078
        %v1171 = vadd.f32 %v973, %v1080
        %v1172 = vadd.f32 %v974, %v1082
        %v1173 = vadd.f32 %v975, %v1084
        %v1174 = vadd.f32 %v976, %v1086
        %v1175 = vadd.f32 %v977, %v1088
        %v1176 = vadd.f32 %v978, %v1090
        %v1177 = vadd.f32 %v979, %v1092
        %v1178 = vadd.f32 %v980, %v1094
        %v1179 = vadd.f32 %v981, %v1096
        %v1180 = vadd.f32 %v982, %v1098
        %v1181 = vadd.f32 %v983, %v1100
        %v1182 = vadd.f32 %v984, %v1102
        %v1183 = vadd.f32 %v985, %v1104
        %v1184 = vadd.f32 %v986, %v1106
        %v1185 = vadd.f32 %v987, %v1108
        %v1186 = vadd.f32 %v988, %v1110
        %v1187 = vadd.f32 %v989, %v1112
        %v1188 = vadd.f32 %v990, %v1114
        %v1189 = vadd.f32 %v991, %v1116
        %v1190 = vadd.f32 %v992, %v1118
        %v1191 = vadd.f32 %v993, %v1120
        %v1192 = vadd.f32 %v994, %v1122
        %v1193 = vadd.f32 %v995, %v1124
        %v1194 = vadd.f32 %v996, %v1126
        %v1195 = vadd.f32 %v997, %v1128
        %v1196 = vadd.f32 %v998, %v1130
        %v1197 = vadd.f32 %v999, %v1132
        %v1198 = vadd.f32 %v1000, %v1134
        %v1199 = vlaneseq
        %v1200 = vshrl.u32 %v1199, 7
        %v1201 = vadd.s32 %v1200, 8
        %v1202 = vlaneseq
        %v1203 = vand.u32 %v1202, 127
        %vm1204 = vcmp.ge.s32.totalorder %v1200, %v1203
        %vm1205 = vcmp.ge.s32.totalorder %v1201, %v1203
        %1208 = vrot.lane.b32.xlu0 %v1167, 64
        %v1209 = vpop.permute.xlu0 %1208
        %1210 = vrot.lane.b32.xlu0 %v1168, 64
        %v1211 = vpop.permute.xlu0 %1210
        %vm1212 = vcmask 130048
        %v1214 = vsel %vm1212, %v929, 0
        %v1217 = vsel %vm1212, %v930, 0
        %v1219 = vsel %vm1212, %v1209, 0
        %v1221 = vsel %vm1212, %v1211, 0
        %1223 = vmatprep.subr.mxu0 0.0
        %1224 = vmatpush1.xpose.msra.mxu0 0.0
        %1225 = vmatprep.subr.mxu0 0.0
        %1226 = vmatpush1.xpose.msra.mxu0 0.0
        %1227 = vmatprep.subr.mxu0 0.0
        %1228 = vmatpush1.xpose.msra.mxu0 0.0
        %1229 = vmatprep.subr.mxu0 0.0
        %1230 = vmatpush1.xpose.msra.mxu0 0.0
        %1231 = vmatprep.subr.mxu0 0.0
        %1232 = vmatpush1.xpose.msra.mxu0 0.0
        %1233 = vmatprep.subr.mxu0 0.0
        %1234 = vmatpush1.xpose.msra.mxu0 0.0
        %1235 = vmatprep.subr.mxu0 0.0
        %1236 = vmatpush1.xpose.msra.mxu0 0.0
        %1237 = vmatprep.subr.mxu0 0.0
        %1238 = vmatpush1.xpose.msra.mxu0 0.0
        %1239 = vmatprep.subr.mxu0 0.0
        %1240 = vmatpush1.xpose.msra.mxu0 0.0
        %1241 = vmatprep.subr.mxu0 0.0
        %1242 = vmatpush1.xpose.msra.mxu0 0.0
        %1243 = vmatprep.subr.mxu0 0.0
        %1244 = vmatpush1.xpose.msra.mxu0 0.0
        %1245 = vmatprep.subr.mxu0 0.0
        %1246 = vmatpush1.xpose.msra.mxu0 0.0
        %1247 = vmatprep.subr.mxu0 0.0
        %1248 = vmatpush1.xpose.msra.mxu0 0.0
        %1249 = vmatprep.subr.mxu0 0.0
        %1250 = vmatpush1.xpose.msra.mxu0 0.0
        %1251 = vmatprep.subr.mxu0 0.0
        %1252 = vmatpush1.xpose.msra.mxu0 %v1221
        %1253 = vmatprep.subr.mxu0 0.0
        %1254 = vmatpush1.xpose.msra.mxu0 %v1219
        %1255 = vmatprep.subr.mxu0 0.0
        %1256 = vmatpush2.xpose.msra.mxu0 0.0
        %1257 = vmatprep.subr.mxu0 0.0
        %1258 = vmatpush2.xpose.msra.mxu0 0.0
        %1259 = vmatprep.subr.mxu0 0.0
        %1260 = vmatpush2.xpose.msra.mxu0 0.0
        %1261 = vmatprep.subr.mxu0 0.0
        %1262 = vmatpush2.xpose.msra.mxu0 0.0
        %1263 = vmatprep.subr.mxu0 0.0
        %1264 = vmatpush2.xpose.msra.mxu0 0.0
        %1265 = vmatprep.subr.mxu0 0.0
        %1266 = vmatpush2.xpose.msra.mxu0 0.0
        %1267 = vmatprep.subr.mxu0 0.0
        %1268 = vmatpush2.xpose.msra.mxu0 0.0
        %1269 = vmatprep.subr.mxu0 0.0
        %1270 = vmatpush2.xpose.msra.mxu0 0.0
        %1271 = vmatprep.subr.mxu0 0.0
        %1272 = vmatpush2.xpose.msra.mxu0 0.0
        %1273 = vmatprep.subr.mxu0 0.0
        %1274 = vmatpush2.xpose.msra.mxu0 0.0
        %1275 = vmatprep.subr.mxu0 0.0
        %1276 = vmatpush2.xpose.msra.mxu0 0.0
        %1277 = vmatprep.subr.mxu0 0.0
        %1278 = vmatpush2.xpose.msra.mxu0 0.0
        %1279 = vmatprep.subr.mxu0 0.0
        %1280 = vmatpush2.xpose.msra.mxu0 0.0
        %1281 = vmatprep.subr.mxu0 0.0
        %1282 = vmatpush2.xpose.msra.mxu0 0.0
        %1283 = vmatprep.subr.mxu0 0.0
        %1284 = vmatpush2.xpose.msra.mxu0 0.0
        %1285 = vmatprep.subr.mxu0 0.0
        %1286 = vmatpush2.xpose.msra.mxu0 0.0
        %1287 = vmatprep.mubr.f32.mxu0 0.0
        %1288 = vmatmul.mubr.f32.gmra.mxu0 %v1214
        %v1289 = vpop.f32.mrf.mxu0
        %v1290 = vadd.f32 0.0, %v1289
        %v1291 = vpop.f32.mrf.mxu0
        %1292 = vmatprep.mubr.f32.mxu0 0.0
        %1293 = vmatmul.mubr.f32.gmra.mxu0 %v1217
        %v1294 = vpop.f32.mrf.mxu0
        %v1295 = vadd.f32 0.0, %v1294
        %v1296 = vpop.f32.mrf.mxu0
        %1297 = vdwg.mxu0
        %1300 = vrot.lane.b32.xlu0 %v1169, 64
        %v1301 = vpop.permute.xlu0 %1300
        %1302 = vrot.lane.b32.xlu0 %v1170, 64
        %v1303 = vpop.permute.xlu0 %1302
        %v1305 = vsel %vm1212, %v931, 0
        %v1308 = vsel %vm1212, %v932, 0
        %v1310 = vsel %vm1212, %v1301, 0
        %v1312 = vsel %vm1212, %v1303, 0
        %1314 = vmatprep.subr.mxu0 0.0
        %1315 = vmatpush1.xpose.msra.mxu0 0.0
        %1316 = vmatprep.subr.mxu0 0.0
        %1317 = vmatpush1.xpose.msra.mxu0 0.0
        %1318 = vmatprep.subr.mxu0 0.0
        %1319 = vmatpush1.xpose.msra.mxu0 0.0
        %1320 = vmatprep.subr.mxu0 0.0
        %1321 = vmatpush1.xpose.msra.mxu0 0.0
        %1322 = vmatprep.subr.mxu0 0.0
        %1323 = vmatpush1.xpose.msra.mxu0 0.0
        %1324 = vmatprep.subr.mxu0 0.0
        %1325 = vmatpush1.xpose.msra.mxu0 0.0
        %1326 = vmatprep.subr.mxu0 0.0
        %1327 = vmatpush1.xpose.msra.mxu0 0.0
        %1328 = vmatprep.subr.mxu0 0.0
        %1329 = vmatpush1.xpose.msra.mxu0 0.0
        %1330 = vmatprep.subr.mxu0 0.0
        %1331 = vmatpush1.xpose.msra.mxu0 0.0
        %1332 = vmatprep.subr.mxu0 0.0
        %1333 = vmatpush1.xpose.msra.mxu0 0.0
        %1334 = vmatprep.subr.mxu0 0.0
        %1335 = vmatpush1.xpose.msra.mxu0 0.0
        %1336 = vmatprep.subr.mxu0 0.0
        %1337 = vmatpush1.xpose.msra.mxu0 0.0
        %1338 = vmatprep.subr.mxu0 0.0
        %1339 = vmatpush1.xpose.msra.mxu0 0.0
        %1340 = vmatprep.subr.mxu0 0.0
        %1341 = vmatpush1.xpose.msra.mxu0 0.0
        %1342 = vmatprep.subr.mxu0 0.0
        %1343 = vmatpush1.xpose.msra.mxu0 %v1312
        %1344 = vmatprep.subr.mxu0 0.0
        %1345 = vmatpush1.xpose.msra.mxu0 %v1310
        %1346 = vmatprep.subr.mxu0 0.0
        %1347 = vmatpush2.xpose.msra.mxu0 0.0
        %1348 = vmatprep.subr.mxu0 0.0
        %1349 = vmatpush2.xpose.msra.mxu0 0.0
        %1350 = vmatprep.subr.mxu0 0.0
        %1351 = vmatpush2.xpose.msra.mxu0 0.0
        %1352 = vmatprep.subr.mxu0 0.0
        %1353 = vmatpush2.xpose.msra.mxu0 0.0
        %1354 = vmatprep.subr.mxu0 0.0
        %1355 = vmatpush2.xpose.msra.mxu0 0.0
        %1356 = vmatprep.subr.mxu0 0.0
        %1357 = vmatpush2.xpose.msra.mxu0 0.0
        %1358 = vmatprep.subr.mxu0 0.0
        %1359 = vmatpush2.xpose.msra.mxu0 0.0
        %1360 = vmatprep.subr.mxu0 0.0
        %1361 = vmatpush2.xpose.msra.mxu0 0.0
        %1362 = vmatprep.subr.mxu0 0.0
        %1363 = vmatpush2.xpose.msra.mxu0 0.0
        %1364 = vmatprep.subr.mxu0 0.0
        %1365 = vmatpush2.xpose.msra.mxu0 0.0
        %1366 = vmatprep.subr.mxu0 0.0
        %1367 = vmatpush2.xpose.msra.mxu0 0.0
        %1368 = vmatprep.subr.mxu0 0.0
        %1369 = vmatpush2.xpose.msra.mxu0 0.0
        %1370 = vmatprep.subr.mxu0 0.0
        %1371 = vmatpush2.xpose.msra.mxu0 0.0
        %1372 = vmatprep.subr.mxu0 0.0
        %1373 = vmatpush2.xpose.msra.mxu0 0.0
        %1374 = vmatprep.subr.mxu0 0.0
        %1375 = vmatpush2.xpose.msra.mxu0 0.0
        %1376 = vmatprep.subr.mxu0 0.0
        %1377 = vmatpush2.xpose.msra.mxu0 0.0
        %1378 = vmatprep.mubr.f32.mxu0 0.0
        %1379 = vmatmul.mubr.f32.gmra.mxu0 %v1305
        %v1380 = vpop.f32.mrf.mxu0
        %v1381 = vadd.f32 0.0, %v1380
        %v1382 = vpop.f32.mrf.mxu0
        %1383 = vmatprep.mubr.f32.mxu0 0.0
        %1384 = vmatmul.mubr.f32.gmra.mxu0 %v1308
        %v1385 = vpop.f32.mrf.mxu0
        %v1386 = vadd.f32 0.0, %v1385
        %v1387 = vpop.f32.mrf.mxu0
        %1388 = vdwg.mxu0
        %1391 = vrot.lane.b32.xlu0 %v1171, 64
        %v1392 = vpop.permute.xlu0 %1391
        %1393 = vrot.lane.b32.xlu0 %v1172, 64
        %v1394 = vpop.permute.xlu0 %1393
        %v1396 = vsel %vm1212, %v933, 0
        %v1399 = vsel %vm1212, %v934, 0
        %v1401 = vsel %vm1212, %v1392, 0
        %v1403 = vsel %vm1212, %v1394, 0
        %1405 = vmatprep.subr.mxu0 0.0
        %1406 = vmatpush1.xpose.msra.mxu0 0.0
        %1407 = vmatprep.subr.mxu0 0.0
        %1408 = vmatpush1.xpose.msra.mxu0 0.0
        %1409 = vmatprep.subr.mxu0 0.0
        %1410 = vmatpush1.xpose.msra.mxu0 0.0
        %1411 = vmatprep.subr.mxu0 0.0
        %1412 = vmatpush1.xpose.msra.mxu0 0.0
        %1413 = vmatprep.subr.mxu0 0.0
        %1414 = vmatpush1.xpose.msra.mxu0 0.0
        %1415 = vmatprep.subr.mxu0 0.0
        %1416 = vmatpush1.xpose.msra.mxu0 0.0
        %1417 = vmatprep.subr.mxu0 0.0
        %1418 = vmatpush1.xpose.msra.mxu0 0.0
        %1419 = vmatprep.subr.mxu0 0.0
        %1420 = vmatpush1.xpose.msra.mxu0 0.0
        %1421 = vmatprep.subr.mxu0 0.0
        %1422 = vmatpush1.xpose.msra.mxu0 0.0
        %1423 = vmatprep.subr.mxu0 0.0
        %1424 = vmatpush1.xpose.msra.mxu0 0.0
        %1425 = vmatprep.subr.mxu0 0.0
        %1426 = vmatpush1.xpose.msra.mxu0 0.0
        %1427 = vmatprep.subr.mxu0 0.0
        %1428 = vmatpush1.xpose.msra.mxu0 0.0
        %1429 = vmatprep.subr.mxu0 0.0
        %1430 = vmatpush1.xpose.msra.mxu0 0.0
        %1431 = vmatprep.subr.mxu0 0.0
        %1432 = vmatpush1.xpose.msra.mxu0 0.0
        %1433 = vmatprep.subr.mxu0 0.0
        %1434 = vmatpush1.xpose.msra.mxu0 %v1403
        %1435 = vmatprep.subr.mxu0 0.0
        %1436 = vmatpush1.xpose.msra.mxu0 %v1401
        %1437 = vmatprep.subr.mxu0 0.0
        %1438 = vmatpush2.xpose.msra.mxu0 0.0
        %1439 = vmatprep.subr.mxu0 0.0
        %1440 = vmatpush2.xpose.msra.mxu0 0.0
        %1441 = vmatprep.subr.mxu0 0.0
        %1442 = vmatpush2.xpose.msra.mxu0 0.0
        %1443 = vmatprep.subr.mxu0 0.0
        %1444 = vmatpush2.xpose.msra.mxu0 0.0
        %1445 = vmatprep.subr.mxu0 0.0
        %1446 = vmatpush2.xpose.msra.mxu0 0.0
        %1447 = vmatprep.subr.mxu0 0.0
        %1448 = vmatpush2.xpose.msra.mxu0 0.0
        %1449 = vmatprep.subr.mxu0 0.0
        %1450 = vmatpush2.xpose.msra.mxu0 0.0
        %1451 = vmatprep.subr.mxu0 0.0
        %1452 = vmatpush2.xpose.msra.mxu0 0.0
        %1453 = vmatprep.subr.mxu0 0.0
        %1454 = vmatpush2.xpose.msra.mxu0 0.0
        %1455 = vmatprep.subr.mxu0 0.0
        %1456 = vmatpush2.xpose.msra.mxu0 0.0
        %1457 = vmatprep.subr.mxu0 0.0
        %1458 = vmatpush2.xpose.msra.mxu0 0.0
        %1459 = vmatprep.subr.mxu0 0.0
        %1460 = vmatpush2.xpose.msra.mxu0 0.0
        %1461 = vmatprep.subr.mxu0 0.0
        %1462 = vmatpush2.xpose.msra.mxu0 0.0
        %1463 = vmatprep.subr.mxu0 0.0
        %1464 = vmatpush2.xpose.msra.mxu0 0.0
        %1465 = vmatprep.subr.mxu0 0.0
        %1466 = vmatpush2.xpose.msra.mxu0 0.0
        %1467 = vmatprep.subr.mxu0 0.0
        %1468 = vmatpush2.xpose.msra.mxu0 0.0
        %1469 = vmatprep.mubr.f32.mxu0 0.0
        %1470 = vmatmul.mubr.f32.gmra.mxu0 %v1396
        %v1471 = vpop.f32.mrf.mxu0
        %v1472 = vadd.f32 0.0, %v1471
        %v1473 = vpop.f32.mrf.mxu0
        %1474 = vmatprep.mubr.f32.mxu0 0.0
        %1475 = vmatmul.mubr.f32.gmra.mxu0 %v1399
        %v1476 = vpop.f32.mrf.mxu0
        %v1477 = vadd.f32 0.0, %v1476
        %v1478 = vpop.f32.mrf.mxu0
        %1479 = vdwg.mxu0
        %1482 = vrot.lane.b32.xlu0 %v1173, 64
        %v1483 = vpop.permute.xlu0 %1482
        %1484 = vrot.lane.b32.xlu0 %v1174, 64
        %v1485 = vpop.permute.xlu0 %1484
        %v1487 = vsel %vm1212, %v935, 0
        %v1490 = vsel %vm1212, %v936, 0
        %v1492 = vsel %vm1212, %v1483, 0
        %v1494 = vsel %vm1212, %v1485, 0
        %1496 = vmatprep.subr.mxu0 0.0
        %1497 = vmatpush1.xpose.msra.mxu0 0.0
        %1498 = vmatprep.subr.mxu0 0.0
        %1499 = vmatpush1.xpose.msra.mxu0 0.0
        %1500 = vmatprep.subr.mxu0 0.0
        %1501 = vmatpush1.xpose.msra.mxu0 0.0
        %1502 = vmatprep.subr.mxu0 0.0
        %1503 = vmatpush1.xpose.msra.mxu0 0.0
        %1504 = vmatprep.subr.mxu0 0.0
        %1505 = vmatpush1.xpose.msra.mxu0 0.0
        %1506 = vmatprep.subr.mxu0 0.0
        %1507 = vmatpush1.xpose.msra.mxu0 0.0
        %1508 = vmatprep.subr.mxu0 0.0
        %1509 = vmatpush1.xpose.msra.mxu0 0.0
        %1510 = vmatprep.subr.mxu0 0.0
        %1511 = vmatpush1.xpose.msra.mxu0 0.0
        %1512 = vmatprep.subr.mxu0 0.0
        %1513 = vmatpush1.xpose.msra.mxu0 0.0
        %1514 = vmatprep.subr.mxu0 0.0
        %1515 = vmatpush1.xpose.msra.mxu0 0.0
        %1516 = vmatprep.subr.mxu0 0.0
        %1517 = vmatpush1.xpose.msra.mxu0 0.0
        %1518 = vmatprep.subr.mxu0 0.0
        %1519 = vmatpush1.xpose.msra.mxu0 0.0
        %1520 = vmatprep.subr.mxu0 0.0
        %1521 = vmatpush1.xpose.msra.mxu0 0.0
        %1522 = vmatprep.subr.mxu0 0.0
        %1523 = vmatpush1.xpose.msra.mxu0 0.0
        %1524 = vmatprep.subr.mxu0 0.0
        %1525 = vmatpush1.xpose.msra.mxu0 %v1494
        %1526 = vmatprep.subr.mxu0 0.0
        %1527 = vmatpush1.xpose.msra.mxu0 %v1492
        %1528 = vmatprep.subr.mxu0 0.0
        %1529 = vmatpush2.xpose.msra.mxu0 0.0
        %1530 = vmatprep.subr.mxu0 0.0
        %1531 = vmatpush2.xpose.msra.mxu0 0.0
        %1532 = vmatprep.subr.mxu0 0.0
        %1533 = vmatpush2.xpose.msra.mxu0 0.0
        %1534 = vmatprep.subr.mxu0 0.0
        %1535 = vmatpush2.xpose.msra.mxu0 0.0
        %1536 = vmatprep.subr.mxu0 0.0
        %1537 = vmatpush2.xpose.msra.mxu0 0.0
        %1538 = vmatprep.subr.mxu0 0.0
        %1539 = vmatpush2.xpose.msra.mxu0 0.0
        %1540 = vmatprep.subr.mxu0 0.0
        %1541 = vmatpush2.xpose.msra.mxu0 0.0
        %1542 = vmatprep.subr.mxu0 0.0
        %1543 = vmatpush2.xpose.msra.mxu0 0.0
        %1544 = vmatprep.subr.mxu0 0.0
        %1545 = vmatpush2.xpose.msra.mxu0 0.0
        %1546 = vmatprep.subr.mxu0 0.0
        %1547 = vmatpush2.xpose.msra.mxu0 0.0
        %1548 = vmatprep.subr.mxu0 0.0
        %1549 = vmatpush2.xpose.msra.mxu0 0.0
        %1550 = vmatprep.subr.mxu0 0.0
        %1551 = vmatpush2.xpose.msra.mxu0 0.0
        %1552 = vmatprep.subr.mxu0 0.0
        %1553 = vmatpush2.xpose.msra.mxu0 0.0
        %1554 = vmatprep.subr.mxu0 0.0
        %1555 = vmatpush2.xpose.msra.mxu0 0.0
        %1556 = vmatprep.subr.mxu0 0.0
        %1557 = vmatpush2.xpose.msra.mxu0 0.0
        %1558 = vmatprep.subr.mxu0 0.0
        %1559 = vmatpush2.xpose.msra.mxu0 0.0
        %1560 = vmatprep.mubr.f32.mxu0 0.0
        %1561 = vmatmul.mubr.f32.gmra.mxu0 %v1487
        %v1562 = vpop.f32.mrf.mxu0
        %v1563 = vadd.f32 0.0, %v1562
        %v1564 = vpop.f32.mrf.mxu0
        %1565 = vmatprep.mubr.f32.mxu0 0.0
        %1566 = vmatmul.mubr.f32.gmra.mxu0 %v1490
        %v1567 = vpop.f32.mrf.mxu0
        %v1568 = vadd.f32 0.0, %v1567
        %v1569 = vpop.f32.mrf.mxu0
        %1570 = vdwg.mxu0
        %1573 = vrot.lane.b32.xlu0 %v1175, 64
        %v1574 = vpop.permute.xlu0 %1573
        %1575 = vrot.lane.b32.xlu0 %v1176, 64
        %v1576 = vpop.permute.xlu0 %1575
        %v1578 = vsel %vm1212, %v937, 0
        %v1581 = vsel %vm1212, %v938, 0
        %v1583 = vsel %vm1212, %v1574, 0
        %v1585 = vsel %vm1212, %v1576, 0
        %1587 = vmatprep.subr.mxu0 0.0
        %1588 = vmatpush1.xpose.msra.mxu0 0.0
        %1589 = vmatprep.subr.mxu0 0.0
        %1590 = vmatpush1.xpose.msra.mxu0 0.0
        %1591 = vmatprep.subr.mxu0 0.0
        %1592 = vmatpush1.xpose.msra.mxu0 0.0
        %1593 = vmatprep.subr.mxu0 0.0
        %1594 = vmatpush1.xpose.msra.mxu0 0.0
        %1595 = vmatprep.subr.mxu0 0.0
        %1596 = vmatpush1.xpose.msra.mxu0 0.0
        %1597 = vmatprep.subr.mxu0 0.0
        %1598 = vmatpush1.xpose.msra.mxu0 0.0
        %1599 = vmatprep.subr.mxu0 0.0
        %1600 = vmatpush1.xpose.msra.mxu0 0.0
        %1601 = vmatprep.subr.mxu0 0.0
        %1602 = vmatpush1.xpose.msra.mxu0 0.0
        %1603 = vmatprep.subr.mxu0 0.0
        %1604 = vmatpush1.xpose.msra.mxu0 0.0
        %1605 = vmatprep.subr.mxu0 0.0
        %1606 = vmatpush1.xpose.msra.mxu0 0.0
        %1607 = vmatprep.subr.mxu0 0.0
        %1608 = vmatpush1.xpose.msra.mxu0 0.0
        %1609 = vmatprep.subr.mxu0 0.0
        %1610 = vmatpush1.xpose.msra.mxu0 0.0
        %1611 = vmatprep.subr.mxu0 0.0
        %1612 = vmatpush1.xpose.msra.mxu0 0.0
        %1613 = vmatprep.subr.mxu0 0.0
        %1614 = vmatpush1.xpose.msra.mxu0 0.0
        %1615 = vmatprep.subr.mxu0 0.0
        %1616 = vmatpush1.xpose.msra.mxu0 %v1585
        %1617 = vmatprep.subr.mxu0 0.0
        %1618 = vmatpush1.xpose.msra.mxu0 %v1583
        %1619 = vmatprep.subr.mxu0 0.0
        %1620 = vmatpush2.xpose.msra.mxu0 0.0
        %1621 = vmatprep.subr.mxu0 0.0
        %1622 = vmatpush2.xpose.msra.mxu0 0.0
        %1623 = vmatprep.subr.mxu0 0.0
        %1624 = vmatpush2.xpose.msra.mxu0 0.0
        %1625 = vmatprep.subr.mxu0 0.0
        %1626 = vmatpush2.xpose.msra.mxu0 0.0
        %1627 = vmatprep.subr.mxu0 0.0
        %1628 = vmatpush2.xpose.msra.mxu0 0.0
        %1629 = vmatprep.subr.mxu0 0.0
        %1630 = vmatpush2.xpose.msra.mxu0 0.0
        %1631 = vmatprep.subr.mxu0 0.0
        %1632 = vmatpush2.xpose.msra.mxu0 0.0
        %1633 = vmatprep.subr.mxu0 0.0
        %1634 = vmatpush2.xpose.msra.mxu0 0.0
        %1635 = vmatprep.subr.mxu0 0.0
        %1636 = vmatpush2.xpose.msra.mxu0 0.0
        %1637 = vmatprep.subr.mxu0 0.0
        %1638 = vmatpush2.xpose.msra.mxu0 0.0
        %1639 = vmatprep.subr.mxu0 0.0
        %1640 = vmatpush2.xpose.msra.mxu0 0.0
        %1641 = vmatprep.subr.mxu0 0.0
        %1642 = vmatpush2.xpose.msra.mxu0 0.0
        %1643 = vmatprep.subr.mxu0 0.0
        %1644 = vmatpush2.xpose.msra.mxu0 0.0
        %1645 = vmatprep.subr.mxu0 0.0
        %1646 = vmatpush2.xpose.msra.mxu0 0.0
        %1647 = vmatprep.subr.mxu0 0.0
        %1648 = vmatpush2.xpose.msra.mxu0 0.0
        %1649 = vmatprep.subr.mxu0 0.0
        %1650 = vmatpush2.xpose.msra.mxu0 0.0
        %1651 = vmatprep.mubr.f32.mxu0 0.0
        %1652 = vmatmul.mubr.f32.gmra.mxu0 %v1578
        %v1653 = vpop.f32.mrf.mxu0
        %v1654 = vadd.f32 0.0, %v1653
        %v1655 = vpop.f32.mrf.mxu0
        %1656 = vmatprep.mubr.f32.mxu0 0.0
        %1657 = vmatmul.mubr.f32.gmra.mxu0 %v1581
        %v1658 = vpop.f32.mrf.mxu0
        %v1659 = vadd.f32 0.0, %v1658
        %v1660 = vpop.f32.mrf.mxu0
        %1661 = vdwg.mxu0
        %1664 = vrot.lane.b32.xlu0 %v1177, 64
        %v1665 = vpop.permute.xlu0 %1664
        %1666 = vrot.lane.b32.xlu0 %v1178, 64
        %v1667 = vpop.permute.xlu0 %1666
        %v1669 = vsel %vm1212, %v939, 0
        %v1672 = vsel %vm1212, %v940, 0
        %v1674 = vsel %vm1212, %v1665, 0
        %v1676 = vsel %vm1212, %v1667, 0
        %1678 = vmatprep.subr.mxu0 0.0
        %1679 = vmatpush1.xpose.msra.mxu0 0.0
        %1680 = vmatprep.subr.mxu0 0.0
        %1681 = vmatpush1.xpose.msra.mxu0 0.0
        %1682 = vmatprep.subr.mxu0 0.0
        %1683 = vmatpush1.xpose.msra.mxu0 0.0
        %1684 = vmatprep.subr.mxu0 0.0
        %1685 = vmatpush1.xpose.msra.mxu0 0.0
        %1686 = vmatprep.subr.mxu0 0.0
        %1687 = vmatpush1.xpose.msra.mxu0 0.0
        %1688 = vmatprep.subr.mxu0 0.0
        %1689 = vmatpush1.xpose.msra.mxu0 0.0
        %1690 = vmatprep.subr.mxu0 0.0
        %1691 = vmatpush1.xpose.msra.mxu0 0.0
        %1692 = vmatprep.subr.mxu0 0.0
        %1693 = vmatpush1.xpose.msra.mxu0 0.0
        %1694 = vmatprep.subr.mxu0 0.0
        %1695 = vmatpush1.xpose.msra.mxu0 0.0
        %1696 = vmatprep.subr.mxu0 0.0
        %1697 = vmatpush1.xpose.msra.mxu0 0.0
        %1698 = vmatprep.subr.mxu0 0.0
        %1699 = vmatpush1.xpose.msra.mxu0 0.0
        %1700 = vmatprep.subr.mxu0 0.0
        %1701 = vmatpush1.xpose.msra.mxu0 0.0
        %1702 = vmatprep.subr.mxu0 0.0
        %1703 = vmatpush1.xpose.msra.mxu0 0.0
        %1704 = vmatprep.subr.mxu0 0.0
        %1705 = vmatpush1.xpose.msra.mxu0 0.0
        %1706 = vmatprep.subr.mxu0 0.0
        %1707 = vmatpush1.xpose.msra.mxu0 %v1676
        %1708 = vmatprep.subr.mxu0 0.0
        %1709 = vmatpush1.xpose.msra.mxu0 %v1674
        %1710 = vmatprep.subr.mxu0 0.0
        %1711 = vmatpush2.xpose.msra.mxu0 0.0
        %1712 = vmatprep.subr.mxu0 0.0
        %1713 = vmatpush2.xpose.msra.mxu0 0.0
        %1714 = vmatprep.subr.mxu0 0.0
        %1715 = vmatpush2.xpose.msra.mxu0 0.0
        %1716 = vmatprep.subr.mxu0 0.0
        %1717 = vmatpush2.xpose.msra.mxu0 0.0
        %1718 = vmatprep.subr.mxu0 0.0
        %1719 = vmatpush2.xpose.msra.mxu0 0.0
        %1720 = vmatprep.subr.mxu0 0.0
        %1721 = vmatpush2.xpose.msra.mxu0 0.0
        %1722 = vmatprep.subr.mxu0 0.0
        %1723 = vmatpush2.xpose.msra.mxu0 0.0
        %1724 = vmatprep.subr.mxu0 0.0
        %1725 = vmatpush2.xpose.msra.mxu0 0.0
        %1726 = vmatprep.subr.mxu0 0.0
        %1727 = vmatpush2.xpose.msra.mxu0 0.0
        %1728 = vmatprep.subr.mxu0 0.0
        %1729 = vmatpush2.xpose.msra.mxu0 0.0
        %1730 = vmatprep.subr.mxu0 0.0
        %1731 = vmatpush2.xpose.msra.mxu0 0.0
        %1732 = vmatprep.subr.mxu0 0.0
        %1733 = vmatpush2.xpose.msra.mxu0 0.0
        %1734 = vmatprep.subr.mxu0 0.0
        %1735 = vmatpush2.xpose.msra.mxu0 0.0
        %1736 = vmatprep.subr.mxu0 0.0
        %1737 = vmatpush2.xpose.msra.mxu0 0.0
        %1738 = vmatprep.subr.mxu0 0.0
        %1739 = vmatpush2.xpose.msra.mxu0 0.0
        %1740 = vmatprep.subr.mxu0 0.0
        %1741 = vmatpush2.xpose.msra.mxu0 0.0
        %1742 = vmatprep.mubr.f32.mxu0 0.0
        %1743 = vmatmul.mubr.f32.gmra.mxu0 %v1669
        %v1744 = vpop.f32.mrf.mxu0
        %v1745 = vadd.f32 0.0, %v1744
        %v1746 = vpop.f32.mrf.mxu0
        %1747 = vmatprep.mubr.f32.mxu0 0.0
        %1748 = vmatmul.mubr.f32.gmra.mxu0 %v1672
        %v1749 = vpop.f32.mrf.mxu0
        %v1750 = vadd.f32 0.0, %v1749
        %v1751 = vpop.f32.mrf.mxu0
        %1752 = vdwg.mxu0
        %1755 = vrot.lane.b32.xlu0 %v1179, 64
        %v1756 = vpop.permute.xlu0 %1755
        %1757 = vrot.lane.b32.xlu0 %v1180, 64
        %v1758 = vpop.permute.xlu0 %1757
        %v1760 = vsel %vm1212, %v941, 0
        %v1763 = vsel %vm1212, %v942, 0
        %v1765 = vsel %vm1212, %v1756, 0
        %v1767 = vsel %vm1212, %v1758, 0
        %1769 = vmatprep.subr.mxu0 0.0
        %1770 = vmatpush1.xpose.msra.mxu0 0.0
        %1771 = vmatprep.subr.mxu0 0.0
        %1772 = vmatpush1.xpose.msra.mxu0 0.0
        %1773 = vmatprep.subr.mxu0 0.0
        %1774 = vmatpush1.xpose.msra.mxu0 0.0
        %1775 = vmatprep.subr.mxu0 0.0
        %1776 = vmatpush1.xpose.msra.mxu0 0.0
        %1777 = vmatprep.subr.mxu0 0.0
        %1778 = vmatpush1.xpose.msra.mxu0 0.0
        %1779 = vmatprep.subr.mxu0 0.0
        %1780 = vmatpush1.xpose.msra.mxu0 0.0
        %1781 = vmatprep.subr.mxu0 0.0
        %1782 = vmatpush1.xpose.msra.mxu0 0.0
        %1783 = vmatprep.subr.mxu0 0.0
        %1784 = vmatpush1.xpose.msra.mxu0 0.0
        %1785 = vmatprep.subr.mxu0 0.0
        %1786 = vmatpush1.xpose.msra.mxu0 0.0
        %1787 = vmatprep.subr.mxu0 0.0
        %1788 = vmatpush1.xpose.msra.mxu0 0.0
        %1789 = vmatprep.subr.mxu0 0.0
        %1790 = vmatpush1.xpose.msra.mxu0 0.0
        %1791 = vmatprep.subr.mxu0 0.0
        %1792 = vmatpush1.xpose.msra.mxu0 0.0
        %1793 = vmatprep.subr.mxu0 0.0
        %1794 = vmatpush1.xpose.msra.mxu0 0.0
        %1795 = vmatprep.subr.mxu0 0.0
        %1796 = vmatpush1.xpose.msra.mxu0 0.0
        %1797 = vmatprep.subr.mxu0 0.0
        %1798 = vmatpush1.xpose.msra.mxu0 %v1767
        %1799 = vmatprep.subr.mxu0 0.0
        %1800 = vmatpush1.xpose.msra.mxu0 %v1765
        %1801 = vmatprep.subr.mxu0 0.0
        %1802 = vmatpush2.xpose.msra.mxu0 0.0
        %1803 = vmatprep.subr.mxu0 0.0
        %1804 = vmatpush2.xpose.msra.mxu0 0.0
        %1805 = vmatprep.subr.mxu0 0.0
        %1806 = vmatpush2.xpose.msra.mxu0 0.0
        %1807 = vmatprep.subr.mxu0 0.0
        %1808 = vmatpush2.xpose.msra.mxu0 0.0
        %1809 = vmatprep.subr.mxu0 0.0
        %1810 = vmatpush2.xpose.msra.mxu0 0.0
        %1811 = vmatprep.subr.mxu0 0.0
        %1812 = vmatpush2.xpose.msra.mxu0 0.0
        %1813 = vmatprep.subr.mxu0 0.0
        %1814 = vmatpush2.xpose.msra.mxu0 0.0
        %1815 = vmatprep.subr.mxu0 0.0
        %1816 = vmatpush2.xpose.msra.mxu0 0.0
        %1817 = vmatprep.subr.mxu0 0.0
        %1818 = vmatpush2.xpose.msra.mxu0 0.0
        %1819 = vmatprep.subr.mxu0 0.0
        %1820 = vmatpush2.xpose.msra.mxu0 0.0
        %1821 = vmatprep.subr.mxu0 0.0
        %1822 = vmatpush2.xpose.msra.mxu0 0.0
        %1823 = vmatprep.subr.mxu0 0.0
        %1824 = vmatpush2.xpose.msra.mxu0 0.0
        %1825 = vmatprep.subr.mxu0 0.0
        %1826 = vmatpush2.xpose.msra.mxu0 0.0
        %1827 = vmatprep.subr.mxu0 0.0
        %1828 = vmatpush2.xpose.msra.mxu0 0.0
        %1829 = vmatprep.subr.mxu0 0.0
        %1830 = vmatpush2.xpose.msra.mxu0 0.0
        %1831 = vmatprep.subr.mxu0 0.0
        %1832 = vmatpush2.xpose.msra.mxu0 0.0
        %1833 = vmatprep.mubr.f32.mxu0 0.0
        %1834 = vmatmul.mubr.f32.gmra.mxu0 %v1760
        %v1835 = vpop.f32.mrf.mxu0
        %v1836 = vadd.f32 0.0, %v1835
        %v1837 = vpop.f32.mrf.mxu0
        %1838 = vmatprep.mubr.f32.mxu0 0.0
        %1839 = vmatmul.mubr.f32.gmra.mxu0 %v1763
        %v1840 = vpop.f32.mrf.mxu0
        %v1841 = vadd.f32 0.0, %v1840
        %v1842 = vpop.f32.mrf.mxu0
        %1843 = vdwg.mxu0
        %1846 = vrot.lane.b32.xlu0 %v1181, 64
        %v1847 = vpop.permute.xlu0 %1846
        %1848 = vrot.lane.b32.xlu0 %v1182, 64
        %v1849 = vpop.permute.xlu0 %1848
        %v1851 = vsel %vm1212, %v943, 0
        %v1854 = vsel %vm1212, %v944, 0
        %v1856 = vsel %vm1212, %v1847, 0
        %v1858 = vsel %vm1212, %v1849, 0
        %1860 = vmatprep.subr.mxu0 0.0
        %1861 = vmatpush1.xpose.msra.mxu0 0.0
        %1862 = vmatprep.subr.mxu0 0.0
        %1863 = vmatpush1.xpose.msra.mxu0 0.0
        %1864 = vmatprep.subr.mxu0 0.0
        %1865 = vmatpush1.xpose.msra.mxu0 0.0
        %1866 = vmatprep.subr.mxu0 0.0
        %1867 = vmatpush1.xpose.msra.mxu0 0.0
        %1868 = vmatprep.subr.mxu0 0.0
        %1869 = vmatpush1.xpose.msra.mxu0 0.0
        %1870 = vmatprep.subr.mxu0 0.0
        %1871 = vmatpush1.xpose.msra.mxu0 0.0
        %1872 = vmatprep.subr.mxu0 0.0
        %1873 = vmatpush1.xpose.msra.mxu0 0.0
        %1874 = vmatprep.subr.mxu0 0.0
        %1875 = vmatpush1.xpose.msra.mxu0 0.0
        %1876 = vmatprep.subr.mxu0 0.0
        %1877 = vmatpush1.xpose.msra.mxu0 0.0
        %1878 = vmatprep.subr.mxu0 0.0
        %1879 = vmatpush1.xpose.msra.mxu0 0.0
        %1880 = vmatprep.subr.mxu0 0.0
        %1881 = vmatpush1.xpose.msra.mxu0 0.0
        %1882 = vmatprep.subr.mxu0 0.0
        %1883 = vmatpush1.xpose.msra.mxu0 0.0
        %1884 = vmatprep.subr.mxu0 0.0
        %1885 = vmatpush1.xpose.msra.mxu0 0.0
        %1886 = vmatprep.subr.mxu0 0.0
        %1887 = vmatpush1.xpose.msra.mxu0 0.0
        %1888 = vmatprep.subr.mxu0 0.0
        %1889 = vmatpush1.xpose.msra.mxu0 %v1858
        %1890 = vmatprep.subr.mxu0 0.0
        %1891 = vmatpush1.xpose.msra.mxu0 %v1856
        %1892 = vmatprep.subr.mxu0 0.0
        %1893 = vmatpush2.xpose.msra.mxu0 0.0
        %1894 = vmatprep.subr.mxu0 0.0
        %1895 = vmatpush2.xpose.msra.mxu0 0.0
        %1896 = vmatprep.subr.mxu0 0.0
        %1897 = vmatpush2.xpose.msra.mxu0 0.0
        %1898 = vmatprep.subr.mxu0 0.0
        %1899 = vmatpush2.xpose.msra.mxu0 0.0
        %1900 = vmatprep.subr.mxu0 0.0
        %1901 = vmatpush2.xpose.msra.mxu0 0.0
        %1902 = vmatprep.subr.mxu0 0.0
        %1903 = vmatpush2.xpose.msra.mxu0 0.0
        %1904 = vmatprep.subr.mxu0 0.0
        %1905 = vmatpush2.xpose.msra.mxu0 0.0
        %1906 = vmatprep.subr.mxu0 0.0
        %1907 = vmatpush2.xpose.msra.mxu0 0.0
        %1908 = vmatprep.subr.mxu0 0.0
        %1909 = vmatpush2.xpose.msra.mxu0 0.0
        %1910 = vmatprep.subr.mxu0 0.0
        %1911 = vmatpush2.xpose.msra.mxu0 0.0
        %1912 = vmatprep.subr.mxu0 0.0
        %1913 = vmatpush2.xpose.msra.mxu0 0.0
        %1914 = vmatprep.subr.mxu0 0.0
        %1915 = vmatpush2.xpose.msra.mxu0 0.0
        %1916 = vmatprep.subr.mxu0 0.0
        %1917 = vmatpush2.xpose.msra.mxu0 0.0
        %1918 = vmatprep.subr.mxu0 0.0
        %1919 = vmatpush2.xpose.msra.mxu0 0.0
        %1920 = vmatprep.subr.mxu0 0.0
        %1921 = vmatpush2.xpose.msra.mxu0 0.0
        %1922 = vmatprep.subr.mxu0 0.0
        %1923 = vmatpush2.xpose.msra.mxu0 0.0
        %1924 = vmatprep.mubr.f32.mxu0 0.0
        %1925 = vmatmul.mubr.f32.gmra.mxu0 %v1851
        %v1926 = vpop.f32.mrf.mxu0
        %v1927 = vadd.f32 0.0, %v1926
        %v1928 = vpop.f32.mrf.mxu0
        %1929 = vmatprep.mubr.f32.mxu0 0.0
        %1930 = vmatmul.mubr.f32.gmra.mxu0 %v1854
        %v1931 = vpop.f32.mrf.mxu0
        %v1932 = vadd.f32 0.0, %v1931
        %v1933 = vpop.f32.mrf.mxu0
        %1934 = vdwg.mxu0
        %1937 = vrot.lane.b32.xlu0 %v1183, 64
        %v1938 = vpop.permute.xlu0 %1937
        %1939 = vrot.lane.b32.xlu0 %v1184, 64
        %v1940 = vpop.permute.xlu0 %1939
        %v1942 = vsel %vm1212, %v945, 0
        %v1945 = vsel %vm1212, %v946, 0
        %v1947 = vsel %vm1212, %v1938, 0
        %v1949 = vsel %vm1212, %v1940, 0
        %1951 = vmatprep.subr.mxu0 0.0
        %1952 = vmatpush1.xpose.msra.mxu0 0.0
        %1953 = vmatprep.subr.mxu0 0.0
        %1954 = vmatpush1.xpose.msra.mxu0 0.0
        %1955 = vmatprep.subr.mxu0 0.0
        %1956 = vmatpush1.xpose.msra.mxu0 0.0
        %1957 = vmatprep.subr.mxu0 0.0
        %1958 = vmatpush1.xpose.msra.mxu0 0.0
        %1959 = vmatprep.subr.mxu0 0.0
        %1960 = vmatpush1.xpose.msra.mxu0 0.0
        %1961 = vmatprep.subr.mxu0 0.0
        %1962 = vmatpush1.xpose.msra.mxu0 0.0
        %1963 = vmatprep.subr.mxu0 0.0
        %1964 = vmatpush1.xpose.msra.mxu0 0.0
        %1965 = vmatprep.subr.mxu0 0.0
        %1966 = vmatpush1.xpose.msra.mxu0 0.0
        %1967 = vmatprep.subr.mxu0 0.0
        %1968 = vmatpush1.xpose.msra.mxu0 0.0
        %1969 = vmatprep.subr.mxu0 0.0
        %1970 = vmatpush1.xpose.msra.mxu0 0.0
        %1971 = vmatprep.subr.mxu0 0.0
        %1972 = vmatpush1.xpose.msra.mxu0 0.0
        %1973 = vmatprep.subr.mxu0 0.0
        %1974 = vmatpush1.xpose.msra.mxu0 0.0
        %1975 = vmatprep.subr.mxu0 0.0
        %1976 = vmatpush1.xpose.msra.mxu0 0.0
        %1977 = vmatprep.subr.mxu0 0.0
        %1978 = vmatpush1.xpose.msra.mxu0 0.0
        %1979 = vmatprep.subr.mxu0 0.0
        %1980 = vmatpush1.xpose.msra.mxu0 %v1949
        %1981 = vmatprep.subr.mxu0 0.0
        %1982 = vmatpush1.xpose.msra.mxu0 %v1947
        %1983 = vmatprep.subr.mxu0 0.0
        %1984 = vmatpush2.xpose.msra.mxu0 0.0
        %1985 = vmatprep.subr.mxu0 0.0
        %1986 = vmatpush2.xpose.msra.mxu0 0.0
        %1987 = vmatprep.subr.mxu0 0.0
        %1988 = vmatpush2.xpose.msra.mxu0 0.0
        %1989 = vmatprep.subr.mxu0 0.0
        %1990 = vmatpush2.xpose.msra.mxu0 0.0
        %1991 = vmatprep.subr.mxu0 0.0
        %1992 = vmatpush2.xpose.msra.mxu0 0.0
        %1993 = vmatprep.subr.mxu0 0.0
        %1994 = vmatpush2.xpose.msra.mxu0 0.0
        %1995 = vmatprep.subr.mxu0 0.0
        %1996 = vmatpush2.xpose.msra.mxu0 0.0
        %1997 = vmatprep.subr.mxu0 0.0
        %1998 = vmatpush2.xpose.msra.mxu0 0.0
        %1999 = vmatprep.subr.mxu0 0.0
        %2000 = vmatpush2.xpose.msra.mxu0 0.0
        %2001 = vmatprep.subr.mxu0 0.0
        %2002 = vmatpush2.xpose.msra.mxu0 0.0
        %2003 = vmatprep.subr.mxu0 0.0
        %2004 = vmatpush2.xpose.msra.mxu0 0.0
        %2005 = vmatprep.subr.mxu0 0.0
        %2006 = vmatpush2.xpose.msra.mxu0 0.0
        %2007 = vmatprep.subr.mxu0 0.0
        %2008 = vmatpush2.xpose.msra.mxu0 0.0
        %2009 = vmatprep.subr.mxu0 0.0
        %2010 = vmatpush2.xpose.msra.mxu0 0.0
        %2011 = vmatprep.subr.mxu0 0.0
        %2012 = vmatpush2.xpose.msra.mxu0 0.0
        %2013 = vmatprep.subr.mxu0 0.0
        %2014 = vmatpush2.xpose.msra.mxu0 0.0
        %2015 = vmatprep.mubr.f32.mxu0 0.0
        %2016 = vmatmul.mubr.f32.gmra.mxu0 %v1942
        %v2017 = vpop.f32.mrf.mxu0
        %v2018 = vadd.f32 0.0, %v2017
        %v2019 = vpop.f32.mrf.mxu0
        %2020 = vmatprep.mubr.f32.mxu0 0.0
        %2021 = vmatmul.mubr.f32.gmra.mxu0 %v1945
        %v2022 = vpop.f32.mrf.mxu0
        %v2023 = vadd.f32 0.0, %v2022
        %v2024 = vpop.f32.mrf.mxu0
        %2025 = vdwg.mxu0
        %2028 = vrot.lane.b32.xlu0 %v1185, 64
        %v2029 = vpop.permute.xlu0 %2028
        %2030 = vrot.lane.b32.xlu0 %v1186, 64
        %v2031 = vpop.permute.xlu0 %2030
        %v2033 = vsel %vm1212, %v947, 0
        %v2036 = vsel %vm1212, %v948, 0
        %v2038 = vsel %vm1212, %v2029, 0
        %v2040 = vsel %vm1212, %v2031, 0
        %2042 = vmatprep.subr.mxu0 0.0
        %2043 = vmatpush1.xpose.msra.mxu0 0.0
        %2044 = vmatprep.subr.mxu0 0.0
        %2045 = vmatpush1.xpose.msra.mxu0 0.0
        %2046 = vmatprep.subr.mxu0 0.0
        %2047 = vmatpush1.xpose.msra.mxu0 0.0
        %2048 = vmatprep.subr.mxu0 0.0
        %2049 = vmatpush1.xpose.msra.mxu0 0.0
        %2050 = vmatprep.subr.mxu0 0.0
        %2051 = vmatpush1.xpose.msra.mxu0 0.0
        %2052 = vmatprep.subr.mxu0 0.0
        %2053 = vmatpush1.xpose.msra.mxu0 0.0
        %2054 = vmatprep.subr.mxu0 0.0
        %2055 = vmatpush1.xpose.msra.mxu0 0.0
        %2056 = vmatprep.subr.mxu0 0.0
        %2057 = vmatpush1.xpose.msra.mxu0 0.0
        %2058 = vmatprep.subr.mxu0 0.0
        %2059 = vmatpush1.xpose.msra.mxu0 0.0
        %2060 = vmatprep.subr.mxu0 0.0
        %2061 = vmatpush1.xpose.msra.mxu0 0.0
        %2062 = vmatprep.subr.mxu0 0.0
        %2063 = vmatpush1.xpose.msra.mxu0 0.0
        %2064 = vmatprep.subr.mxu0 0.0
        %2065 = vmatpush1.xpose.msra.mxu0 0.0
        %2066 = vmatprep.subr.mxu0 0.0
        %2067 = vmatpush1.xpose.msra.mxu0 0.0
        %2068 = vmatprep.subr.mxu0 0.0
        %2069 = vmatpush1.xpose.msra.mxu0 0.0
        %2070 = vmatprep.subr.mxu0 0.0
        %2071 = vmatpush1.xpose.msra.mxu0 %v2040
        %2072 = vmatprep.subr.mxu0 0.0
        %2073 = vmatpush1.xpose.msra.mxu0 %v2038
        %2074 = vmatprep.subr.mxu0 0.0
        %2075 = vmatpush2.xpose.msra.mxu0 0.0
        %2076 = vmatprep.subr.mxu0 0.0
        %2077 = vmatpush2.xpose.msra.mxu0 0.0
        %2078 = vmatprep.subr.mxu0 0.0
        %2079 = vmatpush2.xpose.msra.mxu0 0.0
        %2080 = vmatprep.subr.mxu0 0.0
        %2081 = vmatpush2.xpose.msra.mxu0 0.0
        %2082 = vmatprep.subr.mxu0 0.0
        %2083 = vmatpush2.xpose.msra.mxu0 0.0
        %2084 = vmatprep.subr.mxu0 0.0
        %2085 = vmatpush2.xpose.msra.mxu0 0.0
        %2086 = vmatprep.subr.mxu0 0.0
        %2087 = vmatpush2.xpose.msra.mxu0 0.0
        %2088 = vmatprep.subr.mxu0 0.0
        %2089 = vmatpush2.xpose.msra.mxu0 0.0
        %2090 = vmatprep.subr.mxu0 0.0
        %2091 = vmatpush2.xpose.msra.mxu0 0.0
        %2092 = vmatprep.subr.mxu0 0.0
        %2093 = vmatpush2.xpose.msra.mxu0 0.0
        %2094 = vmatprep.subr.mxu0 0.0
        %2095 = vmatpush2.xpose.msra.mxu0 0.0
        %2096 = vmatprep.subr.mxu0 0.0
        %2097 = vmatpush2.xpose.msra.mxu0 0.0
        %2098 = vmatprep.subr.mxu0 0.0
        %2099 = vmatpush2.xpose.msra.mxu0 0.0
        %2100 = vmatprep.subr.mxu0 0.0
        %2101 = vmatpush2.xpose.msra.mxu0 0.0
        %2102 = vmatprep.subr.mxu0 0.0
        %2103 = vmatpush2.xpose.msra.mxu0 0.0
        %2104 = vmatprep.subr.mxu0 0.0
        %2105 = vmatpush2.xpose.msra.mxu0 0.0
        %2106 = vmatprep.mubr.f32.mxu0 0.0
        %2107 = vmatmul.mubr.f32.gmra.mxu0 %v2033
        %v2108 = vpop.f32.mrf.mxu0
        %v2109 = vadd.f32 0.0, %v2108
        %v2110 = vpop.f32.mrf.mxu0
        %2111 = vmatprep.mubr.f32.mxu0 0.0
        %2112 = vmatmul.mubr.f32.gmra.mxu0 %v2036
        %v2113 = vpop.f32.mrf.mxu0
        %v2114 = vadd.f32 0.0, %v2113
        %v2115 = vpop.f32.mrf.mxu0
        %2116 = vdwg.mxu0
        %2119 = vrot.lane.b32.xlu0 %v1187, 64
        %v2120 = vpop.permute.xlu0 %2119
        %2121 = vrot.lane.b32.xlu0 %v1188, 64
        %v2122 = vpop.permute.xlu0 %2121
        %v2124 = vsel %vm1212, %v949, 0
        %v2127 = vsel %vm1212, %v950, 0
        %v2129 = vsel %vm1212, %v2120, 0
        %v2131 = vsel %vm1212, %v2122, 0
        %2133 = vmatprep.subr.mxu0 0.0
        %2134 = vmatpush1.xpose.msra.mxu0 0.0
        %2135 = vmatprep.subr.mxu0 0.0
        %2136 = vmatpush1.xpose.msra.mxu0 0.0
        %2137 = vmatprep.subr.mxu0 0.0
        %2138 = vmatpush1.xpose.msra.mxu0 0.0
        %2139 = vmatprep.subr.mxu0 0.0
        %2140 = vmatpush1.xpose.msra.mxu0 0.0
        %2141 = vmatprep.subr.mxu0 0.0
        %2142 = vmatpush1.xpose.msra.mxu0 0.0
        %2143 = vmatprep.subr.mxu0 0.0
        %2144 = vmatpush1.xpose.msra.mxu0 0.0
        %2145 = vmatprep.subr.mxu0 0.0
        %2146 = vmatpush1.xpose.msra.mxu0 0.0
        %2147 = vmatprep.subr.mxu0 0.0
        %2148 = vmatpush1.xpose.msra.mxu0 0.0
        %2149 = vmatprep.subr.mxu0 0.0
        %2150 = vmatpush1.xpose.msra.mxu0 0.0
        %2151 = vmatprep.subr.mxu0 0.0
        %2152 = vmatpush1.xpose.msra.mxu0 0.0
        %2153 = vmatprep.subr.mxu0 0.0
        %2154 = vmatpush1.xpose.msra.mxu0 0.0
        %2155 = vmatprep.subr.mxu0 0.0
        %2156 = vmatpush1.xpose.msra.mxu0 0.0
        %2157 = vmatprep.subr.mxu0 0.0
        %2158 = vmatpush1.xpose.msra.mxu0 0.0
        %2159 = vmatprep.subr.mxu0 0.0
        %2160 = vmatpush1.xpose.msra.mxu0 0.0
        %2161 = vmatprep.subr.mxu0 0.0
        %2162 = vmatpush1.xpose.msra.mxu0 %v2131
        %2163 = vmatprep.subr.mxu0 0.0
        %2164 = vmatpush1.xpose.msra.mxu0 %v2129
        %2165 = vmatprep.subr.mxu0 0.0
        %2166 = vmatpush2.xpose.msra.mxu0 0.0
        %2167 = vmatprep.subr.mxu0 0.0
        %2168 = vmatpush2.xpose.msra.mxu0 0.0
        %2169 = vmatprep.subr.mxu0 0.0
        %2170 = vmatpush2.xpose.msra.mxu0 0.0
        %2171 = vmatprep.subr.mxu0 0.0
        %2172 = vmatpush2.xpose.msra.mxu0 0.0
        %2173 = vmatprep.subr.mxu0 0.0
        %2174 = vmatpush2.xpose.msra.mxu0 0.0
        %2175 = vmatprep.subr.mxu0 0.0
        %2176 = vmatpush2.xpose.msra.mxu0 0.0
        %2177 = vmatprep.subr.mxu0 0.0
        %2178 = vmatpush2.xpose.msra.mxu0 0.0
        %2179 = vmatprep.subr.mxu0 0.0
        %2180 = vmatpush2.xpose.msra.mxu0 0.0
        %2181 = vmatprep.subr.mxu0 0.0
        %2182 = vmatpush2.xpose.msra.mxu0 0.0
        %2183 = vmatprep.subr.mxu0 0.0
        %2184 = vmatpush2.xpose.msra.mxu0 0.0
        %2185 = vmatprep.subr.mxu0 0.0
        %2186 = vmatpush2.xpose.msra.mxu0 0.0
        %2187 = vmatprep.subr.mxu0 0.0
        %2188 = vmatpush2.xpose.msra.mxu0 0.0
        %2189 = vmatprep.subr.mxu0 0.0
        %2190 = vmatpush2.xpose.msra.mxu0 0.0
        %2191 = vmatprep.subr.mxu0 0.0
        %2192 = vmatpush2.xpose.msra.mxu0 0.0
        %2193 = vmatprep.subr.mxu0 0.0
        %2194 = vmatpush2.xpose.msra.mxu0 0.0
        %2195 = vmatprep.subr.mxu0 0.0
        %2196 = vmatpush2.xpose.msra.mxu0 0.0
        %2197 = vmatprep.mubr.f32.mxu0 0.0
        %2198 = vmatmul.mubr.f32.gmra.mxu0 %v2124
        %v2199 = vpop.f32.mrf.mxu0
        %v2200 = vadd.f32 0.0, %v2199
        %v2201 = vpop.f32.mrf.mxu0
        %2202 = vmatprep.mubr.f32.mxu0 0.0
        %2203 = vmatmul.mubr.f32.gmra.mxu0 %v2127
        %v2204 = vpop.f32.mrf.mxu0
        %v2205 = vadd.f32 0.0, %v2204
        %v2206 = vpop.f32.mrf.mxu0
        %2207 = vdwg.mxu0
        %2210 = vrot.lane.b32.xlu0 %v1189, 64
        %v2211 = vpop.permute.xlu0 %2210
        %2212 = vrot.lane.b32.xlu0 %v1190, 64
        %v2213 = vpop.permute.xlu0 %2212
        %v2215 = vsel %vm1212, %v951, 0
        %v2218 = vsel %vm1212, %v952, 0
        %v2220 = vsel %vm1212, %v2211, 0
        %v2222 = vsel %vm1212, %v2213, 0
        %2224 = vmatprep.subr.mxu0 0.0
        %2225 = vmatpush1.xpose.msra.mxu0 0.0
        %2226 = vmatprep.subr.mxu0 0.0
        %2227 = vmatpush1.xpose.msra.mxu0 0.0
        %2228 = vmatprep.subr.mxu0 0.0
        %2229 = vmatpush1.xpose.msra.mxu0 0.0
        %2230 = vmatprep.subr.mxu0 0.0
        %2231 = vmatpush1.xpose.msra.mxu0 0.0
        %2232 = vmatprep.subr.mxu0 0.0
        %2233 = vmatpush1.xpose.msra.mxu0 0.0
        %2234 = vmatprep.subr.mxu0 0.0
        %2235 = vmatpush1.xpose.msra.mxu0 0.0
        %2236 = vmatprep.subr.mxu0 0.0
        %2237 = vmatpush1.xpose.msra.mxu0 0.0
        %2238 = vmatprep.subr.mxu0 0.0
        %2239 = vmatpush1.xpose.msra.mxu0 0.0
        %2240 = vmatprep.subr.mxu0 0.0
        %2241 = vmatpush1.xpose.msra.mxu0 0.0
        %2242 = vmatprep.subr.mxu0 0.0
        %2243 = vmatpush1.xpose.msra.mxu0 0.0
        %2244 = vmatprep.subr.mxu0 0.0
        %2245 = vmatpush1.xpose.msra.mxu0 0.0
        %2246 = vmatprep.subr.mxu0 0.0
        %2247 = vmatpush1.xpose.msra.mxu0 0.0
        %2248 = vmatprep.subr.mxu0 0.0
        %2249 = vmatpush1.xpose.msra.mxu0 0.0
        %2250 = vmatprep.subr.mxu0 0.0
        %2251 = vmatpush1.xpose.msra.mxu0 0.0
        %2252 = vmatprep.subr.mxu0 0.0
        %2253 = vmatpush1.xpose.msra.mxu0 %v2222
        %2254 = vmatprep.subr.mxu0 0.0
        %2255 = vmatpush1.xpose.msra.mxu0 %v2220
        %2256 = vmatprep.subr.mxu0 0.0
        %2257 = vmatpush2.xpose.msra.mxu0 0.0
        %2258 = vmatprep.subr.mxu0 0.0
        %2259 = vmatpush2.xpose.msra.mxu0 0.0
        %2260 = vmatprep.subr.mxu0 0.0
        %2261 = vmatpush2.xpose.msra.mxu0 0.0
        %2262 = vmatprep.subr.mxu0 0.0
        %2263 = vmatpush2.xpose.msra.mxu0 0.0
        %2264 = vmatprep.subr.mxu0 0.0
        %2265 = vmatpush2.xpose.msra.mxu0 0.0
        %2266 = vmatprep.subr.mxu0 0.0
        %2267 = vmatpush2.xpose.msra.mxu0 0.0
        %2268 = vmatprep.subr.mxu0 0.0
        %2269 = vmatpush2.xpose.msra.mxu0 0.0
        %2270 = vmatprep.subr.mxu0 0.0
        %2271 = vmatpush2.xpose.msra.mxu0 0.0
        %2272 = vmatprep.subr.mxu0 0.0
        %2273 = vmatpush2.xpose.msra.mxu0 0.0
        %2274 = vmatprep.subr.mxu0 0.0
        %2275 = vmatpush2.xpose.msra.mxu0 0.0
        %2276 = vmatprep.subr.mxu0 0.0
        %2277 = vmatpush2.xpose.msra.mxu0 0.0
        %2278 = vmatprep.subr.mxu0 0.0
        %2279 = vmatpush2.xpose.msra.mxu0 0.0
        %2280 = vmatprep.subr.mxu0 0.0
        %2281 = vmatpush2.xpose.msra.mxu0 0.0
        %2282 = vmatprep.subr.mxu0 0.0
        %2283 = vmatpush2.xpose.msra.mxu0 0.0
        %2284 = vmatprep.subr.mxu0 0.0
        %2285 = vmatpush2.xpose.msra.mxu0 0.0
        %2286 = vmatprep.subr.mxu0 0.0
        %2287 = vmatpush2.xpose.msra.mxu0 0.0
        %2288 = vmatprep.mubr.f32.mxu0 0.0
        %2289 = vmatmul.mubr.f32.gmra.mxu0 %v2215
        %v2290 = vpop.f32.mrf.mxu0
        %v2291 = vadd.f32 0.0, %v2290
        %v2292 = vpop.f32.mrf.mxu0
        %2293 = vmatprep.mubr.f32.mxu0 0.0
        %2294 = vmatmul.mubr.f32.gmra.mxu0 %v2218
        %v2295 = vpop.f32.mrf.mxu0
        %v2296 = vadd.f32 0.0, %v2295
        %v2297 = vpop.f32.mrf.mxu0
        %2298 = vdwg.mxu0
        %2301 = vrot.lane.b32.xlu0 %v1191, 64
        %v2302 = vpop.permute.xlu0 %2301
        %2303 = vrot.lane.b32.xlu0 %v1192, 64
        %v2304 = vpop.permute.xlu0 %2303
        %v2306 = vsel %vm1212, %v953, 0
        %v2309 = vsel %vm1212, %v954, 0
        %v2311 = vsel %vm1212, %v2302, 0
        %v2313 = vsel %vm1212, %v2304, 0
        %2315 = vmatprep.subr.mxu0 0.0
        %2316 = vmatpush1.xpose.msra.mxu0 0.0
        %2317 = vmatprep.subr.mxu0 0.0
        %2318 = vmatpush1.xpose.msra.mxu0 0.0
        %2319 = vmatprep.subr.mxu0 0.0
        %2320 = vmatpush1.xpose.msra.mxu0 0.0
        %2321 = vmatprep.subr.mxu0 0.0
        %2322 = vmatpush1.xpose.msra.mxu0 0.0
        %2323 = vmatprep.subr.mxu0 0.0
        %2324 = vmatpush1.xpose.msra.mxu0 0.0
        %2325 = vmatprep.subr.mxu0 0.0
        %2326 = vmatpush1.xpose.msra.mxu0 0.0
        %2327 = vmatprep.subr.mxu0 0.0
        %2328 = vmatpush1.xpose.msra.mxu0 0.0
        %2329 = vmatprep.subr.mxu0 0.0
        %2330 = vmatpush1.xpose.msra.mxu0 0.0
        %2331 = vmatprep.subr.mxu0 0.0
        %2332 = vmatpush1.xpose.msra.mxu0 0.0
        %2333 = vmatprep.subr.mxu0 0.0
        %2334 = vmatpush1.xpose.msra.mxu0 0.0
        %2335 = vmatprep.subr.mxu0 0.0
        %2336 = vmatpush1.xpose.msra.mxu0 0.0
        %2337 = vmatprep.subr.mxu0 0.0
        %2338 = vmatpush1.xpose.msra.mxu0 0.0
        %2339 = vmatprep.subr.mxu0 0.0
        %2340 = vmatpush1.xpose.msra.mxu0 0.0
        %2341 = vmatprep.subr.mxu0 0.0
        %2342 = vmatpush1.xpose.msra.mxu0 0.0
        %2343 = vmatprep.subr.mxu0 0.0
        %2344 = vmatpush1.xpose.msra.mxu0 %v2313
        %2345 = vmatprep.subr.mxu0 0.0
        %2346 = vmatpush1.xpose.msra.mxu0 %v2311
        %2347 = vmatprep.subr.mxu0 0.0
        %2348 = vmatpush2.xpose.msra.mxu0 0.0
        %2349 = vmatprep.subr.mxu0 0.0
        %2350 = vmatpush2.xpose.msra.mxu0 0.0
        %2351 = vmatprep.subr.mxu0 0.0
        %2352 = vmatpush2.xpose.msra.mxu0 0.0
        %2353 = vmatprep.subr.mxu0 0.0
        %2354 = vmatpush2.xpose.msra.mxu0 0.0
        %2355 = vmatprep.subr.mxu0 0.0
        %2356 = vmatpush2.xpose.msra.mxu0 0.0
        %2357 = vmatprep.subr.mxu0 0.0
        %2358 = vmatpush2.xpose.msra.mxu0 0.0
        %2359 = vmatprep.subr.mxu0 0.0
        %2360 = vmatpush2.xpose.msra.mxu0 0.0
        %2361 = vmatprep.subr.mxu0 0.0
        %2362 = vmatpush2.xpose.msra.mxu0 0.0
        %2363 = vmatprep.subr.mxu0 0.0
        %2364 = vmatpush2.xpose.msra.mxu0 0.0
        %2365 = vmatprep.subr.mxu0 0.0
        %2366 = vmatpush2.xpose.msra.mxu0 0.0
        %2367 = vmatprep.subr.mxu0 0.0
        %2368 = vmatpush2.xpose.msra.mxu0 0.0
        %2369 = vmatprep.subr.mxu0 0.0
        %2370 = vmatpush2.xpose.msra.mxu0 0.0
        %2371 = vmatprep.subr.mxu0 0.0
        %2372 = vmatpush2.xpose.msra.mxu0 0.0
        %2373 = vmatprep.subr.mxu0 0.0
        %2374 = vmatpush2.xpose.msra.mxu0 0.0
        %2375 = vmatprep.subr.mxu0 0.0
        %2376 = vmatpush2.xpose.msra.mxu0 0.0
        %2377 = vmatprep.subr.mxu0 0.0
        %2378 = vmatpush2.xpose.msra.mxu0 0.0
        %2379 = vmatprep.mubr.f32.mxu0 0.0
        %2380 = vmatmul.mubr.f32.gmra.mxu0 %v2306
        %v2381 = vpop.f32.mrf.mxu0
        %v2382 = vadd.f32 0.0, %v2381
        %v2383 = vpop.f32.mrf.mxu0
        %2384 = vmatprep.mubr.f32.mxu0 0.0
        %2385 = vmatmul.mubr.f32.gmra.mxu0 %v2309
        %v2386 = vpop.f32.mrf.mxu0
        %v2387 = vadd.f32 0.0, %v2386
        %v2388 = vpop.f32.mrf.mxu0
        %2389 = vdwg.mxu0
        %2392 = vrot.lane.b32.xlu0 %v1193, 64
        %v2393 = vpop.permute.xlu0 %2392
        %2394 = vrot.lane.b32.xlu0 %v1194, 64
        %v2395 = vpop.permute.xlu0 %2394
        %v2397 = vsel %vm1212, %v955, 0
        %v2400 = vsel %vm1212, %v956, 0
        %v2402 = vsel %vm1212, %v2393, 0
        %v2404 = vsel %vm1212, %v2395, 0
        %2406 = vmatprep.subr.mxu0 0.0
        %2407 = vmatpush1.xpose.msra.mxu0 0.0
        %2408 = vmatprep.subr.mxu0 0.0
        %2409 = vmatpush1.xpose.msra.mxu0 0.0
        %2410 = vmatprep.subr.mxu0 0.0
        %2411 = vmatpush1.xpose.msra.mxu0 0.0
        %2412 = vmatprep.subr.mxu0 0.0
        %2413 = vmatpush1.xpose.msra.mxu0 0.0
        %2414 = vmatprep.subr.mxu0 0.0
        %2415 = vmatpush1.xpose.msra.mxu0 0.0
        %2416 = vmatprep.subr.mxu0 0.0
        %2417 = vmatpush1.xpose.msra.mxu0 0.0
        %2418 = vmatprep.subr.mxu0 0.0
        %2419 = vmatpush1.xpose.msra.mxu0 0.0
        %2420 = vmatprep.subr.mxu0 0.0
        %2421 = vmatpush1.xpose.msra.mxu0 0.0
        %2422 = vmatprep.subr.mxu0 0.0
        %2423 = vmatpush1.xpose.msra.mxu0 0.0
        %2424 = vmatprep.subr.mxu0 0.0
        %2425 = vmatpush1.xpose.msra.mxu0 0.0
        %2426 = vmatprep.subr.mxu0 0.0
        %2427 = vmatpush1.xpose.msra.mxu0 0.0
        %2428 = vmatprep.subr.mxu0 0.0
        %2429 = vmatpush1.xpose.msra.mxu0 0.0
        %2430 = vmatprep.subr.mxu0 0.0
        %2431 = vmatpush1.xpose.msra.mxu0 0.0
        %2432 = vmatprep.subr.mxu0 0.0
        %2433 = vmatpush1.xpose.msra.mxu0 0.0
        %2434 = vmatprep.subr.mxu0 0.0
        %2435 = vmatpush1.xpose.msra.mxu0 %v2404
        %2436 = vmatprep.subr.mxu0 0.0
        %2437 = vmatpush1.xpose.msra.mxu0 %v2402
        %2438 = vmatprep.subr.mxu0 0.0
        %2439 = vmatpush2.xpose.msra.mxu0 0.0
        %2440 = vmatprep.subr.mxu0 0.0
        %2441 = vmatpush2.xpose.msra.mxu0 0.0
        %2442 = vmatprep.subr.mxu0 0.0
        %2443 = vmatpush2.xpose.msra.mxu0 0.0
        %2444 = vmatprep.subr.mxu0 0.0
        %2445 = vmatpush2.xpose.msra.mxu0 0.0
        %2446 = vmatprep.subr.mxu0 0.0
        %2447 = vmatpush2.xpose.msra.mxu0 0.0
        %2448 = vmatprep.subr.mxu0 0.0
        %2449 = vmatpush2.xpose.msra.mxu0 0.0
        %2450 = vmatprep.subr.mxu0 0.0
        %2451 = vmatpush2.xpose.msra.mxu0 0.0
        %2452 = vmatprep.subr.mxu0 0.0
        %2453 = vmatpush2.xpose.msra.mxu0 0.0
        %2454 = vmatprep.subr.mxu0 0.0
        %2455 = vmatpush2.xpose.msra.mxu0 0.0
        %2456 = vmatprep.subr.mxu0 0.0
        %2457 = vmatpush2.xpose.msra.mxu0 0.0
        %2458 = vmatprep.subr.mxu0 0.0
        %2459 = vmatpush2.xpose.msra.mxu0 0.0
        %2460 = vmatprep.subr.mxu0 0.0
        %2461 = vmatpush2.xpose.msra.mxu0 0.0
        %2462 = vmatprep.subr.mxu0 0.0
        %2463 = vmatpush2.xpose.msra.mxu0 0.0
        %2464 = vmatprep.subr.mxu0 0.0
        %2465 = vmatpush2.xpose.msra.mxu0 0.0
        %2466 = vmatprep.subr.mxu0 0.0
        %2467 = vmatpush2.xpose.msra.mxu0 0.0
        %2468 = vmatprep.subr.mxu0 0.0
        %2469 = vmatpush2.xpose.msra.mxu0 0.0
        %2470 = vmatprep.mubr.f32.mxu0 0.0
        %2471 = vmatmul.mubr.f32.gmra.mxu0 %v2397
        %v2472 = vpop.f32.mrf.mxu0
        %v2473 = vadd.f32 0.0, %v2472
        %v2474 = vpop.f32.mrf.mxu0
        %2475 = vmatprep.mubr.f32.mxu0 0.0
        %2476 = vmatmul.mubr.f32.gmra.mxu0 %v2400
        %v2477 = vpop.f32.mrf.mxu0
        %v2478 = vadd.f32 0.0, %v2477
        %v2479 = vpop.f32.mrf.mxu0
        %2480 = vdwg.mxu0
        %2483 = vrot.lane.b32.xlu0 %v1195, 64
        %v2484 = vpop.permute.xlu0 %2483
        %2485 = vrot.lane.b32.xlu0 %v1196, 64
        %v2486 = vpop.permute.xlu0 %2485
        %v2488 = vsel %vm1212, %v957, 0
        %v2491 = vsel %vm1212, %v958, 0
        %v2493 = vsel %vm1212, %v2484, 0
        %v2495 = vsel %vm1212, %v2486, 0
        %2497 = vmatprep.subr.mxu0 0.0
        %2498 = vmatpush1.xpose.msra.mxu0 0.0
        %2499 = vmatprep.subr.mxu0 0.0
        %2500 = vmatpush1.xpose.msra.mxu0 0.0
        %2501 = vmatprep.subr.mxu0 0.0
        %2502 = vmatpush1.xpose.msra.mxu0 0.0
        %2503 = vmatprep.subr.mxu0 0.0
        %2504 = vmatpush1.xpose.msra.mxu0 0.0
        %2505 = vmatprep.subr.mxu0 0.0
        %2506 = vmatpush1.xpose.msra.mxu0 0.0
        %2507 = vmatprep.subr.mxu0 0.0
        %2508 = vmatpush1.xpose.msra.mxu0 0.0
        %2509 = vmatprep.subr.mxu0 0.0
        %2510 = vmatpush1.xpose.msra.mxu0 0.0
        %2511 = vmatprep.subr.mxu0 0.0
        %2512 = vmatpush1.xpose.msra.mxu0 0.0
        %2513 = vmatprep.subr.mxu0 0.0
        %2514 = vmatpush1.xpose.msra.mxu0 0.0
        %2515 = vmatprep.subr.mxu0 0.0
        %2516 = vmatpush1.xpose.msra.mxu0 0.0
        %2517 = vmatprep.subr.mxu0 0.0
        %2518 = vmatpush1.xpose.msra.mxu0 0.0
        %2519 = vmatprep.subr.mxu0 0.0
        %2520 = vmatpush1.xpose.msra.mxu0 0.0
        %2521 = vmatprep.subr.mxu0 0.0
        %2522 = vmatpush1.xpose.msra.mxu0 0.0
        %2523 = vmatprep.subr.mxu0 0.0
        %2524 = vmatpush1.xpose.msra.mxu0 0.0
        %2525 = vmatprep.subr.mxu0 0.0
        %2526 = vmatpush1.xpose.msra.mxu0 %v2495
        %2527 = vmatprep.subr.mxu0 0.0
        %2528 = vmatpush1.xpose.msra.mxu0 %v2493
        %2529 = vmatprep.subr.mxu0 0.0
        %2530 = vmatpush2.xpose.msra.mxu0 0.0
        %2531 = vmatprep.subr.mxu0 0.0
        %2532 = vmatpush2.xpose.msra.mxu0 0.0
        %2533 = vmatprep.subr.mxu0 0.0
        %2534 = vmatpush2.xpose.msra.mxu0 0.0
        %2535 = vmatprep.subr.mxu0 0.0
        %2536 = vmatpush2.xpose.msra.mxu0 0.0
        %2537 = vmatprep.subr.mxu0 0.0
        %2538 = vmatpush2.xpose.msra.mxu0 0.0
        %2539 = vmatprep.subr.mxu0 0.0
        %2540 = vmatpush2.xpose.msra.mxu0 0.0
        %2541 = vmatprep.subr.mxu0 0.0
        %2542 = vmatpush2.xpose.msra.mxu0 0.0
        %2543 = vmatprep.subr.mxu0 0.0
        %2544 = vmatpush2.xpose.msra.mxu0 0.0
        %2545 = vmatprep.subr.mxu0 0.0
        %2546 = vmatpush2.xpose.msra.mxu0 0.0
        %2547 = vmatprep.subr.mxu0 0.0
        %2548 = vmatpush2.xpose.msra.mxu0 0.0
        %2549 = vmatprep.subr.mxu0 0.0
        %2550 = vmatpush2.xpose.msra.mxu0 0.0
        %2551 = vmatprep.subr.mxu0 0.0
        %2552 = vmatpush2.xpose.msra.mxu0 0.0
        %2553 = vmatprep.subr.mxu0 0.0
        %2554 = vmatpush2.xpose.msra.mxu0 0.0
        %2555 = vmatprep.subr.mxu0 0.0
        %2556 = vmatpush2.xpose.msra.mxu0 0.0
        %2557 = vmatprep.subr.mxu0 0.0
        %2558 = vmatpush2.xpose.msra.mxu0 0.0
        %2559 = vmatprep.subr.mxu0 0.0
        %2560 = vmatpush2.xpose.msra.mxu0 0.0
        %2561 = vmatprep.mubr.f32.mxu0 0.0
        %2562 = vmatmul.mubr.f32.gmra.mxu0 %v2488
        %v2563 = vpop.f32.mrf.mxu0
        %v2564 = vadd.f32 0.0, %v2563
        %v2565 = vpop.f32.mrf.mxu0
        %2566 = vmatprep.mubr.f32.mxu0 0.0
        %2567 = vmatmul.mubr.f32.gmra.mxu0 %v2491
        %v2568 = vpop.f32.mrf.mxu0
        %v2569 = vadd.f32 0.0, %v2568
        %v2570 = vpop.f32.mrf.mxu0
        %2571 = vdwg.mxu0
        %2574 = vrot.lane.b32.xlu0 %v1197, 64
        %v2575 = vpop.permute.xlu0 %2574
        %2576 = vrot.lane.b32.xlu0 %v1198, 64
        %v2577 = vpop.permute.xlu0 %2576
        %v2579 = vsel %vm1212, %v959, 0
        %v2582 = vsel %vm1212, %v960, 0
        %v2584 = vsel %vm1212, %v2575, 0
        %v2586 = vsel %vm1212, %v2577, 0
        %2588 = vmatprep.subr.mxu0 0.0
        %2589 = vmatpush1.xpose.msra.mxu0 0.0
        %2590 = vmatprep.subr.mxu0 0.0
        %2591 = vmatpush1.xpose.msra.mxu0 0.0
        %2592 = vmatprep.subr.mxu0 0.0
        %2593 = vmatpush1.xpose.msra.mxu0 0.0
        %2594 = vmatprep.subr.mxu0 0.0
        %2595 = vmatpush1.xpose.msra.mxu0 0.0
        %2596 = vmatprep.subr.mxu0 0.0
        %2597 = vmatpush1.xpose.msra.mxu0 0.0
        %2598 = vmatprep.subr.mxu0 0.0
        %2599 = vmatpush1.xpose.msra.mxu0 0.0
        %2600 = vmatprep.subr.mxu0 0.0
        %2601 = vmatpush1.xpose.msra.mxu0 0.0
        %2602 = vmatprep.subr.mxu0 0.0
        %2603 = vmatpush1.xpose.msra.mxu0 0.0
        %2604 = vmatprep.subr.mxu0 0.0
        %2605 = vmatpush1.xpose.msra.mxu0 0.0
        %2606 = vmatprep.subr.mxu0 0.0
        %2607 = vmatpush1.xpose.msra.mxu0 0.0
        %2608 = vmatprep.subr.mxu0 0.0
        %2609 = vmatpush1.xpose.msra.mxu0 0.0
        %2610 = vmatprep.subr.mxu0 0.0
        %2611 = vmatpush1.xpose.msra.mxu0 0.0
        %2612 = vmatprep.subr.mxu0 0.0
        %2613 = vmatpush1.xpose.msra.mxu0 0.0
        %2614 = vmatprep.subr.mxu0 0.0
        %2615 = vmatpush1.xpose.msra.mxu0 0.0
        %2616 = vmatprep.subr.mxu0 0.0
        %2617 = vmatpush1.xpose.msra.mxu0 %v2586
        %2618 = vmatprep.subr.mxu0 0.0
        %2619 = vmatpush1.xpose.msra.mxu0 %v2584
        %2620 = vmatprep.subr.mxu0 0.0
        %2621 = vmatpush2.xpose.msra.mxu0 0.0
        %2622 = vmatprep.subr.mxu0 0.0
        %2623 = vmatpush2.xpose.msra.mxu0 0.0
        %2624 = vmatprep.subr.mxu0 0.0
        %2625 = vmatpush2.xpose.msra.mxu0 0.0
        %2626 = vmatprep.subr.mxu0 0.0
        %2627 = vmatpush2.xpose.msra.mxu0 0.0
        %2628 = vmatprep.subr.mxu0 0.0
        %2629 = vmatpush2.xpose.msra.mxu0 0.0
        %2630 = vmatprep.subr.mxu0 0.0
        %2631 = vmatpush2.xpose.msra.mxu0 0.0
        %2632 = vmatprep.subr.mxu0 0.0
        %2633 = vmatpush2.xpose.msra.mxu0 0.0
        %2634 = vmatprep.subr.mxu0 0.0
        %2635 = vmatpush2.xpose.msra.mxu0 0.0
        %2636 = vmatprep.subr.mxu0 0.0
        %2637 = vmatpush2.xpose.msra.mxu0 0.0
        %2638 = vmatprep.subr.mxu0 0.0
        %2639 = vmatpush2.xpose.msra.mxu0 0.0
        %2640 = vmatprep.subr.mxu0 0.0
        %2641 = vmatpush2.xpose.msra.mxu0 0.0
        %2642 = vmatprep.subr.mxu0 0.0
        %2643 = vmatpush2.xpose.msra.mxu0 0.0
        %2644 = vmatprep.subr.mxu0 0.0
        %2645 = vmatpush2.xpose.msra.mxu0 0.0
        %2646 = vmatprep.subr.mxu0 0.0
        %2647 = vmatpush2.xpose.msra.mxu0 0.0
        %2648 = vmatprep.subr.mxu0 0.0
        %2649 = vmatpush2.xpose.msra.mxu0 0.0
        %2650 = vmatprep.subr.mxu0 0.0
        %2651 = vmatpush2.xpose.msra.mxu0 0.0
        %2652 = vmatprep.mubr.f32.mxu0 0.0
        %2653 = vmatmul.mubr.f32.gmra.mxu0 %v2579
        %v2654 = vpop.f32.mrf.mxu0
        %v2655 = vadd.f32 0.0, %v2654
        %v2656 = vpop.f32.mrf.mxu0
        %2657 = vmatprep.mubr.f32.mxu0 0.0
        %2658 = vmatmul.mubr.f32.gmra.mxu0 %v2582
        %v2659 = vpop.f32.mrf.mxu0
        %v2660 = vadd.f32 0.0, %v2659
        %v2661 = vpop.f32.mrf.mxu0
        %2662 = vdwg.mxu0
        %v2663 = vsel %vm1204, 1, 0
        %v2664 = vsel %vm1205, 1, 0
        %vm2665 = vcmp.eq.s32.totalorder %v2663, 1
        %vm2666 = vcmp.eq.s32.totalorder %v2664, 1
        %v2667 = vsel %vm2665, %v1290, -1e+30
        %v2668 = vsel %vm2666, %v1295, -1e+30
        %v2669 = vsel %vm2665, %v1381, -1e+30
        %v2670 = vsel %vm2666, %v1386, -1e+30
        %v2671 = vsel %vm2665, %v1472, -1e+30
        %v2672 = vsel %vm2666, %v1477, -1e+30
        %v2673 = vsel %vm2665, %v1563, -1e+30
        %v2674 = vsel %vm2666, %v1568, -1e+30
        %v2675 = vsel %vm2665, %v1654, -1e+30
        %v2676 = vsel %vm2666, %v1659, -1e+30
        %v2677 = vsel %vm2665, %v1745, -1e+30
        %v2678 = vsel %vm2666, %v1750, -1e+30
        %v2679 = vsel %vm2665, %v1836, -1e+30
        %v2680 = vsel %vm2666, %v1841, -1e+30
        %v2681 = vsel %vm2665, %v1927, -1e+30
        %v2682 = vsel %vm2666, %v1932, -1e+30
        %v2683 = vsel %vm2665, %v2018, -1e+30
        %v2684 = vsel %vm2666, %v2023, -1e+30
        %v2685 = vsel %vm2665, %v2109, -1e+30
        %v2686 = vsel %vm2666, %v2114, -1e+30
        %v2687 = vsel %vm2665, %v2200, -1e+30
        %v2688 = vsel %vm2666, %v2205, -1e+30
        %v2689 = vsel %vm2665, %v2291, -1e+30
        %v2690 = vsel %vm2666, %v2296, -1e+30
        %v2691 = vsel %vm2665, %v2382, -1e+30
        %v2692 = vsel %vm2666, %v2387, -1e+30
        %v2693 = vsel %vm2665, %v2473, -1e+30
        %v2694 = vsel %vm2666, %v2478, -1e+30
        %v2695 = vsel %vm2665, %v2564, -1e+30
        %v2696 = vsel %vm2666, %v2569, -1e+30
        %v2697 = vsel %vm2665, %v2655, -1e+30
        %v2698 = vsel %vm2666, %v2660, -1e+30
        %v2699 = vsel %vm1212, %v2667, -inf
        %2700 = vmax.xlane.f32.xlu0 %v2699
        %v2701 = vpop.xlane.xlu0 %2700
        %v2702 = vsel %vm1212, %v2668, -inf
        %2703 = vmax.xlane.f32.xlu0 %v2702
        %v2704 = vpop.xlane.xlu0 %2703
        %v2705 = vsel %vm1212, %v2669, -inf
        %2706 = vmax.xlane.f32.xlu0 %v2705
        %v2707 = vpop.xlane.xlu0 %2706
        %v2708 = vsel %vm1212, %v2670, -inf
        %2709 = vmax.xlane.f32.xlu0 %v2708
        %v2710 = vpop.xlane.xlu0 %2709
        %v2711 = vsel %vm1212, %v2671, -inf
        %2712 = vmax.xlane.f32.xlu0 %v2711
        %v2713 = vpop.xlane.xlu0 %2712
        %v2714 = vsel %vm1212, %v2672, -inf
        %2715 = vmax.xlane.f32.xlu0 %v2714
        %v2716 = vpop.xlane.xlu0 %2715
        %v2717 = vsel %vm1212, %v2673, -inf
        %2718 = vmax.xlane.f32.xlu0 %v2717
        %v2719 = vpop.xlane.xlu0 %2718
        %v2720 = vsel %vm1212, %v2674, -inf
        %2721 = vmax.xlane.f32.xlu0 %v2720
        %v2722 = vpop.xlane.xlu0 %2721
        %v2723 = vsel %vm1212, %v2675, -inf
        %2724 = vmax.xlane.f32.xlu0 %v2723
        %v2725 = vpop.xlane.xlu0 %2724
        %v2726 = vsel %vm1212, %v2676, -inf
        %2727 = vmax.xlane.f32.xlu0 %v2726
        %v2728 = vpop.xlane.xlu0 %2727
        %v2729 = vsel %vm1212, %v2677, -inf
        %2730 = vmax.xlane.f32.xlu0 %v2729
        %v2731 = vpop.xlane.xlu0 %2730
        %v2732 = vsel %vm1212, %v2678, -inf
        %2733 = vmax.xlane.f32.xlu0 %v2732
        %v2734 = vpop.xlane.xlu0 %2733
        %v2735 = vsel %vm1212, %v2679, -inf
        %2736 = vmax.xlane.f32.xlu0 %v2735
        %v2737 = vpop.xlane.xlu0 %2736
        %v2738 = vsel %vm1212, %v2680, -inf
        %2739 = vmax.xlane.f32.xlu0 %v2738
        %v2740 = vpop.xlane.xlu0 %2739
        %v2741 = vsel %vm1212, %v2681, -inf
        %2742 = vmax.xlane.f32.xlu0 %v2741
        %v2743 = vpop.xlane.xlu0 %2742
        %v2744 = vsel %vm1212, %v2682, -inf
        %2745 = vmax.xlane.f32.xlu0 %v2744
        %v2746 = vpop.xlane.xlu0 %2745
        %v2747 = vsel %vm1212, %v2683, -inf
        %2748 = vmax.xlane.f32.xlu0 %v2747
        %v2749 = vpop.xlane.xlu0 %2748
        %v2750 = vsel %vm1212, %v2684, -inf
        %2751 = vmax.xlane.f32.xlu0 %v2750
        %v2752 = vpop.xlane.xlu0 %2751
        %v2753 = vsel %vm1212, %v2685, -inf
        %2754 = vmax.xlane.f32.xlu0 %v2753
        %v2755 = vpop.xlane.xlu0 %2754
        %v2756 = vsel %vm1212, %v2686, -inf
        %2757 = vmax.xlane.f32.xlu0 %v2756
        %v2758 = vpop.xlane.xlu0 %2757
        %v2759 = vsel %vm1212, %v2687, -inf
        %2760 = vmax.xlane.f32.xlu0 %v2759
        %v2761 = vpop.xlane.xlu0 %2760
        %v2762 = vsel %vm1212, %v2688, -inf
        %2763 = vmax.xlane.f32.xlu0 %v2762
        %v2764 = vpop.xlane.xlu0 %2763
        %v2765 = vsel %vm1212, %v2689, -inf
        %2766 = vmax.xlane.f32.xlu0 %v2765
        %v2767 = vpop.xlane.xlu0 %2766
        %v2768 = vsel %vm1212, %v2690, -inf
        %2769 = vmax.xlane.f32.xlu0 %v2768
        %v2770 = vpop.xlane.xlu0 %2769
        %v2771 = vsel %vm1212, %v2691, -inf
        %2772 = vmax.xlane.f32.xlu0 %v2771
        %v2773 = vpop.xlane.xlu0 %2772
        %v2774 = vsel %vm1212, %v2692, -inf
        %2775 = vmax.xlane.f32.xlu0 %v2774
        %v2776 = vpop.xlane.xlu0 %2775
        %v2777 = vsel %vm1212, %v2693, -inf
        %2778 = vmax.xlane.f32.xlu0 %v2777
        %v2779 = vpop.xlane.xlu0 %2778
        %v2780 = vsel %vm1212, %v2694, -inf
        %2781 = vmax.xlane.f32.xlu0 %v2780
        %v2782 = vpop.xlane.xlu0 %2781
        %v2783 = vsel %vm1212, %v2695, -inf
        %2784 = vmax.xlane.f32.xlu0 %v2783
        %v2785 = vpop.xlane.xlu0 %2784
        %v2786 = vsel %vm1212, %v2696, -inf
        %2787 = vmax.xlane.f32.xlu0 %v2786
        %v2788 = vpop.xlane.xlu0 %2787
        %v2789 = vsel %vm1212, %v2697, -inf
        %2790 = vmax.xlane.f32.xlu0 %v2789
        %v2791 = vpop.xlane.xlu0 %2790
        %v2792 = vsel %vm1212, %v2698, -inf
        %2793 = vmax.xlane.f32.xlu0 %v2792
        %v2794 = vpop.xlane.xlu0 %2793
        %v2795 = vsub.f32 %v2667, %v2701
        %v2796 = vsub.f32 %v2668, %v2704
        %v2797 = vsub.f32 %v2669, %v2707
        %v2798 = vsub.f32 %v2670, %v2710
        %v2799 = vsub.f32 %v2671, %v2713
        %v2800 = vsub.f32 %v2672, %v2716
        %v2801 = vsub.f32 %v2673, %v2719
        %v2802 = vsub.f32 %v2674, %v2722
        %v2803 = vsub.f32 %v2675, %v2725
        %v2804 = vsub.f32 %v2676, %v2728
        %v2805 = vsub.f32 %v2677, %v2731
        %v2806 = vsub.f32 %v2678, %v2734
        %v2807 = vsub.f32 %v2679, %v2737
        %v2808 = vsub.f32 %v2680, %v2740
        %v2809 = vsub.f32 %v2681, %v2743
        %v2810 = vsub.f32 %v2682, %v2746
        %v2811 = vsub.f32 %v2683, %v2749
        %v2812 = vsub.f32 %v2684, %v2752
        %v2813 = vsub.f32 %v2685, %v2755
        %v2814 = vsub.f32 %v2686, %v2758
        %v2815 = vsub.f32 %v2687, %v2761
        %v2816 = vsub.f32 %v2688, %v2764
        %v2817 = vsub.f32 %v2689, %v2767
        %v2818 = vsub.f32 %v2690, %v2770
        %v2819 = vsub.f32 %v2691, %v2773
        %v2820 = vsub.f32 %v2692, %v2776
        %v2821 = vsub.f32 %v2693, %v2779
        %v2822 = vsub.f32 %v2694, %v2782
        %v2823 = vsub.f32 %v2695, %v2785
        %v2824 = vsub.f32 %v2696, %v2788
        %v2825 = vsub.f32 %v2697, %v2791
        %v2826 = vsub.f32 %v2698, %v2794
        %v2827 = vmul.f32 %v2795, 1.442695
        %v2828 = vpow.pop %v2827
        %v2829 = vmul.f32 %v2796, 1.442695
        %v2830 = vpow.pop %v2829
        %v2831 = vmul.f32 %v2797, 1.442695
        %v2832 = vpow.pop %v2831
        %v2833 = vmul.f32 %v2798, 1.442695
        %v2834 = vpow.pop %v2833
        %v2835 = vmul.f32 %v2799, 1.442695
        %v2836 = vpow.pop %v2835
        %v2837 = vmul.f32 %v2800, 1.442695
        %v2838 = vpow.pop %v2837
        %v2839 = vmul.f32 %v2801, 1.442695
        %v2840 = vpow.pop %v2839
        %v2841 = vmul.f32 %v2802, 1.442695
        %v2842 = vpow.pop %v2841
        %v2843 = vmul.f32 %v2803, 1.442695
        %v2844 = vpow.pop %v2843
        %v2845 = vmul.f32 %v2804, 1.442695
        %v2846 = vpow.pop %v2845
        %v2847 = vmul.f32 %v2805, 1.442695
        %v2848 = vpow.pop %v2847
        %v2849 = vmul.f32 %v2806, 1.442695
        %v2850 = vpow.pop %v2849
        %v2851 = vmul.f32 %v2807, 1.442695
        %v2852 = vpow.pop %v2851
        %v2853 = vmul.f32 %v2808, 1.442695
        %v2854 = vpow.pop %v2853
        %v2855 = vmul.f32 %v2809, 1.442695
        %v2856 = vpow.pop %v2855
        %v2857 = vmul.f32 %v2810, 1.442695
        %v2858 = vpow.pop %v2857
        %v2859 = vmul.f32 %v2811, 1.442695
        %v2860 = vpow.pop %v2859
        %v2861 = vmul.f32 %v2812, 1.442695
        %v2862 = vpow.pop %v2861
        %v2863 = vmul.f32 %v2813, 1.442695
        %v2864 = vpow.pop %v2863
        %v2865 = vmul.f32 %v2814, 1.442695
        %v2866 = vpow.pop %v2865
        %v2867 = vmul.f32 %v2815, 1.442695
        %v2868 = vpow.pop %v2867
        %v2869 = vmul.f32 %v2816, 1.442695
        %v2870 = vpow.pop %v2869
        %v2871 = vmul.f32 %v2817, 1.442695
        %v2872 = vpow.pop %v2871
        %v2873 = vmul.f32 %v2818, 1.442695
        %v2874 = vpow.pop %v2873
        %v2875 = vmul.f32 %v2819, 1.442695
        %v2876 = vpow.pop %v2875
        %v2877 = vmul.f32 %v2820, 1.442695
        %v2878 = vpow.pop %v2877
        %v2879 = vmul.f32 %v2821, 1.442695
        %v2880 = vpow.pop %v2879
        %v2881 = vmul.f32 %v2822, 1.442695
        %v2882 = vpow.pop %v2881
        %v2883 = vmul.f32 %v2823, 1.442695
        %v2884 = vpow.pop %v2883
        %v2885 = vmul.f32 %v2824, 1.442695
        %v2886 = vpow.pop %v2885
        %v2887 = vmul.f32 %v2825, 1.442695
        %v2888 = vpow.pop %v2887
        %v2889 = vmul.f32 %v2826, 1.442695
        %v2890 = vpow.pop %v2889
        %v2891 = vsel %vm1212, %v2828, 0.0
        %2892 = vadd.xlane.f32.xlu0 %v2891
        %v2893 = vpop.xlane.xlu0 %2892
        %v2894 = vsel %vm1212, %v2830, 0.0
        %2895 = vadd.xlane.f32.xlu0 %v2894
        %v2896 = vpop.xlane.xlu0 %2895
        %v2897 = vsel %vm1212, %v2832, 0.0
        %2898 = vadd.xlane.f32.xlu0 %v2897
        %v2899 = vpop.xlane.xlu0 %2898
        %v2900 = vsel %vm1212, %v2834, 0.0
        %2901 = vadd.xlane.f32.xlu0 %v2900
        %v2902 = vpop.xlane.xlu0 %2901
        %v2903 = vsel %vm1212, %v2836, 0.0
        %2904 = vadd.xlane.f32.xlu0 %v2903
        %v2905 = vpop.xlane.xlu0 %2904
        %v2906 = vsel %vm1212, %v2838, 0.0
        %2907 = vadd.xlane.f32.xlu0 %v2906
        %v2908 = vpop.xlane.xlu0 %2907
        %v2909 = vsel %vm1212, %v2840, 0.0
        %2910 = vadd.xlane.f32.xlu0 %v2909
        %v2911 = vpop.xlane.xlu0 %2910
        %v2912 = vsel %vm1212, %v2842, 0.0
        %2913 = vadd.xlane.f32.xlu0 %v2912
        %v2914 = vpop.xlane.xlu0 %2913
        %v2915 = vsel %vm1212, %v2844, 0.0
        %2916 = vadd.xlane.f32.xlu0 %v2915
        %v2917 = vpop.xlane.xlu0 %2916
        %v2918 = vsel %vm1212, %v2846, 0.0
        %2919 = vadd.xlane.f32.xlu0 %v2918
        %v2920 = vpop.xlane.xlu0 %2919
        %v2921 = vsel %vm1212, %v2848, 0.0
        %2922 = vadd.xlane.f32.xlu0 %v2921
        %v2923 = vpop.xlane.xlu0 %2922
        %v2924 = vsel %vm1212, %v2850, 0.0
        %2925 = vadd.xlane.f32.xlu0 %v2924
        %v2926 = vpop.xlane.xlu0 %2925
        %v2927 = vsel %vm1212, %v2852, 0.0
        %2928 = vadd.xlane.f32.xlu0 %v2927
        %v2929 = vpop.xlane.xlu0 %2928
        %v2930 = vsel %vm1212, %v2854, 0.0
        %2931 = vadd.xlane.f32.xlu0 %v2930
        %v2932 = vpop.xlane.xlu0 %2931
        %v2933 = vsel %vm1212, %v2856, 0.0
        %2934 = vadd.xlane.f32.xlu0 %v2933
        %v2935 = vpop.xlane.xlu0 %2934
        %v2936 = vsel %vm1212, %v2858, 0.0
        %2937 = vadd.xlane.f32.xlu0 %v2936
        %v2938 = vpop.xlane.xlu0 %2937
        %v2939 = vsel %vm1212, %v2860, 0.0
        %2940 = vadd.xlane.f32.xlu0 %v2939
        %v2941 = vpop.xlane.xlu0 %2940
        %v2942 = vsel %vm1212, %v2862, 0.0
        %2943 = vadd.xlane.f32.xlu0 %v2942
        %v2944 = vpop.xlane.xlu0 %2943
        %v2945 = vsel %vm1212, %v2864, 0.0
        %2946 = vadd.xlane.f32.xlu0 %v2945
        %v2947 = vpop.xlane.xlu0 %2946
        %v2948 = vsel %vm1212, %v2866, 0.0
        %2949 = vadd.xlane.f32.xlu0 %v2948
        %v2950 = vpop.xlane.xlu0 %2949
        %v2951 = vsel %vm1212, %v2868, 0.0
        %2952 = vadd.xlane.f32.xlu0 %v2951
        %v2953 = vpop.xlane.xlu0 %2952
        %v2954 = vsel %vm1212, %v2870, 0.0
        %2955 = vadd.xlane.f32.xlu0 %v2954
        %v2956 = vpop.xlane.xlu0 %2955
        %v2957 = vsel %vm1212, %v2872, 0.0
        %2958 = vadd.xlane.f32.xlu0 %v2957
        %v2959 = vpop.xlane.xlu0 %2958
        %v2960 = vsel %vm1212, %v2874, 0.0
        %2961 = vadd.xlane.f32.xlu0 %v2960
        %v2962 = vpop.xlane.xlu0 %2961
        %v2963 = vsel %vm1212, %v2876, 0.0
        %2964 = vadd.xlane.f32.xlu0 %v2963
        %v2965 = vpop.xlane.xlu0 %2964
        %v2966 = vsel %vm1212, %v2878, 0.0
        %2967 = vadd.xlane.f32.xlu0 %v2966
        %v2968 = vpop.xlane.xlu0 %2967
        %v2969 = vsel %vm1212, %v2880, 0.0
        %2970 = vadd.xlane.f32.xlu0 %v2969
        %v2971 = vpop.xlane.xlu0 %2970
        %v2972 = vsel %vm1212, %v2882, 0.0
        %2973 = vadd.xlane.f32.xlu0 %v2972
        %v2974 = vpop.xlane.xlu0 %2973
        %v2975 = vsel %vm1212, %v2884, 0.0
        %2976 = vadd.xlane.f32.xlu0 %v2975
        %v2977 = vpop.xlane.xlu0 %2976
        %v2978 = vsel %vm1212, %v2886, 0.0
        %2979 = vadd.xlane.f32.xlu0 %v2978
        %v2980 = vpop.xlane.xlu0 %2979
        %v2981 = vsel %vm1212, %v2888, 0.0
        %2982 = vadd.xlane.f32.xlu0 %v2981
        %v2983 = vpop.xlane.xlu0 %2982
        %v2984 = vsel %vm1212, %v2890, 0.0
        %2985 = vadd.xlane.f32.xlu0 %v2984
        %v2986 = vpop.xlane.xlu0 %2985
        %v2987 = vrcp.pop %v2893
        %v2988 = vrcp.pop %v2896
        %v2989 = vrcp.pop %v2899
        %v2990 = vrcp.pop %v2902
        %v2991 = vrcp.pop %v2905
        %v2992 = vrcp.pop %v2908
        %v2993 = vrcp.pop %v2911
        %v2994 = vrcp.pop %v2914
        %v2995 = vrcp.pop %v2917
        %v2996 = vrcp.pop %v2920
        %v2997 = vrcp.pop %v2923
        %v2998 = vrcp.pop %v2926
        %v2999 = vrcp.pop %v2929
        %v3000 = vrcp.pop %v2932
        %v3001 = vrcp.pop %v2935
        %v3002 = vrcp.pop %v2938
        %v3003 = vrcp.pop %v2941
        %v3004 = vrcp.pop %v2944
        %v3005 = vrcp.pop %v2947
        %v3006 = vrcp.pop %v2950
        %v3007 = vrcp.pop %v2953
        %v3008 = vrcp.pop %v2956
        %v3009 = vrcp.pop %v2959
        %v3010 = vrcp.pop %v2962
        %v3011 = vrcp.pop %v2965
        %v3012 = vrcp.pop %v2968
        %v3013 = vrcp.pop %v2971
        %v3014 = vrcp.pop %v2974
        %v3015 = vrcp.pop %v2977
        %v3016 = vrcp.pop %v2980
        %v3017 = vrcp.pop %v2983
        %v3018 = vrcp.pop %v2986
        %v3019 = vmul.f32 %v2828, %v2987
        %v3020 = vmul.f32 %v2830, %v2988
        %v3021 = vmul.f32 %v2832, %v2989
        %v3022 = vmul.f32 %v2834, %v2990
        %v3023 = vmul.f32 %v2836, %v2991
        %v3024 = vmul.f32 %v2838, %v2992
        %v3025 = vmul.f32 %v2840, %v2993
        %v3026 = vmul.f32 %v2842, %v2994
        %v3027 = vmul.f32 %v2844, %v2995
        %v3028 = vmul.f32 %v2846, %v2996
        %v3029 = vmul.f32 %v2848, %v2997
        %v3030 = vmul.f32 %v2850, %v2998
        %v3031 = vmul.f32 %v2852, %v2999
        %v3032 = vmul.f32 %v2854, %v3000
        %v3033 = vmul.f32 %v2856, %v3001
        %v3034 = vmul.f32 %v2858, %v3002
        %v3035 = vmul.f32 %v2860, %v3003
        %v3036 = vmul.f32 %v2862, %v3004
        %v3037 = vmul.f32 %v2864, %v3005
        %v3038 = vmul.f32 %v2866, %v3006
        %v3039 = vmul.f32 %v2868, %v3007
        %v3040 = vmul.f32 %v2870, %v3008
        %v3041 = vmul.f32 %v2872, %v3009
        %v3042 = vmul.f32 %v2874, %v3010
        %v3043 = vmul.f32 %v2876, %v3011
        %v3044 = vmul.f32 %v2878, %v3012
        %v3045 = vmul.f32 %v2880, %v3013
        %v3046 = vmul.f32 %v2882, %v3014
        %v3047 = vmul.f32 %v2884, %v3015
        %v3048 = vmul.f32 %v2886, %v3016
        %v3049 = vmul.f32 %v2888, %v3017
        %v3050 = vmul.f32 %v2890, %v3018
        %v3052 = vsel %vm1212, %v3019, 0
        %v3055 = vsel %vm1212, %v3020, 0
        %3057 = vmatprep.subr.mxu0 0.0
        %3058 = vmatpush1.msra.mxu0 0.0
        %3059 = vmatprep.subr.mxu0 0.0
        %3060 = vmatpush1.msra.mxu0 0.0
        %3061 = vmatprep.subr.mxu0 0.0
        %3062 = vmatpush1.msra.mxu0 0.0
        %3063 = vmatprep.subr.mxu0 0.0
        %3064 = vmatpush1.msra.mxu0 0.0
        %3065 = vmatprep.subr.mxu0 0.0
        %3066 = vmatpush1.msra.mxu0 0.0
        %3067 = vmatprep.subr.mxu0 0.0
        %3068 = vmatpush1.msra.mxu0 0.0
        %3069 = vmatprep.subr.mxu0 0.0
        %3070 = vmatpush1.msra.mxu0 0.0
        %3071 = vmatprep.subr.mxu0 0.0
        %3072 = vmatpush1.msra.mxu0 0.0
        %3073 = vmatprep.subr.mxu0 0.0
        %3074 = vmatpush1.msra.mxu0 0.0
        %3075 = vmatprep.subr.mxu0 0.0
        %3076 = vmatpush1.msra.mxu0 0.0
        %3077 = vmatprep.subr.mxu0 0.0
        %3078 = vmatpush1.msra.mxu0 0.0
        %3079 = vmatprep.subr.mxu0 0.0
        %3080 = vmatpush1.msra.mxu0 0.0
        %3081 = vmatprep.subr.mxu0 0.0
        %3082 = vmatpush1.msra.mxu0 0.0
        %3083 = vmatprep.subr.mxu0 0.0
        %3084 = vmatpush1.msra.mxu0 0.0
        %3085 = vmatprep.subr.mxu0 0.0
        %3086 = vmatpush1.msra.mxu0 %v543
        %3087 = vmatprep.subr.mxu0 0.0
        %3088 = vmatpush1.msra.mxu0 %v537
        %3089 = vmatprep.subr.mxu0 0.0
        %3090 = vmatpush2.msra.mxu0 0.0
        %3091 = vmatprep.subr.mxu0 0.0
        %3092 = vmatpush2.msra.mxu0 0.0
        %3093 = vmatprep.subr.mxu0 0.0
        %3094 = vmatpush2.msra.mxu0 0.0
        %3095 = vmatprep.subr.mxu0 0.0
        %3096 = vmatpush2.msra.mxu0 0.0
        %3097 = vmatprep.subr.mxu0 0.0
        %3098 = vmatpush2.msra.mxu0 0.0
        %3099 = vmatprep.subr.mxu0 0.0
        %3100 = vmatpush2.msra.mxu0 0.0
        %3101 = vmatprep.subr.mxu0 0.0
        %3102 = vmatpush2.msra.mxu0 0.0
        %3103 = vmatprep.subr.mxu0 0.0
        %3104 = vmatpush2.msra.mxu0 0.0
        %3105 = vmatprep.subr.mxu0 0.0
        %3106 = vmatpush2.msra.mxu0 0.0
        %3107 = vmatprep.subr.mxu0 0.0
        %3108 = vmatpush2.msra.mxu0 0.0
        %3109 = vmatprep.subr.mxu0 0.0
        %3110 = vmatpush2.msra.mxu0 0.0
        %3111 = vmatprep.subr.mxu0 0.0
        %3112 = vmatpush2.msra.mxu0 0.0
        %3113 = vmatprep.subr.mxu0 0.0
        %3114 = vmatpush2.msra.mxu0 0.0
        %3115 = vmatprep.subr.mxu0 0.0
        %3116 = vmatpush2.msra.mxu0 0.0
        %3117 = vmatprep.subr.mxu0 0.0
        %3118 = vmatpush2.msra.mxu0 0.0
        %3119 = vmatprep.subr.mxu0 0.0
        %3120 = vmatpush2.msra.mxu0 0.0
        %3121 = vmatprep.mubr.f32.mxu0 0.0
        %3122 = vmatmul.mubr.f32.gmra.mxu0 %v3052
        %v3123 = vpop.f32.mrf.mxu0
        %v3124 = vadd.f32 0.0, %v3123
        %v3125 = vpop.f32.mrf.mxu0
        %3126 = vmatprep.mubr.f32.mxu0 0.0
        %3127 = vmatmul.mubr.f32.gmra.mxu0 %v3055
        %v3128 = vpop.f32.mrf.mxu0
        %v3129 = vadd.f32 0.0, %v3128
        %v3130 = vpop.f32.mrf.mxu0
        %3131 = vdwg.mxu0
        %v3133 = vsel %vm1212, %v3021, 0
        %v3136 = vsel %vm1212, %v3022, 0
        %3138 = vmatprep.subr.mxu0 0.0
        %3139 = vmatpush1.msra.mxu0 0.0
        %3140 = vmatprep.subr.mxu0 0.0
        %3141 = vmatpush1.msra.mxu0 0.0
        %3142 = vmatprep.subr.mxu0 0.0
        %3143 = vmatpush1.msra.mxu0 0.0
        %3144 = vmatprep.subr.mxu0 0.0
        %3145 = vmatpush1.msra.mxu0 0.0
        %3146 = vmatprep.subr.mxu0 0.0
        %3147 = vmatpush1.msra.mxu0 0.0
        %3148 = vmatprep.subr.mxu0 0.0
        %3149 = vmatpush1.msra.mxu0 0.0
        %3150 = vmatprep.subr.mxu0 0.0
        %3151 = vmatpush1.msra.mxu0 0.0
        %3152 = vmatprep.subr.mxu0 0.0
        %3153 = vmatpush1.msra.mxu0 0.0
        %3154 = vmatprep.subr.mxu0 0.0
        %3155 = vmatpush1.msra.mxu0 0.0
        %3156 = vmatprep.subr.mxu0 0.0
        %3157 = vmatpush1.msra.mxu0 0.0
        %3158 = vmatprep.subr.mxu0 0.0
        %3159 = vmatpush1.msra.mxu0 0.0
        %3160 = vmatprep.subr.mxu0 0.0
        %3161 = vmatpush1.msra.mxu0 0.0
        %3162 = vmatprep.subr.mxu0 0.0
        %3163 = vmatpush1.msra.mxu0 0.0
        %3164 = vmatprep.subr.mxu0 0.0
        %3165 = vmatpush1.msra.mxu0 0.0
        %3166 = vmatprep.subr.mxu0 0.0
        %3167 = vmatpush1.msra.mxu0 %v555
        %3168 = vmatprep.subr.mxu0 0.0
        %3169 = vmatpush1.msra.mxu0 %v549
        %3170 = vmatprep.subr.mxu0 0.0
        %3171 = vmatpush2.msra.mxu0 0.0
        %3172 = vmatprep.subr.mxu0 0.0
        %3173 = vmatpush2.msra.mxu0 0.0
        %3174 = vmatprep.subr.mxu0 0.0
        %3175 = vmatpush2.msra.mxu0 0.0
        %3176 = vmatprep.subr.mxu0 0.0
        %3177 = vmatpush2.msra.mxu0 0.0
        %3178 = vmatprep.subr.mxu0 0.0
        %3179 = vmatpush2.msra.mxu0 0.0
        %3180 = vmatprep.subr.mxu0 0.0
        %3181 = vmatpush2.msra.mxu0 0.0
        %3182 = vmatprep.subr.mxu0 0.0
        %3183 = vmatpush2.msra.mxu0 0.0
        %3184 = vmatprep.subr.mxu0 0.0
        %3185 = vmatpush2.msra.mxu0 0.0
        %3186 = vmatprep.subr.mxu0 0.0
        %3187 = vmatpush2.msra.mxu0 0.0
        %3188 = vmatprep.subr.mxu0 0.0
        %3189 = vmatpush2.msra.mxu0 0.0
        %3190 = vmatprep.subr.mxu0 0.0
        %3191 = vmatpush2.msra.mxu0 0.0
        %3192 = vmatprep.subr.mxu0 0.0
        %3193 = vmatpush2.msra.mxu0 0.0
        %3194 = vmatprep.subr.mxu0 0.0
        %3195 = vmatpush2.msra.mxu0 0.0
        %3196 = vmatprep.subr.mxu0 0.0
        %3197 = vmatpush2.msra.mxu0 0.0
        %3198 = vmatprep.subr.mxu0 0.0
        %3199 = vmatpush2.msra.mxu0 0.0
        %3200 = vmatprep.subr.mxu0 0.0
        %3201 = vmatpush2.msra.mxu0 0.0
        %3202 = vmatprep.mubr.f32.mxu0 0.0
        %3203 = vmatmul.mubr.f32.gmra.mxu0 %v3133
        %v3204 = vpop.f32.mrf.mxu0
        %v3205 = vadd.f32 0.0, %v3204
        %v3206 = vpop.f32.mrf.mxu0
        %3207 = vmatprep.mubr.f32.mxu0 0.0
        %3208 = vmatmul.mubr.f32.gmra.mxu0 %v3136
        %v3209 = vpop.f32.mrf.mxu0
        %v3210 = vadd.f32 0.0, %v3209
        %v3211 = vpop.f32.mrf.mxu0
        %3212 = vdwg.mxu0
        %v3214 = vsel %vm1212, %v3023, 0
        %v3217 = vsel %vm1212, %v3024, 0
        %3219 = vmatprep.subr.mxu0 0.0
        %3220 = vmatpush1.msra.mxu0 0.0
        %3221 = vmatprep.subr.mxu0 0.0
        %3222 = vmatpush1.msra.mxu0 0.0
        %3223 = vmatprep.subr.mxu0 0.0
        %3224 = vmatpush1.msra.mxu0 0.0
        %3225 = vmatprep.subr.mxu0 0.0
        %3226 = vmatpush1.msra.mxu0 0.0
        %3227 = vmatprep.subr.mxu0 0.0
        %3228 = vmatpush1.msra.mxu0 0.0
        %3229 = vmatprep.subr.mxu0 0.0
        %3230 = vmatpush1.msra.mxu0 0.0
        %3231 = vmatprep.subr.mxu0 0.0
        %3232 = vmatpush1.msra.mxu0 0.0
        %3233 = vmatprep.subr.mxu0 0.0
        %3234 = vmatpush1.msra.mxu0 0.0
        %3235 = vmatprep.subr.mxu0 0.0
        %3236 = vmatpush1.msra.mxu0 0.0
        %3237 = vmatprep.subr.mxu0 0.0
        %3238 = vmatpush1.msra.mxu0 0.0
        %3239 = vmatprep.subr.mxu0 0.0
        %3240 = vmatpush1.msra.mxu0 0.0
        %3241 = vmatprep.subr.mxu0 0.0
        %3242 = vmatpush1.msra.mxu0 0.0
        %3243 = vmatprep.subr.mxu0 0.0
        %3244 = vmatpush1.msra.mxu0 0.0
        %3245 = vmatprep.subr.mxu0 0.0
        %3246 = vmatpush1.msra.mxu0 0.0
        %3247 = vmatprep.subr.mxu0 0.0
        %3248 = vmatpush1.msra.mxu0 %v567
        %3249 = vmatprep.subr.mxu0 0.0
        %3250 = vmatpush1.msra.mxu0 %v561
        %3251 = vmatprep.subr.mxu0 0.0
        %3252 = vmatpush2.msra.mxu0 0.0
        %3253 = vmatprep.subr.mxu0 0.0
        %3254 = vmatpush2.msra.mxu0 0.0
        %3255 = vmatprep.subr.mxu0 0.0
        %3256 = vmatpush2.msra.mxu0 0.0
        %3257 = vmatprep.subr.mxu0 0.0
        %3258 = vmatpush2.msra.mxu0 0.0
        %3259 = vmatprep.subr.mxu0 0.0
        %3260 = vmatpush2.msra.mxu0 0.0
        %3261 = vmatprep.subr.mxu0 0.0
        %3262 = vmatpush2.msra.mxu0 0.0
        %3263 = vmatprep.subr.mxu0 0.0
        %3264 = vmatpush2.msra.mxu0 0.0
        %3265 = vmatprep.subr.mxu0 0.0
        %3266 = vmatpush2.msra.mxu0 0.0
        %3267 = vmatprep.subr.mxu0 0.0
        %3268 = vmatpush2.msra.mxu0 0.0
        %3269 = vmatprep.subr.mxu0 0.0
        %3270 = vmatpush2.msra.mxu0 0.0
        %3271 = vmatprep.subr.mxu0 0.0
        %3272 = vmatpush2.msra.mxu0 0.0
        %3273 = vmatprep.subr.mxu0 0.0
        %3274 = vmatpush2.msra.mxu0 0.0
        %3275 = vmatprep.subr.mxu0 0.0
        %3276 = vmatpush2.msra.mxu0 0.0
        %3277 = vmatprep.subr.mxu0 0.0
        %3278 = vmatpush2.msra.mxu0 0.0
        %3279 = vmatprep.subr.mxu0 0.0
        %3280 = vmatpush2.msra.mxu0 0.0
        %3281 = vmatprep.subr.mxu0 0.0
        %3282 = vmatpush2.msra.mxu0 0.0
        %3283 = vmatprep.mubr.f32.mxu0 0.0
        %3284 = vmatmul.mubr.f32.gmra.mxu0 %v3214
        %v3285 = vpop.f32.mrf.mxu0
        %v3286 = vadd.f32 0.0, %v3285
        %v3287 = vpop.f32.mrf.mxu0
        %3288 = vmatprep.mubr.f32.mxu0 0.0
        %3289 = vmatmul.mubr.f32.gmra.mxu0 %v3217
        %v3290 = vpop.f32.mrf.mxu0
        %v3291 = vadd.f32 0.0, %v3290
        %v3292 = vpop.f32.mrf.mxu0
        %3293 = vdwg.mxu0
        %v3295 = vsel %vm1212, %v3025, 0
        %v3298 = vsel %vm1212, %v3026, 0
        %3300 = vmatprep.subr.mxu0 0.0
        %3301 = vmatpush1.msra.mxu0 0.0
        %3302 = vmatprep.subr.mxu0 0.0
        %3303 = vmatpush1.msra.mxu0 0.0
        %3304 = vmatprep.subr.mxu0 0.0
        %3305 = vmatpush1.msra.mxu0 0.0
        %3306 = vmatprep.subr.mxu0 0.0
        %3307 = vmatpush1.msra.mxu0 0.0
        %3308 = vmatprep.subr.mxu0 0.0
        %3309 = vmatpush1.msra.mxu0 0.0
        %3310 = vmatprep.subr.mxu0 0.0
        %3311 = vmatpush1.msra.mxu0 0.0
        %3312 = vmatprep.subr.mxu0 0.0
        %3313 = vmatpush1.msra.mxu0 0.0
        %3314 = vmatprep.subr.mxu0 0.0
        %3315 = vmatpush1.msra.mxu0 0.0
        %3316 = vmatprep.subr.mxu0 0.0
        %3317 = vmatpush1.msra.mxu0 0.0
        %3318 = vmatprep.subr.mxu0 0.0
        %3319 = vmatpush1.msra.mxu0 0.0
        %3320 = vmatprep.subr.mxu0 0.0
        %3321 = vmatpush1.msra.mxu0 0.0
        %3322 = vmatprep.subr.mxu0 0.0
        %3323 = vmatpush1.msra.mxu0 0.0
        %3324 = vmatprep.subr.mxu0 0.0
        %3325 = vmatpush1.msra.mxu0 0.0
        %3326 = vmatprep.subr.mxu0 0.0
        %3327 = vmatpush1.msra.mxu0 0.0
        %3328 = vmatprep.subr.mxu0 0.0
        %3329 = vmatpush1.msra.mxu0 %v579
        %3330 = vmatprep.subr.mxu0 0.0
        %3331 = vmatpush1.msra.mxu0 %v573
        %3332 = vmatprep.subr.mxu0 0.0
        %3333 = vmatpush2.msra.mxu0 0.0
        %3334 = vmatprep.subr.mxu0 0.0
        %3335 = vmatpush2.msra.mxu0 0.0
        %3336 = vmatprep.subr.mxu0 0.0
        %3337 = vmatpush2.msra.mxu0 0.0
        %3338 = vmatprep.subr.mxu0 0.0
        %3339 = vmatpush2.msra.mxu0 0.0
        %3340 = vmatprep.subr.mxu0 0.0
        %3341 = vmatpush2.msra.mxu0 0.0
        %3342 = vmatprep.subr.mxu0 0.0
        %3343 = vmatpush2.msra.mxu0 0.0
        %3344 = vmatprep.subr.mxu0 0.0
        %3345 = vmatpush2.msra.mxu0 0.0
        %3346 = vmatprep.subr.mxu0 0.0
        %3347 = vmatpush2.msra.mxu0 0.0
        %3348 = vmatprep.subr.mxu0 0.0
        %3349 = vmatpush2.msra.mxu0 0.0
        %3350 = vmatprep.subr.mxu0 0.0
        %3351 = vmatpush2.msra.mxu0 0.0
        %3352 = vmatprep.subr.mxu0 0.0
        %3353 = vmatpush2.msra.mxu0 0.0
        %3354 = vmatprep.subr.mxu0 0.0
        %3355 = vmatpush2.msra.mxu0 0.0
        %3356 = vmatprep.subr.mxu0 0.0
        %3357 = vmatpush2.msra.mxu0 0.0
        %3358 = vmatprep.subr.mxu0 0.0
        %3359 = vmatpush2.msra.mxu0 0.0
        %3360 = vmatprep.subr.mxu0 0.0
        %3361 = vmatpush2.msra.mxu0 0.0
        %3362 = vmatprep.subr.mxu0 0.0
        %3363 = vmatpush2.msra.mxu0 0.0
        %3364 = vmatprep.mubr.f32.mxu0 0.0
        %3365 = vmatmul.mubr.f32.gmra.mxu0 %v3295
        %v3366 = vpop.f32.mrf.mxu0
        %v3367 = vadd.f32 0.0, %v3366
        %v3368 = vpop.f32.mrf.mxu0
        %3369 = vmatprep.mubr.f32.mxu0 0.0
        %3370 = vmatmul.mubr.f32.gmra.mxu0 %v3298
        %v3371 = vpop.f32.mrf.mxu0
        %v3372 = vadd.f32 0.0, %v3371
        %v3373 = vpop.f32.mrf.mxu0
        %3374 = vdwg.mxu0
        %v3376 = vsel %vm1212, %v3027, 0
        %v3379 = vsel %vm1212, %v3028, 0
        %3381 = vmatprep.subr.mxu0 0.0
        %3382 = vmatpush1.msra.mxu0 0.0
        %3383 = vmatprep.subr.mxu0 0.0
        %3384 = vmatpush1.msra.mxu0 0.0
        %3385 = vmatprep.subr.mxu0 0.0
        %3386 = vmatpush1.msra.mxu0 0.0
        %3387 = vmatprep.subr.mxu0 0.0
        %3388 = vmatpush1.msra.mxu0 0.0
        %3389 = vmatprep.subr.mxu0 0.0
        %3390 = vmatpush1.msra.mxu0 0.0
        %3391 = vmatprep.subr.mxu0 0.0
        %3392 = vmatpush1.msra.mxu0 0.0
        %3393 = vmatprep.subr.mxu0 0.0
        %3394 = vmatpush1.msra.mxu0 0.0
        %3395 = vmatprep.subr.mxu0 0.0
        %3396 = vmatpush1.msra.mxu0 0.0
        %3397 = vmatprep.subr.mxu0 0.0
        %3398 = vmatpush1.msra.mxu0 0.0
        %3399 = vmatprep.subr.mxu0 0.0
        %3400 = vmatpush1.msra.mxu0 0.0
        %3401 = vmatprep.subr.mxu0 0.0
        %3402 = vmatpush1.msra.mxu0 0.0
        %3403 = vmatprep.subr.mxu0 0.0
        %3404 = vmatpush1.msra.mxu0 0.0
        %3405 = vmatprep.subr.mxu0 0.0
        %3406 = vmatpush1.msra.mxu0 0.0
        %3407 = vmatprep.subr.mxu0 0.0
        %3408 = vmatpush1.msra.mxu0 0.0
        %3409 = vmatprep.subr.mxu0 0.0
        %3410 = vmatpush1.msra.mxu0 %v591
        %3411 = vmatprep.subr.mxu0 0.0
        %3412 = vmatpush1.msra.mxu0 %v585
        %3413 = vmatprep.subr.mxu0 0.0
        %3414 = vmatpush2.msra.mxu0 0.0
        %3415 = vmatprep.subr.mxu0 0.0
        %3416 = vmatpush2.msra.mxu0 0.0
        %3417 = vmatprep.subr.mxu0 0.0
        %3418 = vmatpush2.msra.mxu0 0.0
        %3419 = vmatprep.subr.mxu0 0.0
        %3420 = vmatpush2.msra.mxu0 0.0
        %3421 = vmatprep.subr.mxu0 0.0
        %3422 = vmatpush2.msra.mxu0 0.0
        %3423 = vmatprep.subr.mxu0 0.0
        %3424 = vmatpush2.msra.mxu0 0.0
        %3425 = vmatprep.subr.mxu0 0.0
        %3426 = vmatpush2.msra.mxu0 0.0
        %3427 = vmatprep.subr.mxu0 0.0
        %3428 = vmatpush2.msra.mxu0 0.0
        %3429 = vmatprep.subr.mxu0 0.0
        %3430 = vmatpush2.msra.mxu0 0.0
        %3431 = vmatprep.subr.mxu0 0.0
        %3432 = vmatpush2.msra.mxu0 0.0
        %3433 = vmatprep.subr.mxu0 0.0
        %3434 = vmatpush2.msra.mxu0 0.0
        %3435 = vmatprep.subr.mxu0 0.0
        %3436 = vmatpush2.msra.mxu0 0.0
        %3437 = vmatprep.subr.mxu0 0.0
        %3438 = vmatpush2.msra.mxu0 0.0
        %3439 = vmatprep.subr.mxu0 0.0
        %3440 = vmatpush2.msra.mxu0 0.0
        %3441 = vmatprep.subr.mxu0 0.0
        %3442 = vmatpush2.msra.mxu0 0.0
        %3443 = vmatprep.subr.mxu0 0.0
        %3444 = vmatpush2.msra.mxu0 0.0
        %3445 = vmatprep.mubr.f32.mxu0 0.0
        %3446 = vmatmul.mubr.f32.gmra.mxu0 %v3376
        %v3447 = vpop.f32.mrf.mxu0
        %v3448 = vadd.f32 0.0, %v3447
        %v3449 = vpop.f32.mrf.mxu0
        %3450 = vmatprep.mubr.f32.mxu0 0.0
        %3451 = vmatmul.mubr.f32.gmra.mxu0 %v3379
        %v3452 = vpop.f32.mrf.mxu0
        %v3453 = vadd.f32 0.0, %v3452
        %v3454 = vpop.f32.mrf.mxu0
        %3455 = vdwg.mxu0
        %v3457 = vsel %vm1212, %v3029, 0
        %v3460 = vsel %vm1212, %v3030, 0
        %3462 = vmatprep.subr.mxu0 0.0
        %3463 = vmatpush1.msra.mxu0 0.0
        %3464 = vmatprep.subr.mxu0 0.0
        %3465 = vmatpush1.msra.mxu0 0.0
        %3466 = vmatprep.subr.mxu0 0.0
        %3467 = vmatpush1.msra.mxu0 0.0
        %3468 = vmatprep.subr.mxu0 0.0
        %3469 = vmatpush1.msra.mxu0 0.0
        %3470 = vmatprep.subr.mxu0 0.0
        %3471 = vmatpush1.msra.mxu0 0.0
        %3472 = vmatprep.subr.mxu0 0.0
        %3473 = vmatpush1.msra.mxu0 0.0
        %3474 = vmatprep.subr.mxu0 0.0
        %3475 = vmatpush1.msra.mxu0 0.0
        %3476 = vmatprep.subr.mxu0 0.0
        %3477 = vmatpush1.msra.mxu0 0.0
        %3478 = vmatprep.subr.mxu0 0.0
        %3479 = vmatpush1.msra.mxu0 0.0
        %3480 = vmatprep.subr.mxu0 0.0
        %3481 = vmatpush1.msra.mxu0 0.0
        %3482 = vmatprep.subr.mxu0 0.0
        %3483 = vmatpush1.msra.mxu0 0.0
        %3484 = vmatprep.subr.mxu0 0.0
        %3485 = vmatpush1.msra.mxu0 0.0
        %3486 = vmatprep.subr.mxu0 0.0
        %3487 = vmatpush1.msra.mxu0 0.0
        %3488 = vmatprep.subr.mxu0 0.0
        %3489 = vmatpush1.msra.mxu0 0.0
        %3490 = vmatprep.subr.mxu0 0.0
        %3491 = vmatpush1.msra.mxu0 %v603
        %3492 = vmatprep.subr.mxu0 0.0
        %3493 = vmatpush1.msra.mxu0 %v597
        %3494 = vmatprep.subr.mxu0 0.0
        %3495 = vmatpush2.msra.mxu0 0.0
        %3496 = vmatprep.subr.mxu0 0.0
        %3497 = vmatpush2.msra.mxu0 0.0
        %3498 = vmatprep.subr.mxu0 0.0
        %3499 = vmatpush2.msra.mxu0 0.0
        %3500 = vmatprep.subr.mxu0 0.0
        %3501 = vmatpush2.msra.mxu0 0.0
        %3502 = vmatprep.subr.mxu0 0.0
        %3503 = vmatpush2.msra.mxu0 0.0
        %3504 = vmatprep.subr.mxu0 0.0
        %3505 = vmatpush2.msra.mxu0 0.0
        %3506 = vmatprep.subr.mxu0 0.0
        %3507 = vmatpush2.msra.mxu0 0.0
        %3508 = vmatprep.subr.mxu0 0.0
        %3509 = vmatpush2.msra.mxu0 0.0
        %3510 = vmatprep.subr.mxu0 0.0
        %3511 = vmatpush2.msra.mxu0 0.0
        %3512 = vmatprep.subr.mxu0 0.0
        %3513 = vmatpush2.msra.mxu0 0.0
        %3514 = vmatprep.subr.mxu0 0.0
        %3515 = vmatpush2.msra.mxu0 0.0
        %3516 = vmatprep.subr.mxu0 0.0
        %3517 = vmatpush2.msra.mxu0 0.0
        %3518 = vmatprep.subr.mxu0 0.0
        %3519 = vmatpush2.msra.mxu0 0.0
        %3520 = vmatprep.subr.mxu0 0.0
        %3521 = vmatpush2.msra.mxu0 0.0
        %3522 = vmatprep.subr.mxu0 0.0
        %3523 = vmatpush2.msra.mxu0 0.0
        %3524 = vmatprep.subr.mxu0 0.0
        %3525 = vmatpush2.msra.mxu0 0.0
        %3526 = vmatprep.mubr.f32.mxu0 0.0
        %3527 = vmatmul.mubr.f32.gmra.mxu0 %v3457
        %v3528 = vpop.f32.mrf.mxu0
        %v3529 = vadd.f32 0.0, %v3528
        %v3530 = vpop.f32.mrf.mxu0
        %3531 = vmatprep.mubr.f32.mxu0 0.0
        %3532 = vmatmul.mubr.f32.gmra.mxu0 %v3460
        %v3533 = vpop.f32.mrf.mxu0
        %v3534 = vadd.f32 0.0, %v3533
        %v3535 = vpop.f32.mrf.mxu0
        %3536 = vdwg.mxu0
        %v3538 = vsel %vm1212, %v3031, 0
        %v3541 = vsel %vm1212, %v3032, 0
        %3543 = vmatprep.subr.mxu0 0.0
        %3544 = vmatpush1.msra.mxu0 0.0
        %3545 = vmatprep.subr.mxu0 0.0
        %3546 = vmatpush1.msra.mxu0 0.0
        %3547 = vmatprep.subr.mxu0 0.0
        %3548 = vmatpush1.msra.mxu0 0.0
        %3549 = vmatprep.subr.mxu0 0.0
        %3550 = vmatpush1.msra.mxu0 0.0
        %3551 = vmatprep.subr.mxu0 0.0
        %3552 = vmatpush1.msra.mxu0 0.0
        %3553 = vmatprep.subr.mxu0 0.0
        %3554 = vmatpush1.msra.mxu0 0.0
        %3555 = vmatprep.subr.mxu0 0.0
        %3556 = vmatpush1.msra.mxu0 0.0
        %3557 = vmatprep.subr.mxu0 0.0
        %3558 = vmatpush1.msra.mxu0 0.0
        %3559 = vmatprep.subr.mxu0 0.0
        %3560 = vmatpush1.msra.mxu0 0.0
        %3561 = vmatprep.subr.mxu0 0.0
        %3562 = vmatpush1.msra.mxu0 0.0
        %3563 = vmatprep.subr.mxu0 0.0
        %3564 = vmatpush1.msra.mxu0 0.0
        %3565 = vmatprep.subr.mxu0 0.0
        %3566 = vmatpush1.msra.mxu0 0.0
        %3567 = vmatprep.subr.mxu0 0.0
        %3568 = vmatpush1.msra.mxu0 0.0
        %3569 = vmatprep.subr.mxu0 0.0
        %3570 = vmatpush1.msra.mxu0 0.0
        %3571 = vmatprep.subr.mxu0 0.0
        %3572 = vmatpush1.msra.mxu0 %v615
        %3573 = vmatprep.subr.mxu0 0.0
        %3574 = vmatpush1.msra.mxu0 %v609
        %3575 = vmatprep.subr.mxu0 0.0
        %3576 = vmatpush2.msra.mxu0 0.0
        %3577 = vmatprep.subr.mxu0 0.0
        %3578 = vmatpush2.msra.mxu0 0.0
        %3579 = vmatprep.subr.mxu0 0.0
        %3580 = vmatpush2.msra.mxu0 0.0
        %3581 = vmatprep.subr.mxu0 0.0
        %3582 = vmatpush2.msra.mxu0 0.0
        %3583 = vmatprep.subr.mxu0 0.0
        %3584 = vmatpush2.msra.mxu0 0.0
        %3585 = vmatprep.subr.mxu0 0.0
        %3586 = vmatpush2.msra.mxu0 0.0
        %3587 = vmatprep.subr.mxu0 0.0
        %3588 = vmatpush2.msra.mxu0 0.0
        %3589 = vmatprep.subr.mxu0 0.0
        %3590 = vmatpush2.msra.mxu0 0.0
        %3591 = vmatprep.subr.mxu0 0.0
        %3592 = vmatpush2.msra.mxu0 0.0
        %3593 = vmatprep.subr.mxu0 0.0
        %3594 = vmatpush2.msra.mxu0 0.0
        %3595 = vmatprep.subr.mxu0 0.0
        %3596 = vmatpush2.msra.mxu0 0.0
        %3597 = vmatprep.subr.mxu0 0.0
        %3598 = vmatpush2.msra.mxu0 0.0
        %3599 = vmatprep.subr.mxu0 0.0
        %3600 = vmatpush2.msra.mxu0 0.0
        %3601 = vmatprep.subr.mxu0 0.0
        %3602 = vmatpush2.msra.mxu0 0.0
        %3603 = vmatprep.subr.mxu0 0.0
        %3604 = vmatpush2.msra.mxu0 0.0
        %3605 = vmatprep.subr.mxu0 0.0
        %3606 = vmatpush2.msra.mxu0 0.0
        %3607 = vmatprep.mubr.f32.mxu0 0.0
        %3608 = vmatmul.mubr.f32.gmra.mxu0 %v3538
        %v3609 = vpop.f32.mrf.mxu0
        %v3610 = vadd.f32 0.0, %v3609
        %v3611 = vpop.f32.mrf.mxu0
        %3612 = vmatprep.mubr.f32.mxu0 0.0
        %3613 = vmatmul.mubr.f32.gmra.mxu0 %v3541
        %v3614 = vpop.f32.mrf.mxu0
        %v3615 = vadd.f32 0.0, %v3614
        %v3616 = vpop.f32.mrf.mxu0
        %3617 = vdwg.mxu0
        %v3619 = vsel %vm1212, %v3033, 0
        %v3622 = vsel %vm1212, %v3034, 0
        %3624 = vmatprep.subr.mxu0 0.0
        %3625 = vmatpush1.msra.mxu0 0.0
        %3626 = vmatprep.subr.mxu0 0.0
        %3627 = vmatpush1.msra.mxu0 0.0
        %3628 = vmatprep.subr.mxu0 0.0
        %3629 = vmatpush1.msra.mxu0 0.0
        %3630 = vmatprep.subr.mxu0 0.0
        %3631 = vmatpush1.msra.mxu0 0.0
        %3632 = vmatprep.subr.mxu0 0.0
        %3633 = vmatpush1.msra.mxu0 0.0
        %3634 = vmatprep.subr.mxu0 0.0
        %3635 = vmatpush1.msra.mxu0 0.0
        %3636 = vmatprep.subr.mxu0 0.0
        %3637 = vmatpush1.msra.mxu0 0.0
        %3638 = vmatprep.subr.mxu0 0.0
        %3639 = vmatpush1.msra.mxu0 0.0
        %3640 = vmatprep.subr.mxu0 0.0
        %3641 = vmatpush1.msra.mxu0 0.0
        %3642 = vmatprep.subr.mxu0 0.0
        %3643 = vmatpush1.msra.mxu0 0.0
        %3644 = vmatprep.subr.mxu0 0.0
        %3645 = vmatpush1.msra.mxu0 0.0
        %3646 = vmatprep.subr.mxu0 0.0
        %3647 = vmatpush1.msra.mxu0 0.0
        %3648 = vmatprep.subr.mxu0 0.0
        %3649 = vmatpush1.msra.mxu0 0.0
        %3650 = vmatprep.subr.mxu0 0.0
        %3651 = vmatpush1.msra.mxu0 0.0
        %3652 = vmatprep.subr.mxu0 0.0
        %3653 = vmatpush1.msra.mxu0 %v627
        %3654 = vmatprep.subr.mxu0 0.0
        %3655 = vmatpush1.msra.mxu0 %v621
        %3656 = vmatprep.subr.mxu0 0.0
        %3657 = vmatpush2.msra.mxu0 0.0
        %3658 = vmatprep.subr.mxu0 0.0
        %3659 = vmatpush2.msra.mxu0 0.0
        %3660 = vmatprep.subr.mxu0 0.0
        %3661 = vmatpush2.msra.mxu0 0.0
        %3662 = vmatprep.subr.mxu0 0.0
        %3663 = vmatpush2.msra.mxu0 0.0
        %3664 = vmatprep.subr.mxu0 0.0
        %3665 = vmatpush2.msra.mxu0 0.0
        %3666 = vmatprep.subr.mxu0 0.0
        %3667 = vmatpush2.msra.mxu0 0.0
        %3668 = vmatprep.subr.mxu0 0.0
        %3669 = vmatpush2.msra.mxu0 0.0
        %3670 = vmatprep.subr.mxu0 0.0
        %3671 = vmatpush2.msra.mxu0 0.0
        %3672 = vmatprep.subr.mxu0 0.0
        %3673 = vmatpush2.msra.mxu0 0.0
        %3674 = vmatprep.subr.mxu0 0.0
        %3675 = vmatpush2.msra.mxu0 0.0
        %3676 = vmatprep.subr.mxu0 0.0
        %3677 = vmatpush2.msra.mxu0 0.0
        %3678 = vmatprep.subr.mxu0 0.0
        %3679 = vmatpush2.msra.mxu0 0.0
        %3680 = vmatprep.subr.mxu0 0.0
        %3681 = vmatpush2.msra.mxu0 0.0
        %3682 = vmatprep.subr.mxu0 0.0
        %3683 = vmatpush2.msra.mxu0 0.0
        %3684 = vmatprep.subr.mxu0 0.0
        %3685 = vmatpush2.msra.mxu0 0.0
        %3686 = vmatprep.subr.mxu0 0.0
        %3687 = vmatpush2.msra.mxu0 0.0
        %3688 = vmatprep.mubr.f32.mxu0 0.0
        %3689 = vmatmul.mubr.f32.gmra.mxu0 %v3619
        %v3690 = vpop.f32.mrf.mxu0
        %v3691 = vadd.f32 0.0, %v3690
        %v3692 = vpop.f32.mrf.mxu0
        %3693 = vmatprep.mubr.f32.mxu0 0.0
        %3694 = vmatmul.mubr.f32.gmra.mxu0 %v3622
        %v3695 = vpop.f32.mrf.mxu0
        %v3696 = vadd.f32 0.0, %v3695
        %v3697 = vpop.f32.mrf.mxu0
        %3698 = vdwg.mxu0
        %v3700 = vsel %vm1212, %v3035, 0
        %v3703 = vsel %vm1212, %v3036, 0
        %3705 = vmatprep.subr.mxu0 0.0
        %3706 = vmatpush1.msra.mxu0 0.0
        %3707 = vmatprep.subr.mxu0 0.0
        %3708 = vmatpush1.msra.mxu0 0.0
        %3709 = vmatprep.subr.mxu0 0.0
        %3710 = vmatpush1.msra.mxu0 0.0
        %3711 = vmatprep.subr.mxu0 0.0
        %3712 = vmatpush1.msra.mxu0 0.0
        %3713 = vmatprep.subr.mxu0 0.0
        %3714 = vmatpush1.msra.mxu0 0.0
        %3715 = vmatprep.subr.mxu0 0.0
        %3716 = vmatpush1.msra.mxu0 0.0
        %3717 = vmatprep.subr.mxu0 0.0
        %3718 = vmatpush1.msra.mxu0 0.0
        %3719 = vmatprep.subr.mxu0 0.0
        %3720 = vmatpush1.msra.mxu0 0.0
        %3721 = vmatprep.subr.mxu0 0.0
        %3722 = vmatpush1.msra.mxu0 0.0
        %3723 = vmatprep.subr.mxu0 0.0
        %3724 = vmatpush1.msra.mxu0 0.0
        %3725 = vmatprep.subr.mxu0 0.0
        %3726 = vmatpush1.msra.mxu0 0.0
        %3727 = vmatprep.subr.mxu0 0.0
        %3728 = vmatpush1.msra.mxu0 0.0
        %3729 = vmatprep.subr.mxu0 0.0
        %3730 = vmatpush1.msra.mxu0 0.0
        %3731 = vmatprep.subr.mxu0 0.0
        %3732 = vmatpush1.msra.mxu0 0.0
        %3733 = vmatprep.subr.mxu0 0.0
        %3734 = vmatpush1.msra.mxu0 %v639
        %3735 = vmatprep.subr.mxu0 0.0
        %3736 = vmatpush1.msra.mxu0 %v633
        %3737 = vmatprep.subr.mxu0 0.0
        %3738 = vmatpush2.msra.mxu0 0.0
        %3739 = vmatprep.subr.mxu0 0.0
        %3740 = vmatpush2.msra.mxu0 0.0
        %3741 = vmatprep.subr.mxu0 0.0
        %3742 = vmatpush2.msra.mxu0 0.0
        %3743 = vmatprep.subr.mxu0 0.0
        %3744 = vmatpush2.msra.mxu0 0.0
        %3745 = vmatprep.subr.mxu0 0.0
        %3746 = vmatpush2.msra.mxu0 0.0
        %3747 = vmatprep.subr.mxu0 0.0
        %3748 = vmatpush2.msra.mxu0 0.0
        %3749 = vmatprep.subr.mxu0 0.0
        %3750 = vmatpush2.msra.mxu0 0.0
        %3751 = vmatprep.subr.mxu0 0.0
        %3752 = vmatpush2.msra.mxu0 0.0
        %3753 = vmatprep.subr.mxu0 0.0
        %3754 = vmatpush2.msra.mxu0 0.0
        %3755 = vmatprep.subr.mxu0 0.0
        %3756 = vmatpush2.msra.mxu0 0.0
        %3757 = vmatprep.subr.mxu0 0.0
        %3758 = vmatpush2.msra.mxu0 0.0
        %3759 = vmatprep.subr.mxu0 0.0
        %3760 = vmatpush2.msra.mxu0 0.0
        %3761 = vmatprep.subr.mxu0 0.0
        %3762 = vmatpush2.msra.mxu0 0.0
        %3763 = vmatprep.subr.mxu0 0.0
        %3764 = vmatpush2.msra.mxu0 0.0
        %3765 = vmatprep.subr.mxu0 0.0
        %3766 = vmatpush2.msra.mxu0 0.0
        %3767 = vmatprep.subr.mxu0 0.0
        %3768 = vmatpush2.msra.mxu0 0.0
        %3769 = vmatprep.mubr.f32.mxu0 0.0
        %3770 = vmatmul.mubr.f32.gmra.mxu0 %v3700
        %v3771 = vpop.f32.mrf.mxu0
        %v3772 = vadd.f32 0.0, %v3771
        %v3773 = vpop.f32.mrf.mxu0
        %3774 = vmatprep.mubr.f32.mxu0 0.0
        %3775 = vmatmul.mubr.f32.gmra.mxu0 %v3703
        %v3776 = vpop.f32.mrf.mxu0
        %v3777 = vadd.f32 0.0, %v3776
        %v3778 = vpop.f32.mrf.mxu0
        %3779 = vdwg.mxu0
        %v3781 = vsel %vm1212, %v3037, 0
        %v3784 = vsel %vm1212, %v3038, 0
        %3786 = vmatprep.subr.mxu0 0.0
        %3787 = vmatpush1.msra.mxu0 0.0
        %3788 = vmatprep.subr.mxu0 0.0
        %3789 = vmatpush1.msra.mxu0 0.0
        %3790 = vmatprep.subr.mxu0 0.0
        %3791 = vmatpush1.msra.mxu0 0.0
        %3792 = vmatprep.subr.mxu0 0.0
        %3793 = vmatpush1.msra.mxu0 0.0
        %3794 = vmatprep.subr.mxu0 0.0
        %3795 = vmatpush1.msra.mxu0 0.0
        %3796 = vmatprep.subr.mxu0 0.0
        %3797 = vmatpush1.msra.mxu0 0.0
        %3798 = vmatprep.subr.mxu0 0.0
        %3799 = vmatpush1.msra.mxu0 0.0
        %3800 = vmatprep.subr.mxu0 0.0
        %3801 = vmatpush1.msra.mxu0 0.0
        %3802 = vmatprep.subr.mxu0 0.0
        %3803 = vmatpush1.msra.mxu0 0.0
        %3804 = vmatprep.subr.mxu0 0.0
        %3805 = vmatpush1.msra.mxu0 0.0
        %3806 = vmatprep.subr.mxu0 0.0
        %3807 = vmatpush1.msra.mxu0 0.0
        %3808 = vmatprep.subr.mxu0 0.0
        %3809 = vmatpush1.msra.mxu0 0.0
        %3810 = vmatprep.subr.mxu0 0.0
        %3811 = vmatpush1.msra.mxu0 0.0
        %3812 = vmatprep.subr.mxu0 0.0
        %3813 = vmatpush1.msra.mxu0 0.0
        %3814 = vmatprep.subr.mxu0 0.0
        %3815 = vmatpush1.msra.mxu0 %v651
        %3816 = vmatprep.subr.mxu0 0.0
        %3817 = vmatpush1.msra.mxu0 %v645
        %3818 = vmatprep.subr.mxu0 0.0
        %3819 = vmatpush2.msra.mxu0 0.0
        %3820 = vmatprep.subr.mxu0 0.0
        %3821 = vmatpush2.msra.mxu0 0.0
        %3822 = vmatprep.subr.mxu0 0.0
        %3823 = vmatpush2.msra.mxu0 0.0
        %3824 = vmatprep.subr.mxu0 0.0
        %3825 = vmatpush2.msra.mxu0 0.0
        %3826 = vmatprep.subr.mxu0 0.0
        %3827 = vmatpush2.msra.mxu0 0.0
        %3828 = vmatprep.subr.mxu0 0.0
        %3829 = vmatpush2.msra.mxu0 0.0
        %3830 = vmatprep.subr.mxu0 0.0
        %3831 = vmatpush2.msra.mxu0 0.0
        %3832 = vmatprep.subr.mxu0 0.0
        %3833 = vmatpush2.msra.mxu0 0.0
        %3834 = vmatprep.subr.mxu0 0.0
        %3835 = vmatpush2.msra.mxu0 0.0
        %3836 = vmatprep.subr.mxu0 0.0
        %3837 = vmatpush2.msra.mxu0 0.0
        %3838 = vmatprep.subr.mxu0 0.0
        %3839 = vmatpush2.msra.mxu0 0.0
        %3840 = vmatprep.subr.mxu0 0.0
        %3841 = vmatpush2.msra.mxu0 0.0
        %3842 = vmatprep.subr.mxu0 0.0
        %3843 = vmatpush2.msra.mxu0 0.0
        %3844 = vmatprep.subr.mxu0 0.0
        %3845 = vmatpush2.msra.mxu0 0.0
        %3846 = vmatprep.subr.mxu0 0.0
        %3847 = vmatpush2.msra.mxu0 0.0
        %3848 = vmatprep.subr.mxu0 0.0
        %3849 = vmatpush2.msra.mxu0 0.0
        %3850 = vmatprep.mubr.f32.mxu0 0.0
        %3851 = vmatmul.mubr.f32.gmra.mxu0 %v3781
        %v3852 = vpop.f32.mrf.mxu0
        %v3853 = vadd.f32 0.0, %v3852
        %v3854 = vpop.f32.mrf.mxu0
        %3855 = vmatprep.mubr.f32.mxu0 0.0
        %3856 = vmatmul.mubr.f32.gmra.mxu0 %v3784
        %v3857 = vpop.f32.mrf.mxu0
        %v3858 = vadd.f32 0.0, %v3857
        %v3859 = vpop.f32.mrf.mxu0
        %3860 = vdwg.mxu0
        %v3862 = vsel %vm1212, %v3039, 0
        %v3865 = vsel %vm1212, %v3040, 0
        %3867 = vmatprep.subr.mxu0 0.0
        %3868 = vmatpush1.msra.mxu0 0.0
        %3869 = vmatprep.subr.mxu0 0.0
        %3870 = vmatpush1.msra.mxu0 0.0
        %3871 = vmatprep.subr.mxu0 0.0
        %3872 = vmatpush1.msra.mxu0 0.0
        %3873 = vmatprep.subr.mxu0 0.0
        %3874 = vmatpush1.msra.mxu0 0.0
        %3875 = vmatprep.subr.mxu0 0.0
        %3876 = vmatpush1.msra.mxu0 0.0
        %3877 = vmatprep.subr.mxu0 0.0
        %3878 = vmatpush1.msra.mxu0 0.0
        %3879 = vmatprep.subr.mxu0 0.0
        %3880 = vmatpush1.msra.mxu0 0.0
        %3881 = vmatprep.subr.mxu0 0.0
        %3882 = vmatpush1.msra.mxu0 0.0
        %3883 = vmatprep.subr.mxu0 0.0
        %3884 = vmatpush1.msra.mxu0 0.0
        %3885 = vmatprep.subr.mxu0 0.0
        %3886 = vmatpush1.msra.mxu0 0.0
        %3887 = vmatprep.subr.mxu0 0.0
        %3888 = vmatpush1.msra.mxu0 0.0
        %3889 = vmatprep.subr.mxu0 0.0
        %3890 = vmatpush1.msra.mxu0 0.0
        %3891 = vmatprep.subr.mxu0 0.0
        %3892 = vmatpush1.msra.mxu0 0.0
        %3893 = vmatprep.subr.mxu0 0.0
        %3894 = vmatpush1.msra.mxu0 0.0
        %3895 = vmatprep.subr.mxu0 0.0
        %3896 = vmatpush1.msra.mxu0 %v663
        %3897 = vmatprep.subr.mxu0 0.0
        %3898 = vmatpush1.msra.mxu0 %v657
        %3899 = vmatprep.subr.mxu0 0.0
        %3900 = vmatpush2.msra.mxu0 0.0
        %3901 = vmatprep.subr.mxu0 0.0
        %3902 = vmatpush2.msra.mxu0 0.0
        %3903 = vmatprep.subr.mxu0 0.0
        %3904 = vmatpush2.msra.mxu0 0.0
        %3905 = vmatprep.subr.mxu0 0.0
        %3906 = vmatpush2.msra.mxu0 0.0
        %3907 = vmatprep.subr.mxu0 0.0
        %3908 = vmatpush2.msra.mxu0 0.0
        %3909 = vmatprep.subr.mxu0 0.0
        %3910 = vmatpush2.msra.mxu0 0.0
        %3911 = vmatprep.subr.mxu0 0.0
        %3912 = vmatpush2.msra.mxu0 0.0
        %3913 = vmatprep.subr.mxu0 0.0
        %3914 = vmatpush2.msra.mxu0 0.0
        %3915 = vmatprep.subr.mxu0 0.0
        %3916 = vmatpush2.msra.mxu0 0.0
        %3917 = vmatprep.subr.mxu0 0.0
        %3918 = vmatpush2.msra.mxu0 0.0
        %3919 = vmatprep.subr.mxu0 0.0
        %3920 = vmatpush2.msra.mxu0 0.0
        %3921 = vmatprep.subr.mxu0 0.0
        %3922 = vmatpush2.msra.mxu0 0.0
        %3923 = vmatprep.subr.mxu0 0.0
        %3924 = vmatpush2.msra.mxu0 0.0
        %3925 = vmatprep.subr.mxu0 0.0
        %3926 = vmatpush2.msra.mxu0 0.0
        %3927 = vmatprep.subr.mxu0 0.0
        %3928 = vmatpush2.msra.mxu0 0.0
        %3929 = vmatprep.subr.mxu0 0.0
        %3930 = vmatpush2.msra.mxu0 0.0
        %3931 = vmatprep.mubr.f32.mxu0 0.0
        %3932 = vmatmul.mubr.f32.gmra.mxu0 %v3862
        %v3933 = vpop.f32.mrf.mxu0
        %v3934 = vadd.f32 0.0, %v3933
        %v3935 = vpop.f32.mrf.mxu0
        %3936 = vmatprep.mubr.f32.mxu0 0.0
        %3937 = vmatmul.mubr.f32.gmra.mxu0 %v3865
        %v3938 = vpop.f32.mrf.mxu0
        %v3939 = vadd.f32 0.0, %v3938
        %v3940 = vpop.f32.mrf.mxu0
        %3941 = vdwg.mxu0
        %v3943 = vsel %vm1212, %v3041, 0
        %v3946 = vsel %vm1212, %v3042, 0
        %3948 = vmatprep.subr.mxu0 0.0
        %3949 = vmatpush1.msra.mxu0 0.0
        %3950 = vmatprep.subr.mxu0 0.0
        %3951 = vmatpush1.msra.mxu0 0.0
        %3952 = vmatprep.subr.mxu0 0.0
        %3953 = vmatpush1.msra.mxu0 0.0
        %3954 = vmatprep.subr.mxu0 0.0
        %3955 = vmatpush1.msra.mxu0 0.0
        %3956 = vmatprep.subr.mxu0 0.0
        %3957 = vmatpush1.msra.mxu0 0.0
        %3958 = vmatprep.subr.mxu0 0.0
        %3959 = vmatpush1.msra.mxu0 0.0
        %3960 = vmatprep.subr.mxu0 0.0
        %3961 = vmatpush1.msra.mxu0 0.0
        %3962 = vmatprep.subr.mxu0 0.0
        %3963 = vmatpush1.msra.mxu0 0.0
        %3964 = vmatprep.subr.mxu0 0.0
        %3965 = vmatpush1.msra.mxu0 0.0
        %3966 = vmatprep.subr.mxu0 0.0
        %3967 = vmatpush1.msra.mxu0 0.0
        %3968 = vmatprep.subr.mxu0 0.0
        %3969 = vmatpush1.msra.mxu0 0.0
        %3970 = vmatprep.subr.mxu0 0.0
        %3971 = vmatpush1.msra.mxu0 0.0
        %3972 = vmatprep.subr.mxu0 0.0
        %3973 = vmatpush1.msra.mxu0 0.0
        %3974 = vmatprep.subr.mxu0 0.0
        %3975 = vmatpush1.msra.mxu0 0.0
        %3976 = vmatprep.subr.mxu0 0.0
        %3977 = vmatpush1.msra.mxu0 %v675
        %3978 = vmatprep.subr.mxu0 0.0
        %3979 = vmatpush1.msra.mxu0 %v669
        %3980 = vmatprep.subr.mxu0 0.0
        %3981 = vmatpush2.msra.mxu0 0.0
        %3982 = vmatprep.subr.mxu0 0.0
        %3983 = vmatpush2.msra.mxu0 0.0
        %3984 = vmatprep.subr.mxu0 0.0
        %3985 = vmatpush2.msra.mxu0 0.0
        %3986 = vmatprep.subr.mxu0 0.0
        %3987 = vmatpush2.msra.mxu0 0.0
        %3988 = vmatprep.subr.mxu0 0.0
        %3989 = vmatpush2.msra.mxu0 0.0
        %3990 = vmatprep.subr.mxu0 0.0
        %3991 = vmatpush2.msra.mxu0 0.0
        %3992 = vmatprep.subr.mxu0 0.0
        %3993 = vmatpush2.msra.mxu0 0.0
        %3994 = vmatprep.subr.mxu0 0.0
        %3995 = vmatpush2.msra.mxu0 0.0
        %3996 = vmatprep.subr.mxu0 0.0
        %3997 = vmatpush2.msra.mxu0 0.0
        %3998 = vmatprep.subr.mxu0 0.0
        %3999 = vmatpush2.msra.mxu0 0.0
        %4000 = vmatprep.subr.mxu0 0.0
        %4001 = vmatpush2.msra.mxu0 0.0
        %4002 = vmatprep.subr.mxu0 0.0
        %4003 = vmatpush2.msra.mxu0 0.0
        %4004 = vmatprep.subr.mxu0 0.0
        %4005 = vmatpush2.msra.mxu0 0.0
        %4006 = vmatprep.subr.mxu0 0.0
        %4007 = vmatpush2.msra.mxu0 0.0
        %4008 = vmatprep.subr.mxu0 0.0
        %4009 = vmatpush2.msra.mxu0 0.0
        %4010 = vmatprep.subr.mxu0 0.0
        %4011 = vmatpush2.msra.mxu0 0.0
        %4012 = vmatprep.mubr.f32.mxu0 0.0
        %4013 = vmatmul.mubr.f32.gmra.mxu0 %v3943
        %v4014 = vpop.f32.mrf.mxu0
        %v4015 = vadd.f32 0.0, %v4014
        %v4016 = vpop.f32.mrf.mxu0
        %4017 = vmatprep.mubr.f32.mxu0 0.0
        %4018 = vmatmul.mubr.f32.gmra.mxu0 %v3946
        %v4019 = vpop.f32.mrf.mxu0
        %v4020 = vadd.f32 0.0, %v4019
        %v4021 = vpop.f32.mrf.mxu0
        %4022 = vdwg.mxu0
        %v4024 = vsel %vm1212, %v3043, 0
        %v4027 = vsel %vm1212, %v3044, 0
        %4029 = vmatprep.subr.mxu0 0.0
        %4030 = vmatpush1.msra.mxu0 0.0
        %4031 = vmatprep.subr.mxu0 0.0
        %4032 = vmatpush1.msra.mxu0 0.0
        %4033 = vmatprep.subr.mxu0 0.0
        %4034 = vmatpush1.msra.mxu0 0.0
        %4035 = vmatprep.subr.mxu0 0.0
        %4036 = vmatpush1.msra.mxu0 0.0
        %4037 = vmatprep.subr.mxu0 0.0
        %4038 = vmatpush1.msra.mxu0 0.0
        %4039 = vmatprep.subr.mxu0 0.0
        %4040 = vmatpush1.msra.mxu0 0.0
        %4041 = vmatprep.subr.mxu0 0.0
        %4042 = vmatpush1.msra.mxu0 0.0
        %4043 = vmatprep.subr.mxu0 0.0
        %4044 = vmatpush1.msra.mxu0 0.0
        %4045 = vmatprep.subr.mxu0 0.0
        %4046 = vmatpush1.msra.mxu0 0.0
        %4047 = vmatprep.subr.mxu0 0.0
        %4048 = vmatpush1.msra.mxu0 0.0
        %4049 = vmatprep.subr.mxu0 0.0
        %4050 = vmatpush1.msra.mxu0 0.0
        %4051 = vmatprep.subr.mxu0 0.0
        %4052 = vmatpush1.msra.mxu0 0.0
        %4053 = vmatprep.subr.mxu0 0.0
        %4054 = vmatpush1.msra.mxu0 0.0
        %4055 = vmatprep.subr.mxu0 0.0
        %4056 = vmatpush1.msra.mxu0 0.0
        %4057 = vmatprep.subr.mxu0 0.0
        %4058 = vmatpush1.msra.mxu0 %v687
        %4059 = vmatprep.subr.mxu0 0.0
        %4060 = vmatpush1.msra.mxu0 %v681
        %4061 = vmatprep.subr.mxu0 0.0
        %4062 = vmatpush2.msra.mxu0 0.0
        %4063 = vmatprep.subr.mxu0 0.0
        %4064 = vmatpush2.msra.mxu0 0.0
        %4065 = vmatprep.subr.mxu0 0.0
        %4066 = vmatpush2.msra.mxu0 0.0
        %4067 = vmatprep.subr.mxu0 0.0
        %4068 = vmatpush2.msra.mxu0 0.0
        %4069 = vmatprep.subr.mxu0 0.0
        %4070 = vmatpush2.msra.mxu0 0.0
        %4071 = vmatprep.subr.mxu0 0.0
        %4072 = vmatpush2.msra.mxu0 0.0
        %4073 = vmatprep.subr.mxu0 0.0
        %4074 = vmatpush2.msra.mxu0 0.0
        %4075 = vmatprep.subr.mxu0 0.0
        %4076 = vmatpush2.msra.mxu0 0.0
        %4077 = vmatprep.subr.mxu0 0.0
        %4078 = vmatpush2.msra.mxu0 0.0
        %4079 = vmatprep.subr.mxu0 0.0
        %4080 = vmatpush2.msra.mxu0 0.0
        %4081 = vmatprep.subr.mxu0 0.0
        %4082 = vmatpush2.msra.mxu0 0.0
        %4083 = vmatprep.subr.mxu0 0.0
        %4084 = vmatpush2.msra.mxu0 0.0
        %4085 = vmatprep.subr.mxu0 0.0
        %4086 = vmatpush2.msra.mxu0 0.0
        %4087 = vmatprep.subr.mxu0 0.0
        %4088 = vmatpush2.msra.mxu0 0.0
        %4089 = vmatprep.subr.mxu0 0.0
        %4090 = vmatpush2.msra.mxu0 0.0
        %4091 = vmatprep.subr.mxu0 0.0
        %4092 = vmatpush2.msra.mxu0 0.0
        %4093 = vmatprep.mubr.f32.mxu0 0.0
        %4094 = vmatmul.mubr.f32.gmra.mxu0 %v4024
        %v4095 = vpop.f32.mrf.mxu0
        %v4096 = vadd.f32 0.0, %v4095
        %v4097 = vpop.f32.mrf.mxu0
        %4098 = vmatprep.mubr.f32.mxu0 0.0
        %4099 = vmatmul.mubr.f32.gmra.mxu0 %v4027
        %v4100 = vpop.f32.mrf.mxu0
        %v4101 = vadd.f32 0.0, %v4100
        %v4102 = vpop.f32.mrf.mxu0
        %4103 = vdwg.mxu0
        %v4105 = vsel %vm1212, %v3045, 0
        %v4108 = vsel %vm1212, %v3046, 0
        %4110 = vmatprep.subr.mxu0 0.0
        %4111 = vmatpush1.msra.mxu0 0.0
        %4112 = vmatprep.subr.mxu0 0.0
        %4113 = vmatpush1.msra.mxu0 0.0
        %4114 = vmatprep.subr.mxu0 0.0
        %4115 = vmatpush1.msra.mxu0 0.0
        %4116 = vmatprep.subr.mxu0 0.0
        %4117 = vmatpush1.msra.mxu0 0.0
        %4118 = vmatprep.subr.mxu0 0.0
        %4119 = vmatpush1.msra.mxu0 0.0
        %4120 = vmatprep.subr.mxu0 0.0
        %4121 = vmatpush1.msra.mxu0 0.0
        %4122 = vmatprep.subr.mxu0 0.0
        %4123 = vmatpush1.msra.mxu0 0.0
        %4124 = vmatprep.subr.mxu0 0.0
        %4125 = vmatpush1.msra.mxu0 0.0
        %4126 = vmatprep.subr.mxu0 0.0
        %4127 = vmatpush1.msra.mxu0 0.0
        %4128 = vmatprep.subr.mxu0 0.0
        %4129 = vmatpush1.msra.mxu0 0.0
        %4130 = vmatprep.subr.mxu0 0.0
        %4131 = vmatpush1.msra.mxu0 0.0
        %4132 = vmatprep.subr.mxu0 0.0
        %4133 = vmatpush1.msra.mxu0 0.0
        %4134 = vmatprep.subr.mxu0 0.0
        %4135 = vmatpush1.msra.mxu0 0.0
        %4136 = vmatprep.subr.mxu0 0.0
        %4137 = vmatpush1.msra.mxu0 0.0
        %4138 = vmatprep.subr.mxu0 0.0
        %4139 = vmatpush1.msra.mxu0 %v699
        %4140 = vmatprep.subr.mxu0 0.0
        %4141 = vmatpush1.msra.mxu0 %v693
        %4142 = vmatprep.subr.mxu0 0.0
        %4143 = vmatpush2.msra.mxu0 0.0
        %4144 = vmatprep.subr.mxu0 0.0
        %4145 = vmatpush2.msra.mxu0 0.0
        %4146 = vmatprep.subr.mxu0 0.0
        %4147 = vmatpush2.msra.mxu0 0.0
        %4148 = vmatprep.subr.mxu0 0.0
        %4149 = vmatpush2.msra.mxu0 0.0
        %4150 = vmatprep.subr.mxu0 0.0
        %4151 = vmatpush2.msra.mxu0 0.0
        %4152 = vmatprep.subr.mxu0 0.0
        %4153 = vmatpush2.msra.mxu0 0.0
        %4154 = vmatprep.subr.mxu0 0.0
        %4155 = vmatpush2.msra.mxu0 0.0
        %4156 = vmatprep.subr.mxu0 0.0
        %4157 = vmatpush2.msra.mxu0 0.0
        %4158 = vmatprep.subr.mxu0 0.0
        %4159 = vmatpush2.msra.mxu0 0.0
        %4160 = vmatprep.subr.mxu0 0.0
        %4161 = vmatpush2.msra.mxu0 0.0
        %4162 = vmatprep.subr.mxu0 0.0
        %4163 = vmatpush2.msra.mxu0 0.0
        %4164 = vmatprep.subr.mxu0 0.0
        %4165 = vmatpush2.msra.mxu0 0.0
        %4166 = vmatprep.subr.mxu0 0.0
        %4167 = vmatpush2.msra.mxu0 0.0
        %4168 = vmatprep.subr.mxu0 0.0
        %4169 = vmatpush2.msra.mxu0 0.0
        %4170 = vmatprep.subr.mxu0 0.0
        %4171 = vmatpush2.msra.mxu0 0.0
        %4172 = vmatprep.subr.mxu0 0.0
        %4173 = vmatpush2.msra.mxu0 0.0
        %4174 = vmatprep.mubr.f32.mxu0 0.0
        %4175 = vmatmul.mubr.f32.gmra.mxu0 %v4105
        %v4176 = vpop.f32.mrf.mxu0
        %v4177 = vadd.f32 0.0, %v4176
        %v4178 = vpop.f32.mrf.mxu0
        %4179 = vmatprep.mubr.f32.mxu0 0.0
        %4180 = vmatmul.mubr.f32.gmra.mxu0 %v4108
        %v4181 = vpop.f32.mrf.mxu0
        %v4182 = vadd.f32 0.0, %v4181
        %v4183 = vpop.f32.mrf.mxu0
        %4184 = vdwg.mxu0
        %v4186 = vsel %vm1212, %v3047, 0
        %v4189 = vsel %vm1212, %v3048, 0
        %4191 = vmatprep.subr.mxu0 0.0
        %4192 = vmatpush1.msra.mxu0 0.0
        %4193 = vmatprep.subr.mxu0 0.0
        %4194 = vmatpush1.msra.mxu0 0.0
        %4195 = vmatprep.subr.mxu0 0.0
        %4196 = vmatpush1.msra.mxu0 0.0
        %4197 = vmatprep.subr.mxu0 0.0
        %4198 = vmatpush1.msra.mxu0 0.0
        %4199 = vmatprep.subr.mxu0 0.0
        %4200 = vmatpush1.msra.mxu0 0.0
        %4201 = vmatprep.subr.mxu0 0.0
        %4202 = vmatpush1.msra.mxu0 0.0
        %4203 = vmatprep.subr.mxu0 0.0
        %4204 = vmatpush1.msra.mxu0 0.0
        %4205 = vmatprep.subr.mxu0 0.0
        %4206 = vmatpush1.msra.mxu0 0.0
        %4207 = vmatprep.subr.mxu0 0.0
        %4208 = vmatpush1.msra.mxu0 0.0
        %4209 = vmatprep.subr.mxu0 0.0
        %4210 = vmatpush1.msra.mxu0 0.0
        %4211 = vmatprep.subr.mxu0 0.0
        %4212 = vmatpush1.msra.mxu0 0.0
        %4213 = vmatprep.subr.mxu0 0.0
        %4214 = vmatpush1.msra.mxu0 0.0
        %4215 = vmatprep.subr.mxu0 0.0
        %4216 = vmatpush1.msra.mxu0 0.0
        %4217 = vmatprep.subr.mxu0 0.0
        %4218 = vmatpush1.msra.mxu0 0.0
        %4219 = vmatprep.subr.mxu0 0.0
        %4220 = vmatpush1.msra.mxu0 %v711
        %4221 = vmatprep.subr.mxu0 0.0
        %4222 = vmatpush1.msra.mxu0 %v705
        %4223 = vmatprep.subr.mxu0 0.0
        %4224 = vmatpush2.msra.mxu0 0.0
        %4225 = vmatprep.subr.mxu0 0.0
        %4226 = vmatpush2.msra.mxu0 0.0
        %4227 = vmatprep.subr.mxu0 0.0
        %4228 = vmatpush2.msra.mxu0 0.0
        %4229 = vmatprep.subr.mxu0 0.0
        %4230 = vmatpush2.msra.mxu0 0.0
        %4231 = vmatprep.subr.mxu0 0.0
        %4232 = vmatpush2.msra.mxu0 0.0
        %4233 = vmatprep.subr.mxu0 0.0
        %4234 = vmatpush2.msra.mxu0 0.0
        %4235 = vmatprep.subr.mxu0 0.0
        %4236 = vmatpush2.msra.mxu0 0.0
        %4237 = vmatprep.subr.mxu0 0.0
        %4238 = vmatpush2.msra.mxu0 0.0
        %4239 = vmatprep.subr.mxu0 0.0
        %4240 = vmatpush2.msra.mxu0 0.0
        %4241 = vmatprep.subr.mxu0 0.0
        %4242 = vmatpush2.msra.mxu0 0.0
        %4243 = vmatprep.subr.mxu0 0.0
        %4244 = vmatpush2.msra.mxu0 0.0
        %4245 = vmatprep.subr.mxu0 0.0
        %4246 = vmatpush2.msra.mxu0 0.0
        %4247 = vmatprep.subr.mxu0 0.0
        %4248 = vmatpush2.msra.mxu0 0.0
        %4249 = vmatprep.subr.mxu0 0.0
        %4250 = vmatpush2.msra.mxu0 0.0
        %4251 = vmatprep.subr.mxu0 0.0
        %4252 = vmatpush2.msra.mxu0 0.0
        %4253 = vmatprep.subr.mxu0 0.0
        %4254 = vmatpush2.msra.mxu0 0.0
        %4255 = vmatprep.mubr.f32.mxu0 0.0
        %4256 = vmatmul.mubr.f32.gmra.mxu0 %v4186
        %v4257 = vpop.f32.mrf.mxu0
        %v4258 = vadd.f32 0.0, %v4257
        %v4259 = vpop.f32.mrf.mxu0
        %4260 = vmatprep.mubr.f32.mxu0 0.0
        %4261 = vmatmul.mubr.f32.gmra.mxu0 %v4189
        %v4262 = vpop.f32.mrf.mxu0
        %v4263 = vadd.f32 0.0, %v4262
        %v4264 = vpop.f32.mrf.mxu0
        %4265 = vdwg.mxu0
        %v4267 = vsel %vm1212, %v3049, 0
        %v4270 = vsel %vm1212, %v3050, 0
        %4272 = vmatprep.subr.mxu0 0.0
        %4273 = vmatpush1.msra.mxu0 0.0
        %4274 = vmatprep.subr.mxu0 0.0
        %4275 = vmatpush1.msra.mxu0 0.0
        %4276 = vmatprep.subr.mxu0 0.0
        %4277 = vmatpush1.msra.mxu0 0.0
        %4278 = vmatprep.subr.mxu0 0.0
        %4279 = vmatpush1.msra.mxu0 0.0
        %4280 = vmatprep.subr.mxu0 0.0
        %4281 = vmatpush1.msra.mxu0 0.0
        %4282 = vmatprep.subr.mxu0 0.0
        %4283 = vmatpush1.msra.mxu0 0.0
        %4284 = vmatprep.subr.mxu0 0.0
        %4285 = vmatpush1.msra.mxu0 0.0
        %4286 = vmatprep.subr.mxu0 0.0
        %4287 = vmatpush1.msra.mxu0 0.0
        %4288 = vmatprep.subr.mxu0 0.0
        %4289 = vmatpush1.msra.mxu0 0.0
        %4290 = vmatprep.subr.mxu0 0.0
        %4291 = vmatpush1.msra.mxu0 0.0
        %4292 = vmatprep.subr.mxu0 0.0
        %4293 = vmatpush1.msra.mxu0 0.0
        %4294 = vmatprep.subr.mxu0 0.0
        %4295 = vmatpush1.msra.mxu0 0.0
        %4296 = vmatprep.subr.mxu0 0.0
        %4297 = vmatpush1.msra.mxu0 0.0
        %4298 = vmatprep.subr.mxu0 0.0
        %4299 = vmatpush1.msra.mxu0 0.0
        %4300 = vmatprep.subr.mxu0 0.0
        %4301 = vmatpush1.msra.mxu0 %v723
        %4302 = vmatprep.subr.mxu0 0.0
        %4303 = vmatpush1.msra.mxu0 %v717
        %4304 = vmatprep.subr.mxu0 0.0
        %4305 = vmatpush2.msra.mxu0 0.0
        %4306 = vmatprep.subr.mxu0 0.0
        %4307 = vmatpush2.msra.mxu0 0.0
        %4308 = vmatprep.subr.mxu0 0.0
        %4309 = vmatpush2.msra.mxu0 0.0
        %4310 = vmatprep.subr.mxu0 0.0
        %4311 = vmatpush2.msra.mxu0 0.0
        %4312 = vmatprep.subr.mxu0 0.0
        %4313 = vmatpush2.msra.mxu0 0.0
        %4314 = vmatprep.subr.mxu0 0.0
        %4315 = vmatpush2.msra.mxu0 0.0
        %4316 = vmatprep.subr.mxu0 0.0
        %4317 = vmatpush2.msra.mxu0 0.0
        %4318 = vmatprep.subr.mxu0 0.0
        %4319 = vmatpush2.msra.mxu0 0.0
        %4320 = vmatprep.subr.mxu0 0.0
        %4321 = vmatpush2.msra.mxu0 0.0
        %4322 = vmatprep.subr.mxu0 0.0
        %4323 = vmatpush2.msra.mxu0 0.0
        %4324 = vmatprep.subr.mxu0 0.0
        %4325 = vmatpush2.msra.mxu0 0.0
        %4326 = vmatprep.subr.mxu0 0.0
        %4327 = vmatpush2.msra.mxu0 0.0
        %4328 = vmatprep.subr.mxu0 0.0
        %4329 = vmatpush2.msra.mxu0 0.0
        %4330 = vmatprep.subr.mxu0 0.0
        %4331 = vmatpush2.msra.mxu0 0.0
        %4332 = vmatprep.subr.mxu0 0.0
        %4333 = vmatpush2.msra.mxu0 0.0
        %4334 = vmatprep.subr.mxu0 0.0
        %4335 = vmatpush2.msra.mxu0 0.0
        %4336 = vmatprep.mubr.f32.mxu0 0.0
        %4337 = vmatmul.mubr.f32.gmra.mxu0 %v4267
        %v4338 = vpop.f32.mrf.mxu0
        %v4339 = vadd.f32 0.0, %v4338
        %v4340 = vpop.f32.mrf.mxu0
        %4341 = vmatprep.mubr.f32.mxu0 0.0
        %4342 = vmatmul.mubr.f32.gmra.mxu0 %v4270
        %v4343 = vpop.f32.mrf.mxu0
        %v4344 = vadd.f32 0.0, %v4343
        %v4345 = vpop.f32.mrf.mxu0
        %4346 = vdwg.mxu0
        %4347 = vrot.lane.b32.xlu0 %v929, 112
        %v4348 = vpop.permute.xlu0 %4347
        %4349 = vrot.lane.b32.xlu0 %v930, 112
        %v4350 = vpop.permute.xlu0 %4349
        %4351 = vrot.lane.b32.xlu0 %v1167, 48
        %v4352 = vpop.permute.xlu0 %4351
        %4353 = vrot.lane.b32.xlu0 %v1168, 48
        %v4354 = vpop.permute.xlu0 %4353
        %v4355 = vsel %vm1212, %v4348, 0
        %v4357 = vsel %vm1212, %v4350, 0
        %v4359 = vsel %vm1212, %v4352, 0
        %v4361 = vsel %vm1212, %v4354, 0
        %4363 = vmatprep.subr.mxu0 0.0
        %4364 = vmatpush1.xpose.msra.mxu0 0.0
        %4365 = vmatprep.subr.mxu0 0.0
        %4366 = vmatpush1.xpose.msra.mxu0 0.0
        %4367 = vmatprep.subr.mxu0 0.0
        %4368 = vmatpush1.xpose.msra.mxu0 0.0
        %4369 = vmatprep.subr.mxu0 0.0
        %4370 = vmatpush1.xpose.msra.mxu0 0.0
        %4371 = vmatprep.subr.mxu0 0.0
        %4372 = vmatpush1.xpose.msra.mxu0 0.0
        %4373 = vmatprep.subr.mxu0 0.0
        %4374 = vmatpush1.xpose.msra.mxu0 0.0
        %4375 = vmatprep.subr.mxu0 0.0
        %4376 = vmatpush1.xpose.msra.mxu0 0.0
        %4377 = vmatprep.subr.mxu0 0.0
        %4378 = vmatpush1.xpose.msra.mxu0 0.0
        %4379 = vmatprep.subr.mxu0 0.0
        %4380 = vmatpush1.xpose.msra.mxu0 0.0
        %4381 = vmatprep.subr.mxu0 0.0
        %4382 = vmatpush1.xpose.msra.mxu0 0.0
        %4383 = vmatprep.subr.mxu0 0.0
        %4384 = vmatpush1.xpose.msra.mxu0 0.0
        %4385 = vmatprep.subr.mxu0 0.0
        %4386 = vmatpush1.xpose.msra.mxu0 0.0
        %4387 = vmatprep.subr.mxu0 0.0
        %4388 = vmatpush1.xpose.msra.mxu0 0.0
        %4389 = vmatprep.subr.mxu0 0.0
        %4390 = vmatpush1.xpose.msra.mxu0 0.0
        %4391 = vmatprep.subr.mxu0 0.0
        %4392 = vmatpush1.xpose.msra.mxu0 %v4361
        %4393 = vmatprep.subr.mxu0 0.0
        %4394 = vmatpush1.xpose.msra.mxu0 %v4359
        %4395 = vmatprep.subr.mxu0 0.0
        %4396 = vmatpush2.xpose.msra.mxu0 0.0
        %4397 = vmatprep.subr.mxu0 0.0
        %4398 = vmatpush2.xpose.msra.mxu0 0.0
        %4399 = vmatprep.subr.mxu0 0.0
        %4400 = vmatpush2.xpose.msra.mxu0 0.0
        %4401 = vmatprep.subr.mxu0 0.0
        %4402 = vmatpush2.xpose.msra.mxu0 0.0
        %4403 = vmatprep.subr.mxu0 0.0
        %4404 = vmatpush2.xpose.msra.mxu0 0.0
        %4405 = vmatprep.subr.mxu0 0.0
        %4406 = vmatpush2.xpose.msra.mxu0 0.0
        %4407 = vmatprep.subr.mxu0 0.0
        %4408 = vmatpush2.xpose.msra.mxu0 0.0
        %4409 = vmatprep.subr.mxu0 0.0
        %4410 = vmatpush2.xpose.msra.mxu0 0.0
        %4411 = vmatprep.subr.mxu0 0.0
        %4412 = vmatpush2.xpose.msra.mxu0 0.0
        %4413 = vmatprep.subr.mxu0 0.0
        %4414 = vmatpush2.xpose.msra.mxu0 0.0
        %4415 = vmatprep.subr.mxu0 0.0
        %4416 = vmatpush2.xpose.msra.mxu0 0.0
        %4417 = vmatprep.subr.mxu0 0.0
        %4418 = vmatpush2.xpose.msra.mxu0 0.0
        %4419 = vmatprep.subr.mxu0 0.0
        %4420 = vmatpush2.xpose.msra.mxu0 0.0
        %4421 = vmatprep.subr.mxu0 0.0
        %4422 = vmatpush2.xpose.msra.mxu0 0.0
        %4423 = vmatprep.subr.mxu0 0.0
        %4424 = vmatpush2.xpose.msra.mxu0 0.0
        %4425 = vmatprep.subr.mxu0 0.0
        %4426 = vmatpush2.xpose.msra.mxu0 0.0
        %4427 = vmatprep.mubr.f32.mxu0 0.0
        %4428 = vmatmul.mubr.f32.gmra.mxu0 %v4355
        %v4429 = vpop.f32.mrf.mxu0
        %v4430 = vadd.f32 0.0, %v4429
        %v4431 = vpop.f32.mrf.mxu0
        %4432 = vmatprep.mubr.f32.mxu0 0.0
        %4433 = vmatmul.mubr.f32.gmra.mxu0 %v4357
        %v4434 = vpop.f32.mrf.mxu0
        %v4435 = vadd.f32 0.0, %v4434
        %v4436 = vpop.f32.mrf.mxu0
        %4437 = vdwg.mxu0
        %4438 = vrot.lane.b32.xlu0 %v931, 112
        %v4439 = vpop.permute.xlu0 %4438
        %4440 = vrot.lane.b32.xlu0 %v932, 112
        %v4441 = vpop.permute.xlu0 %4440
        %4442 = vrot.lane.b32.xlu0 %v1169, 48
        %v4443 = vpop.permute.xlu0 %4442
        %4444 = vrot.lane.b32.xlu0 %v1170, 48
        %v4445 = vpop.permute.xlu0 %4444
        %v4446 = vsel %vm1212, %v4439, 0
        %v4448 = vsel %vm1212, %v4441, 0
        %v4450 = vsel %vm1212, %v4443, 0
        %v4452 = vsel %vm1212, %v4445, 0
        %4454 = vmatprep.subr.mxu0 0.0
        %4455 = vmatpush1.xpose.msra.mxu0 0.0
        %4456 = vmatprep.subr.mxu0 0.0
        %4457 = vmatpush1.xpose.msra.mxu0 0.0
        %4458 = vmatprep.subr.mxu0 0.0
        %4459 = vmatpush1.xpose.msra.mxu0 0.0
        %4460 = vmatprep.subr.mxu0 0.0
        %4461 = vmatpush1.xpose.msra.mxu0 0.0
        %4462 = vmatprep.subr.mxu0 0.0
        %4463 = vmatpush1.xpose.msra.mxu0 0.0
        %4464 = vmatprep.subr.mxu0 0.0
        %4465 = vmatpush1.xpose.msra.mxu0 0.0
        %4466 = vmatprep.subr.mxu0 0.0
        %4467 = vmatpush1.xpose.msra.mxu0 0.0
        %4468 = vmatprep.subr.mxu0 0.0
        %4469 = vmatpush1.xpose.msra.mxu0 0.0
        %4470 = vmatprep.subr.mxu0 0.0
        %4471 = vmatpush1.xpose.msra.mxu0 0.0
        %4472 = vmatprep.subr.mxu0 0.0
        %4473 = vmatpush1.xpose.msra.mxu0 0.0
        %4474 = vmatprep.subr.mxu0 0.0
        %4475 = vmatpush1.xpose.msra.mxu0 0.0
        %4476 = vmatprep.subr.mxu0 0.0
        %4477 = vmatpush1.xpose.msra.mxu0 0.0
        %4478 = vmatprep.subr.mxu0 0.0
        %4479 = vmatpush1.xpose.msra.mxu0 0.0
        %4480 = vmatprep.subr.mxu0 0.0
        %4481 = vmatpush1.xpose.msra.mxu0 0.0
        %4482 = vmatprep.subr.mxu0 0.0
        %4483 = vmatpush1.xpose.msra.mxu0 %v4452
        %4484 = vmatprep.subr.mxu0 0.0
        %4485 = vmatpush1.xpose.msra.mxu0 %v4450
        %4486 = vmatprep.subr.mxu0 0.0
        %4487 = vmatpush2.xpose.msra.mxu0 0.0
        %4488 = vmatprep.subr.mxu0 0.0
        %4489 = vmatpush2.xpose.msra.mxu0 0.0
        %4490 = vmatprep.subr.mxu0 0.0
        %4491 = vmatpush2.xpose.msra.mxu0 0.0
        %4492 = vmatprep.subr.mxu0 0.0
        %4493 = vmatpush2.xpose.msra.mxu0 0.0
        %4494 = vmatprep.subr.mxu0 0.0
        %4495 = vmatpush2.xpose.msra.mxu0 0.0
        %4496 = vmatprep.subr.mxu0 0.0
        %4497 = vmatpush2.xpose.msra.mxu0 0.0
        %4498 = vmatprep.subr.mxu0 0.0
        %4499 = vmatpush2.xpose.msra.mxu0 0.0
        %4500 = vmatprep.subr.mxu0 0.0
        %4501 = vmatpush2.xpose.msra.mxu0 0.0
        %4502 = vmatprep.subr.mxu0 0.0
        %4503 = vmatpush2.xpose.msra.mxu0 0.0
        %4504 = vmatprep.subr.mxu0 0.0
        %4505 = vmatpush2.xpose.msra.mxu0 0.0
        %4506 = vmatprep.subr.mxu0 0.0
        %4507 = vmatpush2.xpose.msra.mxu0 0.0
        %4508 = vmatprep.subr.mxu0 0.0
        %4509 = vmatpush2.xpose.msra.mxu0 0.0
        %4510 = vmatprep.subr.mxu0 0.0
        %4511 = vmatpush2.xpose.msra.mxu0 0.0
        %4512 = vmatprep.subr.mxu0 0.0
        %4513 = vmatpush2.xpose.msra.mxu0 0.0
        %4514 = vmatprep.subr.mxu0 0.0
        %4515 = vmatpush2.xpose.msra.mxu0 0.0
        %4516 = vmatprep.subr.mxu0 0.0
        %4517 = vmatpush2.xpose.msra.mxu0 0.0
        %4518 = vmatprep.mubr.f32.mxu0 0.0
        %4519 = vmatmul.mubr.f32.gmra.mxu0 %v4446
        %v4520 = vpop.f32.mrf.mxu0
        %v4521 = vadd.f32 0.0, %v4520
        %v4522 = vpop.f32.mrf.mxu0
        %4523 = vmatprep.mubr.f32.mxu0 0.0
        %4524 = vmatmul.mubr.f32.gmra.mxu0 %v4448
        %v4525 = vpop.f32.mrf.mxu0
        %v4526 = vadd.f32 0.0, %v4525
        %v4527 = vpop.f32.mrf.mxu0
        %4528 = vdwg.mxu0
        %4529 = vrot.lane.b32.xlu0 %v933, 112
        %v4530 = vpop.permute.xlu0 %4529
        %4531 = vrot.lane.b32.xlu0 %v934, 112
        %v4532 = vpop.permute.xlu0 %4531
        %4533 = vrot.lane.b32.xlu0 %v1171, 48
        %v4534 = vpop.permute.xlu0 %4533
        %4535 = vrot.lane.b32.xlu0 %v1172, 48
        %v4536 = vpop.permute.xlu0 %4535
        %v4537 = vsel %vm1212, %v4530, 0
        %v4539 = vsel %vm1212, %v4532, 0
        %v4541 = vsel %vm1212, %v4534, 0
        %v4543 = vsel %vm1212, %v4536, 0
        %4545 = vmatprep.subr.mxu0 0.0
        %4546 = vmatpush1.xpose.msra.mxu0 0.0
        %4547 = vmatprep.subr.mxu0 0.0
        %4548 = vmatpush1.xpose.msra.mxu0 0.0
        %4549 = vmatprep.subr.mxu0 0.0
        %4550 = vmatpush1.xpose.msra.mxu0 0.0
        %4551 = vmatprep.subr.mxu0 0.0
        %4552 = vmatpush1.xpose.msra.mxu0 0.0
        %4553 = vmatprep.subr.mxu0 0.0
        %4554 = vmatpush1.xpose.msra.mxu0 0.0
        %4555 = vmatprep.subr.mxu0 0.0
        %4556 = vmatpush1.xpose.msra.mxu0 0.0
        %4557 = vmatprep.subr.mxu0 0.0
        %4558 = vmatpush1.xpose.msra.mxu0 0.0
        %4559 = vmatprep.subr.mxu0 0.0
        %4560 = vmatpush1.xpose.msra.mxu0 0.0
        %4561 = vmatprep.subr.mxu0 0.0
        %4562 = vmatpush1.xpose.msra.mxu0 0.0
        %4563 = vmatprep.subr.mxu0 0.0
        %4564 = vmatpush1.xpose.msra.mxu0 0.0
        %4565 = vmatprep.subr.mxu0 0.0
        %4566 = vmatpush1.xpose.msra.mxu0 0.0
        %4567 = vmatprep.subr.mxu0 0.0
        %4568 = vmatpush1.xpose.msra.mxu0 0.0
        %4569 = vmatprep.subr.mxu0 0.0
        %4570 = vmatpush1.xpose.msra.mxu0 0.0
        %4571 = vmatprep.subr.mxu0 0.0
        %4572 = vmatpush1.xpose.msra.mxu0 0.0
        %4573 = vmatprep.subr.mxu0 0.0
        %4574 = vmatpush1.xpose.msra.mxu0 %v4543
        %4575 = vmatprep.subr.mxu0 0.0
        %4576 = vmatpush1.xpose.msra.mxu0 %v4541
        %4577 = vmatprep.subr.mxu0 0.0
        %4578 = vmatpush2.xpose.msra.mxu0 0.0
        %4579 = vmatprep.subr.mxu0 0.0
        %4580 = vmatpush2.xpose.msra.mxu0 0.0
        %4581 = vmatprep.subr.mxu0 0.0
        %4582 = vmatpush2.xpose.msra.mxu0 0.0
        %4583 = vmatprep.subr.mxu0 0.0
        %4584 = vmatpush2.xpose.msra.mxu0 0.0
        %4585 = vmatprep.subr.mxu0 0.0
        %4586 = vmatpush2.xpose.msra.mxu0 0.0
        %4587 = vmatprep.subr.mxu0 0.0
        %4588 = vmatpush2.xpose.msra.mxu0 0.0
        %4589 = vmatprep.subr.mxu0 0.0
        %4590 = vmatpush2.xpose.msra.mxu0 0.0
        %4591 = vmatprep.subr.mxu0 0.0
        %4592 = vmatpush2.xpose.msra.mxu0 0.0
        %4593 = vmatprep.subr.mxu0 0.0
        %4594 = vmatpush2.xpose.msra.mxu0 0.0
        %4595 = vmatprep.subr.mxu0 0.0
        %4596 = vmatpush2.xpose.msra.mxu0 0.0
        %4597 = vmatprep.subr.mxu0 0.0
        %4598 = vmatpush2.xpose.msra.mxu0 0.0
        %4599 = vmatprep.subr.mxu0 0.0
        %4600 = vmatpush2.xpose.msra.mxu0 0.0
        %4601 = vmatprep.subr.mxu0 0.0
        %4602 = vmatpush2.xpose.msra.mxu0 0.0
        %4603 = vmatprep.subr.mxu0 0.0
        %4604 = vmatpush2.xpose.msra.mxu0 0.0
        %4605 = vmatprep.subr.mxu0 0.0
        %4606 = vmatpush2.xpose.msra.mxu0 0.0
        %4607 = vmatprep.subr.mxu0 0.0
        %4608 = vmatpush2.xpose.msra.mxu0 0.0
        %4609 = vmatprep.mubr.f32.mxu0 0.0
        %4610 = vmatmul.mubr.f32.gmra.mxu0 %v4537
        %v4611 = vpop.f32.mrf.mxu0
        %v4612 = vadd.f32 0.0, %v4611
        %v4613 = vpop.f32.mrf.mxu0
        %4614 = vmatprep.mubr.f32.mxu0 0.0
        %4615 = vmatmul.mubr.f32.gmra.mxu0 %v4539
        %v4616 = vpop.f32.mrf.mxu0
        %v4617 = vadd.f32 0.0, %v4616
        %v4618 = vpop.f32.mrf.mxu0
        %4619 = vdwg.mxu0
        %4620 = vrot.lane.b32.xlu0 %v935, 112
        %v4621 = vpop.permute.xlu0 %4620
        %4622 = vrot.lane.b32.xlu0 %v936, 112
        %v4623 = vpop.permute.xlu0 %4622
        %4624 = vrot.lane.b32.xlu0 %v1173, 48
        %v4625 = vpop.permute.xlu0 %4624
        %4626 = vrot.lane.b32.xlu0 %v1174, 48
        %v4627 = vpop.permute.xlu0 %4626
        %v4628 = vsel %vm1212, %v4621, 0
        %v4630 = vsel %vm1212, %v4623, 0
        %v4632 = vsel %vm1212, %v4625, 0
        %v4634 = vsel %vm1212, %v4627, 0
        %4636 = vmatprep.subr.mxu0 0.0
        %4637 = vmatpush1.xpose.msra.mxu0 0.0
        %4638 = vmatprep.subr.mxu0 0.0
        %4639 = vmatpush1.xpose.msra.mxu0 0.0
        %4640 = vmatprep.subr.mxu0 0.0
        %4641 = vmatpush1.xpose.msra.mxu0 0.0
        %4642 = vmatprep.subr.mxu0 0.0
        %4643 = vmatpush1.xpose.msra.mxu0 0.0
        %4644 = vmatprep.subr.mxu0 0.0
        %4645 = vmatpush1.xpose.msra.mxu0 0.0
        %4646 = vmatprep.subr.mxu0 0.0
        %4647 = vmatpush1.xpose.msra.mxu0 0.0
        %4648 = vmatprep.subr.mxu0 0.0
        %4649 = vmatpush1.xpose.msra.mxu0 0.0
        %4650 = vmatprep.subr.mxu0 0.0
        %4651 = vmatpush1.xpose.msra.mxu0 0.0
        %4652 = vmatprep.subr.mxu0 0.0
        %4653 = vmatpush1.xpose.msra.mxu0 0.0
        %4654 = vmatprep.subr.mxu0 0.0
        %4655 = vmatpush1.xpose.msra.mxu0 0.0
        %4656 = vmatprep.subr.mxu0 0.0
        %4657 = vmatpush1.xpose.msra.mxu0 0.0
        %4658 = vmatprep.subr.mxu0 0.0
        %4659 = vmatpush1.xpose.msra.mxu0 0.0
        %4660 = vmatprep.subr.mxu0 0.0
        %4661 = vmatpush1.xpose.msra.mxu0 0.0
        %4662 = vmatprep.subr.mxu0 0.0
        %4663 = vmatpush1.xpose.msra.mxu0 0.0
        %4664 = vmatprep.subr.mxu0 0.0
        %4665 = vmatpush1.xpose.msra.mxu0 %v4634
        %4666 = vmatprep.subr.mxu0 0.0
        %4667 = vmatpush1.xpose.msra.mxu0 %v4632
        %4668 = vmatprep.subr.mxu0 0.0
        %4669 = vmatpush2.xpose.msra.mxu0 0.0
        %4670 = vmatprep.subr.mxu0 0.0
        %4671 = vmatpush2.xpose.msra.mxu0 0.0
        %4672 = vmatprep.subr.mxu0 0.0
        %4673 = vmatpush2.xpose.msra.mxu0 0.0
        %4674 = vmatprep.subr.mxu0 0.0
        %4675 = vmatpush2.xpose.msra.mxu0 0.0
        %4676 = vmatprep.subr.mxu0 0.0
        %4677 = vmatpush2.xpose.msra.mxu0 0.0
        %4678 = vmatprep.subr.mxu0 0.0
        %4679 = vmatpush2.xpose.msra.mxu0 0.0
        %4680 = vmatprep.subr.mxu0 0.0
        %4681 = vmatpush2.xpose.msra.mxu0 0.0
        %4682 = vmatprep.subr.mxu0 0.0
        %4683 = vmatpush2.xpose.msra.mxu0 0.0
        %4684 = vmatprep.subr.mxu0 0.0
        %4685 = vmatpush2.xpose.msra.mxu0 0.0
        %4686 = vmatprep.subr.mxu0 0.0
        %4687 = vmatpush2.xpose.msra.mxu0 0.0
        %4688 = vmatprep.subr.mxu0 0.0
        %4689 = vmatpush2.xpose.msra.mxu0 0.0
        %4690 = vmatprep.subr.mxu0 0.0
        %4691 = vmatpush2.xpose.msra.mxu0 0.0
        %4692 = vmatprep.subr.mxu0 0.0
        %4693 = vmatpush2.xpose.msra.mxu0 0.0
        %4694 = vmatprep.subr.mxu0 0.0
        %4695 = vmatpush2.xpose.msra.mxu0 0.0
        %4696 = vmatprep.subr.mxu0 0.0
        %4697 = vmatpush2.xpose.msra.mxu0 0.0
        %4698 = vmatprep.subr.mxu0 0.0
        %4699 = vmatpush2.xpose.msra.mxu0 0.0
        %4700 = vmatprep.mubr.f32.mxu0 0.0
        %4701 = vmatmul.mubr.f32.gmra.mxu0 %v4628
        %v4702 = vpop.f32.mrf.mxu0
        %v4703 = vadd.f32 0.0, %v4702
        %v4704 = vpop.f32.mrf.mxu0
        %4705 = vmatprep.mubr.f32.mxu0 0.0
        %4706 = vmatmul.mubr.f32.gmra.mxu0 %v4630
        %v4707 = vpop.f32.mrf.mxu0
        %v4708 = vadd.f32 0.0, %v4707
        %v4709 = vpop.f32.mrf.mxu0
        %4710 = vdwg.mxu0
        %4711 = vrot.lane.b32.xlu0 %v937, 112
        %v4712 = vpop.permute.xlu0 %4711
        %4713 = vrot.lane.b32.xlu0 %v938, 112
        %v4714 = vpop.permute.xlu0 %4713
        %4715 = vrot.lane.b32.xlu0 %v1175, 48
        %v4716 = vpop.permute.xlu0 %4715
        %4717 = vrot.lane.b32.xlu0 %v1176, 48
        %v4718 = vpop.permute.xlu0 %4717
        %v4719 = vsel %vm1212, %v4712, 0
        %v4721 = vsel %vm1212, %v4714, 0
        %v4723 = vsel %vm1212, %v4716, 0
        %v4725 = vsel %vm1212, %v4718, 0
        %4727 = vmatprep.subr.mxu0 0.0
        %4728 = vmatpush1.xpose.msra.mxu0 0.0
        %4729 = vmatprep.subr.mxu0 0.0
        %4730 = vmatpush1.xpose.msra.mxu0 0.0
        %4731 = vmatprep.subr.mxu0 0.0
        %4732 = vmatpush1.xpose.msra.mxu0 0.0
        %4733 = vmatprep.subr.mxu0 0.0
        %4734 = vmatpush1.xpose.msra.mxu0 0.0
        %4735 = vmatprep.subr.mxu0 0.0
        %4736 = vmatpush1.xpose.msra.mxu0 0.0
        %4737 = vmatprep.subr.mxu0 0.0
        %4738 = vmatpush1.xpose.msra.mxu0 0.0
        %4739 = vmatprep.subr.mxu0 0.0
        %4740 = vmatpush1.xpose.msra.mxu0 0.0
        %4741 = vmatprep.subr.mxu0 0.0
        %4742 = vmatpush1.xpose.msra.mxu0 0.0
        %4743 = vmatprep.subr.mxu0 0.0
        %4744 = vmatpush1.xpose.msra.mxu0 0.0
        %4745 = vmatprep.subr.mxu0 0.0
        %4746 = vmatpush1.xpose.msra.mxu0 0.0
        %4747 = vmatprep.subr.mxu0 0.0
        %4748 = vmatpush1.xpose.msra.mxu0 0.0
        %4749 = vmatprep.subr.mxu0 0.0
        %4750 = vmatpush1.xpose.msra.mxu0 0.0
        %4751 = vmatprep.subr.mxu0 0.0
        %4752 = vmatpush1.xpose.msra.mxu0 0.0
        %4753 = vmatprep.subr.mxu0 0.0
        %4754 = vmatpush1.xpose.msra.mxu0 0.0
        %4755 = vmatprep.subr.mxu0 0.0
        %4756 = vmatpush1.xpose.msra.mxu0 %v4725
        %4757 = vmatprep.subr.mxu0 0.0
        %4758 = vmatpush1.xpose.msra.mxu0 %v4723
        %4759 = vmatprep.subr.mxu0 0.0
        %4760 = vmatpush2.xpose.msra.mxu0 0.0
        %4761 = vmatprep.subr.mxu0 0.0
        %4762 = vmatpush2.xpose.msra.mxu0 0.0
        %4763 = vmatprep.subr.mxu0 0.0
        %4764 = vmatpush2.xpose.msra.mxu0 0.0
        %4765 = vmatprep.subr.mxu0 0.0
        %4766 = vmatpush2.xpose.msra.mxu0 0.0
        %4767 = vmatprep.subr.mxu0 0.0
        %4768 = vmatpush2.xpose.msra.mxu0 0.0
        %4769 = vmatprep.subr.mxu0 0.0
        %4770 = vmatpush2.xpose.msra.mxu0 0.0
        %4771 = vmatprep.subr.mxu0 0.0
        %4772 = vmatpush2.xpose.msra.mxu0 0.0
        %4773 = vmatprep.subr.mxu0 0.0
        %4774 = vmatpush2.xpose.msra.mxu0 0.0
        %4775 = vmatprep.subr.mxu0 0.0
        %4776 = vmatpush2.xpose.msra.mxu0 0.0
        %4777 = vmatprep.subr.mxu0 0.0
        %4778 = vmatpush2.xpose.msra.mxu0 0.0
        %4779 = vmatprep.subr.mxu0 0.0
        %4780 = vmatpush2.xpose.msra.mxu0 0.0
        %4781 = vmatprep.subr.mxu0 0.0
        %4782 = vmatpush2.xpose.msra.mxu0 0.0
        %4783 = vmatprep.subr.mxu0 0.0
        %4784 = vmatpush2.xpose.msra.mxu0 0.0
        %4785 = vmatprep.subr.mxu0 0.0
        %4786 = vmatpush2.xpose.msra.mxu0 0.0
        %4787 = vmatprep.subr.mxu0 0.0
        %4788 = vmatpush2.xpose.msra.mxu0 0.0
        %4789 = vmatprep.subr.mxu0 0.0
        %4790 = vmatpush2.xpose.msra.mxu0 0.0
        %4791 = vmatprep.mubr.f32.mxu0 0.0
        %4792 = vmatmul.mubr.f32.gmra.mxu0 %v4719
        %v4793 = vpop.f32.mrf.mxu0
        %v4794 = vadd.f32 0.0, %v4793
        %v4795 = vpop.f32.mrf.mxu0
        %4796 = vmatprep.mubr.f32.mxu0 0.0
        %4797 = vmatmul.mubr.f32.gmra.mxu0 %v4721
        %v4798 = vpop.f32.mrf.mxu0
        %v4799 = vadd.f32 0.0, %v4798
        %v4800 = vpop.f32.mrf.mxu0
        %4801 = vdwg.mxu0
        %4802 = vrot.lane.b32.xlu0 %v939, 112
        %v4803 = vpop.permute.xlu0 %4802
        %4804 = vrot.lane.b32.xlu0 %v940, 112
        %v4805 = vpop.permute.xlu0 %4804
        %4806 = vrot.lane.b32.xlu0 %v1177, 48
        %v4807 = vpop.permute.xlu0 %4806
        %4808 = vrot.lane.b32.xlu0 %v1178, 48
        %v4809 = vpop.permute.xlu0 %4808
        %v4810 = vsel %vm1212, %v4803, 0
        %v4812 = vsel %vm1212, %v4805, 0
        %v4814 = vsel %vm1212, %v4807, 0
        %v4816 = vsel %vm1212, %v4809, 0
        %4818 = vmatprep.subr.mxu0 0.0
        %4819 = vmatpush1.xpose.msra.mxu0 0.0
        %4820 = vmatprep.subr.mxu0 0.0
        %4821 = vmatpush1.xpose.msra.mxu0 0.0
        %4822 = vmatprep.subr.mxu0 0.0
        %4823 = vmatpush1.xpose.msra.mxu0 0.0
        %4824 = vmatprep.subr.mxu0 0.0
        %4825 = vmatpush1.xpose.msra.mxu0 0.0
        %4826 = vmatprep.subr.mxu0 0.0
        %4827 = vmatpush1.xpose.msra.mxu0 0.0
        %4828 = vmatprep.subr.mxu0 0.0
        %4829 = vmatpush1.xpose.msra.mxu0 0.0
        %4830 = vmatprep.subr.mxu0 0.0
        %4831 = vmatpush1.xpose.msra.mxu0 0.0
        %4832 = vmatprep.subr.mxu0 0.0
        %4833 = vmatpush1.xpose.msra.mxu0 0.0
        %4834 = vmatprep.subr.mxu0 0.0
        %4835 = vmatpush1.xpose.msra.mxu0 0.0
        %4836 = vmatprep.subr.mxu0 0.0
        %4837 = vmatpush1.xpose.msra.mxu0 0.0
        %4838 = vmatprep.subr.mxu0 0.0
        %4839 = vmatpush1.xpose.msra.mxu0 0.0
        %4840 = vmatprep.subr.mxu0 0.0
        %4841 = vmatpush1.xpose.msra.mxu0 0.0
        %4842 = vmatprep.subr.mxu0 0.0
        %4843 = vmatpush1.xpose.msra.mxu0 0.0
        %4844 = vmatprep.subr.mxu0 0.0
        %4845 = vmatpush1.xpose.msra.mxu0 0.0
        %4846 = vmatprep.subr.mxu0 0.0
        %4847 = vmatpush1.xpose.msra.mxu0 %v4816
        %4848 = vmatprep.subr.mxu0 0.0
        %4849 = vmatpush1.xpose.msra.mxu0 %v4814
        %4850 = vmatprep.subr.mxu0 0.0
        %4851 = vmatpush2.xpose.msra.mxu0 0.0
        %4852 = vmatprep.subr.mxu0 0.0
        %4853 = vmatpush2.xpose.msra.mxu0 0.0
        %4854 = vmatprep.subr.mxu0 0.0
        %4855 = vmatpush2.xpose.msra.mxu0 0.0
        %4856 = vmatprep.subr.mxu0 0.0
        %4857 = vmatpush2.xpose.msra.mxu0 0.0
        %4858 = vmatprep.subr.mxu0 0.0
        %4859 = vmatpush2.xpose.msra.mxu0 0.0
        %4860 = vmatprep.subr.mxu0 0.0
        %4861 = vmatpush2.xpose.msra.mxu0 0.0
        %4862 = vmatprep.subr.mxu0 0.0
        %4863 = vmatpush2.xpose.msra.mxu0 0.0
        %4864 = vmatprep.subr.mxu0 0.0
        %4865 = vmatpush2.xpose.msra.mxu0 0.0
        %4866 = vmatprep.subr.mxu0 0.0
        %4867 = vmatpush2.xpose.msra.mxu0 0.0
        %4868 = vmatprep.subr.mxu0 0.0
        %4869 = vmatpush2.xpose.msra.mxu0 0.0
        %4870 = vmatprep.subr.mxu0 0.0
        %4871 = vmatpush2.xpose.msra.mxu0 0.0
        %4872 = vmatprep.subr.mxu0 0.0
        %4873 = vmatpush2.xpose.msra.mxu0 0.0
        %4874 = vmatprep.subr.mxu0 0.0
        %4875 = vmatpush2.xpose.msra.mxu0 0.0
        %4876 = vmatprep.subr.mxu0 0.0
        %4877 = vmatpush2.xpose.msra.mxu0 0.0
        %4878 = vmatprep.subr.mxu0 0.0
        %4879 = vmatpush2.xpose.msra.mxu0 0.0
        %4880 = vmatprep.subr.mxu0 0.0
        %4881 = vmatpush2.xpose.msra.mxu0 0.0
        %4882 = vmatprep.mubr.f32.mxu0 0.0
        %4883 = vmatmul.mubr.f32.gmra.mxu0 %v4810
        %v4884 = vpop.f32.mrf.mxu0
        %v4885 = vadd.f32 0.0, %v4884
        %v4886 = vpop.f32.mrf.mxu0
        %4887 = vmatprep.mubr.f32.mxu0 0.0
        %4888 = vmatmul.mubr.f32.gmra.mxu0 %v4812
        %v4889 = vpop.f32.mrf.mxu0
        %v4890 = vadd.f32 0.0, %v4889
        %v4891 = vpop.f32.mrf.mxu0
        %4892 = vdwg.mxu0
        %4893 = vrot.lane.b32.xlu0 %v941, 112
        %v4894 = vpop.permute.xlu0 %4893
        %4895 = vrot.lane.b32.xlu0 %v942, 112
        %v4896 = vpop.permute.xlu0 %4895
        %4897 = vrot.lane.b32.xlu0 %v1179, 48
        %v4898 = vpop.permute.xlu0 %4897
        %4899 = vrot.lane.b32.xlu0 %v1180, 48
        %v4900 = vpop.permute.xlu0 %4899
        %v4901 = vsel %vm1212, %v4894, 0
        %v4903 = vsel %vm1212, %v4896, 0
        %v4905 = vsel %vm1212, %v4898, 0
        %v4907 = vsel %vm1212, %v4900, 0
        %4909 = vmatprep.subr.mxu0 0.0
        %4910 = vmatpush1.xpose.msra.mxu0 0.0
        %4911 = vmatprep.subr.mxu0 0.0
        %4912 = vmatpush1.xpose.msra.mxu0 0.0
        %4913 = vmatprep.subr.mxu0 0.0
        %4914 = vmatpush1.xpose.msra.mxu0 0.0
        %4915 = vmatprep.subr.mxu0 0.0
        %4916 = vmatpush1.xpose.msra.mxu0 0.0
        %4917 = vmatprep.subr.mxu0 0.0
        %4918 = vmatpush1.xpose.msra.mxu0 0.0
        %4919 = vmatprep.subr.mxu0 0.0
        %4920 = vmatpush1.xpose.msra.mxu0 0.0
        %4921 = vmatprep.subr.mxu0 0.0
        %4922 = vmatpush1.xpose.msra.mxu0 0.0
        %4923 = vmatprep.subr.mxu0 0.0
        %4924 = vmatpush1.xpose.msra.mxu0 0.0
        %4925 = vmatprep.subr.mxu0 0.0
        %4926 = vmatpush1.xpose.msra.mxu0 0.0
        %4927 = vmatprep.subr.mxu0 0.0
        %4928 = vmatpush1.xpose.msra.mxu0 0.0
        %4929 = vmatprep.subr.mxu0 0.0
        %4930 = vmatpush1.xpose.msra.mxu0 0.0
        %4931 = vmatprep.subr.mxu0 0.0
        %4932 = vmatpush1.xpose.msra.mxu0 0.0
        %4933 = vmatprep.subr.mxu0 0.0
        %4934 = vmatpush1.xpose.msra.mxu0 0.0
        %4935 = vmatprep.subr.mxu0 0.0
        %4936 = vmatpush1.xpose.msra.mxu0 0.0
        %4937 = vmatprep.subr.mxu0 0.0
        %4938 = vmatpush1.xpose.msra.mxu0 %v4907
        %4939 = vmatprep.subr.mxu0 0.0
        %4940 = vmatpush1.xpose.msra.mxu0 %v4905
        %4941 = vmatprep.subr.mxu0 0.0
        %4942 = vmatpush2.xpose.msra.mxu0 0.0
        %4943 = vmatprep.subr.mxu0 0.0
        %4944 = vmatpush2.xpose.msra.mxu0 0.0
        %4945 = vmatprep.subr.mxu0 0.0
        %4946 = vmatpush2.xpose.msra.mxu0 0.0
        %4947 = vmatprep.subr.mxu0 0.0
        %4948 = vmatpush2.xpose.msra.mxu0 0.0
        %4949 = vmatprep.subr.mxu0 0.0
        %4950 = vmatpush2.xpose.msra.mxu0 0.0
        %4951 = vmatprep.subr.mxu0 0.0
        %4952 = vmatpush2.xpose.msra.mxu0 0.0
        %4953 = vmatprep.subr.mxu0 0.0
        %4954 = vmatpush2.xpose.msra.mxu0 0.0
        %4955 = vmatprep.subr.mxu0 0.0
        %4956 = vmatpush2.xpose.msra.mxu0 0.0
        %4957 = vmatprep.subr.mxu0 0.0
        %4958 = vmatpush2.xpose.msra.mxu0 0.0
        %4959 = vmatprep.subr.mxu0 0.0
        %4960 = vmatpush2.xpose.msra.mxu0 0.0
        %4961 = vmatprep.subr.mxu0 0.0
        %4962 = vmatpush2.xpose.msra.mxu0 0.0
        %4963 = vmatprep.subr.mxu0 0.0
        %4964 = vmatpush2.xpose.msra.mxu0 0.0
        %4965 = vmatprep.subr.mxu0 0.0
        %4966 = vmatpush2.xpose.msra.mxu0 0.0
        %4967 = vmatprep.subr.mxu0 0.0
        %4968 = vmatpush2.xpose.msra.mxu0 0.0
        %4969 = vmatprep.subr.mxu0 0.0
        %4970 = vmatpush2.xpose.msra.mxu0 0.0
        %4971 = vmatprep.subr.mxu0 0.0
        %4972 = vmatpush2.xpose.msra.mxu0 0.0
        %4973 = vmatprep.mubr.f32.mxu0 0.0
        %4974 = vmatmul.mubr.f32.gmra.mxu0 %v4901
        %v4975 = vpop.f32.mrf.mxu0
        %v4976 = vadd.f32 0.0, %v4975
        %v4977 = vpop.f32.mrf.mxu0
        %4978 = vmatprep.mubr.f32.mxu0 0.0
        %4979 = vmatmul.mubr.f32.gmra.mxu0 %v4903
        %v4980 = vpop.f32.mrf.mxu0
        %v4981 = vadd.f32 0.0, %v4980
        %v4982 = vpop.f32.mrf.mxu0
        %4983 = vdwg.mxu0
        %4984 = vrot.lane.b32.xlu0 %v943, 112
        %v4985 = vpop.permute.xlu0 %4984
        %4986 = vrot.lane.b32.xlu0 %v944, 112
        %v4987 = vpop.permute.xlu0 %4986
        %4988 = vrot.lane.b32.xlu0 %v1181, 48
        %v4989 = vpop.permute.xlu0 %4988
        %4990 = vrot.lane.b32.xlu0 %v1182, 48
        %v4991 = vpop.permute.xlu0 %4990
        %v4992 = vsel %vm1212, %v4985, 0
        %v4994 = vsel %vm1212, %v4987, 0
        %v4996 = vsel %vm1212, %v4989, 0
        %v4998 = vsel %vm1212, %v4991, 0
        %5000 = vmatprep.subr.mxu0 0.0
        %5001 = vmatpush1.xpose.msra.mxu0 0.0
        %5002 = vmatprep.subr.mxu0 0.0
        %5003 = vmatpush1.xpose.msra.mxu0 0.0
        %5004 = vmatprep.subr.mxu0 0.0
        %5005 = vmatpush1.xpose.msra.mxu0 0.0
        %5006 = vmatprep.subr.mxu0 0.0
        %5007 = vmatpush1.xpose.msra.mxu0 0.0
        %5008 = vmatprep.subr.mxu0 0.0
        %5009 = vmatpush1.xpose.msra.mxu0 0.0
        %5010 = vmatprep.subr.mxu0 0.0
        %5011 = vmatpush1.xpose.msra.mxu0 0.0
        %5012 = vmatprep.subr.mxu0 0.0
        %5013 = vmatpush1.xpose.msra.mxu0 0.0
        %5014 = vmatprep.subr.mxu0 0.0
        %5015 = vmatpush1.xpose.msra.mxu0 0.0
        %5016 = vmatprep.subr.mxu0 0.0
        %5017 = vmatpush1.xpose.msra.mxu0 0.0
        %5018 = vmatprep.subr.mxu0 0.0
        %5019 = vmatpush1.xpose.msra.mxu0 0.0
        %5020 = vmatprep.subr.mxu0 0.0
        %5021 = vmatpush1.xpose.msra.mxu0 0.0
        %5022 = vmatprep.subr.mxu0 0.0
        %5023 = vmatpush1.xpose.msra.mxu0 0.0
        %5024 = vmatprep.subr.mxu0 0.0
        %5025 = vmatpush1.xpose.msra.mxu0 0.0
        %5026 = vmatprep.subr.mxu0 0.0
        %5027 = vmatpush1.xpose.msra.mxu0 0.0
        %5028 = vmatprep.subr.mxu0 0.0
        %5029 = vmatpush1.xpose.msra.mxu0 %v4998
        %5030 = vmatprep.subr.mxu0 0.0
        %5031 = vmatpush1.xpose.msra.mxu0 %v4996
        %5032 = vmatprep.subr.mxu0 0.0
        %5033 = vmatpush2.xpose.msra.mxu0 0.0
        %5034 = vmatprep.subr.mxu0 0.0
        %5035 = vmatpush2.xpose.msra.mxu0 0.0
        %5036 = vmatprep.subr.mxu0 0.0
        %5037 = vmatpush2.xpose.msra.mxu0 0.0
        %5038 = vmatprep.subr.mxu0 0.0
        %5039 = vmatpush2.xpose.msra.mxu0 0.0
        %5040 = vmatprep.subr.mxu0 0.0
        %5041 = vmatpush2.xpose.msra.mxu0 0.0
        %5042 = vmatprep.subr.mxu0 0.0
        %5043 = vmatpush2.xpose.msra.mxu0 0.0
        %5044 = vmatprep.subr.mxu0 0.0
        %5045 = vmatpush2.xpose.msra.mxu0 0.0
        %5046 = vmatprep.subr.mxu0 0.0
        %5047 = vmatpush2.xpose.msra.mxu0 0.0
        %5048 = vmatprep.subr.mxu0 0.0
        %5049 = vmatpush2.xpose.msra.mxu0 0.0
        %5050 = vmatprep.subr.mxu0 0.0
        %5051 = vmatpush2.xpose.msra.mxu0 0.0
        %5052 = vmatprep.subr.mxu0 0.0
        %5053 = vmatpush2.xpose.msra.mxu0 0.0
        %5054 = vmatprep.subr.mxu0 0.0
        %5055 = vmatpush2.xpose.msra.mxu0 0.0
        %5056 = vmatprep.subr.mxu0 0.0
        %5057 = vmatpush2.xpose.msra.mxu0 0.0
        %5058 = vmatprep.subr.mxu0 0.0
        %5059 = vmatpush2.xpose.msra.mxu0 0.0
        %5060 = vmatprep.subr.mxu0 0.0
        %5061 = vmatpush2.xpose.msra.mxu0 0.0
        %5062 = vmatprep.subr.mxu0 0.0
        %5063 = vmatpush2.xpose.msra.mxu0 0.0
        %5064 = vmatprep.mubr.f32.mxu0 0.0
        %5065 = vmatmul.mubr.f32.gmra.mxu0 %v4992
        %v5066 = vpop.f32.mrf.mxu0
        %v5067 = vadd.f32 0.0, %v5066
        %v5068 = vpop.f32.mrf.mxu0
        %5069 = vmatprep.mubr.f32.mxu0 0.0
        %5070 = vmatmul.mubr.f32.gmra.mxu0 %v4994
        %v5071 = vpop.f32.mrf.mxu0
        %v5072 = vadd.f32 0.0, %v5071
        %v5073 = vpop.f32.mrf.mxu0
        %5074 = vdwg.mxu0
        %5075 = vrot.lane.b32.xlu0 %v945, 112
        %v5076 = vpop.permute.xlu0 %5075
        %5077 = vrot.lane.b32.xlu0 %v946, 112
        %v5078 = vpop.permute.xlu0 %5077
        %5079 = vrot.lane.b32.xlu0 %v1183, 48
        %v5080 = vpop.permute.xlu0 %5079
        %5081 = vrot.lane.b32.xlu0 %v1184, 48
        %v5082 = vpop.permute.xlu0 %5081
        %v5083 = vsel %vm1212, %v5076, 0
        %v5085 = vsel %vm1212, %v5078, 0
        %v5087 = vsel %vm1212, %v5080, 0
        %v5089 = vsel %vm1212, %v5082, 0
        %5091 = vmatprep.subr.mxu0 0.0
        %5092 = vmatpush1.xpose.msra.mxu0 0.0
        %5093 = vmatprep.subr.mxu0 0.0
        %5094 = vmatpush1.xpose.msra.mxu0 0.0
        %5095 = vmatprep.subr.mxu0 0.0
        %5096 = vmatpush1.xpose.msra.mxu0 0.0
        %5097 = vmatprep.subr.mxu0 0.0
        %5098 = vmatpush1.xpose.msra.mxu0 0.0
        %5099 = vmatprep.subr.mxu0 0.0
        %5100 = vmatpush1.xpose.msra.mxu0 0.0
        %5101 = vmatprep.subr.mxu0 0.0
        %5102 = vmatpush1.xpose.msra.mxu0 0.0
        %5103 = vmatprep.subr.mxu0 0.0
        %5104 = vmatpush1.xpose.msra.mxu0 0.0
        %5105 = vmatprep.subr.mxu0 0.0
        %5106 = vmatpush1.xpose.msra.mxu0 0.0
        %5107 = vmatprep.subr.mxu0 0.0
        %5108 = vmatpush1.xpose.msra.mxu0 0.0
        %5109 = vmatprep.subr.mxu0 0.0
        %5110 = vmatpush1.xpose.msra.mxu0 0.0
        %5111 = vmatprep.subr.mxu0 0.0
        %5112 = vmatpush1.xpose.msra.mxu0 0.0
        %5113 = vmatprep.subr.mxu0 0.0
        %5114 = vmatpush1.xpose.msra.mxu0 0.0
        %5115 = vmatprep.subr.mxu0 0.0
        %5116 = vmatpush1.xpose.msra.mxu0 0.0
        %5117 = vmatprep.subr.mxu0 0.0
        %5118 = vmatpush1.xpose.msra.mxu0 0.0
        %5119 = vmatprep.subr.mxu0 0.0
        %5120 = vmatpush1.xpose.msra.mxu0 %v5089
        %5121 = vmatprep.subr.mxu0 0.0
        %5122 = vmatpush1.xpose.msra.mxu0 %v5087
        %5123 = vmatprep.subr.mxu0 0.0
        %5124 = vmatpush2.xpose.msra.mxu0 0.0
        %5125 = vmatprep.subr.mxu0 0.0
        %5126 = vmatpush2.xpose.msra.mxu0 0.0
        %5127 = vmatprep.subr.mxu0 0.0
        %5128 = vmatpush2.xpose.msra.mxu0 0.0
        %5129 = vmatprep.subr.mxu0 0.0
        %5130 = vmatpush2.xpose.msra.mxu0 0.0
        %5131 = vmatprep.subr.mxu0 0.0
        %5132 = vmatpush2.xpose.msra.mxu0 0.0
        %5133 = vmatprep.subr.mxu0 0.0
        %5134 = vmatpush2.xpose.msra.mxu0 0.0
        %5135 = vmatprep.subr.mxu0 0.0
        %5136 = vmatpush2.xpose.msra.mxu0 0.0
        %5137 = vmatprep.subr.mxu0 0.0
        %5138 = vmatpush2.xpose.msra.mxu0 0.0
        %5139 = vmatprep.subr.mxu0 0.0
        %5140 = vmatpush2.xpose.msra.mxu0 0.0
        %5141 = vmatprep.subr.mxu0 0.0
        %5142 = vmatpush2.xpose.msra.mxu0 0.0
        %5143 = vmatprep.subr.mxu0 0.0
        %5144 = vmatpush2.xpose.msra.mxu0 0.0
        %5145 = vmatprep.subr.mxu0 0.0
        %5146 = vmatpush2.xpose.msra.mxu0 0.0
        %5147 = vmatprep.subr.mxu0 0.0
        %5148 = vmatpush2.xpose.msra.mxu0 0.0
        %5149 = vmatprep.subr.mxu0 0.0
        %5150 = vmatpush2.xpose.msra.mxu0 0.0
        %5151 = vmatprep.subr.mxu0 0.0
        %5152 = vmatpush2.xpose.msra.mxu0 0.0
        %5153 = vmatprep.subr.mxu0 0.0
        %5154 = vmatpush2.xpose.msra.mxu0 0.0
        %5155 = vmatprep.mubr.f32.mxu0 0.0
        %5156 = vmatmul.mubr.f32.gmra.mxu0 %v5083
        %v5157 = vpop.f32.mrf.mxu0
        %v5158 = vadd.f32 0.0, %v5157
        %v5159 = vpop.f32.mrf.mxu0
        %5160 = vmatprep.mubr.f32.mxu0 0.0
        %5161 = vmatmul.mubr.f32.gmra.mxu0 %v5085
        %v5162 = vpop.f32.mrf.mxu0
        %v5163 = vadd.f32 0.0, %v5162
        %v5164 = vpop.f32.mrf.mxu0
        %5165 = vdwg.mxu0
        %5166 = vrot.lane.b32.xlu0 %v947, 112
        %v5167 = vpop.permute.xlu0 %5166
        %5168 = vrot.lane.b32.xlu0 %v948, 112
        %v5169 = vpop.permute.xlu0 %5168
        %5170 = vrot.lane.b32.xlu0 %v1185, 48
        %v5171 = vpop.permute.xlu0 %5170
        %5172 = vrot.lane.b32.xlu0 %v1186, 48
        %v5173 = vpop.permute.xlu0 %5172
        %v5174 = vsel %vm1212, %v5167, 0
        %v5176 = vsel %vm1212, %v5169, 0
        %v5178 = vsel %vm1212, %v5171, 0
        %v5180 = vsel %vm1212, %v5173, 0
        %5182 = vmatprep.subr.mxu0 0.0
        %5183 = vmatpush1.xpose.msra.mxu0 0.0
        %5184 = vmatprep.subr.mxu0 0.0
        %5185 = vmatpush1.xpose.msra.mxu0 0.0
        %5186 = vmatprep.subr.mxu0 0.0
        %5187 = vmatpush1.xpose.msra.mxu0 0.0
        %5188 = vmatprep.subr.mxu0 0.0
        %5189 = vmatpush1.xpose.msra.mxu0 0.0
        %5190 = vmatprep.subr.mxu0 0.0
        %5191 = vmatpush1.xpose.msra.mxu0 0.0
        %5192 = vmatprep.subr.mxu0 0.0
        %5193 = vmatpush1.xpose.msra.mxu0 0.0
        %5194 = vmatprep.subr.mxu0 0.0
        %5195 = vmatpush1.xpose.msra.mxu0 0.0
        %5196 = vmatprep.subr.mxu0 0.0
        %5197 = vmatpush1.xpose.msra.mxu0 0.0
        %5198 = vmatprep.subr.mxu0 0.0
        %5199 = vmatpush1.xpose.msra.mxu0 0.0
        %5200 = vmatprep.subr.mxu0 0.0
        %5201 = vmatpush1.xpose.msra.mxu0 0.0
        %5202 = vmatprep.subr.mxu0 0.0
        %5203 = vmatpush1.xpose.msra.mxu0 0.0
        %5204 = vmatprep.subr.mxu0 0.0
        %5205 = vmatpush1.xpose.msra.mxu0 0.0
        %5206 = vmatprep.subr.mxu0 0.0
        %5207 = vmatpush1.xpose.msra.mxu0 0.0
        %5208 = vmatprep.subr.mxu0 0.0
        %5209 = vmatpush1.xpose.msra.mxu0 0.0
        %5210 = vmatprep.subr.mxu0 0.0
        %5211 = vmatpush1.xpose.msra.mxu0 %v5180
        %5212 = vmatprep.subr.mxu0 0.0
        %5213 = vmatpush1.xpose.msra.mxu0 %v5178
        %5214 = vmatprep.subr.mxu0 0.0
        %5215 = vmatpush2.xpose.msra.mxu0 0.0
        %5216 = vmatprep.subr.mxu0 0.0
        %5217 = vmatpush2.xpose.msra.mxu0 0.0
        %5218 = vmatprep.subr.mxu0 0.0
        %5219 = vmatpush2.xpose.msra.mxu0 0.0
        %5220 = vmatprep.subr.mxu0 0.0
        %5221 = vmatpush2.xpose.msra.mxu0 0.0
        %5222 = vmatprep.subr.mxu0 0.0
        %5223 = vmatpush2.xpose.msra.mxu0 0.0
        %5224 = vmatprep.subr.mxu0 0.0
        %5225 = vmatpush2.xpose.msra.mxu0 0.0
        %5226 = vmatprep.subr.mxu0 0.0
        %5227 = vmatpush2.xpose.msra.mxu0 0.0
        %5228 = vmatprep.subr.mxu0 0.0
        %5229 = vmatpush2.xpose.msra.mxu0 0.0
        %5230 = vmatprep.subr.mxu0 0.0
        %5231 = vmatpush2.xpose.msra.mxu0 0.0
        %5232 = vmatprep.subr.mxu0 0.0
        %5233 = vmatpush2.xpose.msra.mxu0 0.0
        %5234 = vmatprep.subr.mxu0 0.0
        %5235 = vmatpush2.xpose.msra.mxu0 0.0
        %5236 = vmatprep.subr.mxu0 0.0
        %5237 = vmatpush2.xpose.msra.mxu0 0.0
        %5238 = vmatprep.subr.mxu0 0.0
        %5239 = vmatpush2.xpose.msra.mxu0 0.0
        %5240 = vmatprep.subr.mxu0 0.0
        %5241 = vmatpush2.xpose.msra.mxu0 0.0
        %5242 = vmatprep.subr.mxu0 0.0
        %5243 = vmatpush2.xpose.msra.mxu0 0.0
        %5244 = vmatprep.subr.mxu0 0.0
        %5245 = vmatpush2.xpose.msra.mxu0 0.0
        %5246 = vmatprep.mubr.f32.mxu0 0.0
        %5247 = vmatmul.mubr.f32.gmra.mxu0 %v5174
        %v5248 = vpop.f32.mrf.mxu0
        %v5249 = vadd.f32 0.0, %v5248
        %v5250 = vpop.f32.mrf.mxu0
        %5251 = vmatprep.mubr.f32.mxu0 0.0
        %5252 = vmatmul.mubr.f32.gmra.mxu0 %v5176
        %v5253 = vpop.f32.mrf.mxu0
        %v5254 = vadd.f32 0.0, %v5253
        %v5255 = vpop.f32.mrf.mxu0
        %5256 = vdwg.mxu0
        %5257 = vrot.lane.b32.xlu0 %v949, 112
        %v5258 = vpop.permute.xlu0 %5257
        %5259 = vrot.lane.b32.xlu0 %v950, 112
        %v5260 = vpop.permute.xlu0 %5259
        %5261 = vrot.lane.b32.xlu0 %v1187, 48
        %v5262 = vpop.permute.xlu0 %5261
        %5263 = vrot.lane.b32.xlu0 %v1188, 48
        %v5264 = vpop.permute.xlu0 %5263
        %v5265 = vsel %vm1212, %v5258, 0
        %v5267 = vsel %vm1212, %v5260, 0
        %v5269 = vsel %vm1212, %v5262, 0
        %v5271 = vsel %vm1212, %v5264, 0
        %5273 = vmatprep.subr.mxu0 0.0
        %5274 = vmatpush1.xpose.msra.mxu0 0.0
        %5275 = vmatprep.subr.mxu0 0.0
        %5276 = vmatpush1.xpose.msra.mxu0 0.0
        %5277 = vmatprep.subr.mxu0 0.0
        %5278 = vmatpush1.xpose.msra.mxu0 0.0
        %5279 = vmatprep.subr.mxu0 0.0
        %5280 = vmatpush1.xpose.msra.mxu0 0.0
        %5281 = vmatprep.subr.mxu0 0.0
        %5282 = vmatpush1.xpose.msra.mxu0 0.0
        %5283 = vmatprep.subr.mxu0 0.0
        %5284 = vmatpush1.xpose.msra.mxu0 0.0
        %5285 = vmatprep.subr.mxu0 0.0
        %5286 = vmatpush1.xpose.msra.mxu0 0.0
        %5287 = vmatprep.subr.mxu0 0.0
        %5288 = vmatpush1.xpose.msra.mxu0 0.0
        %5289 = vmatprep.subr.mxu0 0.0
        %5290 = vmatpush1.xpose.msra.mxu0 0.0
        %5291 = vmatprep.subr.mxu0 0.0
        %5292 = vmatpush1.xpose.msra.mxu0 0.0
        %5293 = vmatprep.subr.mxu0 0.0
        %5294 = vmatpush1.xpose.msra.mxu0 0.0
        %5295 = vmatprep.subr.mxu0 0.0
        %5296 = vmatpush1.xpose.msra.mxu0 0.0
        %5297 = vmatprep.subr.mxu0 0.0
        %5298 = vmatpush1.xpose.msra.mxu0 0.0
        %5299 = vmatprep.subr.mxu0 0.0
        %5300 = vmatpush1.xpose.msra.mxu0 0.0
        %5301 = vmatprep.subr.mxu0 0.0
        %5302 = vmatpush1.xpose.msra.mxu0 %v5271
        %5303 = vmatprep.subr.mxu0 0.0
        %5304 = vmatpush1.xpose.msra.mxu0 %v5269
        %5305 = vmatprep.subr.mxu0 0.0
        %5306 = vmatpush2.xpose.msra.mxu0 0.0
        %5307 = vmatprep.subr.mxu0 0.0
        %5308 = vmatpush2.xpose.msra.mxu0 0.0
        %5309 = vmatprep.subr.mxu0 0.0
        %5310 = vmatpush2.xpose.msra.mxu0 0.0
        %5311 = vmatprep.subr.mxu0 0.0
        %5312 = vmatpush2.xpose.msra.mxu0 0.0
        %5313 = vmatprep.subr.mxu0 0.0
        %5314 = vmatpush2.xpose.msra.mxu0 0.0
        %5315 = vmatprep.subr.mxu0 0.0
        %5316 = vmatpush2.xpose.msra.mxu0 0.0
        %5317 = vmatprep.subr.mxu0 0.0
        %5318 = vmatpush2.xpose.msra.mxu0 0.0
        %5319 = vmatprep.subr.mxu0 0.0
        %5320 = vmatpush2.xpose.msra.mxu0 0.0
        %5321 = vmatprep.subr.mxu0 0.0
        %5322 = vmatpush2.xpose.msra.mxu0 0.0
        %5323 = vmatprep.subr.mxu0 0.0
        %5324 = vmatpush2.xpose.msra.mxu0 0.0
        %5325 = vmatprep.subr.mxu0 0.0
        %5326 = vmatpush2.xpose.msra.mxu0 0.0
        %5327 = vmatprep.subr.mxu0 0.0
        %5328 = vmatpush2.xpose.msra.mxu0 0.0
        %5329 = vmatprep.subr.mxu0 0.0
        %5330 = vmatpush2.xpose.msra.mxu0 0.0
        %5331 = vmatprep.subr.mxu0 0.0
        %5332 = vmatpush2.xpose.msra.mxu0 0.0
        %5333 = vmatprep.subr.mxu0 0.0
        %5334 = vmatpush2.xpose.msra.mxu0 0.0
        %5335 = vmatprep.subr.mxu0 0.0
        %5336 = vmatpush2.xpose.msra.mxu0 0.0
        %5337 = vmatprep.mubr.f32.mxu0 0.0
        %5338 = vmatmul.mubr.f32.gmra.mxu0 %v5265
        %v5339 = vpop.f32.mrf.mxu0
        %v5340 = vadd.f32 0.0, %v5339
        %v5341 = vpop.f32.mrf.mxu0
        %5342 = vmatprep.mubr.f32.mxu0 0.0
        %5343 = vmatmul.mubr.f32.gmra.mxu0 %v5267
        %v5344 = vpop.f32.mrf.mxu0
        %v5345 = vadd.f32 0.0, %v5344
        %v5346 = vpop.f32.mrf.mxu0
        %5347 = vdwg.mxu0
        %5348 = vrot.lane.b32.xlu0 %v951, 112
        %v5349 = vpop.permute.xlu0 %5348
        %5350 = vrot.lane.b32.xlu0 %v952, 112
        %v5351 = vpop.permute.xlu0 %5350
        %5352 = vrot.lane.b32.xlu0 %v1189, 48
        %v5353 = vpop.permute.xlu0 %5352
        %5354 = vrot.lane.b32.xlu0 %v1190, 48
        %v5355 = vpop.permute.xlu0 %5354
        %v5356 = vsel %vm1212, %v5349, 0
        %v5358 = vsel %vm1212, %v5351, 0
        %v5360 = vsel %vm1212, %v5353, 0
        %v5362 = vsel %vm1212, %v5355, 0
        %5364 = vmatprep.subr.mxu0 0.0
        %5365 = vmatpush1.xpose.msra.mxu0 0.0
        %5366 = vmatprep.subr.mxu0 0.0
        %5367 = vmatpush1.xpose.msra.mxu0 0.0
        %5368 = vmatprep.subr.mxu0 0.0
        %5369 = vmatpush1.xpose.msra.mxu0 0.0
        %5370 = vmatprep.subr.mxu0 0.0
        %5371 = vmatpush1.xpose.msra.mxu0 0.0
        %5372 = vmatprep.subr.mxu0 0.0
        %5373 = vmatpush1.xpose.msra.mxu0 0.0
        %5374 = vmatprep.subr.mxu0 0.0
        %5375 = vmatpush1.xpose.msra.mxu0 0.0
        %5376 = vmatprep.subr.mxu0 0.0
        %5377 = vmatpush1.xpose.msra.mxu0 0.0
        %5378 = vmatprep.subr.mxu0 0.0
        %5379 = vmatpush1.xpose.msra.mxu0 0.0
        %5380 = vmatprep.subr.mxu0 0.0
        %5381 = vmatpush1.xpose.msra.mxu0 0.0
        %5382 = vmatprep.subr.mxu0 0.0
        %5383 = vmatpush1.xpose.msra.mxu0 0.0
        %5384 = vmatprep.subr.mxu0 0.0
        %5385 = vmatpush1.xpose.msra.mxu0 0.0
        %5386 = vmatprep.subr.mxu0 0.0
        %5387 = vmatpush1.xpose.msra.mxu0 0.0
        %5388 = vmatprep.subr.mxu0 0.0
        %5389 = vmatpush1.xpose.msra.mxu0 0.0
        %5390 = vmatprep.subr.mxu0 0.0
        %5391 = vmatpush1.xpose.msra.mxu0 0.0
        %5392 = vmatprep.subr.mxu0 0.0
        %5393 = vmatpush1.xpose.msra.mxu0 %v5362
        %5394 = vmatprep.subr.mxu0 0.0
        %5395 = vmatpush1.xpose.msra.mxu0 %v5360
        %5396 = vmatprep.subr.mxu0 0.0
        %5397 = vmatpush2.xpose.msra.mxu0 0.0
        %5398 = vmatprep.subr.mxu0 0.0
        %5399 = vmatpush2.xpose.msra.mxu0 0.0
        %5400 = vmatprep.subr.mxu0 0.0
        %5401 = vmatpush2.xpose.msra.mxu0 0.0
        %5402 = vmatprep.subr.mxu0 0.0
        %5403 = vmatpush2.xpose.msra.mxu0 0.0
        %5404 = vmatprep.subr.mxu0 0.0
        %5405 = vmatpush2.xpose.msra.mxu0 0.0
        %5406 = vmatprep.subr.mxu0 0.0
        %5407 = vmatpush2.xpose.msra.mxu0 0.0
        %5408 = vmatprep.subr.mxu0 0.0
        %5409 = vmatpush2.xpose.msra.mxu0 0.0
        %5410 = vmatprep.subr.mxu0 0.0
        %5411 = vmatpush2.xpose.msra.mxu0 0.0
        %5412 = vmatprep.subr.mxu0 0.0
        %5413 = vmatpush2.xpose.msra.mxu0 0.0
        %5414 = vmatprep.subr.mxu0 0.0
        %5415 = vmatpush2.xpose.msra.mxu0 0.0
        %5416 = vmatprep.subr.mxu0 0.0
        %5417 = vmatpush2.xpose.msra.mxu0 0.0
        %5418 = vmatprep.subr.mxu0 0.0
        %5419 = vmatpush2.xpose.msra.mxu0 0.0
        %5420 = vmatprep.subr.mxu0 0.0
        %5421 = vmatpush2.xpose.msra.mxu0 0.0
        %5422 = vmatprep.subr.mxu0 0.0
        %5423 = vmatpush2.xpose.msra.mxu0 0.0
        %5424 = vmatprep.subr.mxu0 0.0
        %5425 = vmatpush2.xpose.msra.mxu0 0.0
        %5426 = vmatprep.subr.mxu0 0.0
        %5427 = vmatpush2.xpose.msra.mxu0 0.0
        %5428 = vmatprep.mubr.f32.mxu0 0.0
        %5429 = vmatmul.mubr.f32.gmra.mxu0 %v5356
        %v5430 = vpop.f32.mrf.mxu0
        %v5431 = vadd.f32 0.0, %v5430
        %v5432 = vpop.f32.mrf.mxu0
        %5433 = vmatprep.mubr.f32.mxu0 0.0
        %5434 = vmatmul.mubr.f32.gmra.mxu0 %v5358
        %v5435 = vpop.f32.mrf.mxu0
        %v5436 = vadd.f32 0.0, %v5435
        %v5437 = vpop.f32.mrf.mxu0
        %5438 = vdwg.mxu0
        %5439 = vrot.lane.b32.xlu0 %v953, 112
        %v5440 = vpop.permute.xlu0 %5439
        %5441 = vrot.lane.b32.xlu0 %v954, 112
        %v5442 = vpop.permute.xlu0 %5441
        %5443 = vrot.lane.b32.xlu0 %v1191, 48
        %v5444 = vpop.permute.xlu0 %5443
        %5445 = vrot.lane.b32.xlu0 %v1192, 48
        %v5446 = vpop.permute.xlu0 %5445
        %v5447 = vsel %vm1212, %v5440, 0
        %v5449 = vsel %vm1212, %v5442, 0
        %v5451 = vsel %vm1212, %v5444, 0
        %v5453 = vsel %vm1212, %v5446, 0
        %5455 = vmatprep.subr.mxu0 0.0
        %5456 = vmatpush1.xpose.msra.mxu0 0.0
        %5457 = vmatprep.subr.mxu0 0.0
        %5458 = vmatpush1.xpose.msra.mxu0 0.0
        %5459 = vmatprep.subr.mxu0 0.0
        %5460 = vmatpush1.xpose.msra.mxu0 0.0
        %5461 = vmatprep.subr.mxu0 0.0
        %5462 = vmatpush1.xpose.msra.mxu0 0.0
        %5463 = vmatprep.subr.mxu0 0.0
        %5464 = vmatpush1.xpose.msra.mxu0 0.0
        %5465 = vmatprep.subr.mxu0 0.0
        %5466 = vmatpush1.xpose.msra.mxu0 0.0
        %5467 = vmatprep.subr.mxu0 0.0
        %5468 = vmatpush1.xpose.msra.mxu0 0.0
        %5469 = vmatprep.subr.mxu0 0.0
        %5470 = vmatpush1.xpose.msra.mxu0 0.0
        %5471 = vmatprep.subr.mxu0 0.0
        %5472 = vmatpush1.xpose.msra.mxu0 0.0
        %5473 = vmatprep.subr.mxu0 0.0
        %5474 = vmatpush1.xpose.msra.mxu0 0.0
        %5475 = vmatprep.subr.mxu0 0.0
        %5476 = vmatpush1.xpose.msra.mxu0 0.0
        %5477 = vmatprep.subr.mxu0 0.0
        %5478 = vmatpush1.xpose.msra.mxu0 0.0
        %5479 = vmatprep.subr.mxu0 0.0
        %5480 = vmatpush1.xpose.msra.mxu0 0.0
        %5481 = vmatprep.subr.mxu0 0.0
        %5482 = vmatpush1.xpose.msra.mxu0 0.0
        %5483 = vmatprep.subr.mxu0 0.0
        %5484 = vmatpush1.xpose.msra.mxu0 %v5453
        %5485 = vmatprep.subr.mxu0 0.0
        %5486 = vmatpush1.xpose.msra.mxu0 %v5451
        %5487 = vmatprep.subr.mxu0 0.0
        %5488 = vmatpush2.xpose.msra.mxu0 0.0
        %5489 = vmatprep.subr.mxu0 0.0
        %5490 = vmatpush2.xpose.msra.mxu0 0.0
        %5491 = vmatprep.subr.mxu0 0.0
        %5492 = vmatpush2.xpose.msra.mxu0 0.0
        %5493 = vmatprep.subr.mxu0 0.0
        %5494 = vmatpush2.xpose.msra.mxu0 0.0
        %5495 = vmatprep.subr.mxu0 0.0
        %5496 = vmatpush2.xpose.msra.mxu0 0.0
        %5497 = vmatprep.subr.mxu0 0.0
        %5498 = vmatpush2.xpose.msra.mxu0 0.0
        %5499 = vmatprep.subr.mxu0 0.0
        %5500 = vmatpush2.xpose.msra.mxu0 0.0
        %5501 = vmatprep.subr.mxu0 0.0
        %5502 = vmatpush2.xpose.msra.mxu0 0.0
        %5503 = vmatprep.subr.mxu0 0.0
        %5504 = vmatpush2.xpose.msra.mxu0 0.0
        %5505 = vmatprep.subr.mxu0 0.0
        %5506 = vmatpush2.xpose.msra.mxu0 0.0
        %5507 = vmatprep.subr.mxu0 0.0
        %5508 = vmatpush2.xpose.msra.mxu0 0.0
        %5509 = vmatprep.subr.mxu0 0.0
        %5510 = vmatpush2.xpose.msra.mxu0 0.0
        %5511 = vmatprep.subr.mxu0 0.0
        %5512 = vmatpush2.xpose.msra.mxu0 0.0
        %5513 = vmatprep.subr.mxu0 0.0
        %5514 = vmatpush2.xpose.msra.mxu0 0.0
        %5515 = vmatprep.subr.mxu0 0.0
        %5516 = vmatpush2.xpose.msra.mxu0 0.0
        %5517 = vmatprep.subr.mxu0 0.0
        %5518 = vmatpush2.xpose.msra.mxu0 0.0
        %5519 = vmatprep.mubr.f32.mxu0 0.0
        %5520 = vmatmul.mubr.f32.gmra.mxu0 %v5447
        %v5521 = vpop.f32.mrf.mxu0
        %v5522 = vadd.f32 0.0, %v5521
        %v5523 = vpop.f32.mrf.mxu0
        %5524 = vmatprep.mubr.f32.mxu0 0.0
        %5525 = vmatmul.mubr.f32.gmra.mxu0 %v5449
        %v5526 = vpop.f32.mrf.mxu0
        %v5527 = vadd.f32 0.0, %v5526
        %v5528 = vpop.f32.mrf.mxu0
        %5529 = vdwg.mxu0
        %5530 = vrot.lane.b32.xlu0 %v955, 112
        %v5531 = vpop.permute.xlu0 %5530
        %5532 = vrot.lane.b32.xlu0 %v956, 112
        %v5533 = vpop.permute.xlu0 %5532
        %5534 = vrot.lane.b32.xlu0 %v1193, 48
        %v5535 = vpop.permute.xlu0 %5534
        %5536 = vrot.lane.b32.xlu0 %v1194, 48
        %v5537 = vpop.permute.xlu0 %5536
        %v5538 = vsel %vm1212, %v5531, 0
        %v5540 = vsel %vm1212, %v5533, 0
        %v5542 = vsel %vm1212, %v5535, 0
        %v5544 = vsel %vm1212, %v5537, 0
        %5546 = vmatprep.subr.mxu0 0.0
        %5547 = vmatpush1.xpose.msra.mxu0 0.0
        %5548 = vmatprep.subr.mxu0 0.0
        %5549 = vmatpush1.xpose.msra.mxu0 0.0
        %5550 = vmatprep.subr.mxu0 0.0
        %5551 = vmatpush1.xpose.msra.mxu0 0.0
        %5552 = vmatprep.subr.mxu0 0.0
        %5553 = vmatpush1.xpose.msra.mxu0 0.0
        %5554 = vmatprep.subr.mxu0 0.0
        %5555 = vmatpush1.xpose.msra.mxu0 0.0
        %5556 = vmatprep.subr.mxu0 0.0
        %5557 = vmatpush1.xpose.msra.mxu0 0.0
        %5558 = vmatprep.subr.mxu0 0.0
        %5559 = vmatpush1.xpose.msra.mxu0 0.0
        %5560 = vmatprep.subr.mxu0 0.0
        %5561 = vmatpush1.xpose.msra.mxu0 0.0
        %5562 = vmatprep.subr.mxu0 0.0
        %5563 = vmatpush1.xpose.msra.mxu0 0.0
        %5564 = vmatprep.subr.mxu0 0.0
        %5565 = vmatpush1.xpose.msra.mxu0 0.0
        %5566 = vmatprep.subr.mxu0 0.0
        %5567 = vmatpush1.xpose.msra.mxu0 0.0
        %5568 = vmatprep.subr.mxu0 0.0
        %5569 = vmatpush1.xpose.msra.mxu0 0.0
        %5570 = vmatprep.subr.mxu0 0.0
        %5571 = vmatpush1.xpose.msra.mxu0 0.0
        %5572 = vmatprep.subr.mxu0 0.0
        %5573 = vmatpush1.xpose.msra.mxu0 0.0
        %5574 = vmatprep.subr.mxu0 0.0
        %5575 = vmatpush1.xpose.msra.mxu0 %v5544
        %5576 = vmatprep.subr.mxu0 0.0
        %5577 = vmatpush1.xpose.msra.mxu0 %v5542
        %5578 = vmatprep.subr.mxu0 0.0
        %5579 = vmatpush2.xpose.msra.mxu0 0.0
        %5580 = vmatprep.subr.mxu0 0.0
        %5581 = vmatpush2.xpose.msra.mxu0 0.0
        %5582 = vmatprep.subr.mxu0 0.0
        %5583 = vmatpush2.xpose.msra.mxu0 0.0
        %5584 = vmatprep.subr.mxu0 0.0
        %5585 = vmatpush2.xpose.msra.mxu0 0.0
        %5586 = vmatprep.subr.mxu0 0.0
        %5587 = vmatpush2.xpose.msra.mxu0 0.0
        %5588 = vmatprep.subr.mxu0 0.0
        %5589 = vmatpush2.xpose.msra.mxu0 0.0
        %5590 = vmatprep.subr.mxu0 0.0
        %5591 = vmatpush2.xpose.msra.mxu0 0.0
        %5592 = vmatprep.subr.mxu0 0.0
        %5593 = vmatpush2.xpose.msra.mxu0 0.0
        %5594 = vmatprep.subr.mxu0 0.0
        %5595 = vmatpush2.xpose.msra.mxu0 0.0
        %5596 = vmatprep.subr.mxu0 0.0
        %5597 = vmatpush2.xpose.msra.mxu0 0.0
        %5598 = vmatprep.subr.mxu0 0.0
        %5599 = vmatpush2.xpose.msra.mxu0 0.0
        %5600 = vmatprep.subr.mxu0 0.0
        %5601 = vmatpush2.xpose.msra.mxu0 0.0
        %5602 = vmatprep.subr.mxu0 0.0
        %5603 = vmatpush2.xpose.msra.mxu0 0.0
        %5604 = vmatprep.subr.mxu0 0.0
        %5605 = vmatpush2.xpose.msra.mxu0 0.0
        %5606 = vmatprep.subr.mxu0 0.0
        %5607 = vmatpush2.xpose.msra.mxu0 0.0
        %5608 = vmatprep.subr.mxu0 0.0
        %5609 = vmatpush2.xpose.msra.mxu0 0.0
        %5610 = vmatprep.mubr.f32.mxu0 0.0
        %5611 = vmatmul.mubr.f32.gmra.mxu0 %v5538
        %v5612 = vpop.f32.mrf.mxu0
        %v5613 = vadd.f32 0.0, %v5612
        %v5614 = vpop.f32.mrf.mxu0
        %5615 = vmatprep.mubr.f32.mxu0 0.0
        %5616 = vmatmul.mubr.f32.gmra.mxu0 %v5540
        %v5617 = vpop.f32.mrf.mxu0
        %v5618 = vadd.f32 0.0, %v5617
        %v5619 = vpop.f32.mrf.mxu0
        %5620 = vdwg.mxu0
        %5621 = vrot.lane.b32.xlu0 %v957, 112
        %v5622 = vpop.permute.xlu0 %5621
        %5623 = vrot.lane.b32.xlu0 %v958, 112
        %v5624 = vpop.permute.xlu0 %5623
        %5625 = vrot.lane.b32.xlu0 %v1195, 48
        %v5626 = vpop.permute.xlu0 %5625
        %5627 = vrot.lane.b32.xlu0 %v1196, 48
        %v5628 = vpop.permute.xlu0 %5627
        %v5629 = vsel %vm1212, %v5622, 0
        %v5631 = vsel %vm1212, %v5624, 0
        %v5633 = vsel %vm1212, %v5626, 0
        %v5635 = vsel %vm1212, %v5628, 0
        %5637 = vmatprep.subr.mxu0 0.0
        %5638 = vmatpush1.xpose.msra.mxu0 0.0
        %5639 = vmatprep.subr.mxu0 0.0
        %5640 = vmatpush1.xpose.msra.mxu0 0.0
        %5641 = vmatprep.subr.mxu0 0.0
        %5642 = vmatpush1.xpose.msra.mxu0 0.0
        %5643 = vmatprep.subr.mxu0 0.0
        %5644 = vmatpush1.xpose.msra.mxu0 0.0
        %5645 = vmatprep.subr.mxu0 0.0
        %5646 = vmatpush1.xpose.msra.mxu0 0.0
        %5647 = vmatprep.subr.mxu0 0.0
        %5648 = vmatpush1.xpose.msra.mxu0 0.0
        %5649 = vmatprep.subr.mxu0 0.0
        %5650 = vmatpush1.xpose.msra.mxu0 0.0
        %5651 = vmatprep.subr.mxu0 0.0
        %5652 = vmatpush1.xpose.msra.mxu0 0.0
        %5653 = vmatprep.subr.mxu0 0.0
        %5654 = vmatpush1.xpose.msra.mxu0 0.0
        %5655 = vmatprep.subr.mxu0 0.0
        %5656 = vmatpush1.xpose.msra.mxu0 0.0
        %5657 = vmatprep.subr.mxu0 0.0
        %5658 = vmatpush1.xpose.msra.mxu0 0.0
        %5659 = vmatprep.subr.mxu0 0.0
        %5660 = vmatpush1.xpose.msra.mxu0 0.0
        %5661 = vmatprep.subr.mxu0 0.0
        %5662 = vmatpush1.xpose.msra.mxu0 0.0
        %5663 = vmatprep.subr.mxu0 0.0
        %5664 = vmatpush1.xpose.msra.mxu0 0.0
        %5665 = vmatprep.subr.mxu0 0.0
        %5666 = vmatpush1.xpose.msra.mxu0 %v5635
        %5667 = vmatprep.subr.mxu0 0.0
        %5668 = vmatpush1.xpose.msra.mxu0 %v5633
        %5669 = vmatprep.subr.mxu0 0.0
        %5670 = vmatpush2.xpose.msra.mxu0 0.0
        %5671 = vmatprep.subr.mxu0 0.0
        %5672 = vmatpush2.xpose.msra.mxu0 0.0
        %5673 = vmatprep.subr.mxu0 0.0
        %5674 = vmatpush2.xpose.msra.mxu0 0.0
        %5675 = vmatprep.subr.mxu0 0.0
        %5676 = vmatpush2.xpose.msra.mxu0 0.0
        %5677 = vmatprep.subr.mxu0 0.0
        %5678 = vmatpush2.xpose.msra.mxu0 0.0
        %5679 = vmatprep.subr.mxu0 0.0
        %5680 = vmatpush2.xpose.msra.mxu0 0.0
        %5681 = vmatprep.subr.mxu0 0.0
        %5682 = vmatpush2.xpose.msra.mxu0 0.0
        %5683 = vmatprep.subr.mxu0 0.0
        %5684 = vmatpush2.xpose.msra.mxu0 0.0
        %5685 = vmatprep.subr.mxu0 0.0
        %5686 = vmatpush2.xpose.msra.mxu0 0.0
        %5687 = vmatprep.subr.mxu0 0.0
        %5688 = vmatpush2.xpose.msra.mxu0 0.0
        %5689 = vmatprep.subr.mxu0 0.0
        %5690 = vmatpush2.xpose.msra.mxu0 0.0
        %5691 = vmatprep.subr.mxu0 0.0
        %5692 = vmatpush2.xpose.msra.mxu0 0.0
        %5693 = vmatprep.subr.mxu0 0.0
        %5694 = vmatpush2.xpose.msra.mxu0 0.0
        %5695 = vmatprep.subr.mxu0 0.0
        %5696 = vmatpush2.xpose.msra.mxu0 0.0
        %5697 = vmatprep.subr.mxu0 0.0
        %5698 = vmatpush2.xpose.msra.mxu0 0.0
        %5699 = vmatprep.subr.mxu0 0.0
        %5700 = vmatpush2.xpose.msra.mxu0 0.0
        %5701 = vmatprep.mubr.f32.mxu0 0.0
        %5702 = vmatmul.mubr.f32.gmra.mxu0 %v5629
        %v5703 = vpop.f32.mrf.mxu0
        %v5704 = vadd.f32 0.0, %v5703
        %v5705 = vpop.f32.mrf.mxu0
        %5706 = vmatprep.mubr.f32.mxu0 0.0
        %5707 = vmatmul.mubr.f32.gmra.mxu0 %v5631
        %v5708 = vpop.f32.mrf.mxu0
        %v5709 = vadd.f32 0.0, %v5708
        %v5710 = vpop.f32.mrf.mxu0
        %5711 = vdwg.mxu0
        %5712 = vrot.lane.b32.xlu0 %v959, 112
        %v5713 = vpop.permute.xlu0 %5712
        %5714 = vrot.lane.b32.xlu0 %v960, 112
        %v5715 = vpop.permute.xlu0 %5714
        %5716 = vrot.lane.b32.xlu0 %v1197, 48
        %v5717 = vpop.permute.xlu0 %5716
        %5718 = vrot.lane.b32.xlu0 %v1198, 48
        %v5719 = vpop.permute.xlu0 %5718
        %v5720 = vsel %vm1212, %v5713, 0
        %v5722 = vsel %vm1212, %v5715, 0
        %v5724 = vsel %vm1212, %v5717, 0
        %v5726 = vsel %vm1212, %v5719, 0
        %5728 = vmatprep.subr.mxu0 0.0
        %5729 = vmatpush1.xpose.msra.mxu0 0.0
        %5730 = vmatprep.subr.mxu0 0.0
        %5731 = vmatpush1.xpose.msra.mxu0 0.0
        %5732 = vmatprep.subr.mxu0 0.0
        %5733 = vmatpush1.xpose.msra.mxu0 0.0
        %5734 = vmatprep.subr.mxu0 0.0
        %5735 = vmatpush1.xpose.msra.mxu0 0.0
        %5736 = vmatprep.subr.mxu0 0.0
        %5737 = vmatpush1.xpose.msra.mxu0 0.0
        %5738 = vmatprep.subr.mxu0 0.0
        %5739 = vmatpush1.xpose.msra.mxu0 0.0
        %5740 = vmatprep.subr.mxu0 0.0
        %5741 = vmatpush1.xpose.msra.mxu0 0.0
        %5742 = vmatprep.subr.mxu0 0.0
        %5743 = vmatpush1.xpose.msra.mxu0 0.0
        %5744 = vmatprep.subr.mxu0 0.0
        %5745 = vmatpush1.xpose.msra.mxu0 0.0
        %5746 = vmatprep.subr.mxu0 0.0
        %5747 = vmatpush1.xpose.msra.mxu0 0.0
        %5748 = vmatprep.subr.mxu0 0.0
        %5749 = vmatpush1.xpose.msra.mxu0 0.0
        %5750 = vmatprep.subr.mxu0 0.0
        %5751 = vmatpush1.xpose.msra.mxu0 0.0
        %5752 = vmatprep.subr.mxu0 0.0
        %5753 = vmatpush1.xpose.msra.mxu0 0.0
        %5754 = vmatprep.subr.mxu0 0.0
        %5755 = vmatpush1.xpose.msra.mxu0 0.0
        %5756 = vmatprep.subr.mxu0 0.0
        %5757 = vmatpush1.xpose.msra.mxu0 %v5726
        %5758 = vmatprep.subr.mxu0 0.0
        %5759 = vmatpush1.xpose.msra.mxu0 %v5724
        %5760 = vmatprep.subr.mxu0 0.0
        %5761 = vmatpush2.xpose.msra.mxu0 0.0
        %5762 = vmatprep.subr.mxu0 0.0
        %5763 = vmatpush2.xpose.msra.mxu0 0.0
        %5764 = vmatprep.subr.mxu0 0.0
        %5765 = vmatpush2.xpose.msra.mxu0 0.0
        %5766 = vmatprep.subr.mxu0 0.0
        %5767 = vmatpush2.xpose.msra.mxu0 0.0
        %5768 = vmatprep.subr.mxu0 0.0
        %5769 = vmatpush2.xpose.msra.mxu0 0.0
        %5770 = vmatprep.subr.mxu0 0.0
        %5771 = vmatpush2.xpose.msra.mxu0 0.0
        %5772 = vmatprep.subr.mxu0 0.0
        %5773 = vmatpush2.xpose.msra.mxu0 0.0
        %5774 = vmatprep.subr.mxu0 0.0
        %5775 = vmatpush2.xpose.msra.mxu0 0.0
        %5776 = vmatprep.subr.mxu0 0.0
        %5777 = vmatpush2.xpose.msra.mxu0 0.0
        %5778 = vmatprep.subr.mxu0 0.0
        %5779 = vmatpush2.xpose.msra.mxu0 0.0
        %5780 = vmatprep.subr.mxu0 0.0
        %5781 = vmatpush2.xpose.msra.mxu0 0.0
        %5782 = vmatprep.subr.mxu0 0.0
        %5783 = vmatpush2.xpose.msra.mxu0 0.0
        %5784 = vmatprep.subr.mxu0 0.0
        %5785 = vmatpush2.xpose.msra.mxu0 0.0
        %5786 = vmatprep.subr.mxu0 0.0
        %5787 = vmatpush2.xpose.msra.mxu0 0.0
        %5788 = vmatprep.subr.mxu0 0.0
        %5789 = vmatpush2.xpose.msra.mxu0 0.0
        %5790 = vmatprep.subr.mxu0 0.0
        %5791 = vmatpush2.xpose.msra.mxu0 0.0
        %5792 = vmatprep.mubr.f32.mxu0 0.0
        %5793 = vmatmul.mubr.f32.gmra.mxu0 %v5720
        %v5794 = vpop.f32.mrf.mxu0
        %v5795 = vadd.f32 0.0, %v5794
        %v5796 = vpop.f32.mrf.mxu0
        %5797 = vmatprep.mubr.f32.mxu0 0.0
        %5798 = vmatmul.mubr.f32.gmra.mxu0 %v5722
        %v5799 = vpop.f32.mrf.mxu0
        %v5800 = vadd.f32 0.0, %v5799
        %v5801 = vpop.f32.mrf.mxu0
        %5802 = vdwg.mxu0
        %v5803 = vsel %vm2665, %v4430, -1e+30
        %v5804 = vsel %vm2666, %v4435, -1e+30
        %v5805 = vsel %vm2665, %v4521, -1e+30
        %v5806 = vsel %vm2666, %v4526, -1e+30
        %v5807 = vsel %vm2665, %v4612, -1e+30
        %v5808 = vsel %vm2666, %v4617, -1e+30
        %v5809 = vsel %vm2665, %v4703, -1e+30
        %v5810 = vsel %vm2666, %v4708, -1e+30
        %v5811 = vsel %vm2665, %v4794, -1e+30
        %v5812 = vsel %vm2666, %v4799, -1e+30
        %v5813 = vsel %vm2665, %v4885, -1e+30
        %v5814 = vsel %vm2666, %v4890, -1e+30
        %v5815 = vsel %vm2665, %v4976, -1e+30
        %v5816 = vsel %vm2666, %v4981, -1e+30
        %v5817 = vsel %vm2665, %v5067, -1e+30
        %v5818 = vsel %vm2666, %v5072, -1e+30
        %v5819 = vsel %vm2665, %v5158, -1e+30
        %v5820 = vsel %vm2666, %v5163, -1e+30
        %v5821 = vsel %vm2665, %v5249, -1e+30
        %v5822 = vsel %vm2666, %v5254, -1e+30
        %v5823 = vsel %vm2665, %v5340, -1e+30
        %v5824 = vsel %vm2666, %v5345, -1e+30
        %v5825 = vsel %vm2665, %v5431, -1e+30
        %v5826 = vsel %vm2666, %v5436, -1e+30
        %v5827 = vsel %vm2665, %v5522, -1e+30
        %v5828 = vsel %vm2666, %v5527, -1e+30
        %v5829 = vsel %vm2665, %v5613, -1e+30
        %v5830 = vsel %vm2666, %v5618, -1e+30
        %v5831 = vsel %vm2665, %v5704, -1e+30
        %v5832 = vsel %vm2666, %v5709, -1e+30
        %v5833 = vsel %vm2665, %v5795, -1e+30
        %v5834 = vsel %vm2666, %v5800, -1e+30
        %v5835 = vsel %vm1212, %v5803, -inf
        %5836 = vmax.xlane.f32.xlu0 %v5835
        %v5837 = vpop.xlane.xlu0 %5836
        %v5838 = vsel %vm1212, %v5804, -inf
        %5839 = vmax.xlane.f32.xlu0 %v5838
        %v5840 = vpop.xlane.xlu0 %5839
        %v5841 = vsel %vm1212, %v5805, -inf
        %5842 = vmax.xlane.f32.xlu0 %v5841
        %v5843 = vpop.xlane.xlu0 %5842
        %v5844 = vsel %vm1212, %v5806, -inf
        %5845 = vmax.xlane.f32.xlu0 %v5844
        %v5846 = vpop.xlane.xlu0 %5845
        %v5847 = vsel %vm1212, %v5807, -inf
        %5848 = vmax.xlane.f32.xlu0 %v5847
        %v5849 = vpop.xlane.xlu0 %5848
        %v5850 = vsel %vm1212, %v5808, -inf
        %5851 = vmax.xlane.f32.xlu0 %v5850
        %v5852 = vpop.xlane.xlu0 %5851
        %v5853 = vsel %vm1212, %v5809, -inf
        %5854 = vmax.xlane.f32.xlu0 %v5853
        %v5855 = vpop.xlane.xlu0 %5854
        %v5856 = vsel %vm1212, %v5810, -inf
        %5857 = vmax.xlane.f32.xlu0 %v5856
        %v5858 = vpop.xlane.xlu0 %5857
        %v5859 = vsel %vm1212, %v5811, -inf
        %5860 = vmax.xlane.f32.xlu0 %v5859
        %v5861 = vpop.xlane.xlu0 %5860
        %v5862 = vsel %vm1212, %v5812, -inf
        %5863 = vmax.xlane.f32.xlu0 %v5862
        %v5864 = vpop.xlane.xlu0 %5863
        %v5865 = vsel %vm1212, %v5813, -inf
        %5866 = vmax.xlane.f32.xlu0 %v5865
        %v5867 = vpop.xlane.xlu0 %5866
        %v5868 = vsel %vm1212, %v5814, -inf
        %5869 = vmax.xlane.f32.xlu0 %v5868
        %v5870 = vpop.xlane.xlu0 %5869
        %v5871 = vsel %vm1212, %v5815, -inf
        %5872 = vmax.xlane.f32.xlu0 %v5871
        %v5873 = vpop.xlane.xlu0 %5872
        %v5874 = vsel %vm1212, %v5816, -inf
        %5875 = vmax.xlane.f32.xlu0 %v5874
        %v5876 = vpop.xlane.xlu0 %5875
        %v5877 = vsel %vm1212, %v5817, -inf
        %5878 = vmax.xlane.f32.xlu0 %v5877
        %v5879 = vpop.xlane.xlu0 %5878
        %v5880 = vsel %vm1212, %v5818, -inf
        %5881 = vmax.xlane.f32.xlu0 %v5880
        %v5882 = vpop.xlane.xlu0 %5881
        %v5883 = vsel %vm1212, %v5819, -inf
        %5884 = vmax.xlane.f32.xlu0 %v5883
        %v5885 = vpop.xlane.xlu0 %5884
        %v5886 = vsel %vm1212, %v5820, -inf
        %5887 = vmax.xlane.f32.xlu0 %v5886
        %v5888 = vpop.xlane.xlu0 %5887
        %v5889 = vsel %vm1212, %v5821, -inf
        %5890 = vmax.xlane.f32.xlu0 %v5889
        %v5891 = vpop.xlane.xlu0 %5890
        %v5892 = vsel %vm1212, %v5822, -inf
        %5893 = vmax.xlane.f32.xlu0 %v5892
        %v5894 = vpop.xlane.xlu0 %5893
        %v5895 = vsel %vm1212, %v5823, -inf
        %5896 = vmax.xlane.f32.xlu0 %v5895
        %v5897 = vpop.xlane.xlu0 %5896
        %v5898 = vsel %vm1212, %v5824, -inf
        %5899 = vmax.xlane.f32.xlu0 %v5898
        %v5900 = vpop.xlane.xlu0 %5899
        %v5901 = vsel %vm1212, %v5825, -inf
        %5902 = vmax.xlane.f32.xlu0 %v5901
        %v5903 = vpop.xlane.xlu0 %5902
        %v5904 = vsel %vm1212, %v5826, -inf
        %5905 = vmax.xlane.f32.xlu0 %v5904
        %v5906 = vpop.xlane.xlu0 %5905
        %v5907 = vsel %vm1212, %v5827, -inf
        %5908 = vmax.xlane.f32.xlu0 %v5907
        %v5909 = vpop.xlane.xlu0 %5908
        %v5910 = vsel %vm1212, %v5828, -inf
        %5911 = vmax.xlane.f32.xlu0 %v5910
        %v5912 = vpop.xlane.xlu0 %5911
        %v5913 = vsel %vm1212, %v5829, -inf
        %5914 = vmax.xlane.f32.xlu0 %v5913
        %v5915 = vpop.xlane.xlu0 %5914
        %v5916 = vsel %vm1212, %v5830, -inf
        %5917 = vmax.xlane.f32.xlu0 %v5916
        %v5918 = vpop.xlane.xlu0 %5917
        %v5919 = vsel %vm1212, %v5831, -inf
        %5920 = vmax.xlane.f32.xlu0 %v5919
        %v5921 = vpop.xlane.xlu0 %5920
        %v5922 = vsel %vm1212, %v5832, -inf
        %5923 = vmax.xlane.f32.xlu0 %v5922
        %v5924 = vpop.xlane.xlu0 %5923
        %v5925 = vsel %vm1212, %v5833, -inf
        %5926 = vmax.xlane.f32.xlu0 %v5925
        %v5927 = vpop.xlane.xlu0 %5926
        %v5928 = vsel %vm1212, %v5834, -inf
        %5929 = vmax.xlane.f32.xlu0 %v5928
        %v5930 = vpop.xlane.xlu0 %5929
        %v5931 = vsub.f32 %v5803, %v5837
        %v5932 = vsub.f32 %v5804, %v5840
        %v5933 = vsub.f32 %v5805, %v5843
        %v5934 = vsub.f32 %v5806, %v5846
        %v5935 = vsub.f32 %v5807, %v5849
        %v5936 = vsub.f32 %v5808, %v5852
        %v5937 = vsub.f32 %v5809, %v5855
        %v5938 = vsub.f32 %v5810, %v5858
        %v5939 = vsub.f32 %v5811, %v5861
        %v5940 = vsub.f32 %v5812, %v5864
        %v5941 = vsub.f32 %v5813, %v5867
        %v5942 = vsub.f32 %v5814, %v5870
        %v5943 = vsub.f32 %v5815, %v5873
        %v5944 = vsub.f32 %v5816, %v5876
        %v5945 = vsub.f32 %v5817, %v5879
        %v5946 = vsub.f32 %v5818, %v5882
        %v5947 = vsub.f32 %v5819, %v5885
        %v5948 = vsub.f32 %v5820, %v5888
        %v5949 = vsub.f32 %v5821, %v5891
        %v5950 = vsub.f32 %v5822, %v5894
        %v5951 = vsub.f32 %v5823, %v5897
        %v5952 = vsub.f32 %v5824, %v5900
        %v5953 = vsub.f32 %v5825, %v5903
        %v5954 = vsub.f32 %v5826, %v5906
        %v5955 = vsub.f32 %v5827, %v5909
        %v5956 = vsub.f32 %v5828, %v5912
        %v5957 = vsub.f32 %v5829, %v5915
        %v5958 = vsub.f32 %v5830, %v5918
        %v5959 = vsub.f32 %v5831, %v5921
        %v5960 = vsub.f32 %v5832, %v5924
        %v5961 = vsub.f32 %v5833, %v5927
        %v5962 = vsub.f32 %v5834, %v5930
        %v5963 = vmul.f32 %v5931, 1.442695
        %v5964 = vpow.pop %v5963
        %v5965 = vmul.f32 %v5932, 1.442695
        %v5966 = vpow.pop %v5965
        %v5967 = vmul.f32 %v5933, 1.442695
        %v5968 = vpow.pop %v5967
        %v5969 = vmul.f32 %v5934, 1.442695
        %v5970 = vpow.pop %v5969
        %v5971 = vmul.f32 %v5935, 1.442695
        %v5972 = vpow.pop %v5971
        %v5973 = vmul.f32 %v5936, 1.442695
        %v5974 = vpow.pop %v5973
        %v5975 = vmul.f32 %v5937, 1.442695
        %v5976 = vpow.pop %v5975
        %v5977 = vmul.f32 %v5938, 1.442695
        %v5978 = vpow.pop %v5977
        %v5979 = vmul.f32 %v5939, 1.442695
        %v5980 = vpow.pop %v5979
        %v5981 = vmul.f32 %v5940, 1.442695
        %v5982 = vpow.pop %v5981
        %v5983 = vmul.f32 %v5941, 1.442695
        %v5984 = vpow.pop %v5983
        %v5985 = vmul.f32 %v5942, 1.442695
        %v5986 = vpow.pop %v5985
        %v5987 = vmul.f32 %v5943, 1.442695
        %v5988 = vpow.pop %v5987
        %v5989 = vmul.f32 %v5944, 1.442695
        %v5990 = vpow.pop %v5989
        %v5991 = vmul.f32 %v5945, 1.442695
        %v5992 = vpow.pop %v5991
        %v5993 = vmul.f32 %v5946, 1.442695
        %v5994 = vpow.pop %v5993
        %v5995 = vmul.f32 %v5947, 1.442695
        %v5996 = vpow.pop %v5995
        %v5997 = vmul.f32 %v5948, 1.442695
        %v5998 = vpow.pop %v5997
        %v5999 = vmul.f32 %v5949, 1.442695
        %v6000 = vpow.pop %v5999
        %v6001 = vmul.f32 %v5950, 1.442695
        %v6002 = vpow.pop %v6001
        %v6003 = vmul.f32 %v5951, 1.442695
        %v6004 = vpow.pop %v6003
        %v6005 = vmul.f32 %v5952, 1.442695
        %v6006 = vpow.pop %v6005
        %v6007 = vmul.f32 %v5953, 1.442695
        %v6008 = vpow.pop %v6007
        %v6009 = vmul.f32 %v5954, 1.442695
        %v6010 = vpow.pop %v6009
        %v6011 = vmul.f32 %v5955, 1.442695
        %v6012 = vpow.pop %v6011
        %v6013 = vmul.f32 %v5956, 1.442695
        %v6014 = vpow.pop %v6013
        %v6015 = vmul.f32 %v5957, 1.442695
        %v6016 = vpow.pop %v6015
        %v6017 = vmul.f32 %v5958, 1.442695
        %v6018 = vpow.pop %v6017
        %v6019 = vmul.f32 %v5959, 1.442695
        %v6020 = vpow.pop %v6019
        %v6021 = vmul.f32 %v5960, 1.442695
        %v6022 = vpow.pop %v6021
        %v6023 = vmul.f32 %v5961, 1.442695
        %v6024 = vpow.pop %v6023
        %v6025 = vmul.f32 %v5962, 1.442695
        %v6026 = vpow.pop %v6025
        %v6027 = vsel %vm1212, %v5964, 0.0
        %6028 = vadd.xlane.f32.xlu0 %v6027
        %v6029 = vpop.xlane.xlu0 %6028
        %v6030 = vsel %vm1212, %v5966, 0.0
        %6031 = vadd.xlane.f32.xlu0 %v6030
        %v6032 = vpop.xlane.xlu0 %6031
        %v6033 = vsel %vm1212, %v5968, 0.0
        %6034 = vadd.xlane.f32.xlu0 %v6033
        %v6035 = vpop.xlane.xlu0 %6034
        %v6036 = vsel %vm1212, %v5970, 0.0
        %6037 = vadd.xlane.f32.xlu0 %v6036
        %v6038 = vpop.xlane.xlu0 %6037
        %v6039 = vsel %vm1212, %v5972, 0.0
        %6040 = vadd.xlane.f32.xlu0 %v6039
        %v6041 = vpop.xlane.xlu0 %6040
        %v6042 = vsel %vm1212, %v5974, 0.0
        %6043 = vadd.xlane.f32.xlu0 %v6042
        %v6044 = vpop.xlane.xlu0 %6043
        %v6045 = vsel %vm1212, %v5976, 0.0
        %6046 = vadd.xlane.f32.xlu0 %v6045
        %v6047 = vpop.xlane.xlu0 %6046
        %v6048 = vsel %vm1212, %v5978, 0.0
        %6049 = vadd.xlane.f32.xlu0 %v6048
        %v6050 = vpop.xlane.xlu0 %6049
        %v6051 = vsel %vm1212, %v5980, 0.0
        %6052 = vadd.xlane.f32.xlu0 %v6051
        %v6053 = vpop.xlane.xlu0 %6052
        %v6054 = vsel %vm1212, %v5982, 0.0
        %6055 = vadd.xlane.f32.xlu0 %v6054
        %v6056 = vpop.xlane.xlu0 %6055
        %v6057 = vsel %vm1212, %v5984, 0.0
        %6058 = vadd.xlane.f32.xlu0 %v6057
        %v6059 = vpop.xlane.xlu0 %6058
        %v6060 = vsel %vm1212, %v5986, 0.0
        %6061 = vadd.xlane.f32.xlu0 %v6060
        %v6062 = vpop.xlane.xlu0 %6061
        %v6063 = vsel %vm1212, %v5988, 0.0
        %6064 = vadd.xlane.f32.xlu0 %v6063
        %v6065 = vpop.xlane.xlu0 %6064
        %v6066 = vsel %vm1212, %v5990, 0.0
        %6067 = vadd.xlane.f32.xlu0 %v6066
        %v6068 = vpop.xlane.xlu0 %6067
        %v6069 = vsel %vm1212, %v5992, 0.0
        %6070 = vadd.xlane.f32.xlu0 %v6069
        %v6071 = vpop.xlane.xlu0 %6070
        %v6072 = vsel %vm1212, %v5994, 0.0
        %6073 = vadd.xlane.f32.xlu0 %v6072
        %v6074 = vpop.xlane.xlu0 %6073
        %v6075 = vsel %vm1212, %v5996, 0.0
        %6076 = vadd.xlane.f32.xlu0 %v6075
        %v6077 = vpop.xlane.xlu0 %6076
        %v6078 = vsel %vm1212, %v5998, 0.0
        %6079 = vadd.xlane.f32.xlu0 %v6078
        %v6080 = vpop.xlane.xlu0 %6079
        %v6081 = vsel %vm1212, %v6000, 0.0
        %6082 = vadd.xlane.f32.xlu0 %v6081
        %v6083 = vpop.xlane.xlu0 %6082
        %v6084 = vsel %vm1212, %v6002, 0.0
        %6085 = vadd.xlane.f32.xlu0 %v6084
        %v6086 = vpop.xlane.xlu0 %6085
        %v6087 = vsel %vm1212, %v6004, 0.0
        %6088 = vadd.xlane.f32.xlu0 %v6087
        %v6089 = vpop.xlane.xlu0 %6088
        %v6090 = vsel %vm1212, %v6006, 0.0
        %6091 = vadd.xlane.f32.xlu0 %v6090
        %v6092 = vpop.xlane.xlu0 %6091
        %v6093 = vsel %vm1212, %v6008, 0.0
        %6094 = vadd.xlane.f32.xlu0 %v6093
        %v6095 = vpop.xlane.xlu0 %6094
        %v6096 = vsel %vm1212, %v6010, 0.0
        %6097 = vadd.xlane.f32.xlu0 %v6096
        %v6098 = vpop.xlane.xlu0 %6097
        %v6099 = vsel %vm1212, %v6012, 0.0
        %6100 = vadd.xlane.f32.xlu0 %v6099
        %v6101 = vpop.xlane.xlu0 %6100
        %v6102 = vsel %vm1212, %v6014, 0.0
        %6103 = vadd.xlane.f32.xlu0 %v6102
        %v6104 = vpop.xlane.xlu0 %6103
        %v6105 = vsel %vm1212, %v6016, 0.0
        %6106 = vadd.xlane.f32.xlu0 %v6105
        %v6107 = vpop.xlane.xlu0 %6106
        %v6108 = vsel %vm1212, %v6018, 0.0
        %6109 = vadd.xlane.f32.xlu0 %v6108
        %v6110 = vpop.xlane.xlu0 %6109
        %v6111 = vsel %vm1212, %v6020, 0.0
        %6112 = vadd.xlane.f32.xlu0 %v6111
        %v6113 = vpop.xlane.xlu0 %6112
        %v6114 = vsel %vm1212, %v6022, 0.0
        %6115 = vadd.xlane.f32.xlu0 %v6114
        %v6116 = vpop.xlane.xlu0 %6115
        %v6117 = vsel %vm1212, %v6024, 0.0
        %6118 = vadd.xlane.f32.xlu0 %v6117
        %v6119 = vpop.xlane.xlu0 %6118
        %v6120 = vsel %vm1212, %v6026, 0.0
        %6121 = vadd.xlane.f32.xlu0 %v6120
        %v6122 = vpop.xlane.xlu0 %6121
        %v6123 = vrcp.pop %v6029
        %v6124 = vrcp.pop %v6032
        %v6125 = vrcp.pop %v6035
        %v6126 = vrcp.pop %v6038
        %v6127 = vrcp.pop %v6041
        %v6128 = vrcp.pop %v6044
        %v6129 = vrcp.pop %v6047
        %v6130 = vrcp.pop %v6050
        %v6131 = vrcp.pop %v6053
        %v6132 = vrcp.pop %v6056
        %v6133 = vrcp.pop %v6059
        %v6134 = vrcp.pop %v6062
        %v6135 = vrcp.pop %v6065
        %v6136 = vrcp.pop %v6068
        %v6137 = vrcp.pop %v6071
        %v6138 = vrcp.pop %v6074
        %v6139 = vrcp.pop %v6077
        %v6140 = vrcp.pop %v6080
        %v6141 = vrcp.pop %v6083
        %v6142 = vrcp.pop %v6086
        %v6143 = vrcp.pop %v6089
        %v6144 = vrcp.pop %v6092
        %v6145 = vrcp.pop %v6095
        %v6146 = vrcp.pop %v6098
        %v6147 = vrcp.pop %v6101
        %v6148 = vrcp.pop %v6104
        %v6149 = vrcp.pop %v6107
        %v6150 = vrcp.pop %v6110
        %v6151 = vrcp.pop %v6113
        %v6152 = vrcp.pop %v6116
        %v6153 = vrcp.pop %v6119
        %v6154 = vrcp.pop %v6122
        %v6155 = vmul.f32 %v5964, %v6123
        %v6156 = vmul.f32 %v5966, %v6124
        %v6157 = vmul.f32 %v5968, %v6125
        %v6158 = vmul.f32 %v5970, %v6126
        %v6159 = vmul.f32 %v5972, %v6127
        %v6160 = vmul.f32 %v5974, %v6128
        %v6161 = vmul.f32 %v5976, %v6129
        %v6162 = vmul.f32 %v5978, %v6130
        %v6163 = vmul.f32 %v5980, %v6131
        %v6164 = vmul.f32 %v5982, %v6132
        %v6165 = vmul.f32 %v5984, %v6133
        %v6166 = vmul.f32 %v5986, %v6134
        %v6167 = vmul.f32 %v5988, %v6135
        %v6168 = vmul.f32 %v5990, %v6136
        %v6169 = vmul.f32 %v5992, %v6137
        %v6170 = vmul.f32 %v5994, %v6138
        %v6171 = vmul.f32 %v5996, %v6139
        %v6172 = vmul.f32 %v5998, %v6140
        %v6173 = vmul.f32 %v6000, %v6141
        %v6174 = vmul.f32 %v6002, %v6142
        %v6175 = vmul.f32 %v6004, %v6143
        %v6176 = vmul.f32 %v6006, %v6144
        %v6177 = vmul.f32 %v6008, %v6145
        %v6178 = vmul.f32 %v6010, %v6146
        %v6179 = vmul.f32 %v6012, %v6147
        %v6180 = vmul.f32 %v6014, %v6148
        %v6181 = vmul.f32 %v6016, %v6149
        %v6182 = vmul.f32 %v6018, %v6150
        %v6183 = vmul.f32 %v6020, %v6151
        %v6184 = vmul.f32 %v6022, %v6152
        %v6185 = vmul.f32 %v6024, %v6153
        %v6186 = vmul.f32 %v6026, %v6154
        %6189 = vrot.lane.b32.xlu0 %v537, 112
        %v6190 = vpop.permute.xlu0 %6189
        %6191 = vrot.lane.b32.xlu0 %v543, 112
        %v6192 = vpop.permute.xlu0 %6191
        %v6196 = vsel %vm1212, %v6155, 0
        %v6199 = vsel %vm1212, %v6156, 0
        %6201 = vmatprep.subr.mxu0 0.0
        %6202 = vmatpush1.msra.mxu0 0.0
        %6203 = vmatprep.subr.mxu0 0.0
        %6204 = vmatpush1.msra.mxu0 0.0
        %6205 = vmatprep.subr.mxu0 0.0
        %6206 = vmatpush1.msra.mxu0 0.0
        %6207 = vmatprep.subr.mxu0 0.0
        %6208 = vmatpush1.msra.mxu0 0.0
        %6209 = vmatprep.subr.mxu0 0.0
        %6210 = vmatpush1.msra.mxu0 0.0
        %6211 = vmatprep.subr.mxu0 0.0
        %6212 = vmatpush1.msra.mxu0 0.0
        %6213 = vmatprep.subr.mxu0 0.0
        %6214 = vmatpush1.msra.mxu0 0.0
        %6215 = vmatprep.subr.mxu0 0.0
        %6216 = vmatpush1.msra.mxu0 0.0
        %6217 = vmatprep.subr.mxu0 0.0
        %6218 = vmatpush1.msra.mxu0 0.0
        %6219 = vmatprep.subr.mxu0 0.0
        %6220 = vmatpush1.msra.mxu0 0.0
        %6221 = vmatprep.subr.mxu0 0.0
        %6222 = vmatpush1.msra.mxu0 0.0
        %6223 = vmatprep.subr.mxu0 0.0
        %6224 = vmatpush1.msra.mxu0 0.0
        %6225 = vmatprep.subr.mxu0 0.0
        %6226 = vmatpush1.msra.mxu0 0.0
        %6227 = vmatprep.subr.mxu0 0.0
        %6228 = vmatpush1.msra.mxu0 0.0
        %6229 = vmatprep.subr.mxu0 0.0
        %6230 = vmatpush1.msra.mxu0 %v6192
        %6231 = vmatprep.subr.mxu0 0.0
        %6232 = vmatpush1.msra.mxu0 %v6190
        %6233 = vmatprep.subr.mxu0 0.0
        %6234 = vmatpush2.msra.mxu0 0.0
        %6235 = vmatprep.subr.mxu0 0.0
        %6236 = vmatpush2.msra.mxu0 0.0
        %6237 = vmatprep.subr.mxu0 0.0
        %6238 = vmatpush2.msra.mxu0 0.0
        %6239 = vmatprep.subr.mxu0 0.0
        %6240 = vmatpush2.msra.mxu0 0.0
        %6241 = vmatprep.subr.mxu0 0.0
        %6242 = vmatpush2.msra.mxu0 0.0
        %6243 = vmatprep.subr.mxu0 0.0
        %6244 = vmatpush2.msra.mxu0 0.0
        %6245 = vmatprep.subr.mxu0 0.0
        %6246 = vmatpush2.msra.mxu0 0.0
        %6247 = vmatprep.subr.mxu0 0.0
        %6248 = vmatpush2.msra.mxu0 0.0
        %6249 = vmatprep.subr.mxu0 0.0
        %6250 = vmatpush2.msra.mxu0 0.0
        %6251 = vmatprep.subr.mxu0 0.0
        %6252 = vmatpush2.msra.mxu0 0.0
        %6253 = vmatprep.subr.mxu0 0.0
        %6254 = vmatpush2.msra.mxu0 0.0
        %6255 = vmatprep.subr.mxu0 0.0
        %6256 = vmatpush2.msra.mxu0 0.0
        %6257 = vmatprep.subr.mxu0 0.0
        %6258 = vmatpush2.msra.mxu0 0.0
        %6259 = vmatprep.subr.mxu0 0.0
        %6260 = vmatpush2.msra.mxu0 0.0
        %6261 = vmatprep.subr.mxu0 0.0
        %6262 = vmatpush2.msra.mxu0 0.0
        %6263 = vmatprep.subr.mxu0 0.0
        %6264 = vmatpush2.msra.mxu0 0.0
        %6265 = vmatprep.mubr.f32.mxu0 0.0
        %6266 = vmatmul.mubr.f32.gmra.mxu0 %v6196
        %v6267 = vpop.f32.mrf.mxu0
        %v6268 = vadd.f32 0.0, %v6267
        %v6269 = vpop.f32.mrf.mxu0
        %6270 = vmatprep.mubr.f32.mxu0 0.0
        %6271 = vmatmul.mubr.f32.gmra.mxu0 %v6199
        %v6272 = vpop.f32.mrf.mxu0
        %v6273 = vadd.f32 0.0, %v6272
        %v6274 = vpop.f32.mrf.mxu0
        %6275 = vdwg.mxu0
        %6278 = vrot.lane.b32.xlu0 %v549, 112
        %v6279 = vpop.permute.xlu0 %6278
        %6280 = vrot.lane.b32.xlu0 %v555, 112
        %v6281 = vpop.permute.xlu0 %6280
        %v6285 = vsel %vm1212, %v6157, 0
        %v6288 = vsel %vm1212, %v6158, 0
        %6290 = vmatprep.subr.mxu0 0.0
        %6291 = vmatpush1.msra.mxu0 0.0
        %6292 = vmatprep.subr.mxu0 0.0
        %6293 = vmatpush1.msra.mxu0 0.0
        %6294 = vmatprep.subr.mxu0 0.0
        %6295 = vmatpush1.msra.mxu0 0.0
        %6296 = vmatprep.subr.mxu0 0.0
        %6297 = vmatpush1.msra.mxu0 0.0
        %6298 = vmatprep.subr.mxu0 0.0
        %6299 = vmatpush1.msra.mxu0 0.0
        %6300 = vmatprep.subr.mxu0 0.0
        %6301 = vmatpush1.msra.mxu0 0.0
        %6302 = vmatprep.subr.mxu0 0.0
        %6303 = vmatpush1.msra.mxu0 0.0
        %6304 = vmatprep.subr.mxu0 0.0
        %6305 = vmatpush1.msra.mxu0 0.0
        %6306 = vmatprep.subr.mxu0 0.0
        %6307 = vmatpush1.msra.mxu0 0.0
        %6308 = vmatprep.subr.mxu0 0.0
        %6309 = vmatpush1.msra.mxu0 0.0
        %6310 = vmatprep.subr.mxu0 0.0
        %6311 = vmatpush1.msra.mxu0 0.0
        %6312 = vmatprep.subr.mxu0 0.0
        %6313 = vmatpush1.msra.mxu0 0.0
        %6314 = vmatprep.subr.mxu0 0.0
        %6315 = vmatpush1.msra.mxu0 0.0
        %6316 = vmatprep.subr.mxu0 0.0
        %6317 = vmatpush1.msra.mxu0 0.0
        %6318 = vmatprep.subr.mxu0 0.0
        %6319 = vmatpush1.msra.mxu0 %v6281
        %6320 = vmatprep.subr.mxu0 0.0
        %6321 = vmatpush1.msra.mxu0 %v6279
        %6322 = vmatprep.subr.mxu0 0.0
        %6323 = vmatpush2.msra.mxu0 0.0
        %6324 = vmatprep.subr.mxu0 0.0
        %6325 = vmatpush2.msra.mxu0 0.0
        %6326 = vmatprep.subr.mxu0 0.0
        %6327 = vmatpush2.msra.mxu0 0.0
        %6328 = vmatprep.subr.mxu0 0.0
        %6329 = vmatpush2.msra.mxu0 0.0
        %6330 = vmatprep.subr.mxu0 0.0
        %6331 = vmatpush2.msra.mxu0 0.0
        %6332 = vmatprep.subr.mxu0 0.0
        %6333 = vmatpush2.msra.mxu0 0.0
        %6334 = vmatprep.subr.mxu0 0.0
        %6335 = vmatpush2.msra.mxu0 0.0
        %6336 = vmatprep.subr.mxu0 0.0
        %6337 = vmatpush2.msra.mxu0 0.0
        %6338 = vmatprep.subr.mxu0 0.0
        %6339 = vmatpush2.msra.mxu0 0.0
        %6340 = vmatprep.subr.mxu0 0.0
        %6341 = vmatpush2.msra.mxu0 0.0
        %6342 = vmatprep.subr.mxu0 0.0
        %6343 = vmatpush2.msra.mxu0 0.0
        %6344 = vmatprep.subr.mxu0 0.0
        %6345 = vmatpush2.msra.mxu0 0.0
        %6346 = vmatprep.subr.mxu0 0.0
        %6347 = vmatpush2.msra.mxu0 0.0
        %6348 = vmatprep.subr.mxu0 0.0
        %6349 = vmatpush2.msra.mxu0 0.0
        %6350 = vmatprep.subr.mxu0 0.0
        %6351 = vmatpush2.msra.mxu0 0.0
        %6352 = vmatprep.subr.mxu0 0.0
        %6353 = vmatpush2.msra.mxu0 0.0
        %6354 = vmatprep.mubr.f32.mxu0 0.0
        %6355 = vmatmul.mubr.f32.gmra.mxu0 %v6285
        %v6356 = vpop.f32.mrf.mxu0
        %v6357 = vadd.f32 0.0, %v6356
        %v6358 = vpop.f32.mrf.mxu0
        %6359 = vmatprep.mubr.f32.mxu0 0.0
        %6360 = vmatmul.mubr.f32.gmra.mxu0 %v6288
        %v6361 = vpop.f32.mrf.mxu0
        %v6362 = vadd.f32 0.0, %v6361
        %v6363 = vpop.f32.mrf.mxu0
        %6364 = vdwg.mxu0
        %6367 = vrot.lane.b32.xlu0 %v561, 112
        %v6368 = vpop.permute.xlu0 %6367
        %6369 = vrot.lane.b32.xlu0 %v567, 112
        %v6370 = vpop.permute.xlu0 %6369
        %v6374 = vsel %vm1212, %v6159, 0
        %v6377 = vsel %vm1212, %v6160, 0
        %6379 = vmatprep.subr.mxu0 0.0
        %6380 = vmatpush1.msra.mxu0 0.0
        %6381 = vmatprep.subr.mxu0 0.0
        %6382 = vmatpush1.msra.mxu0 0.0
        %6383 = vmatprep.subr.mxu0 0.0
        %6384 = vmatpush1.msra.mxu0 0.0
        %6385 = vmatprep.subr.mxu0 0.0
        %6386 = vmatpush1.msra.mxu0 0.0
        %6387 = vmatprep.subr.mxu0 0.0
        %6388 = vmatpush1.msra.mxu0 0.0
        %6389 = vmatprep.subr.mxu0 0.0
        %6390 = vmatpush1.msra.mxu0 0.0
        %6391 = vmatprep.subr.mxu0 0.0
        %6392 = vmatpush1.msra.mxu0 0.0
        %6393 = vmatprep.subr.mxu0 0.0
        %6394 = vmatpush1.msra.mxu0 0.0
        %6395 = vmatprep.subr.mxu0 0.0
        %6396 = vmatpush1.msra.mxu0 0.0
        %6397 = vmatprep.subr.mxu0 0.0
        %6398 = vmatpush1.msra.mxu0 0.0
        %6399 = vmatprep.subr.mxu0 0.0
        %6400 = vmatpush1.msra.mxu0 0.0
        %6401 = vmatprep.subr.mxu0 0.0
        %6402 = vmatpush1.msra.mxu0 0.0
        %6403 = vmatprep.subr.mxu0 0.0
        %6404 = vmatpush1.msra.mxu0 0.0
        %6405 = vmatprep.subr.mxu0 0.0
        %6406 = vmatpush1.msra.mxu0 0.0
        %6407 = vmatprep.subr.mxu0 0.0
        %6408 = vmatpush1.msra.mxu0 %v6370
        %6409 = vmatprep.subr.mxu0 0.0
        %6410 = vmatpush1.msra.mxu0 %v6368
        %6411 = vmatprep.subr.mxu0 0.0
        %6412 = vmatpush2.msra.mxu0 0.0
        %6413 = vmatprep.subr.mxu0 0.0
        %6414 = vmatpush2.msra.mxu0 0.0
        %6415 = vmatprep.subr.mxu0 0.0
        %6416 = vmatpush2.msra.mxu0 0.0
        %6417 = vmatprep.subr.mxu0 0.0
        %6418 = vmatpush2.msra.mxu0 0.0
        %6419 = vmatprep.subr.mxu0 0.0
        %6420 = vmatpush2.msra.mxu0 0.0
        %6421 = vmatprep.subr.mxu0 0.0
        %6422 = vmatpush2.msra.mxu0 0.0
        %6423 = vmatprep.subr.mxu0 0.0
        %6424 = vmatpush2.msra.mxu0 0.0
        %6425 = vmatprep.subr.mxu0 0.0
        %6426 = vmatpush2.msra.mxu0 0.0
        %6427 = vmatprep.subr.mxu0 0.0
        %6428 = vmatpush2.msra.mxu0 0.0
        %6429 = vmatprep.subr.mxu0 0.0
        %6430 = vmatpush2.msra.mxu0 0.0
        %6431 = vmatprep.subr.mxu0 0.0
        %6432 = vmatpush2.msra.mxu0 0.0
        %6433 = vmatprep.subr.mxu0 0.0
        %6434 = vmatpush2.msra.mxu0 0.0
        %6435 = vmatprep.subr.mxu0 0.0
        %6436 = vmatpush2.msra.mxu0 0.0
        %6437 = vmatprep.subr.mxu0 0.0
        %6438 = vmatpush2.msra.mxu0 0.0
        %6439 = vmatprep.subr.mxu0 0.0
        %6440 = vmatpush2.msra.mxu0 0.0
        %6441 = vmatprep.subr.mxu0 0.0
        %6442 = vmatpush2.msra.mxu0 0.0
        %6443 = vmatprep.mubr.f32.mxu0 0.0
        %6444 = vmatmul.mubr.f32.gmra.mxu0 %v6374
        %v6445 = vpop.f32.mrf.mxu0
        %v6446 = vadd.f32 0.0, %v6445
        %v6447 = vpop.f32.mrf.mxu0
        %6448 = vmatprep.mubr.f32.mxu0 0.0
        %6449 = vmatmul.mubr.f32.gmra.mxu0 %v6377
        %v6450 = vpop.f32.mrf.mxu0
        %v6451 = vadd.f32 0.0, %v6450
        %v6452 = vpop.f32.mrf.mxu0
        %6453 = vdwg.mxu0
        %6456 = vrot.lane.b32.xlu0 %v573, 112
        %v6457 = vpop.permute.xlu0 %6456
        %6458 = vrot.lane.b32.xlu0 %v579, 112
        %v6459 = vpop.permute.xlu0 %6458
        %v6463 = vsel %vm1212, %v6161, 0
        %v6466 = vsel %vm1212, %v6162, 0
        %6468 = vmatprep.subr.mxu0 0.0
        %6469 = vmatpush1.msra.mxu0 0.0
        %6470 = vmatprep.subr.mxu0 0.0
        %6471 = vmatpush1.msra.mxu0 0.0
        %6472 = vmatprep.subr.mxu0 0.0
        %6473 = vmatpush1.msra.mxu0 0.0
        %6474 = vmatprep.subr.mxu0 0.0
        %6475 = vmatpush1.msra.mxu0 0.0
        %6476 = vmatprep.subr.mxu0 0.0
        %6477 = vmatpush1.msra.mxu0 0.0
        %6478 = vmatprep.subr.mxu0 0.0
        %6479 = vmatpush1.msra.mxu0 0.0
        %6480 = vmatprep.subr.mxu0 0.0
        %6481 = vmatpush1.msra.mxu0 0.0
        %6482 = vmatprep.subr.mxu0 0.0
        %6483 = vmatpush1.msra.mxu0 0.0
        %6484 = vmatprep.subr.mxu0 0.0
        %6485 = vmatpush1.msra.mxu0 0.0
        %6486 = vmatprep.subr.mxu0 0.0
        %6487 = vmatpush1.msra.mxu0 0.0
        %6488 = vmatprep.subr.mxu0 0.0
        %6489 = vmatpush1.msra.mxu0 0.0
        %6490 = vmatprep.subr.mxu0 0.0
        %6491 = vmatpush1.msra.mxu0 0.0
        %6492 = vmatprep.subr.mxu0 0.0
        %6493 = vmatpush1.msra.mxu0 0.0
        %6494 = vmatprep.subr.mxu0 0.0
        %6495 = vmatpush1.msra.mxu0 0.0
        %6496 = vmatprep.subr.mxu0 0.0
        %6497 = vmatpush1.msra.mxu0 %v6459
        %6498 = vmatprep.subr.mxu0 0.0
        %6499 = vmatpush1.msra.mxu0 %v6457
        %6500 = vmatprep.subr.mxu0 0.0
        %6501 = vmatpush2.msra.mxu0 0.0
        %6502 = vmatprep.subr.mxu0 0.0
        %6503 = vmatpush2.msra.mxu0 0.0
        %6504 = vmatprep.subr.mxu0 0.0
        %6505 = vmatpush2.msra.mxu0 0.0
        %6506 = vmatprep.subr.mxu0 0.0
        %6507 = vmatpush2.msra.mxu0 0.0
        %6508 = vmatprep.subr.mxu0 0.0
        %6509 = vmatpush2.msra.mxu0 0.0
        %6510 = vmatprep.subr.mxu0 0.0
        %6511 = vmatpush2.msra.mxu0 0.0
        %6512 = vmatprep.subr.mxu0 0.0
        %6513 = vmatpush2.msra.mxu0 0.0
        %6514 = vmatprep.subr.mxu0 0.0
        %6515 = vmatpush2.msra.mxu0 0.0
        %6516 = vmatprep.subr.mxu0 0.0
        %6517 = vmatpush2.msra.mxu0 0.0
        %6518 = vmatprep.subr.mxu0 0.0
        %6519 = vmatpush2.msra.mxu0 0.0
        %6520 = vmatprep.subr.mxu0 0.0
        %6521 = vmatpush2.msra.mxu0 0.0
        %6522 = vmatprep.subr.mxu0 0.0
        %6523 = vmatpush2.msra.mxu0 0.0
        %6524 = vmatprep.subr.mxu0 0.0
        %6525 = vmatpush2.msra.mxu0 0.0
        %6526 = vmatprep.subr.mxu0 0.0
        %6527 = vmatpush2.msra.mxu0 0.0
        %6528 = vmatprep.subr.mxu0 0.0
        %6529 = vmatpush2.msra.mxu0 0.0
        %6530 = vmatprep.subr.mxu0 0.0
        %6531 = vmatpush2.msra.mxu0 0.0
        %6532 = vmatprep.mubr.f32.mxu0 0.0
        %6533 = vmatmul.mubr.f32.gmra.mxu0 %v6463
        %v6534 = vpop.f32.mrf.mxu0
        %v6535 = vadd.f32 0.0, %v6534
        %v6536 = vpop.f32.mrf.mxu0
        %6537 = vmatprep.mubr.f32.mxu0 0.0
        %6538 = vmatmul.mubr.f32.gmra.mxu0 %v6466
        %v6539 = vpop.f32.mrf.mxu0
        %v6540 = vadd.f32 0.0, %v6539
        %v6541 = vpop.f32.mrf.mxu0
        %6542 = vdwg.mxu0
        %6545 = vrot.lane.b32.xlu0 %v585, 112
        %v6546 = vpop.permute.xlu0 %6545
        %6547 = vrot.lane.b32.xlu0 %v591, 112
        %v6548 = vpop.permute.xlu0 %6547
        %v6552 = vsel %vm1212, %v6163, 0
        %v6555 = vsel %vm1212, %v6164, 0
        %6557 = vmatprep.subr.mxu0 0.0
        %6558 = vmatpush1.msra.mxu0 0.0
        %6559 = vmatprep.subr.mxu0 0.0
        %6560 = vmatpush1.msra.mxu0 0.0
        %6561 = vmatprep.subr.mxu0 0.0
        %6562 = vmatpush1.msra.mxu0 0.0
        %6563 = vmatprep.subr.mxu0 0.0
        %6564 = vmatpush1.msra.mxu0 0.0
        %6565 = vmatprep.subr.mxu0 0.0
        %6566 = vmatpush1.msra.mxu0 0.0
        %6567 = vmatprep.subr.mxu0 0.0
        %6568 = vmatpush1.msra.mxu0 0.0
        %6569 = vmatprep.subr.mxu0 0.0
        %6570 = vmatpush1.msra.mxu0 0.0
        %6571 = vmatprep.subr.mxu0 0.0
        %6572 = vmatpush1.msra.mxu0 0.0
        %6573 = vmatprep.subr.mxu0 0.0
        %6574 = vmatpush1.msra.mxu0 0.0
        %6575 = vmatprep.subr.mxu0 0.0
        %6576 = vmatpush1.msra.mxu0 0.0
        %6577 = vmatprep.subr.mxu0 0.0
        %6578 = vmatpush1.msra.mxu0 0.0
        %6579 = vmatprep.subr.mxu0 0.0
        %6580 = vmatpush1.msra.mxu0 0.0
        %6581 = vmatprep.subr.mxu0 0.0
        %6582 = vmatpush1.msra.mxu0 0.0
        %6583 = vmatprep.subr.mxu0 0.0
        %6584 = vmatpush1.msra.mxu0 0.0
        %6585 = vmatprep.subr.mxu0 0.0
        %6586 = vmatpush1.msra.mxu0 %v6548
        %6587 = vmatprep.subr.mxu0 0.0
        %6588 = vmatpush1.msra.mxu0 %v6546
        %6589 = vmatprep.subr.mxu0 0.0
        %6590 = vmatpush2.msra.mxu0 0.0
        %6591 = vmatprep.subr.mxu0 0.0
        %6592 = vmatpush2.msra.mxu0 0.0
        %6593 = vmatprep.subr.mxu0 0.0
        %6594 = vmatpush2.msra.mxu0 0.0
        %6595 = vmatprep.subr.mxu0 0.0
        %6596 = vmatpush2.msra.mxu0 0.0
        %6597 = vmatprep.subr.mxu0 0.0
        %6598 = vmatpush2.msra.mxu0 0.0
        %6599 = vmatprep.subr.mxu0 0.0
        %6600 = vmatpush2.msra.mxu0 0.0
        %6601 = vmatprep.subr.mxu0 0.0
        %6602 = vmatpush2.msra.mxu0 0.0
        %6603 = vmatprep.subr.mxu0 0.0
        %6604 = vmatpush2.msra.mxu0 0.0
        %6605 = vmatprep.subr.mxu0 0.0
        %6606 = vmatpush2.msra.mxu0 0.0
        %6607 = vmatprep.subr.mxu0 0.0
        %6608 = vmatpush2.msra.mxu0 0.0
        %6609 = vmatprep.subr.mxu0 0.0
        %6610 = vmatpush2.msra.mxu0 0.0
        %6611 = vmatprep.subr.mxu0 0.0
        %6612 = vmatpush2.msra.mxu0 0.0
        %6613 = vmatprep.subr.mxu0 0.0
        %6614 = vmatpush2.msra.mxu0 0.0
        %6615 = vmatprep.subr.mxu0 0.0
        %6616 = vmatpush2.msra.mxu0 0.0
        %6617 = vmatprep.subr.mxu0 0.0
        %6618 = vmatpush2.msra.mxu0 0.0
        %6619 = vmatprep.subr.mxu0 0.0
        %6620 = vmatpush2.msra.mxu0 0.0
        %6621 = vmatprep.mubr.f32.mxu0 0.0
        %6622 = vmatmul.mubr.f32.gmra.mxu0 %v6552
        %v6623 = vpop.f32.mrf.mxu0
        %v6624 = vadd.f32 0.0, %v6623
        %v6625 = vpop.f32.mrf.mxu0
        %6626 = vmatprep.mubr.f32.mxu0 0.0
        %6627 = vmatmul.mubr.f32.gmra.mxu0 %v6555
        %v6628 = vpop.f32.mrf.mxu0
        %v6629 = vadd.f32 0.0, %v6628
        %v6630 = vpop.f32.mrf.mxu0
        %6631 = vdwg.mxu0
        %6634 = vrot.lane.b32.xlu0 %v597, 112
        %v6635 = vpop.permute.xlu0 %6634
        %6636 = vrot.lane.b32.xlu0 %v603, 112
        %v6637 = vpop.permute.xlu0 %6636
        %v6641 = vsel %vm1212, %v6165, 0
        %v6644 = vsel %vm1212, %v6166, 0
        %6646 = vmatprep.subr.mxu0 0.0
        %6647 = vmatpush1.msra.mxu0 0.0
        %6648 = vmatprep.subr.mxu0 0.0
        %6649 = vmatpush1.msra.mxu0 0.0
        %6650 = vmatprep.subr.mxu0 0.0
        %6651 = vmatpush1.msra.mxu0 0.0
        %6652 = vmatprep.subr.mxu0 0.0
        %6653 = vmatpush1.msra.mxu0 0.0
        %6654 = vmatprep.subr.mxu0 0.0
        %6655 = vmatpush1.msra.mxu0 0.0
        %6656 = vmatprep.subr.mxu0 0.0
        %6657 = vmatpush1.msra.mxu0 0.0
        %6658 = vmatprep.subr.mxu0 0.0
        %6659 = vmatpush1.msra.mxu0 0.0
        %6660 = vmatprep.subr.mxu0 0.0
        %6661 = vmatpush1.msra.mxu0 0.0
        %6662 = vmatprep.subr.mxu0 0.0
        %6663 = vmatpush1.msra.mxu0 0.0
        %6664 = vmatprep.subr.mxu0 0.0
        %6665 = vmatpush1.msra.mxu0 0.0
        %6666 = vmatprep.subr.mxu0 0.0
        %6667 = vmatpush1.msra.mxu0 0.0
        %6668 = vmatprep.subr.mxu0 0.0
        %6669 = vmatpush1.msra.mxu0 0.0
        %6670 = vmatprep.subr.mxu0 0.0
        %6671 = vmatpush1.msra.mxu0 0.0
        %6672 = vmatprep.subr.mxu0 0.0
        %6673 = vmatpush1.msra.mxu0 0.0
        %6674 = vmatprep.subr.mxu0 0.0
        %6675 = vmatpush1.msra.mxu0 %v6637
        %6676 = vmatprep.subr.mxu0 0.0
        %6677 = vmatpush1.msra.mxu0 %v6635
        %6678 = vmatprep.subr.mxu0 0.0
        %6679 = vmatpush2.msra.mxu0 0.0
        %6680 = vmatprep.subr.mxu0 0.0
        %6681 = vmatpush2.msra.mxu0 0.0
        %6682 = vmatprep.subr.mxu0 0.0
        %6683 = vmatpush2.msra.mxu0 0.0
        %6684 = vmatprep.subr.mxu0 0.0
        %6685 = vmatpush2.msra.mxu0 0.0
        %6686 = vmatprep.subr.mxu0 0.0
        %6687 = vmatpush2.msra.mxu0 0.0
        %6688 = vmatprep.subr.mxu0 0.0
        %6689 = vmatpush2.msra.mxu0 0.0
        %6690 = vmatprep.subr.mxu0 0.0
        %6691 = vmatpush2.msra.mxu0 0.0
        %6692 = vmatprep.subr.mxu0 0.0
        %6693 = vmatpush2.msra.mxu0 0.0
        %6694 = vmatprep.subr.mxu0 0.0
        %6695 = vmatpush2.msra.mxu0 0.0
        %6696 = vmatprep.subr.mxu0 0.0
        %6697 = vmatpush2.msra.mxu0 0.0
        %6698 = vmatprep.subr.mxu0 0.0
        %6699 = vmatpush2.msra.mxu0 0.0
        %6700 = vmatprep.subr.mxu0 0.0
        %6701 = vmatpush2.msra.mxu0 0.0
        %6702 = vmatprep.subr.mxu0 0.0
        %6703 = vmatpush2.msra.mxu0 0.0
        %6704 = vmatprep.subr.mxu0 0.0
        %6705 = vmatpush2.msra.mxu0 0.0
        %6706 = vmatprep.subr.mxu0 0.0
        %6707 = vmatpush2.msra.mxu0 0.0
        %6708 = vmatprep.subr.mxu0 0.0
        %6709 = vmatpush2.msra.mxu0 0.0
        %6710 = vmatprep.mubr.f32.mxu0 0.0
        %6711 = vmatmul.mubr.f32.gmra.mxu0 %v6641
        %v6712 = vpop.f32.mrf.mxu0
        %v6713 = vadd.f32 0.0, %v6712
        %v6714 = vpop.f32.mrf.mxu0
        %6715 = vmatprep.mubr.f32.mxu0 0.0
        %6716 = vmatmul.mubr.f32.gmra.mxu0 %v6644
        %v6717 = vpop.f32.mrf.mxu0
        %v6718 = vadd.f32 0.0, %v6717
        %v6719 = vpop.f32.mrf.mxu0
        %6720 = vdwg.mxu0
        %6723 = vrot.lane.b32.xlu0 %v609, 112
        %v6724 = vpop.permute.xlu0 %6723
        %6725 = vrot.lane.b32.xlu0 %v615, 112
        %v6726 = vpop.permute.xlu0 %6725
        %v6730 = vsel %vm1212, %v6167, 0
        %v6733 = vsel %vm1212, %v6168, 0
        %6735 = vmatprep.subr.mxu0 0.0
        %6736 = vmatpush1.msra.mxu0 0.0
        %6737 = vmatprep.subr.mxu0 0.0
        %6738 = vmatpush1.msra.mxu0 0.0
        %6739 = vmatprep.subr.mxu0 0.0
        %6740 = vmatpush1.msra.mxu0 0.0
        %6741 = vmatprep.subr.mxu0 0.0
        %6742 = vmatpush1.msra.mxu0 0.0
        %6743 = vmatprep.subr.mxu0 0.0
        %6744 = vmatpush1.msra.mxu0 0.0
        %6745 = vmatprep.subr.mxu0 0.0
        %6746 = vmatpush1.msra.mxu0 0.0
        %6747 = vmatprep.subr.mxu0 0.0
        %6748 = vmatpush1.msra.mxu0 0.0
        %6749 = vmatprep.subr.mxu0 0.0
        %6750 = vmatpush1.msra.mxu0 0.0
        %6751 = vmatprep.subr.mxu0 0.0
        %6752 = vmatpush1.msra.mxu0 0.0
        %6753 = vmatprep.subr.mxu0 0.0
        %6754 = vmatpush1.msra.mxu0 0.0
        %6755 = vmatprep.subr.mxu0 0.0
        %6756 = vmatpush1.msra.mxu0 0.0
        %6757 = vmatprep.subr.mxu0 0.0
        %6758 = vmatpush1.msra.mxu0 0.0
        %6759 = vmatprep.subr.mxu0 0.0
        %6760 = vmatpush1.msra.mxu0 0.0
        %6761 = vmatprep.subr.mxu0 0.0
        %6762 = vmatpush1.msra.mxu0 0.0
        %6763 = vmatprep.subr.mxu0 0.0
        %6764 = vmatpush1.msra.mxu0 %v6726
        %6765 = vmatprep.subr.mxu0 0.0
        %6766 = vmatpush1.msra.mxu0 %v6724
        %6767 = vmatprep.subr.mxu0 0.0
        %6768 = vmatpush2.msra.mxu0 0.0
        %6769 = vmatprep.subr.mxu0 0.0
        %6770 = vmatpush2.msra.mxu0 0.0
        %6771 = vmatprep.subr.mxu0 0.0
        %6772 = vmatpush2.msra.mxu0 0.0
        %6773 = vmatprep.subr.mxu0 0.0
        %6774 = vmatpush2.msra.mxu0 0.0
        %6775 = vmatprep.subr.mxu0 0.0
        %6776 = vmatpush2.msra.mxu0 0.0
        %6777 = vmatprep.subr.mxu0 0.0
        %6778 = vmatpush2.msra.mxu0 0.0
        %6779 = vmatprep.subr.mxu0 0.0
        %6780 = vmatpush2.msra.mxu0 0.0
        %6781 = vmatprep.subr.mxu0 0.0
        %6782 = vmatpush2.msra.mxu0 0.0
        %6783 = vmatprep.subr.mxu0 0.0
        %6784 = vmatpush2.msra.mxu0 0.0
        %6785 = vmatprep.subr.mxu0 0.0
        %6786 = vmatpush2.msra.mxu0 0.0
        %6787 = vmatprep.subr.mxu0 0.0
        %6788 = vmatpush2.msra.mxu0 0.0
        %6789 = vmatprep.subr.mxu0 0.0
        %6790 = vmatpush2.msra.mxu0 0.0
        %6791 = vmatprep.subr.mxu0 0.0
        %6792 = vmatpush2.msra.mxu0 0.0
        %6793 = vmatprep.subr.mxu0 0.0
        %6794 = vmatpush2.msra.mxu0 0.0
        %6795 = vmatprep.subr.mxu0 0.0
        %6796 = vmatpush2.msra.mxu0 0.0
        %6797 = vmatprep.subr.mxu0 0.0
        %6798 = vmatpush2.msra.mxu0 0.0
        %6799 = vmatprep.mubr.f32.mxu0 0.0
        %6800 = vmatmul.mubr.f32.gmra.mxu0 %v6730
        %v6801 = vpop.f32.mrf.mxu0
        %v6802 = vadd.f32 0.0, %v6801
        %v6803 = vpop.f32.mrf.mxu0
        %6804 = vmatprep.mubr.f32.mxu0 0.0
        %6805 = vmatmul.mubr.f32.gmra.mxu0 %v6733
        %v6806 = vpop.f32.mrf.mxu0
        %v6807 = vadd.f32 0.0, %v6806
        %v6808 = vpop.f32.mrf.mxu0
        %6809 = vdwg.mxu0
        %6812 = vrot.lane.b32.xlu0 %v621, 112
        %v6813 = vpop.permute.xlu0 %6812
        %6814 = vrot.lane.b32.xlu0 %v627, 112
        %v6815 = vpop.permute.xlu0 %6814
        %v6819 = vsel %vm1212, %v6169, 0
        %v6822 = vsel %vm1212, %v6170, 0
        %6824 = vmatprep.subr.mxu0 0.0
        %6825 = vmatpush1.msra.mxu0 0.0
        %6826 = vmatprep.subr.mxu0 0.0
        %6827 = vmatpush1.msra.mxu0 0.0
        %6828 = vmatprep.subr.mxu0 0.0
        %6829 = vmatpush1.msra.mxu0 0.0
        %6830 = vmatprep.subr.mxu0 0.0
        %6831 = vmatpush1.msra.mxu0 0.0
        %6832 = vmatprep.subr.mxu0 0.0
        %6833 = vmatpush1.msra.mxu0 0.0
        %6834 = vmatprep.subr.mxu0 0.0
        %6835 = vmatpush1.msra.mxu0 0.0
        %6836 = vmatprep.subr.mxu0 0.0
        %6837 = vmatpush1.msra.mxu0 0.0
        %6838 = vmatprep.subr.mxu0 0.0
        %6839 = vmatpush1.msra.mxu0 0.0
        %6840 = vmatprep.subr.mxu0 0.0
        %6841 = vmatpush1.msra.mxu0 0.0
        %6842 = vmatprep.subr.mxu0 0.0
        %6843 = vmatpush1.msra.mxu0 0.0
        %6844 = vmatprep.subr.mxu0 0.0
        %6845 = vmatpush1.msra.mxu0 0.0
        %6846 = vmatprep.subr.mxu0 0.0
        %6847 = vmatpush1.msra.mxu0 0.0
        %6848 = vmatprep.subr.mxu0 0.0
        %6849 = vmatpush1.msra.mxu0 0.0
        %6850 = vmatprep.subr.mxu0 0.0
        %6851 = vmatpush1.msra.mxu0 0.0
        %6852 = vmatprep.subr.mxu0 0.0
        %6853 = vmatpush1.msra.mxu0 %v6815
        %6854 = vmatprep.subr.mxu0 0.0
        %6855 = vmatpush1.msra.mxu0 %v6813
        %6856 = vmatprep.subr.mxu0 0.0
        %6857 = vmatpush2.msra.mxu0 0.0
        %6858 = vmatprep.subr.mxu0 0.0
        %6859 = vmatpush2.msra.mxu0 0.0
        %6860 = vmatprep.subr.mxu0 0.0
        %6861 = vmatpush2.msra.mxu0 0.0
        %6862 = vmatprep.subr.mxu0 0.0
        %6863 = vmatpush2.msra.mxu0 0.0
        %6864 = vmatprep.subr.mxu0 0.0
        %6865 = vmatpush2.msra.mxu0 0.0
        %6866 = vmatprep.subr.mxu0 0.0
        %6867 = vmatpush2.msra.mxu0 0.0
        %6868 = vmatprep.subr.mxu0 0.0
        %6869 = vmatpush2.msra.mxu0 0.0
        %6870 = vmatprep.subr.mxu0 0.0
        %6871 = vmatpush2.msra.mxu0 0.0
        %6872 = vmatprep.subr.mxu0 0.0
        %6873 = vmatpush2.msra.mxu0 0.0
        %6874 = vmatprep.subr.mxu0 0.0
        %6875 = vmatpush2.msra.mxu0 0.0
        %6876 = vmatprep.subr.mxu0 0.0
        %6877 = vmatpush2.msra.mxu0 0.0
        %6878 = vmatprep.subr.mxu0 0.0
        %6879 = vmatpush2.msra.mxu0 0.0
        %6880 = vmatprep.subr.mxu0 0.0
        %6881 = vmatpush2.msra.mxu0 0.0
        %6882 = vmatprep.subr.mxu0 0.0
        %6883 = vmatpush2.msra.mxu0 0.0
        %6884 = vmatprep.subr.mxu0 0.0
        %6885 = vmatpush2.msra.mxu0 0.0
        %6886 = vmatprep.subr.mxu0 0.0
        %6887 = vmatpush2.msra.mxu0 0.0
        %6888 = vmatprep.mubr.f32.mxu0 0.0
        %6889 = vmatmul.mubr.f32.gmra.mxu0 %v6819
        %v6890 = vpop.f32.mrf.mxu0
        %v6891 = vadd.f32 0.0, %v6890
        %v6892 = vpop.f32.mrf.mxu0
        %6893 = vmatprep.mubr.f32.mxu0 0.0
        %6894 = vmatmul.mubr.f32.gmra.mxu0 %v6822
        %v6895 = vpop.f32.mrf.mxu0
        %v6896 = vadd.f32 0.0, %v6895
        %v6897 = vpop.f32.mrf.mxu0
        %6898 = vdwg.mxu0
        %6901 = vrot.lane.b32.xlu0 %v633, 112
        %v6902 = vpop.permute.xlu0 %6901
        %6903 = vrot.lane.b32.xlu0 %v639, 112
        %v6904 = vpop.permute.xlu0 %6903
        %v6908 = vsel %vm1212, %v6171, 0
        %v6911 = vsel %vm1212, %v6172, 0
        %6913 = vmatprep.subr.mxu0 0.0
        %6914 = vmatpush1.msra.mxu0 0.0
        %6915 = vmatprep.subr.mxu0 0.0
        %6916 = vmatpush1.msra.mxu0 0.0
        %6917 = vmatprep.subr.mxu0 0.0
        %6918 = vmatpush1.msra.mxu0 0.0
        %6919 = vmatprep.subr.mxu0 0.0
        %6920 = vmatpush1.msra.mxu0 0.0
        %6921 = vmatprep.subr.mxu0 0.0
        %6922 = vmatpush1.msra.mxu0 0.0
        %6923 = vmatprep.subr.mxu0 0.0
        %6924 = vmatpush1.msra.mxu0 0.0
        %6925 = vmatprep.subr.mxu0 0.0
        %6926 = vmatpush1.msra.mxu0 0.0
        %6927 = vmatprep.subr.mxu0 0.0
        %6928 = vmatpush1.msra.mxu0 0.0
        %6929 = vmatprep.subr.mxu0 0.0
        %6930 = vmatpush1.msra.mxu0 0.0
        %6931 = vmatprep.subr.mxu0 0.0
        %6932 = vmatpush1.msra.mxu0 0.0
        %6933 = vmatprep.subr.mxu0 0.0
        %6934 = vmatpush1.msra.mxu0 0.0
        %6935 = vmatprep.subr.mxu0 0.0
        %6936 = vmatpush1.msra.mxu0 0.0
        %6937 = vmatprep.subr.mxu0 0.0
        %6938 = vmatpush1.msra.mxu0 0.0
        %6939 = vmatprep.subr.mxu0 0.0
        %6940 = vmatpush1.msra.mxu0 0.0
        %6941 = vmatprep.subr.mxu0 0.0
        %6942 = vmatpush1.msra.mxu0 %v6904
        %6943 = vmatprep.subr.mxu0 0.0
        %6944 = vmatpush1.msra.mxu0 %v6902
        %6945 = vmatprep.subr.mxu0 0.0
        %6946 = vmatpush2.msra.mxu0 0.0
        %6947 = vmatprep.subr.mxu0 0.0
        %6948 = vmatpush2.msra.mxu0 0.0
        %6949 = vmatprep.subr.mxu0 0.0
        %6950 = vmatpush2.msra.mxu0 0.0
        %6951 = vmatprep.subr.mxu0 0.0
        %6952 = vmatpush2.msra.mxu0 0.0
        %6953 = vmatprep.subr.mxu0 0.0
        %6954 = vmatpush2.msra.mxu0 0.0
        %6955 = vmatprep.subr.mxu0 0.0
        %6956 = vmatpush2.msra.mxu0 0.0
        %6957 = vmatprep.subr.mxu0 0.0
        %6958 = vmatpush2.msra.mxu0 0.0
        %6959 = vmatprep.subr.mxu0 0.0
        %6960 = vmatpush2.msra.mxu0 0.0
        %6961 = vmatprep.subr.mxu0 0.0
        %6962 = vmatpush2.msra.mxu0 0.0
        %6963 = vmatprep.subr.mxu0 0.0
        %6964 = vmatpush2.msra.mxu0 0.0
        %6965 = vmatprep.subr.mxu0 0.0
        %6966 = vmatpush2.msra.mxu0 0.0
        %6967 = vmatprep.subr.mxu0 0.0
        %6968 = vmatpush2.msra.mxu0 0.0
        %6969 = vmatprep.subr.mxu0 0.0
        %6970 = vmatpush2.msra.mxu0 0.0
        %6971 = vmatprep.subr.mxu0 0.0
        %6972 = vmatpush2.msra.mxu0 0.0
        %6973 = vmatprep.subr.mxu0 0.0
        %6974 = vmatpush2.msra.mxu0 0.0
        %6975 = vmatprep.subr.mxu0 0.0
        %6976 = vmatpush2.msra.mxu0 0.0
        %6977 = vmatprep.mubr.f32.mxu0 0.0
        %6978 = vmatmul.mubr.f32.gmra.mxu0 %v6908
        %v6979 = vpop.f32.mrf.mxu0
        %v6980 = vadd.f32 0.0, %v6979
        %v6981 = vpop.f32.mrf.mxu0
        %6982 = vmatprep.mubr.f32.mxu0 0.0
        %6983 = vmatmul.mubr.f32.gmra.mxu0 %v6911
        %v6984 = vpop.f32.mrf.mxu0
        %v6985 = vadd.f32 0.0, %v6984
        %v6986 = vpop.f32.mrf.mxu0
        %6987 = vdwg.mxu0
        %6990 = vrot.lane.b32.xlu0 %v645, 112
        %v6991 = vpop.permute.xlu0 %6990
        %6992 = vrot.lane.b32.xlu0 %v651, 112
        %v6993 = vpop.permute.xlu0 %6992
        %v6997 = vsel %vm1212, %v6173, 0
        %v7000 = vsel %vm1212, %v6174, 0
        %7002 = vmatprep.subr.mxu0 0.0
        %7003 = vmatpush1.msra.mxu0 0.0
        %7004 = vmatprep.subr.mxu0 0.0
        %7005 = vmatpush1.msra.mxu0 0.0
        %7006 = vmatprep.subr.mxu0 0.0
        %7007 = vmatpush1.msra.mxu0 0.0
        %7008 = vmatprep.subr.mxu0 0.0
        %7009 = vmatpush1.msra.mxu0 0.0
        %7010 = vmatprep.subr.mxu0 0.0
        %7011 = vmatpush1.msra.mxu0 0.0
        %7012 = vmatprep.subr.mxu0 0.0
        %7013 = vmatpush1.msra.mxu0 0.0
        %7014 = vmatprep.subr.mxu0 0.0
        %7015 = vmatpush1.msra.mxu0 0.0
        %7016 = vmatprep.subr.mxu0 0.0
        %7017 = vmatpush1.msra.mxu0 0.0
        %7018 = vmatprep.subr.mxu0 0.0
        %7019 = vmatpush1.msra.mxu0 0.0
        %7020 = vmatprep.subr.mxu0 0.0
        %7021 = vmatpush1.msra.mxu0 0.0
        %7022 = vmatprep.subr.mxu0 0.0
        %7023 = vmatpush1.msra.mxu0 0.0
        %7024 = vmatprep.subr.mxu0 0.0
        %7025 = vmatpush1.msra.mxu0 0.0
        %7026 = vmatprep.subr.mxu0 0.0
        %7027 = vmatpush1.msra.mxu0 0.0
        %7028 = vmatprep.subr.mxu0 0.0
        %7029 = vmatpush1.msra.mxu0 0.0
        %7030 = vmatprep.subr.mxu0 0.0
        %7031 = vmatpush1.msra.mxu0 %v6993
        %7032 = vmatprep.subr.mxu0 0.0
        %7033 = vmatpush1.msra.mxu0 %v6991
        %7034 = vmatprep.subr.mxu0 0.0
        %7035 = vmatpush2.msra.mxu0 0.0
        %7036 = vmatprep.subr.mxu0 0.0
        %7037 = vmatpush2.msra.mxu0 0.0
        %7038 = vmatprep.subr.mxu0 0.0
        %7039 = vmatpush2.msra.mxu0 0.0
        %7040 = vmatprep.subr.mxu0 0.0
        %7041 = vmatpush2.msra.mxu0 0.0
        %7042 = vmatprep.subr.mxu0 0.0
        %7043 = vmatpush2.msra.mxu0 0.0
        %7044 = vmatprep.subr.mxu0 0.0
        %7045 = vmatpush2.msra.mxu0 0.0
        %7046 = vmatprep.subr.mxu0 0.0
        %7047 = vmatpush2.msra.mxu0 0.0
        %7048 = vmatprep.subr.mxu0 0.0
        %7049 = vmatpush2.msra.mxu0 0.0
        %7050 = vmatprep.subr.mxu0 0.0
        %7051 = vmatpush2.msra.mxu0 0.0
        %7052 = vmatprep.subr.mxu0 0.0
        %7053 = vmatpush2.msra.mxu0 0.0
        %7054 = vmatprep.subr.mxu0 0.0
        %7055 = vmatpush2.msra.mxu0 0.0
        %7056 = vmatprep.subr.mxu0 0.0
        %7057 = vmatpush2.msra.mxu0 0.0
        %7058 = vmatprep.subr.mxu0 0.0
        %7059 = vmatpush2.msra.mxu0 0.0
        %7060 = vmatprep.subr.mxu0 0.0
        %7061 = vmatpush2.msra.mxu0 0.0
        %7062 = vmatprep.subr.mxu0 0.0
        %7063 = vmatpush2.msra.mxu0 0.0
        %7064 = vmatprep.subr.mxu0 0.0
        %7065 = vmatpush2.msra.mxu0 0.0
        %7066 = vmatprep.mubr.f32.mxu0 0.0
        %7067 = vmatmul.mubr.f32.gmra.mxu0 %v6997
        %v7068 = vpop.f32.mrf.mxu0
        %v7069 = vadd.f32 0.0, %v7068
        %v7070 = vpop.f32.mrf.mxu0
        %7071 = vmatprep.mubr.f32.mxu0 0.0
        %7072 = vmatmul.mubr.f32.gmra.mxu0 %v7000
        %v7073 = vpop.f32.mrf.mxu0
        %v7074 = vadd.f32 0.0, %v7073
        %v7075 = vpop.f32.mrf.mxu0
        %7076 = vdwg.mxu0
        %7079 = vrot.lane.b32.xlu0 %v657, 112
        %v7080 = vpop.permute.xlu0 %7079
        %7081 = vrot.lane.b32.xlu0 %v663, 112
        %v7082 = vpop.permute.xlu0 %7081
        %v7086 = vsel %vm1212, %v6175, 0
        %v7089 = vsel %vm1212, %v6176, 0
        %7091 = vmatprep.subr.mxu0 0.0
        %7092 = vmatpush1.msra.mxu0 0.0
        %7093 = vmatprep.subr.mxu0 0.0
        %7094 = vmatpush1.msra.mxu0 0.0
        %7095 = vmatprep.subr.mxu0 0.0
        %7096 = vmatpush1.msra.mxu0 0.0
        %7097 = vmatprep.subr.mxu0 0.0
        %7098 = vmatpush1.msra.mxu0 0.0
        %7099 = vmatprep.subr.mxu0 0.0
        %7100 = vmatpush1.msra.mxu0 0.0
        %7101 = vmatprep.subr.mxu0 0.0
        %7102 = vmatpush1.msra.mxu0 0.0
        %7103 = vmatprep.subr.mxu0 0.0
        %7104 = vmatpush1.msra.mxu0 0.0
        %7105 = vmatprep.subr.mxu0 0.0
        %7106 = vmatpush1.msra.mxu0 0.0
        %7107 = vmatprep.subr.mxu0 0.0
        %7108 = vmatpush1.msra.mxu0 0.0
        %7109 = vmatprep.subr.mxu0 0.0
        %7110 = vmatpush1.msra.mxu0 0.0
        %7111 = vmatprep.subr.mxu0 0.0
        %7112 = vmatpush1.msra.mxu0 0.0
        %7113 = vmatprep.subr.mxu0 0.0
        %7114 = vmatpush1.msra.mxu0 0.0
        %7115 = vmatprep.subr.mxu0 0.0
        %7116 = vmatpush1.msra.mxu0 0.0
        %7117 = vmatprep.subr.mxu0 0.0
        %7118 = vmatpush1.msra.mxu0 0.0
        %7119 = vmatprep.subr.mxu0 0.0
        %7120 = vmatpush1.msra.mxu0 %v7082
        %7121 = vmatprep.subr.mxu0 0.0
        %7122 = vmatpush1.msra.mxu0 %v7080
        %7123 = vmatprep.subr.mxu0 0.0
        %7124 = vmatpush2.msra.mxu0 0.0
        %7125 = vmatprep.subr.mxu0 0.0
        %7126 = vmatpush2.msra.mxu0 0.0
        %7127 = vmatprep.subr.mxu0 0.0
        %7128 = vmatpush2.msra.mxu0 0.0
        %7129 = vmatprep.subr.mxu0 0.0
        %7130 = vmatpush2.msra.mxu0 0.0
        %7131 = vmatprep.subr.mxu0 0.0
        %7132 = vmatpush2.msra.mxu0 0.0
        %7133 = vmatprep.subr.mxu0 0.0
        %7134 = vmatpush2.msra.mxu0 0.0
        %7135 = vmatprep.subr.mxu0 0.0
        %7136 = vmatpush2.msra.mxu0 0.0
        %7137 = vmatprep.subr.mxu0 0.0
        %7138 = vmatpush2.msra.mxu0 0.0
        %7139 = vmatprep.subr.mxu0 0.0
        %7140 = vmatpush2.msra.mxu0 0.0
        %7141 = vmatprep.subr.mxu0 0.0
        %7142 = vmatpush2.msra.mxu0 0.0
        %7143 = vmatprep.subr.mxu0 0.0
        %7144 = vmatpush2.msra.mxu0 0.0
        %7145 = vmatprep.subr.mxu0 0.0
        %7146 = vmatpush2.msra.mxu0 0.0
        %7147 = vmatprep.subr.mxu0 0.0
        %7148 = vmatpush2.msra.mxu0 0.0
        %7149 = vmatprep.subr.mxu0 0.0
        %7150 = vmatpush2.msra.mxu0 0.0
        %7151 = vmatprep.subr.mxu0 0.0
        %7152 = vmatpush2.msra.mxu0 0.0
        %7153 = vmatprep.subr.mxu0 0.0
        %7154 = vmatpush2.msra.mxu0 0.0
        %7155 = vmatprep.mubr.f32.mxu0 0.0
        %7156 = vmatmul.mubr.f32.gmra.mxu0 %v7086
        %v7157 = vpop.f32.mrf.mxu0
        %v7158 = vadd.f32 0.0, %v7157
        %v7159 = vpop.f32.mrf.mxu0
        %7160 = vmatprep.mubr.f32.mxu0 0.0
        %7161 = vmatmul.mubr.f32.gmra.mxu0 %v7089
        %v7162 = vpop.f32.mrf.mxu0
        %v7163 = vadd.f32 0.0, %v7162
        %v7164 = vpop.f32.mrf.mxu0
        %7165 = vdwg.mxu0
        %7168 = vrot.lane.b32.xlu0 %v669, 112
        %v7169 = vpop.permute.xlu0 %7168
        %7170 = vrot.lane.b32.xlu0 %v675, 112
        %v7171 = vpop.permute.xlu0 %7170
        %v7175 = vsel %vm1212, %v6177, 0
        %v7178 = vsel %vm1212, %v6178, 0
        %7180 = vmatprep.subr.mxu0 0.0
        %7181 = vmatpush1.msra.mxu0 0.0
        %7182 = vmatprep.subr.mxu0 0.0
        %7183 = vmatpush1.msra.mxu0 0.0
        %7184 = vmatprep.subr.mxu0 0.0
        %7185 = vmatpush1.msra.mxu0 0.0
        %7186 = vmatprep.subr.mxu0 0.0
        %7187 = vmatpush1.msra.mxu0 0.0
        %7188 = vmatprep.subr.mxu0 0.0
        %7189 = vmatpush1.msra.mxu0 0.0
        %7190 = vmatprep.subr.mxu0 0.0
        %7191 = vmatpush1.msra.mxu0 0.0
        %7192 = vmatprep.subr.mxu0 0.0
        %7193 = vmatpush1.msra.mxu0 0.0
        %7194 = vmatprep.subr.mxu0 0.0
        %7195 = vmatpush1.msra.mxu0 0.0
        %7196 = vmatprep.subr.mxu0 0.0
        %7197 = vmatpush1.msra.mxu0 0.0
        %7198 = vmatprep.subr.mxu0 0.0
        %7199 = vmatpush1.msra.mxu0 0.0
        %7200 = vmatprep.subr.mxu0 0.0
        %7201 = vmatpush1.msra.mxu0 0.0
        %7202 = vmatprep.subr.mxu0 0.0
        %7203 = vmatpush1.msra.mxu0 0.0
        %7204 = vmatprep.subr.mxu0 0.0
        %7205 = vmatpush1.msra.mxu0 0.0
        %7206 = vmatprep.subr.mxu0 0.0
        %7207 = vmatpush1.msra.mxu0 0.0
        %7208 = vmatprep.subr.mxu0 0.0
        %7209 = vmatpush1.msra.mxu0 %v7171
        %7210 = vmatprep.subr.mxu0 0.0
        %7211 = vmatpush1.msra.mxu0 %v7169
        %7212 = vmatprep.subr.mxu0 0.0
        %7213 = vmatpush2.msra.mxu0 0.0
        %7214 = vmatprep.subr.mxu0 0.0
        %7215 = vmatpush2.msra.mxu0 0.0
        %7216 = vmatprep.subr.mxu0 0.0
        %7217 = vmatpush2.msra.mxu0 0.0
        %7218 = vmatprep.subr.mxu0 0.0
        %7219 = vmatpush2.msra.mxu0 0.0
        %7220 = vmatprep.subr.mxu0 0.0
        %7221 = vmatpush2.msra.mxu0 0.0
        %7222 = vmatprep.subr.mxu0 0.0
        %7223 = vmatpush2.msra.mxu0 0.0
        %7224 = vmatprep.subr.mxu0 0.0
        %7225 = vmatpush2.msra.mxu0 0.0
        %7226 = vmatprep.subr.mxu0 0.0
        %7227 = vmatpush2.msra.mxu0 0.0
        %7228 = vmatprep.subr.mxu0 0.0
        %7229 = vmatpush2.msra.mxu0 0.0
        %7230 = vmatprep.subr.mxu0 0.0
        %7231 = vmatpush2.msra.mxu0 0.0
        %7232 = vmatprep.subr.mxu0 0.0
        %7233 = vmatpush2.msra.mxu0 0.0
        %7234 = vmatprep.subr.mxu0 0.0
        %7235 = vmatpush2.msra.mxu0 0.0
        %7236 = vmatprep.subr.mxu0 0.0
        %7237 = vmatpush2.msra.mxu0 0.0
        %7238 = vmatprep.subr.mxu0 0.0
        %7239 = vmatpush2.msra.mxu0 0.0
        %7240 = vmatprep.subr.mxu0 0.0
        %7241 = vmatpush2.msra.mxu0 0.0
        %7242 = vmatprep.subr.mxu0 0.0
        %7243 = vmatpush2.msra.mxu0 0.0
        %7244 = vmatprep.mubr.f32.mxu0 0.0
        %7245 = vmatmul.mubr.f32.gmra.mxu0 %v7175
        %v7246 = vpop.f32.mrf.mxu0
        %v7247 = vadd.f32 0.0, %v7246
        %v7248 = vpop.f32.mrf.mxu0
        %7249 = vmatprep.mubr.f32.mxu0 0.0
        %7250 = vmatmul.mubr.f32.gmra.mxu0 %v7178
        %v7251 = vpop.f32.mrf.mxu0
        %v7252 = vadd.f32 0.0, %v7251
        %v7253 = vpop.f32.mrf.mxu0
        %7254 = vdwg.mxu0
        %7257 = vrot.lane.b32.xlu0 %v681, 112
        %v7258 = vpop.permute.xlu0 %7257
        %7259 = vrot.lane.b32.xlu0 %v687, 112
        %v7260 = vpop.permute.xlu0 %7259
        %v7264 = vsel %vm1212, %v6179, 0
        %v7267 = vsel %vm1212, %v6180, 0
        %7269 = vmatprep.subr.mxu0 0.0
        %7270 = vmatpush1.msra.mxu0 0.0
        %7271 = vmatprep.subr.mxu0 0.0
        %7272 = vmatpush1.msra.mxu0 0.0
        %7273 = vmatprep.subr.mxu0 0.0
        %7274 = vmatpush1.msra.mxu0 0.0
        %7275 = vmatprep.subr.mxu0 0.0
        %7276 = vmatpush1.msra.mxu0 0.0
        %7277 = vmatprep.subr.mxu0 0.0
        %7278 = vmatpush1.msra.mxu0 0.0
        %7279 = vmatprep.subr.mxu0 0.0
        %7280 = vmatpush1.msra.mxu0 0.0
        %7281 = vmatprep.subr.mxu0 0.0
        %7282 = vmatpush1.msra.mxu0 0.0
        %7283 = vmatprep.subr.mxu0 0.0
        %7284 = vmatpush1.msra.mxu0 0.0
        %7285 = vmatprep.subr.mxu0 0.0
        %7286 = vmatpush1.msra.mxu0 0.0
        %7287 = vmatprep.subr.mxu0 0.0
        %7288 = vmatpush1.msra.mxu0 0.0
        %7289 = vmatprep.subr.mxu0 0.0
        %7290 = vmatpush1.msra.mxu0 0.0
        %7291 = vmatprep.subr.mxu0 0.0
        %7292 = vmatpush1.msra.mxu0 0.0
        %7293 = vmatprep.subr.mxu0 0.0
        %7294 = vmatpush1.msra.mxu0 0.0
        %7295 = vmatprep.subr.mxu0 0.0
        %7296 = vmatpush1.msra.mxu0 0.0
        %7297 = vmatprep.subr.mxu0 0.0
        %7298 = vmatpush1.msra.mxu0 %v7260
        %7299 = vmatprep.subr.mxu0 0.0
        %7300 = vmatpush1.msra.mxu0 %v7258
        %7301 = vmatprep.subr.mxu0 0.0
        %7302 = vmatpush2.msra.mxu0 0.0
        %7303 = vmatprep.subr.mxu0 0.0
        %7304 = vmatpush2.msra.mxu0 0.0
        %7305 = vmatprep.subr.mxu0 0.0
        %7306 = vmatpush2.msra.mxu0 0.0
        %7307 = vmatprep.subr.mxu0 0.0
        %7308 = vmatpush2.msra.mxu0 0.0
        %7309 = vmatprep.subr.mxu0 0.0
        %7310 = vmatpush2.msra.mxu0 0.0
        %7311 = vmatprep.subr.mxu0 0.0
        %7312 = vmatpush2.msra.mxu0 0.0
        %7313 = vmatprep.subr.mxu0 0.0
        %7314 = vmatpush2.msra.mxu0 0.0
        %7315 = vmatprep.subr.mxu0 0.0
        %7316 = vmatpush2.msra.mxu0 0.0
        %7317 = vmatprep.subr.mxu0 0.0
        %7318 = vmatpush2.msra.mxu0 0.0
        %7319 = vmatprep.subr.mxu0 0.0
        %7320 = vmatpush2.msra.mxu0 0.0
        %7321 = vmatprep.subr.mxu0 0.0
        %7322 = vmatpush2.msra.mxu0 0.0
        %7323 = vmatprep.subr.mxu0 0.0
        %7324 = vmatpush2.msra.mxu0 0.0
        %7325 = vmatprep.subr.mxu0 0.0
        %7326 = vmatpush2.msra.mxu0 0.0
        %7327 = vmatprep.subr.mxu0 0.0
        %7328 = vmatpush2.msra.mxu0 0.0
        %7329 = vmatprep.subr.mxu0 0.0
        %7330 = vmatpush2.msra.mxu0 0.0
        %7331 = vmatprep.subr.mxu0 0.0
        %7332 = vmatpush2.msra.mxu0 0.0
        %7333 = vmatprep.mubr.f32.mxu0 0.0
        %7334 = vmatmul.mubr.f32.gmra.mxu0 %v7264
        %v7335 = vpop.f32.mrf.mxu0
        %v7336 = vadd.f32 0.0, %v7335
        %v7337 = vpop.f32.mrf.mxu0
        %7338 = vmatprep.mubr.f32.mxu0 0.0
        %7339 = vmatmul.mubr.f32.gmra.mxu0 %v7267
        %v7340 = vpop.f32.mrf.mxu0
        %v7341 = vadd.f32 0.0, %v7340
        %v7342 = vpop.f32.mrf.mxu0
        %7343 = vdwg.mxu0
        %7346 = vrot.lane.b32.xlu0 %v693, 112
        %v7347 = vpop.permute.xlu0 %7346
        %7348 = vrot.lane.b32.xlu0 %v699, 112
        %v7349 = vpop.permute.xlu0 %7348
        %v7353 = vsel %vm1212, %v6181, 0
        %v7356 = vsel %vm1212, %v6182, 0
        %7358 = vmatprep.subr.mxu0 0.0
        %7359 = vmatpush1.msra.mxu0 0.0
        %7360 = vmatprep.subr.mxu0 0.0
        %7361 = vmatpush1.msra.mxu0 0.0
        %7362 = vmatprep.subr.mxu0 0.0
        %7363 = vmatpush1.msra.mxu0 0.0
        %7364 = vmatprep.subr.mxu0 0.0
        %7365 = vmatpush1.msra.mxu0 0.0
        %7366 = vmatprep.subr.mxu0 0.0
        %7367 = vmatpush1.msra.mxu0 0.0
        %7368 = vmatprep.subr.mxu0 0.0
        %7369 = vmatpush1.msra.mxu0 0.0
        %7370 = vmatprep.subr.mxu0 0.0
        %7371 = vmatpush1.msra.mxu0 0.0
        %7372 = vmatprep.subr.mxu0 0.0
        %7373 = vmatpush1.msra.mxu0 0.0
        %7374 = vmatprep.subr.mxu0 0.0
        %7375 = vmatpush1.msra.mxu0 0.0
        %7376 = vmatprep.subr.mxu0 0.0
        %7377 = vmatpush1.msra.mxu0 0.0
        %7378 = vmatprep.subr.mxu0 0.0
        %7379 = vmatpush1.msra.mxu0 0.0
        %7380 = vmatprep.subr.mxu0 0.0
        %7381 = vmatpush1.msra.mxu0 0.0
        %7382 = vmatprep.subr.mxu0 0.0
        %7383 = vmatpush1.msra.mxu0 0.0
        %7384 = vmatprep.subr.mxu0 0.0
        %7385 = vmatpush1.msra.mxu0 0.0
        %7386 = vmatprep.subr.mxu0 0.0
        %7387 = vmatpush1.msra.mxu0 %v7349
        %7388 = vmatprep.subr.mxu0 0.0
        %7389 = vmatpush1.msra.mxu0 %v7347
        %7390 = vmatprep.subr.mxu0 0.0
        %7391 = vmatpush2.msra.mxu0 0.0
        %7392 = vmatprep.subr.mxu0 0.0
        %7393 = vmatpush2.msra.mxu0 0.0
        %7394 = vmatprep.subr.mxu0 0.0
        %7395 = vmatpush2.msra.mxu0 0.0
        %7396 = vmatprep.subr.mxu0 0.0
        %7397 = vmatpush2.msra.mxu0 0.0
        %7398 = vmatprep.subr.mxu0 0.0
        %7399 = vmatpush2.msra.mxu0 0.0
        %7400 = vmatprep.subr.mxu0 0.0
        %7401 = vmatpush2.msra.mxu0 0.0
        %7402 = vmatprep.subr.mxu0 0.0
        %7403 = vmatpush2.msra.mxu0 0.0
        %7404 = vmatprep.subr.mxu0 0.0
        %7405 = vmatpush2.msra.mxu0 0.0
        %7406 = vmatprep.subr.mxu0 0.0
        %7407 = vmatpush2.msra.mxu0 0.0
        %7408 = vmatprep.subr.mxu0 0.0
        %7409 = vmatpush2.msra.mxu0 0.0
        %7410 = vmatprep.subr.mxu0 0.0
        %7411 = vmatpush2.msra.mxu0 0.0
        %7412 = vmatprep.subr.mxu0 0.0
        %7413 = vmatpush2.msra.mxu0 0.0
        %7414 = vmatprep.subr.mxu0 0.0
        %7415 = vmatpush2.msra.mxu0 0.0
        %7416 = vmatprep.subr.mxu0 0.0
        %7417 = vmatpush2.msra.mxu0 0.0
        %7418 = vmatprep.subr.mxu0 0.0
        %7419 = vmatpush2.msra.mxu0 0.0
        %7420 = vmatprep.subr.mxu0 0.0
        %7421 = vmatpush2.msra.mxu0 0.0
        %7422 = vmatprep.mubr.f32.mxu0 0.0
        %7423 = vmatmul.mubr.f32.gmra.mxu0 %v7353
        %v7424 = vpop.f32.mrf.mxu0
        %v7425 = vadd.f32 0.0, %v7424
        %v7426 = vpop.f32.mrf.mxu0
        %7427 = vmatprep.mubr.f32.mxu0 0.0
        %7428 = vmatmul.mubr.f32.gmra.mxu0 %v7356
        %v7429 = vpop.f32.mrf.mxu0
        %v7430 = vadd.f32 0.0, %v7429
        %v7431 = vpop.f32.mrf.mxu0
        %7432 = vdwg.mxu0
        %7435 = vrot.lane.b32.xlu0 %v705, 112
        %v7436 = vpop.permute.xlu0 %7435
        %7437 = vrot.lane.b32.xlu0 %v711, 112
        %v7438 = vpop.permute.xlu0 %7437
        %v7442 = vsel %vm1212, %v6183, 0
        %v7445 = vsel %vm1212, %v6184, 0
        %7447 = vmatprep.subr.mxu0 0.0
        %7448 = vmatpush1.msra.mxu0 0.0
        %7449 = vmatprep.subr.mxu0 0.0
        %7450 = vmatpush1.msra.mxu0 0.0
        %7451 = vmatprep.subr.mxu0 0.0
        %7452 = vmatpush1.msra.mxu0 0.0
        %7453 = vmatprep.subr.mxu0 0.0
        %7454 = vmatpush1.msra.mxu0 0.0
        %7455 = vmatprep.subr.mxu0 0.0
        %7456 = vmatpush1.msra.mxu0 0.0
        %7457 = vmatprep.subr.mxu0 0.0
        %7458 = vmatpush1.msra.mxu0 0.0
        %7459 = vmatprep.subr.mxu0 0.0
        %7460 = vmatpush1.msra.mxu0 0.0
        %7461 = vmatprep.subr.mxu0 0.0
        %7462 = vmatpush1.msra.mxu0 0.0
        %7463 = vmatprep.subr.mxu0 0.0
        %7464 = vmatpush1.msra.mxu0 0.0
        %7465 = vmatprep.subr.mxu0 0.0
        %7466 = vmatpush1.msra.mxu0 0.0
        %7467 = vmatprep.subr.mxu0 0.0
        %7468 = vmatpush1.msra.mxu0 0.0
        %7469 = vmatprep.subr.mxu0 0.0
        %7470 = vmatpush1.msra.mxu0 0.0
        %7471 = vmatprep.subr.mxu0 0.0
        %7472 = vmatpush1.msra.mxu0 0.0
        %7473 = vmatprep.subr.mxu0 0.0
        %7474 = vmatpush1.msra.mxu0 0.0
        %7475 = vmatprep.subr.mxu0 0.0
        %7476 = vmatpush1.msra.mxu0 %v7438
        %7477 = vmatprep.subr.mxu0 0.0
        %7478 = vmatpush1.msra.mxu0 %v7436
        %7479 = vmatprep.subr.mxu0 0.0
        %7480 = vmatpush2.msra.mxu0 0.0
        %7481 = vmatprep.subr.mxu0 0.0
        %7482 = vmatpush2.msra.mxu0 0.0
        %7483 = vmatprep.subr.mxu0 0.0
        %7484 = vmatpush2.msra.mxu0 0.0
        %7485 = vmatprep.subr.mxu0 0.0
        %7486 = vmatpush2.msra.mxu0 0.0
        %7487 = vmatprep.subr.mxu0 0.0
        %7488 = vmatpush2.msra.mxu0 0.0
        %7489 = vmatprep.subr.mxu0 0.0
        %7490 = vmatpush2.msra.mxu0 0.0
        %7491 = vmatprep.subr.mxu0 0.0
        %7492 = vmatpush2.msra.mxu0 0.0
        %7493 = vmatprep.subr.mxu0 0.0
        %7494 = vmatpush2.msra.mxu0 0.0
        %7495 = vmatprep.subr.mxu0 0.0
        %7496 = vmatpush2.msra.mxu0 0.0
        %7497 = vmatprep.subr.mxu0 0.0
        %7498 = vmatpush2.msra.mxu0 0.0
        %7499 = vmatprep.subr.mxu0 0.0
        %7500 = vmatpush2.msra.mxu0 0.0
        %7501 = vmatprep.subr.mxu0 0.0
        %7502 = vmatpush2.msra.mxu0 0.0
        %7503 = vmatprep.subr.mxu0 0.0
        %7504 = vmatpush2.msra.mxu0 0.0
        %7505 = vmatprep.subr.mxu0 0.0
        %7506 = vmatpush2.msra.mxu0 0.0
        %7507 = vmatprep.subr.mxu0 0.0
        %7508 = vmatpush2.msra.mxu0 0.0
        %7509 = vmatprep.subr.mxu0 0.0
        %7510 = vmatpush2.msra.mxu0 0.0
        %7511 = vmatprep.mubr.f32.mxu0 0.0
        %7512 = vmatmul.mubr.f32.gmra.mxu0 %v7442
        %v7513 = vpop.f32.mrf.mxu0
        %v7514 = vadd.f32 0.0, %v7513
        %v7515 = vpop.f32.mrf.mxu0
        %7516 = vmatprep.mubr.f32.mxu0 0.0
        %7517 = vmatmul.mubr.f32.gmra.mxu0 %v7445
        %v7518 = vpop.f32.mrf.mxu0
        %v7519 = vadd.f32 0.0, %v7518
        %v7520 = vpop.f32.mrf.mxu0
        %7521 = vdwg.mxu0
        %7524 = vrot.lane.b32.xlu0 %v717, 112
        %v7525 = vpop.permute.xlu0 %7524
        %7526 = vrot.lane.b32.xlu0 %v723, 112
        %v7527 = vpop.permute.xlu0 %7526
        %v7531 = vsel %vm1212, %v6185, 0
        %v7534 = vsel %vm1212, %v6186, 0
        %7536 = vmatprep.subr.mxu0 0.0
        %7537 = vmatpush1.msra.mxu0 0.0
        %7538 = vmatprep.subr.mxu0 0.0
        %7539 = vmatpush1.msra.mxu0 0.0
        %7540 = vmatprep.subr.mxu0 0.0
        %7541 = vmatpush1.msra.mxu0 0.0
        %7542 = vmatprep.subr.mxu0 0.0
        %7543 = vmatpush1.msra.mxu0 0.0
        %7544 = vmatprep.subr.mxu0 0.0
        %7545 = vmatpush1.msra.mxu0 0.0
        %7546 = vmatprep.subr.mxu0 0.0
        %7547 = vmatpush1.msra.mxu0 0.0
        %7548 = vmatprep.subr.mxu0 0.0
        %7549 = vmatpush1.msra.mxu0 0.0
        %7550 = vmatprep.subr.mxu0 0.0
        %7551 = vmatpush1.msra.mxu0 0.0
        %7552 = vmatprep.subr.mxu0 0.0
        %7553 = vmatpush1.msra.mxu0 0.0
        %7554 = vmatprep.subr.mxu0 0.0
        %7555 = vmatpush1.msra.mxu0 0.0
        %7556 = vmatprep.subr.mxu0 0.0
        %7557 = vmatpush1.msra.mxu0 0.0
        %7558 = vmatprep.subr.mxu0 0.0
        %7559 = vmatpush1.msra.mxu0 0.0
        %7560 = vmatprep.subr.mxu0 0.0
        %7561 = vmatpush1.msra.mxu0 0.0
        %7562 = vmatprep.subr.mxu0 0.0
        %7563 = vmatpush1.msra.mxu0 0.0
        %7564 = vmatprep.subr.mxu0 0.0
        %7565 = vmatpush1.msra.mxu0 %v7527
        %7566 = vmatprep.subr.mxu0 0.0
        %7567 = vmatpush1.msra.mxu0 %v7525
        %7568 = vmatprep.subr.mxu0 0.0
        %7569 = vmatpush2.msra.mxu0 0.0
        %7570 = vmatprep.subr.mxu0 0.0
        %7571 = vmatpush2.msra.mxu0 0.0
        %7572 = vmatprep.subr.mxu0 0.0
        %7573 = vmatpush2.msra.mxu0 0.0
        %7574 = vmatprep.subr.mxu0 0.0
        %7575 = vmatpush2.msra.mxu0 0.0
        %7576 = vmatprep.subr.mxu0 0.0
        %7577 = vmatpush2.msra.mxu0 0.0
        %7578 = vmatprep.subr.mxu0 0.0
        %7579 = vmatpush2.msra.mxu0 0.0
        %7580 = vmatprep.subr.mxu0 0.0
        %7581 = vmatpush2.msra.mxu0 0.0
        %7582 = vmatprep.subr.mxu0 0.0
        %7583 = vmatpush2.msra.mxu0 0.0
        %7584 = vmatprep.subr.mxu0 0.0
        %7585 = vmatpush2.msra.mxu0 0.0
        %7586 = vmatprep.subr.mxu0 0.0
        %7587 = vmatpush2.msra.mxu0 0.0
        %7588 = vmatprep.subr.mxu0 0.0
        %7589 = vmatpush2.msra.mxu0 0.0
        %7590 = vmatprep.subr.mxu0 0.0
        %7591 = vmatpush2.msra.mxu0 0.0
        %7592 = vmatprep.subr.mxu0 0.0
        %7593 = vmatpush2.msra.mxu0 0.0
        %7594 = vmatprep.subr.mxu0 0.0
        %7595 = vmatpush2.msra.mxu0 0.0
        %7596 = vmatprep.subr.mxu0 0.0
        %7597 = vmatpush2.msra.mxu0 0.0
        %7598 = vmatprep.subr.mxu0 0.0
        %7599 = vmatpush2.msra.mxu0 0.0
        %7600 = vmatprep.mubr.f32.mxu0 0.0
        %7601 = vmatmul.mubr.f32.gmra.mxu0 %v7531
        %v7602 = vpop.f32.mrf.mxu0
        %v7603 = vadd.f32 0.0, %v7602
        %v7604 = vpop.f32.mrf.mxu0
        %7605 = vmatprep.mubr.f32.mxu0 0.0
        %7606 = vmatmul.mubr.f32.gmra.mxu0 %v7534
        %v7607 = vpop.f32.mrf.mxu0
        %v7608 = vadd.f32 0.0, %v7607
        %v7609 = vpop.f32.mrf.mxu0
        %7610 = vdwg.mxu0
        %7643 = vrot.lane.b32.xlu0 %v6268, 16
        %v7644 = vpop.permute.xlu0 %7643
        %7645 = vrot.lane.b32.xlu0 %v6273, 16
        %v7646 = vpop.permute.xlu0 %7645
        %7647 = vrot.lane.b32.xlu0 %v6357, 16
        %v7648 = vpop.permute.xlu0 %7647
        %7649 = vrot.lane.b32.xlu0 %v6362, 16
        %v7650 = vpop.permute.xlu0 %7649
        %7651 = vrot.lane.b32.xlu0 %v6446, 16
        %v7652 = vpop.permute.xlu0 %7651
        %7653 = vrot.lane.b32.xlu0 %v6451, 16
        %v7654 = vpop.permute.xlu0 %7653
        %7655 = vrot.lane.b32.xlu0 %v6535, 16
        %v7656 = vpop.permute.xlu0 %7655
        %7657 = vrot.lane.b32.xlu0 %v6540, 16
        %v7658 = vpop.permute.xlu0 %7657
        %7659 = vrot.lane.b32.xlu0 %v6624, 16
        %v7660 = vpop.permute.xlu0 %7659
        %7661 = vrot.lane.b32.xlu0 %v6629, 16
        %v7662 = vpop.permute.xlu0 %7661
        %7663 = vrot.lane.b32.xlu0 %v6713, 16
        %v7664 = vpop.permute.xlu0 %7663
        %7665 = vrot.lane.b32.xlu0 %v6718, 16
        %v7666 = vpop.permute.xlu0 %7665
        %7667 = vrot.lane.b32.xlu0 %v6802, 16
        %v7668 = vpop.permute.xlu0 %7667
        %7669 = vrot.lane.b32.xlu0 %v6807, 16
        %v7670 = vpop.permute.xlu0 %7669
        %7671 = vrot.lane.b32.xlu0 %v6891, 16
        %v7672 = vpop.permute.xlu0 %7671
        %7673 = vrot.lane.b32.xlu0 %v6896, 16
        %v7674 = vpop.permute.xlu0 %7673
        %7675 = vrot.lane.b32.xlu0 %v6980, 16
        %v7676 = vpop.permute.xlu0 %7675
        %7677 = vrot.lane.b32.xlu0 %v6985, 16
        %v7678 = vpop.permute.xlu0 %7677
        %7679 = vrot.lane.b32.xlu0 %v7069, 16
        %v7680 = vpop.permute.xlu0 %7679
        %7681 = vrot.lane.b32.xlu0 %v7074, 16
        %v7682 = vpop.permute.xlu0 %7681
        %7683 = vrot.lane.b32.xlu0 %v7158, 16
        %v7684 = vpop.permute.xlu0 %7683
        %7685 = vrot.lane.b32.xlu0 %v7163, 16
        %v7686 = vpop.permute.xlu0 %7685
        %7687 = vrot.lane.b32.xlu0 %v7247, 16
        %v7688 = vpop.permute.xlu0 %7687
        %7689 = vrot.lane.b32.xlu0 %v7252, 16
        %v7690 = vpop.permute.xlu0 %7689
        %7691 = vrot.lane.b32.xlu0 %v7336, 16
        %v7692 = vpop.permute.xlu0 %7691
        %7693 = vrot.lane.b32.xlu0 %v7341, 16
        %v7694 = vpop.permute.xlu0 %7693
        %7695 = vrot.lane.b32.xlu0 %v7425, 16
        %v7696 = vpop.permute.xlu0 %7695
        %7697 = vrot.lane.b32.xlu0 %v7430, 16
        %v7698 = vpop.permute.xlu0 %7697
        %7699 = vrot.lane.b32.xlu0 %v7514, 16
        %v7700 = vpop.permute.xlu0 %7699
        %7701 = vrot.lane.b32.xlu0 %v7519, 16
        %v7702 = vpop.permute.xlu0 %7701
        %7703 = vrot.lane.b32.xlu0 %v7603, 16
        %v7704 = vpop.permute.xlu0 %7703
        %7705 = vrot.lane.b32.xlu0 %v7608, 16
        %v7706 = vpop.permute.xlu0 %7705
        %v7739 = vsel %vm1212, %v3124, %v7644
        %v7740 = vsel %vm1212, %v3129, %v7646
        %v7741 = vsel %vm1212, %v3205, %v7648
        %v7742 = vsel %vm1212, %v3210, %v7650
        %v7743 = vsel %vm1212, %v3286, %v7652
        %v7744 = vsel %vm1212, %v3291, %v7654
        %v7745 = vsel %vm1212, %v3367, %v7656
        %v7746 = vsel %vm1212, %v3372, %v7658
        %v7747 = vsel %vm1212, %v3448, %v7660
        %v7748 = vsel %vm1212, %v3453, %v7662
        %v7749 = vsel %vm1212, %v3529, %v7664
        %v7750 = vsel %vm1212, %v3534, %v7666
        %v7751 = vsel %vm1212, %v3610, %v7668
        %v7752 = vsel %vm1212, %v3615, %v7670
        %v7753 = vsel %vm1212, %v3691, %v7672
        %v7754 = vsel %vm1212, %v3696, %v7674
        %v7755 = vsel %vm1212, %v3772, %v7676
        %v7756 = vsel %vm1212, %v3777, %v7678
        %v7757 = vsel %vm1212, %v3853, %v7680
        %v7758 = vsel %vm1212, %v3858, %v7682
        %v7759 = vsel %vm1212, %v3934, %v7684
        %v7760 = vsel %vm1212, %v3939, %v7686
        %v7761 = vsel %vm1212, %v4015, %v7688
        %v7762 = vsel %vm1212, %v4020, %v7690
        %v7763 = vsel %vm1212, %v4096, %v7692
        %v7764 = vsel %vm1212, %v4101, %v7694
        %v7765 = vsel %vm1212, %v4177, %v7696
        %v7766 = vsel %vm1212, %v4182, %v7698
        %v7767 = vsel %vm1212, %v4258, %v7700
        %v7768 = vsel %vm1212, %v4263, %v7702
        %v7769 = vsel %vm1212, %v4339, %v7704
        %v7770 = vsel %vm1212, %v4344, %v7706
        %v7771 = vld [vmem:[#allocation10] sm:$0xff]
        %v7772 = vld [vmem:[#allocation10 + $0x8] sm:$0xff]
        %v7773 = vld [vmem:[#allocation10 + $0x10] sm:$0xff]
        %v7774 = vld [vmem:[#allocation10 + $0x18] sm:$0xff]
        %v7775 = vld [vmem:[%s5] sm:$0x1]
        %v7777 = vlaneseq
        %v7778 = vshrl.u32 %v7777, 7
        %v7779 = vsub.s32 0, %v7778
        %v7780 = vrot.slane %v7775, %v7779
        %v7783 = vsel %vm371, %v7739, 0
        %v7786 = vsel %vm371, %v7740, 0
        %v7789 = vsel %vm371, %v7741, 0
        %v7792 = vsel %vm371, %v7742, 0
        %v7795 = vsel %vm371, %v7743, 0
        %v7798 = vsel %vm371, %v7744, 0
        %v7801 = vsel %vm371, %v7745, 0
        %v7804 = vsel %vm371, %v7746, 0
        %v7807 = vsel %vm371, %v7747, 0
        %v7810 = vsel %vm371, %v7748, 0
        %v7813 = vsel %vm371, %v7749, 0
        %v7816 = vsel %vm371, %v7750, 0
        %v7819 = vsel %vm371, %v7751, 0
        %v7822 = vsel %vm371, %v7752, 0
        %v7825 = vsel %vm371, %v7753, 0
        %v7828 = vsel %vm371, %v7754, 0
        %v7831 = vsel %vm371, %v7755, 0
        %v7834 = vsel %vm371, %v7756, 0
        %v7837 = vsel %vm371, %v7757, 0
        %v7840 = vsel %vm371, %v7758, 0
        %v7843 = vsel %vm371, %v7759, 0
        %v7846 = vsel %vm371, %v7760, 0
        %v7849 = vsel %vm371, %v7761, 0
        %v7852 = vsel %vm371, %v7762, 0
        %v7855 = vsel %vm371, %v7763, 0
        %v7858 = vsel %vm371, %v7764, 0
        %v7861 = vsel %vm371, %v7765, 0
        %v7864 = vsel %vm371, %v7766, 0
        %v7867 = vsel %vm371, %v7767, 0
        %v7870 = vsel %vm371, %v7768, 0
        %v7873 = vsel %vm371, %v7769, 0
        %v7876 = vsel %vm371, %v7770, 0
        %7878 = vmatprep.subr.mxu0 0.0
        %7879 = vmatpush1.msra.mxu0 0.0
        %7880 = vmatprep.subr.mxu0 0.0
        %7881 = vmatpush1.msra.mxu0 0.0
        %7882 = vmatprep.subr.mxu0 0.0
        %7883 = vmatpush1.msra.mxu0 0.0
        %7884 = vmatprep.subr.mxu0 0.0
        %7885 = vmatpush1.msra.mxu0 0.0
        %7886 = vmatprep.subr.mxu0 0.0
        %7887 = vmatpush1.msra.mxu0 0.0
        %7888 = vmatprep.subr.mxu0 0.0
        %7889 = vmatpush1.msra.mxu0 0.0
        %7890 = vmatprep.subr.mxu0 0.0
        %7891 = vmatpush1.msra.mxu0 0.0
        %7892 = vmatprep.subr.mxu0 0.0
        %7893 = vmatpush1.msra.mxu0 0.0
        %7894 = vmatprep.subr.mxu0 0.0
        %7895 = vmatpush1.msra.mxu0 0.0
        %7896 = vmatprep.subr.mxu0 0.0
        %7897 = vmatpush1.msra.mxu0 0.0
        %7898 = vmatprep.subr.mxu0 0.0
        %7899 = vmatpush1.msra.mxu0 0.0
        %7900 = vmatprep.subr.mxu0 0.0
        %7901 = vmatpush1.msra.mxu0 0.0
        %7902 = vmatprep.subr.mxu0 0.0
        %7903 = vmatpush1.msra.mxu0 %v7774
        %7904 = vmatprep.subr.mxu0 0.0
        %7905 = vmatpush1.msra.mxu0 %v7773
        %7906 = vmatprep.subr.mxu0 0.0
        %7907 = vmatpush1.msra.mxu0 %v7772
        %7908 = vmatprep.subr.mxu0 0.0
        %7909 = vmatpush1.msra.mxu0 %v7771
        %7910 = vmatprep.subr.mxu0 0.0
        %7911 = vmatpush2.msra.mxu0 0.0
        %7912 = vmatprep.subr.mxu0 0.0
        %7913 = vmatpush2.msra.mxu0 0.0
        %7914 = vmatprep.subr.mxu0 0.0
        %7915 = vmatpush2.msra.mxu0 0.0
        %7916 = vmatprep.subr.mxu0 0.0
        %7917 = vmatpush2.msra.mxu0 0.0
        %7918 = vmatprep.subr.mxu0 0.0
        %7919 = vmatpush2.msra.mxu0 0.0
        %7920 = vmatprep.subr.mxu0 0.0
        %7921 = vmatpush2.msra.mxu0 0.0
        %7922 = vmatprep.subr.mxu0 0.0
        %7923 = vmatpush2.msra.mxu0 0.0
        %7924 = vmatprep.subr.mxu0 0.0
        %7925 = vmatpush2.msra.mxu0 0.0
        %7926 = vmatprep.subr.mxu0 0.0
        %7927 = vmatpush2.msra.mxu0 0.0
        %7928 = vmatprep.subr.mxu0 0.0
        %7929 = vmatpush2.msra.mxu0 0.0
        %7930 = vmatprep.subr.mxu0 0.0
        %7931 = vmatpush2.msra.mxu0 0.0
        %7932 = vmatprep.subr.mxu0 0.0
        %7933 = vmatpush2.msra.mxu0 0.0
        %7934 = vmatprep.subr.mxu0 0.0
        %7935 = vmatpush2.msra.mxu0 0.0
        %7936 = vmatprep.subr.mxu0 0.0
        %7937 = vmatpush2.msra.mxu0 0.0
        %7938 = vmatprep.subr.mxu0 0.0
        %7939 = vmatpush2.msra.mxu0 0.0
        %7940 = vmatprep.subr.mxu0 0.0
        %7941 = vmatpush2.msra.mxu0 0.0
        %7942 = vmatprep.mubr.f32.mxu0 0.0
        %7943 = vmatmul.mubr.f32.gmra.mxu0 %v7783
        %v7944 = vpop.f32.mrf.mxu0
        %v7945 = vadd.f32 %v7780, %v7944
        %v7946 = vpop.f32.mrf.mxu0
        %7947 = vmatprep.mubr.f32.mxu0 0.0
        %7948 = vmatmul.mubr.f32.gmra.mxu0 %v7786
        %v7949 = vpop.f32.mrf.mxu0
        %v7950 = vadd.f32 %v7780, %v7949
        %v7951 = vpop.f32.mrf.mxu0
        %7952 = vmatprep.mubr.f32.mxu0 0.0
        %7953 = vmatmul.mubr.f32.gmra.mxu0 %v7789
        %v7954 = vpop.f32.mrf.mxu0
        %v7955 = vadd.f32 %v7780, %v7954
        %v7956 = vpop.f32.mrf.mxu0
        %7957 = vmatprep.mubr.f32.mxu0 0.0
        %7958 = vmatmul.mubr.f32.gmra.mxu0 %v7792
        %v7959 = vpop.f32.mrf.mxu0
        %v7960 = vadd.f32 %v7780, %v7959
        %v7961 = vpop.f32.mrf.mxu0
        %7962 = vmatprep.mubr.f32.mxu0 0.0
        %7963 = vmatmul.mubr.f32.gmra.mxu0 %v7795
        %v7964 = vpop.f32.mrf.mxu0
        %v7965 = vadd.f32 %v7780, %v7964
        %v7966 = vpop.f32.mrf.mxu0
        %7967 = vmatprep.mubr.f32.mxu0 0.0
        %7968 = vmatmul.mubr.f32.gmra.mxu0 %v7798
        %v7969 = vpop.f32.mrf.mxu0
        %v7970 = vadd.f32 %v7780, %v7969
        %v7971 = vpop.f32.mrf.mxu0
        %7972 = vmatprep.mubr.f32.mxu0 0.0
        %7973 = vmatmul.mubr.f32.gmra.mxu0 %v7801
        %v7974 = vpop.f32.mrf.mxu0
        %v7975 = vadd.f32 %v7780, %v7974
        %v7976 = vpop.f32.mrf.mxu0
        %7977 = vmatprep.mubr.f32.mxu0 0.0
        %7978 = vmatmul.mubr.f32.gmra.mxu0 %v7804
        %v7979 = vpop.f32.mrf.mxu0
        %v7980 = vadd.f32 %v7780, %v7979
        %v7981 = vpop.f32.mrf.mxu0
        %7982 = vmatprep.mubr.f32.mxu0 0.0
        %7983 = vmatmul.mubr.f32.gmra.mxu0 %v7807
        %v7984 = vpop.f32.mrf.mxu0
        %v7985 = vadd.f32 %v7780, %v7984
        %v7986 = vpop.f32.mrf.mxu0
        %7987 = vmatprep.mubr.f32.mxu0 0.0
        %7988 = vmatmul.mubr.f32.gmra.mxu0 %v7810
        %v7989 = vpop.f32.mrf.mxu0
        %v7990 = vadd.f32 %v7780, %v7989
        %v7991 = vpop.f32.mrf.mxu0
        %7992 = vmatprep.mubr.f32.mxu0 0.0
        %7993 = vmatmul.mubr.f32.gmra.mxu0 %v7813
        %v7994 = vpop.f32.mrf.mxu0
        %v7995 = vadd.f32 %v7780, %v7994
        %v7996 = vpop.f32.mrf.mxu0
        %7997 = vmatprep.mubr.f32.mxu0 0.0
        %7998 = vmatmul.mubr.f32.gmra.mxu0 %v7816
        %v7999 = vpop.f32.mrf.mxu0
        %v8000 = vadd.f32 %v7780, %v7999
        %v8001 = vpop.f32.mrf.mxu0
        %8002 = vmatprep.mubr.f32.mxu0 0.0
        %8003 = vmatmul.mubr.f32.gmra.mxu0 %v7819
        %v8004 = vpop.f32.mrf.mxu0
        %v8005 = vadd.f32 %v7780, %v8004
        %v8006 = vpop.f32.mrf.mxu0
        %8007 = vmatprep.mubr.f32.mxu0 0.0
        %8008 = vmatmul.mubr.f32.gmra.mxu0 %v7822
        %v8009 = vpop.f32.mrf.mxu0
        %v8010 = vadd.f32 %v7780, %v8009
        %v8011 = vpop.f32.mrf.mxu0
        %8012 = vmatprep.mubr.f32.mxu0 0.0
        %8013 = vmatmul.mubr.f32.gmra.mxu0 %v7825
        %v8014 = vpop.f32.mrf.mxu0
        %v8015 = vadd.f32 %v7780, %v8014
        %v8016 = vpop.f32.mrf.mxu0
        %8017 = vmatprep.mubr.f32.mxu0 0.0
        %8018 = vmatmul.mubr.f32.gmra.mxu0 %v7828
        %v8019 = vpop.f32.mrf.mxu0
        %v8020 = vadd.f32 %v7780, %v8019
        %v8021 = vpop.f32.mrf.mxu0
        %8022 = vmatprep.mubr.f32.mxu0 0.0
        %8023 = vmatmul.mubr.f32.gmra.mxu0 %v7831
        %v8024 = vpop.f32.mrf.mxu0
        %v8025 = vadd.f32 %v7780, %v8024
        %v8026 = vpop.f32.mrf.mxu0
        %8027 = vmatprep.mubr.f32.mxu0 0.0
        %8028 = vmatmul.mubr.f32.gmra.mxu0 %v7834
        %v8029 = vpop.f32.mrf.mxu0
        %v8030 = vadd.f32 %v7780, %v8029
        %v8031 = vpop.f32.mrf.mxu0
        %8032 = vmatprep.mubr.f32.mxu0 0.0
        %8033 = vmatmul.mubr.f32.gmra.mxu0 %v7837
        %v8034 = vpop.f32.mrf.mxu0
        %v8035 = vadd.f32 %v7780, %v8034
        %v8036 = vpop.f32.mrf.mxu0
        %8037 = vmatprep.mubr.f32.mxu0 0.0
        %8038 = vmatmul.mubr.f32.gmra.mxu0 %v7840
        %v8039 = vpop.f32.mrf.mxu0
        %v8040 = vadd.f32 %v7780, %v8039
        %v8041 = vpop.f32.mrf.mxu0
        %8042 = vmatprep.mubr.f32.mxu0 0.0
        %8043 = vmatmul.mubr.f32.gmra.mxu0 %v7843
        %v8044 = vpop.f32.mrf.mxu0
        %v8045 = vadd.f32 %v7780, %v8044
        %v8046 = vpop.f32.mrf.mxu0
        %8047 = vmatprep.mubr.f32.mxu0 0.0
        %8048 = vmatmul.mubr.f32.gmra.mxu0 %v7846
        %v8049 = vpop.f32.mrf.mxu0
        %v8050 = vadd.f32 %v7780, %v8049
        %v8051 = vpop.f32.mrf.mxu0
        %8052 = vmatprep.mubr.f32.mxu0 0.0
        %8053 = vmatmul.mubr.f32.gmra.mxu0 %v7849
        %v8054 = vpop.f32.mrf.mxu0
        %v8055 = vadd.f32 %v7780, %v8054
        %v8056 = vpop.f32.mrf.mxu0
        %8057 = vmatprep.mubr.f32.mxu0 0.0
        %8058 = vmatmul.mubr.f32.gmra.mxu0 %v7852
        %v8059 = vpop.f32.mrf.mxu0
        %v8060 = vadd.f32 %v7780, %v8059
        %v8061 = vpop.f32.mrf.mxu0
        %8062 = vmatprep.mubr.f32.mxu0 0.0
        %8063 = vmatmul.mubr.f32.gmra.mxu0 %v7855
        %v8064 = vpop.f32.mrf.mxu0
        %v8065 = vadd.f32 %v7780, %v8064
        %v8066 = vpop.f32.mrf.mxu0
        %8067 = vmatprep.mubr.f32.mxu0 0.0
        %8068 = vmatmul.mubr.f32.gmra.mxu0 %v7858
        %v8069 = vpop.f32.mrf.mxu0
        %v8070 = vadd.f32 %v7780, %v8069
        %v8071 = vpop.f32.mrf.mxu0
        %8072 = vmatprep.mubr.f32.mxu0 0.0
        %8073 = vmatmul.mubr.f32.gmra.mxu0 %v7861
        %v8074 = vpop.f32.mrf.mxu0
        %v8075 = vadd.f32 %v7780, %v8074
        %v8076 = vpop.f32.mrf.mxu0
        %8077 = vmatprep.mubr.f32.mxu0 0.0
        %8078 = vmatmul.mubr.f32.gmra.mxu0 %v7864
        %v8079 = vpop.f32.mrf.mxu0
        %v8080 = vadd.f32 %v7780, %v8079
        %v8081 = vpop.f32.mrf.mxu0
        %8082 = vmatprep.mubr.f32.mxu0 0.0
        %8083 = vmatmul.mubr.f32.gmra.mxu0 %v7867
        %v8084 = vpop.f32.mrf.mxu0
        %v8085 = vadd.f32 %v7780, %v8084
        %v8086 = vpop.f32.mrf.mxu0
        %8087 = vmatprep.mubr.f32.mxu0 0.0
        %8088 = vmatmul.mubr.f32.gmra.mxu0 %v7870
        %v8089 = vpop.f32.mrf.mxu0
        %v8090 = vadd.f32 %v7780, %v8089
        %v8091 = vpop.f32.mrf.mxu0
        %8092 = vmatprep.mubr.f32.mxu0 0.0
        %8093 = vmatmul.mubr.f32.gmra.mxu0 %v7873
        %v8094 = vpop.f32.mrf.mxu0
        %v8095 = vadd.f32 %v7780, %v8094
        %v8096 = vpop.f32.mrf.mxu0
        %8097 = vmatprep.mubr.f32.mxu0 0.0
        %8098 = vmatmul.mubr.f32.gmra.mxu0 %v7876
        %v8099 = vpop.f32.mrf.mxu0
        %v8100 = vadd.f32 %v7780, %v8099
        %v8101 = vpop.f32.mrf.mxu0
        %8102 = vdwg.mxu0
        %8103 = vst.msk [vmem:[%s328] sm:$0xff] %vm371, %v7945
        %8104 = vst.msk [vmem:[%s328 + $0x8] sm:$0xff] %vm371, %v7950
        %8105 = vst.msk [vmem:[%s328 + $0x10] sm:$0xff] %vm371, %v7955
        %8106 = vst.msk [vmem:[%s328 + $0x18] sm:$0xff] %vm371, %v7960
        %8107 = vst.msk [vmem:[%s328 + $0x20] sm:$0xff] %vm371, %v7965
        %8108 = vst.msk [vmem:[%s328 + $0x28] sm:$0xff] %vm371, %v7970
        %8109 = vst.msk [vmem:[%s328 + $0x30] sm:$0xff] %vm371, %v7975
        %8110 = vst.msk [vmem:[%s328 + $0x38] sm:$0xff] %vm371, %v7980
        %8111 = vst.msk [vmem:[%s328 + $0x40] sm:$0xff] %vm371, %v7985
        %8112 = vst.msk [vmem:[%s328 + $0x48] sm:$0xff] %vm371, %v7990
        %8113 = vst.msk [vmem:[%s328 + $0x50] sm:$0xff] %vm371, %v7995
        %8114 = vst.msk [vmem:[%s328 + $0x58] sm:$0xff] %vm371, %v8000
        %8115 = vst.msk [vmem:[%s328 + $0x60] sm:$0xff] %vm371, %v8005
        %8116 = vst.msk [vmem:[%s328 + $0x68] sm:$0xff] %vm371, %v8010
        %8117 = vst.msk [vmem:[%s328 + $0x70] sm:$0xff] %vm371, %v8015
        %8118 = vst.msk [vmem:[%s328 + $0x78] sm:$0xff] %vm371, %v8020
        %8119 = vst.msk [vmem:[%s328 + $0x80] sm:$0xff] %vm371, %v8025
        %8120 = vst.msk [vmem:[%s328 + $0x88] sm:$0xff] %vm371, %v8030
        %8121 = vst.msk [vmem:[%s328 + $0x90] sm:$0xff] %vm371, %v8035
        %8122 = vst.msk [vmem:[%s328 + $0x98] sm:$0xff] %vm371, %v8040
        %8123 = vst.msk [vmem:[%s328 + $0xa0] sm:$0xff] %vm371, %v8045
        %8124 = vst.msk [vmem:[%s328 + $0xa8] sm:$0xff] %vm371, %v8050
        %8125 = vst.msk [vmem:[%s328 + $0xb0] sm:$0xff] %vm371, %v8055
        %8126 = vst.msk [vmem:[%s328 + $0xb8] sm:$0xff] %vm371, %v8060
        %8127 = vst.msk [vmem:[%s328 + $0xc0] sm:$0xff] %vm371, %v8065
        %8128 = vst.msk [vmem:[%s328 + $0xc8] sm:$0xff] %vm371, %v8070
        %8129 = vst.msk [vmem:[%s328 + $0xd0] sm:$0xff] %vm371, %v8075
        %8130 = vst.msk [vmem:[%s328 + $0xd8] sm:$0xff] %vm371, %v8080
        %8131 = vst.msk [vmem:[%s328 + $0xe0] sm:$0xff] %vm371, %v8085
        %8132 = vst.msk [vmem:[%s328 + $0xe8] sm:$0xff] %vm371, %v8090
        %8133 = vst.msk [vmem:[%s328 + $0xf0] sm:$0xff] %vm371, %v8095
        %8134 = vst.msk [vmem:[%s328 + $0xf8] sm:$0xff] %vm371, %v8100
        %s8135 = sand.u32 %s164, 1
        %s8136 = scalar_lea.sflag [#allocation4], %s8135
        %s8137 = sand.u32 %s164, 1
        %s8138 = smul.addr %s8137, 256
        %s8139 = scalar_lea.vmem [#allocation11], %s8138
        // Predicated region
        $region65: #{tpu_custom_call.1} parent=43 // pred_check
          %p8140 = pneg %p174
        $region66: #{tpu_custom_call.1} parent=43 // pred_check_branch
          %8142 = sbr.rel (%p8140) target = $region68
        $region67: #{tpu_custom_call.1} parent=43 // pred_region
          %s8143 = smul.u32 16, %s25
          %s8145 = ssub.s32 4096, 4096
          %8146 = vsyncadd %s8136, %s8145
          %s8147 = smul.addr %s8143, 2
          %s8148 = smul.addr %s8147, 128
          %s8149 = scalar_lea.hbm %s6, %s8148
          %s8150 = sshll.u32 %s8139, 4
          %s8151 = int_to_ptr.vmem [resolvable:$true] %s8150
          %8156 = dma.vmem_to_hbm [thread:$0]  %s8151, 4096, %s8149, %s8136, 128, 128, 8
        $region68: #{tpu_custom_call.1} parent=43 // pred_fallthru
          _
      $region44: #{tpu_custom_call.1} parent=5 // pred_fallthru
        _
      %p8157 = scmp.le.s32.totalorder 2, %s20
      // Predicated region
      $region69: #{tpu_custom_call.1} parent=5 // pred_check
        %p8158 = pneg %p8157
      $region70: #{tpu_custom_call.1} parent=5 // pred_check_branch
        %8160 = sbr.rel (%p8158) target = $region72
      $region71: #{tpu_custom_call.1} parent=5 // pred_region
        %s8161 = ssub.s32 %s20, 2
        // Predicated region
        $region73: #{tpu_custom_call.1} parent=71 // pred_check
          %p8162 = pneg %p180
        $region74: #{tpu_custom_call.1} parent=71 // pred_check_branch
          %8164 = sbr.rel (%p8162) target = $region76
        $region75: #{tpu_custom_call.1} parent=71 // pred_region
          %s8165 = sand.u32 %s165, 1
          %s8166 = scalar_lea.sflag [#allocation4], %s8165
          %s8167 = sand.u32 %s165, 1
          %s8168 = smul.addr %s8167, 256
          %s8169 = scalar_lea.vmem [#allocation11], %s8168
          %8170 = dma.done %s8166, 4096
        $region76: #{tpu_custom_call.1} parent=71 // pred_fallthru
          _
      $region72: #{tpu_custom_call.1} parent=5 // pred_fallthru
        _
    $region6: #{tpu_custom_call.1} parent=1 // loop_footer
      %s24 = sadd.s32 1, %s20
    $region7: #{tpu_custom_call.1} parent=1 // loop_footer_branch
      %19 = sbr.rel target = $region3
    $region8: #{tpu_custom_call.1} parent=1 // loop_exit
      _
    %8171 = vsyncpa [#allocation3], 1
    %s8172 = scalar_lea.sflag [#allocation3], 1
    %8173 = vsyncpa %s8172, 1
    %8174 = vsyncpa [#allocation6], 1
    %8175 = vsyncpa [#allocation9], 1
    %8176 = vsyncpa [#allocation4], 1
    %s8177 = scalar_lea.sflag [#allocation4], 1
    %8178 = vsyncpa %s8177, 1

</llo_original>
